<compile_context>
chip_gen: v7x
topology: tpu7x:2x2x1
jax: 0.10.0
libtpu: 0.0.40
codegen_flags: <defaults>
</compile_context>

<pallas_src>
import functools
import numpy as np

import jax
import jax.numpy as jnp
from jax.experimental import pallas as pl
from jax.experimental.pallas import tpu as pltpu


_NEG = -1e9  # out-of-window mask; exp underflows to exactly 0 after row-max sub.

_BLOCK_PARAM_NAMES_HX = ("ln1_g", "ln1_b", "wred", "bred", "wqkv", "bqkv",
                         "attn_bias", "wproj", "bproj", "ln2_g", "ln2_b",
                         "w1", "b1", "w2", "b2")
_BLOCK_PARAM_NAMES = ("ln1_g", "ln1_b", "wqkv", "bqkv", "attn_bias",
                      "wproj", "bproj", "ln2_g", "ln2_b",
                      "w1", "b1", "w2", "b2")


def _block_has_hx(bi):
    # SwinTransformer.forward: block 0 gets hx, even blocks >= 2 get xt, odd get None.
    return bi == 0 or (bi >= 2 and bi % 2 == 0)


def _const_map(ndim):
    return lambda b: (0,) * ndim


def _batch_map(ndim):
    return lambda b: (b,) + (0,) * (ndim - 1)


# ----------------------------------------------------------------------------
# In-kernel math helpers (all f32)
# ----------------------------------------------------------------------------

def _layernorm(x, g, b, eps=1e-5):
    mu = jnp.mean(x, axis=-1, keepdims=True)
    xc = x - mu
    var = jnp.mean(xc * xc, axis=-1, keepdims=True)
    return xc * jax.lax.rsqrt(var + eps) * g + b


def _erf(x):
    # Abramowitz & Stegun 7.1.26 (abs err ~1.5e-7); avoids relying on a lax.erf
    # lowering rule.  TODO(synk): swap for a native erf if exact bit-parity with
    # torch.erf is required.
    a1, a2, a3, a4, a5 = (0.254829592, -0.284496736, 1.421413741,
                          -1.453152027, 1.061405429)
    p = 0.3275911
    ax = jnp.abs(x)
    t = 1.0 / (1.0 + p * ax)
    poly = ((((a5 * t + a4) * t + a3) * t + a2) * t + a1) * t
    y = 1.0 - poly * jnp.exp(-ax * ax)
    return jnp.where(x < 0.0, -y, y)


def _gelu_exact(x):
    return 0.5 * x * (1.0 + _erf(x * 0.7071067811865476))


# ----------------------------------------------------------------------------
# Fused kernels
# ----------------------------------------------------------------------------

def _swin_block(x, h_in, p, *, num_heads, C, head_dim):
    """One SwinTransformerBlock on a per-batch (L, C) f32 slab."""
    f32, bf16 = jnp.float32, jnp.bfloat16
    shortcut = x

    # norm1 (+ hidden-state mix through `red`, single (2C, C) matmul)
    xn = _layernorm(x, p["ln1_g"][...], p["ln1_b"][...])
    if h_in is not None:
        hn = _layernorm(h_in, p["ln1_g"][...], p["ln1_b"][...])
        cat = jnp.concatenate([xn, hn], axis=-1)
        xr = (jnp.dot(cat.astype(bf16), p["wred"][...],
                      preferred_element_type=f32) + p["bred"][...])
    else:
        xr = xn

    # fused lane-dense QKV: one (C, 3C) bf16 matmul, heads split by static slices.
    # (qk scale is already folded into the q columns of wqkv.)
    qkv = (jnp.dot(xr.astype(bf16), p["wqkv"][...],
                   preferred_element_type=f32) + p["bqkv"][...])

    heads = []
    for h in range(num_heads):                      # static unroll (2 or 4)
        q = qkv[:, h * head_dim:(h + 1) * head_dim]
        k = qkv[:, C + h * head_dim:C + (h + 1) * head_dim]
        v = qkv[:, 2 * C + h * head_dim:2 * C + (h + 1) * head_dim]
        s = jax.lax.dot_general(q.astype(bf16), k.astype(bf16),
                                (((1,), (1,)), ((), ())),
                                preferred_element_type=f32)
        s = s + p["attn_bias"][h]                   # rel-pos + shift + window mask
        s = s - jnp.max(s, axis=-1, keepdims=True)
        e = jnp.exp(s)
        pr = e * (1.0 / jnp.sum(e, axis=-1, keepdims=True))   # exact softmax
        heads.append(jnp.dot(pr.astype(bf16), v.astype(bf16),
                             preferred_element_type=f32))
    o = heads[0] if num_heads == 1 else jnp.concatenate(heads, axis=-1)

    # single (C, C) output projection + residual
    attn_out = (jnp.dot(o.astype(bf16), p["wproj"][...],
                        preferred_element_type=f32) + p["bproj"][...])
    x = shortcut + attn_out

    # MLP: norm2 -> fc1 (lane-dense N=4C) -> exact GELU -> fc2 -> residual
    xn2 = _layernorm(x, p["ln2_g"][...], p["ln2_b"][...])
    h1 = (jnp.dot(xn2.astype(bf16), p["w1"][...],
                  preferred_element_type=f32) + p["b1"][...])
    h1 = _gelu_exact(h1)
    h2 = (jnp.dot(h1.astype(bf16), p["w2"][...],
                  preferred_element_type=f32) + p["b2"][...])
    return x + h2


def _swin_cell_kernel(*refs, depth, num_heads, C, head_dim, merge_M):
    """Whole SwinLSTMCell (all blocks + LSTM gating) + PatchMerging, one batch
    element per grid step."""
    refs = list(refs)
    pos = 0

    def nxt():
        nonlocal pos
        r = refs[pos]
        pos += 1
        return r

    x_ref, hx_ref, cx_ref = nxt(), nxt(), nxt()
    block_params = []
    for bi in range(depth):
        names = _BLOCK_PARAM_NAMES_HX if _block_has_hx(bi) else _BLOCK_PARAM_NAMES
        block_params.append({n: nxt() for n in names})
    gmat_ref, mg_g, mg_b, mg_w = nxt(), nxt(), nxt(), nxt()
    hy_ref, cy_ref, mo_ref = nxt(), nxt(), nxt()

    f32 = jnp.float32
    xt0 = x_ref[...].astype(f32)

    x = xt0
    for bi in range(depth):
        if _block_has_hx(bi):
            h_in = hx_ref[...].astype(f32) if bi == 0 else xt0
        else:
            h_in = None
        x = _swin_block(x, h_in, block_params[bi],
                        num_heads=num_heads, C=C, head_dim=head_dim)

    # ---- SwinLSTMCell gating (f32 VPU/EUP) ----
    gate = jax.nn.sigmoid(x)
    cell = jnp.tanh(x)
    cy = gate * (cx_ref[...].astype(f32) + cell)
    hy = gate * jnp.tanh(cy)
    hy_ref[...] = hy.astype(hy_ref.dtype)
    cy_ref[...] = cy.astype(cy_ref.dtype)

    # ---- PatchMerging fused in: exact one-hot row gather, lane concat, LN,
    #      reduction matmul (bias=False). ----
    g = jnp.dot(gmat_ref[...], hy, preferred_element_type=f32)    # (4M, C)
    quads = [g[q * merge_M:(q + 1) * merge_M, :] for q in range(4)]
    mcat = jnp.concatenate(quads, axis=-1)                        # (M, 4C)
    mnorm = _layernorm(mcat, mg_g[...], mg_b[...])
    mo = jnp.dot(mnorm.astype(jnp.bfloat16), mg_w[...],
                 preferred_element_type=f32)
    mo_ref[...] = mo.astype(mo_ref.dtype)


def _patch_embed_kernel(x_ref, w_ref, b_ref, g_ref, bn_ref, o_ref):
    y = (jnp.dot(x_ref[...].astype(jnp.bfloat16), w_ref[...],
                 preferred_element_type=jnp.float32) + b_ref[...])
    o_ref[...] = _layernorm(y, g_ref[...], bn_ref[...]).astype(o_ref.dtype)


# ----------------------------------------------------------------------------
# pallas_call wrappers
# ----------------------------------------------------------------------------

def patch_embed_forward(x, p, patch_size, embed_dim):
    # Conv2d(kernel=stride=patch_size) == per-patch flatten + matmul (glue in XLA).
    B, Cin, H, W = x.shape
    ps = patch_size
    Hp, Wp = H // ps, W // ps
    L, K = Hp * Wp, Cin * ps * ps
    xp = x.reshape(B, Cin, Hp, ps, Wp, ps)
    xp = jnp.transpose(xp, (0, 2, 4, 1, 3, 5)).reshape(B, L, K)
    return pl.pallas_call(
        _patch_embed_kernel,
        grid=(B,),
        out_shape=jax.ShapeDtypeStruct((B, L, embed_dim), jnp.float32),
        in_specs=[pl.BlockSpec((None, L, K), _batch_map(3)),
                  pl.BlockSpec(p["w"].shape, _const_map(2)),
                  pl.BlockSpec(p["b"].shape, _const_map(2)),
                  pl.BlockSpec(p["ln_g"].shape, _const_map(2)),
                  pl.BlockSpec(p["ln_b"].shape, _const_map(2))],
        out_specs=pl.BlockSpec((None, L, embed_dim), _batch_map(3)),
        compiler_params=pltpu.CompilerParams(
            dimension_semantics=("parallel",)),
    )(xp, p["w"], p["b"], p["ln_g"], p["ln_b"])


def swin_cell_merge_forward(xt, hidden, p_cell, p_merge, num_heads):
    """SwinLSTMCell + PatchMerging for one layer, one fused pallas_call."""
    B, L, C = xt.shape
    if hidden is None:
        hx = jnp.zeros((B, L, C), jnp.float32)
        cx = jnp.zeros((B, L, C), jnp.float32)
    else:
        hx, cx = hidden
    depth = len(p_cell["blocks"])
    head_dim = C // num_heads
    M = L // 4

    act_spec = pl.BlockSpec((None, L, C), _batch_map(3))
    inputs = [xt, hx, cx]
    in_specs = [act_spec, act_spec, act_spec]
    for bi, bp in enumerate(p_cell["blocks"]):
        names = _BLOCK_PARAM_NAMES_HX if _block_has_hx(bi) else _BLOCK_PARAM_NAMES
        for n in names:
            arr = bp[n]
            inputs.append(arr)
            in_specs.append(pl.BlockSpec(arr.shape, _const_map(arr.ndim)))
    for arr in (p_merge["gmat"], p_merge["ln_g"], p_merge["ln_b"], p_merge["w"]):
        inputs.append(arr)
        in_specs.append(pl.BlockSpec(arr.shape, _const_map(arr.ndim)))

    out_shape = (jax.ShapeDtypeStruct((B, L, C), jnp.float32),
                 jax.ShapeDtypeStruct((B, L, C), jnp.float32),
                 jax.ShapeDtypeStruct((B, M, 2 * C), jnp.float32))
    out_specs = (act_spec, act_spec,
                 pl.BlockSpec((None, M, 2 * C), _batch_map(3)))

    hy, cy, merged = pl.pallas_call(
        functools.partial(_swin_cell_kernel, depth=depth, num_heads=num_heads,
                          C=C, head_dim=head_dim, merge_M=M),
        grid=(B,),
        out_shape=out_shape,
        in_specs=in_specs,
        out_specs=out_specs,
        compiler_params=pltpu.CompilerParams(
            dimension_semantics=("parallel",)),
    )(*inputs)
    return merged, (hy, cy)


# ----------------------------------------------------------------------------
# Static attention-bias / gather construction (numpy, at init)
# ----------------------------------------------------------------------------

def relative_position_index(ws):
    coords = np.stack(np.meshgrid(np.arange(ws), np.arange(ws), indexing="ij"))
    cf = coords.reshape(2, -1)
    rel = cf[:, :, None] - cf[:, None, :]
    rel = rel.transpose(1, 2, 0).astype(np.int64)
    rel[:, :, 0] += ws - 1
    rel[:, :, 1] += ws - 1
    rel[:, :, 0] *= 2 * ws - 1
    return rel.sum(-1)  # (N, N)


def build_attn_bias(H, W, ws, shift, rel_table, num_heads):
    """(num_heads, L, L) additive bias reproducing shifted-window attention for
    ONE batch element (grid handles the batch => no cross-batch quadrants)."""
    N = ws * ws
    L = H * W
    nWh, nWw = H // ws, W // ws

    rpi = relative_position_index(ws)
    rel_bias = np.asarray(rel_table)[rpi.reshape(-1)].reshape(N, N, num_heads)
    rel_bias = np.transpose(rel_bias, (2, 0, 1)).astype(np.float64)

    if shift > 0:
        img_mask = np.zeros((H, W))
        sl = (slice(0, -ws), slice(-ws, -shift), slice(-shift, None))
        cnt = 0
        for hs in sl:
            for wsl in sl:
                img_mask[hs, wsl] = cnt
                cnt += 1
        mw = img_mask.reshape(nWh, ws, nWw, ws).transpose(0, 2, 1, 3).reshape(-1, N)
        shift_mask = np.where(mw[:, :, None] != mw[:, None, :], -100.0, 0.0)
    else:
        shift_mask = np.zeros((nWh * nWw, N, N))

    r = np.arange(L) // W
    c = np.arange(L) % W
    rs = (r - shift) % H
    cs = (c - shift) % W
    win = (rs // ws) * nWw + (cs // ws)
    pos = (rs % ws) * ws + (cs % ws)

    same = win[:, None] == win[None, :]
    pb = rel_bias[:, pos[:, None], pos[None, :]]
    sb = shift_mask[win[:, None], pos[:, None], pos[None, :]]
    bias = np.where(same[None, :, :], pb + sb[None, :, :], _NEG)
    return jnp.asarray(bias.astype(np.float32))


def build_merge_gather(H, W):
    """(4M, L) one-hot gather so that concat of the 4 row-blocks reproduces the
    PatchMerging strided gather exactly."""
    M = (H // 2) * (W // 2)
    L = H * W
    g = np.zeros((4 * M, L), np.float32)
    m = 0
    for i in range(H // 2):
        for j in range(W // 2):
            rows = [(2 * i) * W + 2 * j, (2 * i + 1) * W + 2 * j,
                    (2 * i) * W + 2 * j + 1, (2 * i + 1) * W + 2 * j + 1]
            for q, r in enumerate(rows):
                g[q * M + m, r] = 1.0
            m += 1
    return jnp.asarray(g)


# ----------------------------------------------------------------------------
# Parameter init (random weights, architecture-faithful shapes)
# ----------------------------------------------------------------------------

class KeyGen:
    def __init__(self, key):
        self.key = key

    def __call__(self):
        self.key, sub = jax.random.split(self.key)
        return sub


def _normal(kg, shape, std=0.02):
    return jax.random.normal(kg(), shape, jnp.float32) * std


def init_block(kg, dim, num_heads, ws_eff, shift_eff, res, mlp_ratio, has_hx):
    head_dim = dim // num_heads
    scale = float(head_dim) ** -0.5
    hidden = int(dim * mlp_ratio)
    rel_table = np.asarray(_normal(kg, ((2 * ws_eff - 1) ** 2, num_heads)))
    wq = _normal(kg, (dim, dim)) * scale      # qk scale folded into q weights
    wk = _normal(kg, (dim, dim))
    wv = _normal(kg, (dim, dim))
    p = {
        "ln1_g": jnp.ones((1, dim), jnp.float32),
        "ln1_b": jnp.zeros((1, dim), jnp.float32),
        "wqkv": jnp.concatenate([wq, wk, wv], axis=1).astype(jnp.bfloat16),
        "bqkv": jnp.zeros((1, 3 * dim), jnp.float32),
        "attn_bias": build_attn_bias(res[0], res[1], ws_eff, shift_eff,
                                     rel_table, num_heads),
        "wproj": _normal(kg, (dim, dim)).astype(jnp.bfloat16),
        "bproj": jnp.zeros((1, dim), jnp.float32),
        "ln2_g": jnp.ones((1, dim), jnp.float32),
        "ln2_b": jnp.zeros((1, dim), jnp.float32),
        "w1": _normal(kg, (dim, hidden)).astype(jnp.bfloat16),
        "b1": jnp.zeros((1, hidden), jnp.float32),
        "w2": _normal(kg, (hidden, dim)).astype(jnp.bfloat16),
        "b2": jnp.zeros((1, dim), jnp.float32),
    }
    if has_hx:
        # red: nn.Linear(2*dim, dim) as one (2C, C) weight for the lane-concat.
        p["wred"] = _normal(kg, (2 * dim, dim)).astype(jnp.bfloat16)
        p["bred"] = jnp.zeros((1, dim), jnp.float32)
    return p


def init_downsample(key, cfg):
    kg = KeyGen(key)
    ps, E, Cin = cfg["patch_size"], cfg["embed_dim"], cfg["in_chans"]
    pr = (cfg["img_size"] // ps, cfg["img_size"] // ps)
    params = {
        "patch_embed": {
            "w": _normal(kg, (Cin * ps * ps, E)).astype(jnp.bfloat16),
            "b": jnp.zeros((1, E), jnp.float32),
            "ln_g": jnp.ones((1, E), jnp.float32),
            "ln_b": jnp.zeros((1, E), jnp.float32),
        },
        "layers": [],
        "downsample": [],
    }
    layer_cfgs = []
    for i, depth in enumerate(cfg["depths"]):
        dim = E * (2 ** i)
        res = (pr[0] // (2 ** i), pr[1] // (2 ** i))
        nh = cfg["num_heads"][i]
        blocks_p = []
        for bi in range(depth):
            if min(res) <= cfg["window_size"]:
                ws_eff, shift_eff = min(res), 0
            else:
                ws_eff = cfg["window_size"]
                shift_eff = 0 if bi % 2 == 0 else cfg["window_size"] // 2
            blocks_p.append(init_block(kg, dim, nh, ws_eff, shift_eff, res,
                                       cfg["mlp_ratio"], _block_has_hx(bi)))
        params["layers"].append({"blocks": blocks_p})
        params["downsample"].append({
            "gmat": build_merge_gather(res[0], res[1]),
            "ln_g": jnp.ones((1, 4 * dim), jnp.float32),
            "ln_b": jnp.zeros((1, 4 * dim), jnp.float32),
            "w": _normal(kg, (4 * dim, 2 * dim)).astype(jnp.bfloat16),  # bias=False
        })
        layer_cfgs.append({"dim": dim, "res": res, "num_heads": nh})
    return params, layer_cfgs


# ----------------------------------------------------------------------------
# Module forward pass
# ----------------------------------------------------------------------------

def downsample_forward(params, layer_cfgs, cfg, x, y):
    xt = patch_embed_forward(x, params["patch_embed"], cfg["patch_size"],
                             cfg["embed_dim"])
    hidden_states_down = []
    for i, lcfg in enumerate(layer_cfgs):
        xt, hidden_state = swin_cell_merge_forward(
            xt, y[i], params["layers"][i], params["downsample"][i],
            lcfg["num_heads"])
        hidden_states_down.append(hidden_state)
    return hidden_states_down, xt


# ----------------------------------------------------------------------------
# Main
# ----------------------------------------------------------------------------

if __name__ == "__main__":
    cfg = dict(img_size=16, patch_size=4, in_chans=4, embed_dim=32,
               depths=(2, 2), num_heads=(2, 4), window_size=2, mlp_ratio=4.0)
    B = 2

    key = jax.random.PRNGKey(0)
    kparam, kx = jax.random.split(key)
    params, layer_cfgs = init_downsample(kparam, cfg)

    x = jax.random.normal(kx, (B, cfg["in_chans"], cfg["img_size"],
                               cfg["img_size"]), jnp.float32)

    @jax.jit
    def fwd(p, xin):
        return downsample_forward(p, layer_cfgs, cfg, xin,
                                  [None] * len(cfg["depths"]))

    hidden_states_down, out = fwd(params, x)
    jax.block_until_ready((hidden_states_down, out))

    # Shape checks: layer0 hidden (2,16,32), layer1 hidden (2,4,64), final (2,1,128)
    assert hidden_states_down[0][0].shape == (2, 16, 32)
    assert hidden_states_down[0][1].shape == (2, 16, 32)
    assert hidden_states_down[1][0].shape == (2, 4, 64)
    assert hidden_states_down[1][1].shape == (2, 4, 64)
    assert out.shape == (2, 1, 128)
    assert bool(jnp.all(jnp.isfinite(out)))
    assert bool(jnp.all(jnp.isfinite(hidden_states_down[0][0])))
    print("KERNEL_OK")
</pallas_src>

<mosaic_0001>
module attributes {stable_mosaic.version = 11 : i64} {
  func.func @_patch_embed_kernel(%arg0: i32, %arg1: memref<1x16x64xf32, #tpu.memory_space<vmem>>, %arg2: memref<64x32xbf16, #tpu.memory_space<vmem>>, %arg3: memref<1x32xf32, #tpu.memory_space<vmem>>, %arg4: memref<1x32xf32, #tpu.memory_space<vmem>>, %arg5: memref<1x32xf32, #tpu.memory_space<vmem>>, %arg6: memref<1x16x32xf32, #tpu.memory_space<vmem>>) attributes {dimension_semantics = [#tpu.dimension_semantics<parallel>], iteration_bounds = array<i64: 2>, scalar_prefetch = 0 : i64, scratch_operands = 0 : i64, tpu.core_type = #tpu.core_type<tc>, window_params = [{transform_indices = @transform_0, window_bounds = array<i64: 1, 16, 64>}, {pipeline_mode = #tpu.pipeline_mode<synchronous>, transform_indices = @transform_1, window_bounds = array<i64: 64, 32>}, {pipeline_mode = #tpu.pipeline_mode<synchronous>, transform_indices = @transform_2, window_bounds = array<i64: 1, 32>}, {pipeline_mode = #tpu.pipeline_mode<synchronous>, transform_indices = @transform_3, window_bounds = array<i64: 1, 32>}, {pipeline_mode = #tpu.pipeline_mode<synchronous>, transform_indices = @transform_4, window_bounds = array<i64: 1, 32>}, {transform_indices = @transform_5, window_bounds = array<i64: 1, 16, 32>}]} {
    %c0 = arith.constant 0 : index
    %c0_0 = arith.constant 0 : index
    %c0_1 = arith.constant 0 : index
    %0 = vector.load %arg1[%c0, %c0_0, %c0_1] : memref<1x16x64xf32, #tpu.memory_space<vmem>>, vector<1x16x64xf32>
    %1 = vector.shape_cast %0 : vector<1x16x64xf32> to vector<16x64xf32>
    %2 = arith.truncf %1 : vector<16x64xf32> to vector<16x64xbf16>
    %c0_2 = arith.constant 0 : index
    %c0_3 = arith.constant 0 : index
    %3 = vector.load %arg2[%c0_2, %c0_3] : memref<64x32xbf16, #tpu.memory_space<vmem>>, vector<64x32xbf16>
    %cst = arith.constant dense<0.000000e+00> : vector<16x32xf32>
    %4 = tpu.matmul %2, %3, %cst {dimension_numbers = #tpu.dot_dimension_numbers<[1], [0], [0], [1], [0, 0, 1, 1], [], []>} : vector<16x64xbf16>, vector<64x32xbf16>, vector<16x32xf32> -> vector<16x32xf32>
    %c0_4 = arith.constant 0 : index
    %c0_5 = arith.constant 0 : index
    %5 = vector.load %arg3[%c0_4, %c0_5] : memref<1x32xf32, #tpu.memory_space<vmem>>, vector<1x32xf32>
    %6 = vector.broadcast %5 : vector<1x32xf32> to vector<16x32xf32>
    %7 = arith.addf %4, %6 : vector<16x32xf32>
    %c0_6 = arith.constant 0 : index
    %c0_7 = arith.constant 0 : index
    %8 = vector.load %arg4[%c0_6, %c0_7] : memref<1x32xf32, #tpu.memory_space<vmem>>, vector<1x32xf32>
    %c0_8 = arith.constant 0 : index
    %c0_9 = arith.constant 0 : index
    %9 = vector.load %arg5[%c0_8, %c0_9] : memref<1x32xf32, #tpu.memory_space<vmem>>, vector<1x32xf32>
    %cst_10 = arith.constant dense<0.000000e+00> : vector<16xf32>
    %10 = vector.multi_reduction <add>, %7, %cst_10 [1] : vector<16x32xf32> to vector<16xf32>
    %11 = vector.shape_cast %10 : vector<16xf32> to vector<16x1xf32>
    %cst_11 = arith.constant 3.200000e+01 : f32
    %12 = vector.broadcast %cst_11 : f32 to vector<16x1xf32>
    %13 = arith.divf %11, %12 : vector<16x1xf32>
    %14 = vector.broadcast %13 : vector<16x1xf32> to vector<16x32xf32>
    %15 = arith.subf %7, %14 : vector<16x32xf32>
    %16 = arith.mulf %15, %15 : vector<16x32xf32>
    %cst_12 = arith.constant dense<0.000000e+00> : vector<16xf32>
    %17 = vector.multi_reduction <add>, %16, %cst_12 [1] : vector<16x32xf32> to vector<16xf32>
    %18 = vector.shape_cast %17 : vector<16xf32> to vector<16x1xf32>
    %cst_13 = arith.constant 3.200000e+01 : f32
    %19 = vector.broadcast %cst_13 : f32 to vector<16x1xf32>
    %20 = arith.divf %18, %19 : vector<16x1xf32>
    %cst_14 = arith.constant 9.99999974E-6 : f32
    %21 = vector.broadcast %cst_14 : f32 to vector<16x1xf32>
    %22 = arith.addf %20, %21 : vector<16x1xf32>
    %23 = math.rsqrt %22 : vector<16x1xf32>
    %24 = vector.broadcast %23 : vector<16x1xf32> to vector<16x32xf32>
    %25 = arith.mulf %15, %24 : vector<16x32xf32>
    %26 = vector.broadcast %8 : vector<1x32xf32> to vector<16x32xf32>
    %27 = arith.mulf %25, %26 : vector<16x32xf32>
    %28 = vector.broadcast %9 : vector<1x32xf32> to vector<16x32xf32>
    %29 = arith.addf %27, %28 : vector<16x32xf32>
    %c0_15 = arith.constant 0 : index
    %c0_16 = arith.constant 0 : index
    %c0_17 = arith.constant 0 : index
    %30 = vector.load %arg6[%c0_15, %c0_16, %c0_17] : memref<1x16x32xf32, #tpu.memory_space<vmem>>, vector<1x16x32xf32>
    %31 = vector.shape_cast %30 : vector<1x16x32xf32> to vector<16x32xf32>
    %32 = vector.shape_cast %29 : vector<16x32xf32> to vector<1x16x32xf32>
    tpu.vector_store %arg6[%c0_15, %c0_16, %c0_17], %32 {strides = array<i32>} : memref<1x16x32xf32, #tpu.memory_space<vmem>>, vector<1x16x32xf32>,
    return
  }
  func.func @transform_0(%arg0: i32) -> (i32, i32, i32) {
    %c0_i32 = arith.constant 0 : i32
    %c0_i32_0 = arith.constant 0 : i32
    %c0_i32_1 = arith.constant 0 : i32
    return %arg0, %c0_i32, %c0_i32_0 : i32, i32, i32
  }
  func.func @transform_1(%arg0: i32) -> (i32, i32) {
    %c0_i32 = arith.constant 0 : i32
    %c0_i32_0 = arith.constant 0 : i32
    %c0_i32_1 = arith.constant 0 : i32
    return %c0_i32, %c0_i32_0 : i32, i32
  }
  func.func @transform_2(%arg0: i32) -> (i32, i32) {
    %c0_i32 = arith.constant 0 : i32
    %c0_i32_0 = arith.constant 0 : i32
    %c0_i32_1 = arith.constant 0 : i32
    return %c0_i32, %c0_i32_0 : i32, i32
  }
  func.func @transform_3(%arg0: i32) -> (i32, i32) {
    %c0_i32 = arith.constant 0 : i32
    %c0_i32_0 = arith.constant 0 : i32
    %c0_i32_1 = arith.constant 0 : i32
    return %c0_i32, %c0_i32_0 : i32, i32
  }
  func.func @transform_4(%arg0: i32) -> (i32, i32) {
    %c0_i32 = arith.constant 0 : i32
    %c0_i32_0 = arith.constant 0 : i32
    %c0_i32_1 = arith.constant 0 : i32
    return %c0_i32, %c0_i32_0 : i32, i32
  }
  func.func @transform_5(%arg0: i32) -> (i32, i32, i32) {
    %c0_i32 = arith.constant 0 : i32
    %c0_i32_0 = arith.constant 0 : i32
    %c0_i32_1 = arith.constant 0 : i32
    return %arg0, %c0_i32, %c0_i32_0 : i32, i32, i32
  }
}

module attributes {stable_mosaic.version = 11 : i64} {
  func.func @_swin_cell_kernel(%arg0: i32, %arg1: memref<1x16x32xf32, #tpu.memory_space<vmem>>, %arg2: memref<1x16x32xf32, #tpu.memory_space<vmem>>, %arg3: memref<1x16x32xf32, #tpu.memory_space<vmem>>, %arg4: memref<1x32xf32, #tpu.memory_space<vmem>>, %arg5: memref<1x32xf32, #tpu.memory_space<vmem>>, %arg6: memref<64x32xbf16, #tpu.memory_space<vmem>>, %arg7: memref<1x32xf32, #tpu.memory_space<vmem>>, %arg8: memref<32x96xbf16, #tpu.memory_space<vmem>>, %arg9: memref<1x96xf32, #tpu.memory_space<vmem>>, %arg10: memref<2x16x16xf32, #tpu.memory_space<vmem>>, %arg11: memref<32x32xbf16, #tpu.memory_space<vmem>>, %arg12: memref<1x32xf32, #tpu.memory_space<vmem>>, %arg13: memref<1x32xf32, #tpu.memory_space<vmem>>, %arg14: memref<1x32xf32, #tpu.memory_space<vmem>>, %arg15: memref<32x128xbf16, #tpu.memory_space<vmem>>, %arg16: memref<1x128xf32, #tpu.memory_space<vmem>>, %arg17: memref<128x32xbf16, #tpu.memory_space<vmem>>, %arg18: memref<1x32xf32, #tpu.memory_space<vmem>>, %arg19: memref<1x32xf32, #tpu.memory_space<vmem>>, %arg20: memref<1x32xf32, #tpu.memory_space<vmem>>, %arg21: memref<32x96xbf16, #tpu.memory_space<vmem>>, %arg22: memref<1x96xf32, #tpu.memory_space<vmem>>, %arg23: memref<2x16x16xf32, #tpu.memory_space<vmem>>, %arg24: memref<32x32xbf16, #tpu.memory_space<vmem>>, %arg25: memref<1x32xf32, #tpu.memory_space<vmem>>, %arg26: memref<1x32xf32, #tpu.memory_space<vmem>>, %arg27: memref<1x32xf32, #tpu.memory_space<vmem>>, %arg28: memref<32x128xbf16, #tpu.memory_space<vmem>>, %arg29: memref<1x128xf32, #tpu.memory_space<vmem>>, %arg30: memref<128x32xbf16, #tpu.memory_space<vmem>>, %arg31: memref<1x32xf32, #tpu.memory_space<vmem>>, %arg32: memref<16x16xf32, #tpu.memory_space<vmem>>, %arg33: memref<1x128xf32, #tpu.memory_space<vmem>>, %arg34: memref<1x128xf32, #tpu.memory_space<vmem>>, %arg35: memref<128x64xbf16, #tpu.memory_space<vmem>>, %arg36: memref<1x16x32xf32, #tpu.memory_space<vmem>>, %arg37: memref<1x16x32xf32, #tpu.memory_space<vmem>>, %arg38: memref<1x4x64xf32, #tpu.memory_space<vmem>>) attributes {dimension_semantics = [#tpu.dimension_semantics<parallel>], iteration_bounds = array<i64: 2>, scalar_prefetch = 0 : i64, scratch_operands = 0 : i64, tpu.core_type = #tpu.core_type<tc>, window_params = [{transform_indices = @transform_0, window_bounds = array<i64: 1, 16, 32>}, {transform_indices = @transform_1, window_bounds = array<i64: 1, 16, 32>}, {transform_indices = @transform_2, window_bounds = array<i64: 1, 16, 32>}, {pipeline_mode = #tpu.pipeline_mode<synchronous>, transform_indices = @transform_3, window_bounds = array<i64: 1, 32>}, {pipeline_mode = #tpu.pipeline_mode<synchronous>, transform_indices = @transform_4, window_bounds = array<i64: 1, 32>}, {pipeline_mode = #tpu.pipeline_mode<synchronous>, transform_indices = @transform_5, window_bounds = array<i64: 64, 32>}, {pipeline_mode = #tpu.pipeline_mode<synchronous>, transform_indices = @transform_6, window_bounds = array<i64: 1, 32>}, {pipeline_mode = #tpu.pipeline_mode<synchronous>, transform_indices = @transform_7, window_bounds = array<i64: 32, 96>}, {pipeline_mode = #tpu.pipeline_mode<synchronous>, transform_indices = @transform_8, window_bounds = array<i64: 1, 96>}, {pipeline_mode = #tpu.pipeline_mode<synchronous>, transform_indices = @transform_9, window_bounds = array<i64: 2, 16, 16>}, {pipeline_mode = #tpu.pipeline_mode<synchronous>, transform_indices = @transform_10, window_bounds = array<i64: 32, 32>}, {pipeline_mode = #tpu.pipeline_mode<synchronous>, transform_indices = @transform_11, window_bounds = array<i64: 1, 32>}, {pipeline_mode = #tpu.pipeline_mode<synchronous>, transform_indices = @transform_12, window_bounds = array<i64: 1, 32>}, {pipeline_mode = #tpu.pipeline_mode<synchronous>, transform_indices = @transform_13, window_bounds = array<i64: 1, 32>}, {pipeline_mode = #tpu.pipeline_mode<synchronous>, transform_indices = @transform_14, window_bounds = array<i64: 32, 128>}, {pipeline_mode = #tpu.pipeline_mode<synchronous>, transform_indices = @transform_15, window_bounds = array<i64: 1, 128>}, {pipeline_mode = #tpu.pipeline_mode<synchronous>, transform_indices = @transform_16, window_bounds = array<i64: 128, 32>}, {pipeline_mode = #tpu.pipeline_mode<synchronous>, transform_indices = @transform_17, window_bounds = array<i64: 1, 32>}, {pipeline_mode = #tpu.pipeline_mode<synchronous>, transform_indices = @transform_18, window_bounds = array<i64: 1, 32>}, {pipeline_mode = #tpu.pipeline_mode<synchronous>, transform_indices = @transform_19, window_bounds = array<i64: 1, 32>}, {pipeline_mode = #tpu.pipeline_mode<synchronous>, transform_indices = @transform_20, window_bounds = array<i64: 32, 96>}, {pipeline_mode = #tpu.pipeline_mode<synchronous>, transform_indices = @transform_21, window_bounds = array<i64: 1, 96>}, {pipeline_mode = #tpu.pipeline_mode<synchronous>, transform_indices = @transform_22, window_bounds = array<i64: 2, 16, 16>}, {pipeline_mode = #tpu.pipeline_mode<synchronous>, transform_indices = @transform_23, window_bounds = array<i64: 32, 32>}, {pipeline_mode = #tpu.pipeline_mode<synchronous>, transform_indices = @transform_24, window_bounds = array<i64: 1, 32>}, {pipeline_mode = #tpu.pipeline_mode<synchronous>, transform_indices = @transform_25, window_bounds = array<i64: 1, 32>}, {pipeline_mode = #tpu.pipeline_mode<synchronous>, transform_indices = @transform_26, window_bounds = array<i64: 1, 32>}, {pipeline_mode = #tpu.pipeline_mode<synchronous>, transform_indices = @transform_27, window_bounds = array<i64: 32, 128>}, {pipeline_mode = #tpu.pipeline_mode<synchronous>, transform_indices = @transform_28, window_bounds = array<i64: 1, 128>}, {pipeline_mode = #tpu.pipeline_mode<synchronous>, transform_indices = @transform_29, window_bounds = array<i64: 128, 32>}, {pipeline_mode = #tpu.pipeline_mode<synchronous>, transform_indices = @transform_30, window_bounds = array<i64: 1, 32>}, {pipeline_mode = #tpu.pipeline_mode<synchronous>, transform_indices = @transform_31, window_bounds = array<i64: 16, 16>}, {pipeline_mode = #tpu.pipeline_mode<synchronous>, transform_indices = @transform_32, window_bounds = array<i64: 1, 128>}, {pipeline_mode = #tpu.pipeline_mode<synchronous>, transform_indices = @transform_33, window_bounds = array<i64: 1, 128>}, {pipeline_mode = #tpu.pipeline_mode<synchronous>, transform_indices = @transform_34, window_bounds = array<i64: 128, 64>}, {transform_indices = @transform_35, window_bounds = array<i64: 1, 16, 32>}, {transform_indices = @transform_36, window_bounds = array<i64: 1, 16, 32>}, {transform_indices = @transform_37, window_bounds = array<i64: 1, 4, 64>}]} {
    %c0 = arith.constant 0 : index
    %c0_0 = arith.constant 0 : index
    %c0_1 = arith.constant 0 : index
    %0 = vector.load %arg1[%c0, %c0_0, %c0_1] : memref<1x16x32xf32, #tpu.memory_space<vmem>>, vector<1x16x32xf32>
    %1 = vector.shape_cast %0 : vector<1x16x32xf32> to vector<16x32xf32>
    %c0_2 = arith.constant 0 : index
    %c0_3 = arith.constant 0 : index
    %c0_4 = arith.constant 0 : index
    %2 = vector.load %arg2[%c0_2, %c0_3, %c0_4] : memref<1x16x32xf32, #tpu.memory_space<vmem>>, vector<1x16x32xf32>
    %3 = vector.shape_cast %2 : vector<1x16x32xf32> to vector<16x32xf32>
    %c0_5 = arith.constant 0 : index
    %c0_6 = arith.constant 0 : index
    %4 = vector.load %arg4[%c0_5, %c0_6] : memref<1x32xf32, #tpu.memory_space<vmem>>, vector<1x32xf32>
    %c0_7 = arith.constant 0 : index
    %c0_8 = arith.constant 0 : index
    %5 = vector.load %arg5[%c0_7, %c0_8] : memref<1x32xf32, #tpu.memory_space<vmem>>, vector<1x32xf32>
    %cst = arith.constant dense<0.000000e+00> : vector<16xf32>
    %6 = vector.multi_reduction <add>, %1, %cst [1] : vector<16x32xf32> to vector<16xf32>
    %7 = vector.shape_cast %6 : vector<16xf32> to vector<16x1xf32>
    %cst_9 = arith.constant 3.200000e+01 : f32
    %8 = vector.broadcast %cst_9 : f32 to vector<16x1xf32>
    %9 = arith.divf %7, %8 : vector<16x1xf32>
    %10 = vector.broadcast %9 : vector<16x1xf32> to vector<16x32xf32>
    %11 = arith.subf %1, %10 : vector<16x32xf32>
    %12 = arith.mulf %11, %11 : vector<16x32xf32>
    %cst_10 = arith.constant dense<0.000000e+00> : vector<16xf32>
    %13 = vector.multi_reduction <add>, %12, %cst_10 [1] : vector<16x32xf32> to vector<16xf32>
    %14 = vector.shape_cast %13 : vector<16xf32> to vector<16x1xf32>
    %cst_11 = arith.constant 3.200000e+01 : f32
    %15 = vector.broadcast %cst_11 : f32 to vector<16x1xf32>
    %16 = arith.divf %14, %15 : vector<16x1xf32>
    %cst_12 = arith.constant 9.99999974E-6 : f32
    %17 = vector.broadcast %cst_12 : f32 to vector<16x1xf32>
    %18 = arith.addf %16, %17 : vector<16x1xf32>
    %19 = math.rsqrt %18 : vector<16x1xf32>
    %20 = vector.broadcast %19 : vector<16x1xf32> to vector<16x32xf32>
    %21 = arith.mulf %11, %20 : vector<16x32xf32>
    %22 = vector.broadcast %4 : vector<1x32xf32> to vector<16x32xf32>
    %23 = arith.mulf %21, %22 : vector<16x32xf32>
    %24 = vector.broadcast %5 : vector<1x32xf32> to vector<16x32xf32>
    %25 = arith.addf %23, %24 : vector<16x32xf32>
    %c0_13 = arith.constant 0 : index
    %c0_14 = arith.constant 0 : index
    %26 = vector.load %arg4[%c0_13, %c0_14] : memref<1x32xf32, #tpu.memory_space<vmem>>, vector<1x32xf32>
    %c0_15 = arith.constant 0 : index
    %c0_16 = arith.constant 0 : index
    %27 = vector.load %arg5[%c0_15, %c0_16] : memref<1x32xf32, #tpu.memory_space<vmem>>, vector<1x32xf32>
    %cst_17 = arith.constant dense<0.000000e+00> : vector<16xf32>
    %28 = vector.multi_reduction <add>, %3, %cst_17 [1] : vector<16x32xf32> to vector<16xf32>
    %29 = vector.shape_cast %28 : vector<16xf32> to vector<16x1xf32>
    %cst_18 = arith.constant 3.200000e+01 : f32
    %30 = vector.broadcast %cst_18 : f32 to vector<16x1xf32>
    %31 = arith.divf %29, %30 : vector<16x1xf32>
    %32 = vector.broadcast %31 : vector<16x1xf32> to vector<16x32xf32>
    %33 = arith.subf %3, %32 : vector<16x32xf32>
    %34 = arith.mulf %33, %33 : vector<16x32xf32>
    %cst_19 = arith.constant dense<0.000000e+00> : vector<16xf32>
    %35 = vector.multi_reduction <add>, %34, %cst_19 [1] : vector<16x32xf32> to vector<16xf32>
    %36 = vector.shape_cast %35 : vector<16xf32> to vector<16x1xf32>
    %cst_20 = arith.constant 3.200000e+01 : f32
    %37 = vector.broadcast %cst_20 : f32 to vector<16x1xf32>
    %38 = arith.divf %36, %37 : vector<16x1xf32>
    %cst_21 = arith.constant 9.99999974E-6 : f32
    %39 = vector.broadcast %cst_21 : f32 to vector<16x1xf32>
    %40 = arith.addf %38, %39 : vector<16x1xf32>
    %41 = math.rsqrt %40 : vector<16x1xf32>
    %42 = vector.broadcast %41 : vector<16x1xf32> to vector<16x32xf32>
    %43 = arith.mulf %33, %42 : vector<16x32xf32>
    %44 = vector.broadcast %26 : vector<1x32xf32> to vector<16x32xf32>
    %45 = arith.mulf %43, %44 : vector<16x32xf32>
    %46 = vector.broadcast %27 : vector<1x32xf32> to vector<16x32xf32>
    %47 = arith.addf %45, %46 : vector<16x32xf32>
    %48 = tpu.concatenate %25, %47 in 1 : vector<16x32xf32>, vector<16x32xf32> -> vector<16x64xf32>
    %49 = arith.truncf %48 : vector<16x64xf32> to vector<16x64xbf16>
    %c0_22 = arith.constant 0 : index
    %c0_23 = arith.constant 0 : index
    %50 = vector.load %arg6[%c0_22, %c0_23] : memref<64x32xbf16, #tpu.memory_space<vmem>>, vector<64x32xbf16>
    %cst_24 = arith.constant dense<0.000000e+00> : vector<16x32xf32>
    %51 = tpu.matmul %49, %50, %cst_24 {dimension_numbers = #tpu.dot_dimension_numbers<[1], [0], [0], [1], [0, 0, 1, 1], [], []>} : vector<16x64xbf16>, vector<64x32xbf16>, vector<16x32xf32> -> vector<16x32xf32>
    %c0_25 = arith.constant 0 : index
    %c0_26 = arith.constant 0 : index
    %52 = vector.load %arg7[%c0_25, %c0_26] : memref<1x32xf32, #tpu.memory_space<vmem>>, vector<1x32xf32>
    %53 = vector.broadcast %52 : vector<1x32xf32> to vector<16x32xf32>
    %54 = arith.addf %51, %53 : vector<16x32xf32>
    %55 = arith.truncf %54 : vector<16x32xf32> to vector<16x32xbf16>
    %c0_27 = arith.constant 0 : index
    %c0_28 = arith.constant 0 : index
    %56 = vector.load %arg8[%c0_27, %c0_28] : memref<32x96xbf16, #tpu.memory_space<vmem>>, vector<32x96xbf16>
    %cst_29 = arith.constant dense<0.000000e+00> : vector<16x96xf32>
    %57 = tpu.matmul %55, %56, %cst_29 {dimension_numbers = #tpu.dot_dimension_numbers<[1], [0], [0], [1], [0, 0, 1, 1], [], []>} : vector<16x32xbf16>, vector<32x96xbf16>, vector<16x96xf32> -> vector<16x96xf32>
    %c0_30 = arith.constant 0 : index
    %c0_31 = arith.constant 0 : index
    %58 = vector.load %arg9[%c0_30, %c0_31] : memref<1x96xf32, #tpu.memory_space<vmem>>, vector<1x96xf32>
    %59 = vector.broadcast %58 : vector<1x96xf32> to vector<16x96xf32>
    %60 = arith.addf %57, %59 : vector<16x96xf32>
    %61 = vector.extract_strided_slice %60 {offsets = [0, 0], sizes = [16, 16], strides = [1, 1]} : vector<16x96xf32> to vector<16x16xf32>
    %62 = vector.extract_strided_slice %60 {offsets = [0, 32], sizes = [16, 16], strides = [1, 1]} : vector<16x96xf32> to vector<16x16xf32>
    %63 = vector.extract_strided_slice %60 {offsets = [0, 64], sizes = [16, 16], strides = [1, 1]} : vector<16x96xf32> to vector<16x16xf32>
    %64 = arith.truncf %61 : vector<16x16xf32> to vector<16x16xbf16>
    %65 = arith.truncf %62 : vector<16x16xf32> to vector<16x16xbf16>
    %cst_32 = arith.constant dense<0.000000e+00> : vector<16x16xf32>
    %66 = tpu.matmul %64, %65, %cst_32 {dimension_numbers = #tpu.dot_dimension_numbers<[1], [1], [0], [0], [0, 0, 1, 0], [], []>} : vector<16x16xbf16>, vector<16x16xbf16>, vector<16x16xf32> -> vector<16x16xf32>
    %c0_33 = arith.constant 0 : index
    %c0_34 = arith.constant 0 : index
    %c0_35 = arith.constant 0 : index
    %67 = vector.load %arg10[%c0_33, %c0_34, %c0_35] : memref<2x16x16xf32, #tpu.memory_space<vmem>>, vector<1x16x16xf32>
    %68 = vector.shape_cast %67 : vector<1x16x16xf32> to vector<16x16xf32>
    %69 = arith.addf %66, %68 : vector<16x16xf32>
    %cst_36 = arith.constant dense<0xFF800000> : vector<16xf32>
    %70 = vector.multi_reduction <maximumf>, %69, %cst_36 [1] : vector<16x16xf32> to vector<16xf32>
    %71 = vector.shape_cast %70 : vector<16xf32> to vector<16x1xf32>
    %72 = vector.broadcast %71 : vector<16x1xf32> to vector<16x16xf32>
    %73 = arith.subf %69, %72 : vector<16x16xf32>
    %74 = math.exp %73 : vector<16x16xf32>
    %cst_37 = arith.constant dense<0.000000e+00> : vector<16xf32>
    %75 = vector.multi_reduction <add>, %74, %cst_37 [1] : vector<16x16xf32> to vector<16xf32>
    %76 = vector.shape_cast %75 : vector<16xf32> to vector<16x1xf32>
    %cst_38 = arith.constant 1.000000e+00 : f32
    %77 = vector.broadcast %cst_38 : f32 to vector<16x1xf32>
    %78 = arith.divf %77, %76 : vector<16x1xf32>
    %79 = vector.broadcast %78 : vector<16x1xf32> to vector<16x16xf32>
    %80 = arith.mulf %74, %79 : vector<16x16xf32>
    %81 = arith.truncf %80 : vector<16x16xf32> to vector<16x16xbf16>
    %82 = arith.truncf %63 : vector<16x16xf32> to vector<16x16xbf16>
    %cst_39 = arith.constant dense<0.000000e+00> : vector<16x16xf32>
    %83 = tpu.matmul %81, %82, %cst_39 {dimension_numbers = #tpu.dot_dimension_numbers<[1], [0], [0], [1], [0, 0, 1, 1], [], []>} : vector<16x16xbf16>, vector<16x16xbf16>, vector<16x16xf32> -> vector<16x16xf32>
    %84 = vector.extract_strided_slice %60 {offsets = [0, 16], sizes = [16, 16], strides = [1, 1]} : vector<16x96xf32> to vector<16x16xf32>
    %85 = vector.extract_strided_slice %60 {offsets = [0, 48], sizes = [16, 16], strides = [1, 1]} : vector<16x96xf32> to vector<16x16xf32>
    %86 = vector.extract_strided_slice %60 {offsets = [0, 80], sizes = [16, 16], strides = [1, 1]} : vector<16x96xf32> to vector<16x16xf32>
    %87 = arith.truncf %84 : vector<16x16xf32> to vector<16x16xbf16>
    %88 = arith.truncf %85 : vector<16x16xf32> to vector<16x16xbf16>
    %cst_40 = arith.constant dense<0.000000e+00> : vector<16x16xf32>
    %89 = tpu.matmul %87, %88, %cst_40 {dimension_numbers = #tpu.dot_dimension_numbers<[1], [1], [0], [0], [0, 0, 1, 0], [], []>} : vector<16x16xbf16>, vector<16x16xbf16>, vector<16x16xf32> -> vector<16x16xf32>
    %c1 = arith.constant 1 : index
    %c0_41 = arith.constant 0 : index
    %c0_42 = arith.constant 0 : index
    %90 = vector.load %arg10[%c1, %c0_41, %c0_42] : memref<2x16x16xf32, #tpu.memory_space<vmem>>, vector<1x16x16xf32>
    %91 = vector.shape_cast %90 : vector<1x16x16xf32> to vector<16x16xf32>
    %92 = arith.addf %89, %91 : vector<16x16xf32>
    %cst_43 = arith.constant dense<0xFF800000> : vector<16xf32>
    %93 = vector.multi_reduction <maximumf>, %92, %cst_43 [1] : vector<16x16xf32> to vector<16xf32>
    %94 = vector.shape_cast %93 : vector<16xf32> to vector<16x1xf32>
    %95 = vector.broadcast %94 : vector<16x1xf32> to vector<16x16xf32>
    %96 = arith.subf %92, %95 : vector<16x16xf32>
    %97 = math.exp %96 : vector<16x16xf32>
    %cst_44 = arith.constant dense<0.000000e+00> : vector<16xf32>
    %98 = vector.multi_reduction <add>, %97, %cst_44 [1] : vector<16x16xf32> to vector<16xf32>
    %99 = vector.shape_cast %98 : vector<16xf32> to vector<16x1xf32>
    %cst_45 = arith.constant 1.000000e+00 : f32
    %100 = vector.broadcast %cst_45 : f32 to vector<16x1xf32>
    %101 = arith.divf %100, %99 : vector<16x1xf32>
    %102 = vector.broadcast %101 : vector<16x1xf32> to vector<16x16xf32>
    %103 = arith.mulf %97, %102 : vector<16x16xf32>
    %104 = arith.truncf %103 : vector<16x16xf32> to vector<16x16xbf16>
    %105 = arith.truncf %86 : vector<16x16xf32> to vector<16x16xbf16>
    %cst_46 = arith.constant dense<0.000000e+00> : vector<16x16xf32>
    %106 = tpu.matmul %104, %105, %cst_46 {dimension_numbers = #tpu.dot_dimension_numbers<[1], [0], [0], [1], [0, 0, 1, 1], [], []>} : vector<16x16xbf16>, vector<16x16xbf16>, vector<16x16xf32> -> vector<16x16xf32>
    %107 = tpu.concatenate %83, %106 in 1 : vector<16x16xf32>, vector<16x16xf32> -> vector<16x32xf32>
    %108 = arith.truncf %107 : vector<16x32xf32> to vector<16x32xbf16>
    %c0_47 = arith.constant 0 : index
    %c0_48 = arith.constant 0 : index
    %109 = vector.load %arg11[%c0_47, %c0_48] : memref<32x32xbf16, #tpu.memory_space<vmem>>, vector<32x32xbf16>
    %cst_49 = arith.constant dense<0.000000e+00> : vector<16x32xf32>
    %110 = tpu.matmul %108, %109, %cst_49 {dimension_numbers = #tpu.dot_dimension_numbers<[1], [0], [0], [1], [0, 0, 1, 1], [], []>} : vector<16x32xbf16>, vector<32x32xbf16>, vector<16x32xf32> -> vector<16x32xf32>
    %c0_50 = arith.constant 0 : index
    %c0_51 = arith.constant 0 : index
    %111 = vector.load %arg12[%c0_50, %c0_51] : memref<1x32xf32, #tpu.memory_space<vmem>>, vector<1x32xf32>
    %112 = vector.broadcast %111 : vector<1x32xf32> to vector<16x32xf32>
    %113 = arith.addf %110, %112 : vector<16x32xf32>
    %114 = arith.addf %1, %113 : vector<16x32xf32>
    %c0_52 = arith.constant 0 : index
    %c0_53 = arith.constant 0 : index
    %115 = vector.load %arg13[%c0_52, %c0_53] : memref<1x32xf32, #tpu.memory_space<vmem>>, vector<1x32xf32>
    %c0_54 = arith.constant 0 : index
    %c0_55 = arith.constant 0 : index
    %116 = vector.load %arg14[%c0_54, %c0_55] : memref<1x32xf32, #tpu.memory_space<vmem>>, vector<1x32xf32>
    %cst_56 = arith.constant dense<0.000000e+00> : vector<16xf32>
    %117 = vector.multi_reduction <add>, %114, %cst_56 [1] : vector<16x32xf32> to vector<16xf32>
    %118 = vector.shape_cast %117 : vector<16xf32> to vector<16x1xf32>
    %cst_57 = arith.constant 3.200000e+01 : f32
    %119 = vector.broadcast %cst_57 : f32 to vector<16x1xf32>
    %120 = arith.divf %118, %119 : vector<16x1xf32>
    %121 = vector.broadcast %120 : vector<16x1xf32> to vector<16x32xf32>
    %122 = arith.subf %114, %121 : vector<16x32xf32>
    %123 = arith.mulf %122, %122 : vector<16x32xf32>
    %cst_58 = arith.constant dense<0.000000e+00> : vector<16xf32>
    %124 = vector.multi_reduction <add>, %123, %cst_58 [1] : vector<16x32xf32> to vector<16xf32>
    %125 = vector.shape_cast %124 : vector<16xf32> to vector<16x1xf32>
    %cst_59 = arith.constant 3.200000e+01 : f32
    %126 = vector.broadcast %cst_59 : f32 to vector<16x1xf32>
    %127 = arith.divf %125, %126 : vector<16x1xf32>
    %cst_60 = arith.constant 9.99999974E-6 : f32
    %128 = vector.broadcast %cst_60 : f32 to vector<16x1xf32>
    %129 = arith.addf %127, %128 : vector<16x1xf32>
    %130 = math.rsqrt %129 : vector<16x1xf32>
    %131 = vector.broadcast %130 : vector<16x1xf32> to vector<16x32xf32>
    %132 = arith.mulf %122, %131 : vector<16x32xf32>
    %133 = vector.broadcast %115 : vector<1x32xf32> to vector<16x32xf32>
    %134 = arith.mulf %132, %133 : vector<16x32xf32>
    %135 = vector.broadcast %116 : vector<1x32xf32> to vector<16x32xf32>
    %136 = arith.addf %134, %135 : vector<16x32xf32>
    %137 = arith.truncf %136 : vector<16x32xf32> to vector<16x32xbf16>
    %c0_61 = arith.constant 0 : index
    %c0_62 = arith.constant 0 : index
    %138 = vector.load %arg15[%c0_61, %c0_62] : memref<32x128xbf16, #tpu.memory_space<vmem>>, vector<32x128xbf16>
    %cst_63 = arith.constant dense<0.000000e+00> : vector<16x128xf32>
    %139 = tpu.matmul %137, %138, %cst_63 {dimension_numbers = #tpu.dot_dimension_numbers<[1], [0], [0], [1], [0, 0, 1, 1], [], []>} : vector<16x32xbf16>, vector<32x128xbf16>, vector<16x128xf32> -> vector<16x128xf32>
    %c0_64 = arith.constant 0 : index
    %c0_65 = arith.constant 0 : index
    %140 = vector.load %arg16[%c0_64, %c0_65] : memref<1x128xf32, #tpu.memory_space<vmem>>, vector<1x128xf32>
    %141 = vector.broadcast %140 : vector<1x128xf32> to vector<16x128xf32>
    %142 = arith.addf %139, %141 : vector<16x128xf32>
    %cst_66 = arith.constant 5.000000e-01 : f32
    %143 = vector.broadcast %cst_66 : f32 to vector<16x128xf32>
    %144 = arith.mulf %143, %142 : vector<16x128xf32>
    %cst_67 = arith.constant 0.707106769 : f32
    %145 = vector.broadcast %cst_67 : f32 to vector<16x128xf32>
    %146 = arith.mulf %142, %145 : vector<16x128xf32>
    %147 = math.absf %146 : vector<16x128xf32>
    %cst_68 = arith.constant 0.327591091 : f32
    %148 = vector.broadcast %cst_68 : f32 to vector<16x128xf32>
    %149 = arith.mulf %148, %147 : vector<16x128xf32>
    %cst_69 = arith.constant 1.000000e+00 : f32
    %150 = vector.broadcast %cst_69 : f32 to vector<16x128xf32>
    %151 = arith.addf %150, %149 : vector<16x128xf32>
    %cst_70 = arith.constant 1.000000e+00 : f32
    %152 = vector.broadcast %cst_70 : f32 to vector<16x128xf32>
    %153 = arith.divf %152, %151 : vector<16x128xf32>
    %cst_71 = arith.constant 1.06140542 : f32
    %154 = vector.broadcast %cst_71 : f32 to vector<16x128xf32>
    %155 = arith.mulf %154, %153 : vector<16x128xf32>
    %cst_72 = arith.constant -1.45315206 : f32
    %156 = vector.broadcast %cst_72 : f32 to vector<16x128xf32>
    %157 = arith.addf %155, %156 : vector<16x128xf32>
    %158 = arith.mulf %157, %153 : vector<16x128xf32>
    %cst_73 = arith.constant 1.42141378 : f32
    %159 = vector.broadcast %cst_73 : f32 to vector<16x128xf32>
    %160 = arith.addf %158, %159 : vector<16x128xf32>
    %161 = arith.mulf %160, %153 : vector<16x128xf32>
    %cst_74 = arith.constant -0.284496725 : f32
    %162 = vector.broadcast %cst_74 : f32 to vector<16x128xf32>
    %163 = arith.addf %161, %162 : vector<16x128xf32>
    %164 = arith.mulf %163, %153 : vector<16x128xf32>
    %cst_75 = arith.constant 0.254829586 : f32
    %165 = vector.broadcast %cst_75 : f32 to vector<16x128xf32>
    %166 = arith.addf %164, %165 : vector<16x128xf32>
    %167 = arith.mulf %166, %153 : vector<16x128xf32>
    %cst_76 = arith.constant 0.000000e+00 : f32
    %168 = vector.broadcast %cst_76 : f32 to vector<16x128xf32>
    %169 = arith.subf %168, %147 : vector<16x128xf32>
    %170 = arith.mulf %169, %147 : vector<16x128xf32>
    %171 = math.exp %170 : vector<16x128xf32>
    %172 = arith.mulf %167, %171 : vector<16x128xf32>
    %cst_77 = arith.constant 1.000000e+00 : f32
    %173 = vector.broadcast %cst_77 : f32 to vector<16x128xf32>
    %174 = arith.subf %173, %172 : vector<16x128xf32>
    %cst_78 = arith.constant 0.000000e+00 : f32
    %175 = vector.broadcast %cst_78 : f32 to vector<16x128xf32>
    %176 = arith.cmpf olt, %146, %175 : vector<16x128xf32>
    %cst_79 = arith.constant 0.000000e+00 : f32
    %177 = vector.broadcast %cst_79 : f32 to vector<16x128xf32>
    %178 = arith.subf %177, %174 : vector<16x128xf32>
    %179 = arith.select %176, %178, %174 : vector<16x128xi1>, vector<16x128xf32>
    %cst_80 = arith.constant 1.000000e+00 : f32
    %180 = vector.broadcast %cst_80 : f32 to vector<16x128xf32>
    %181 = arith.addf %180, %179 : vector<16x128xf32>
    %182 = arith.mulf %144, %181 : vector<16x128xf32>
    %183 = arith.truncf %182 : vector<16x128xf32> to vector<16x128xbf16>
    %c0_81 = arith.constant 0 : index
    %c0_82 = arith.constant 0 : index
    %184 = vector.load %arg17[%c0_81, %c0_82] : memref<128x32xbf16, #tpu.memory_space<vmem>>, vector<128x32xbf16>
    %cst_83 = arith.constant dense<0.000000e+00> : vector<16x32xf32>
    %185 = tpu.matmul %183, %184, %cst_83 {dimension_numbers = #tpu.dot_dimension_numbers<[1], [0], [0], [1], [0, 0, 1, 1], [], []>} : vector<16x128xbf16>, vector<128x32xbf16>, vector<16x32xf32> -> vector<16x32xf32>
    %c0_84 = arith.constant 0 : index
    %c0_85 = arith.constant 0 : index
    %186 = vector.load %arg18[%c0_84, %c0_85] : memref<1x32xf32, #tpu.memory_space<vmem>>, vector<1x32xf32>
    %187 = vector.broadcast %186 : vector<1x32xf32> to vector<16x32xf32>
    %188 = arith.addf %185, %187 : vector<16x32xf32>
    %189 = arith.addf %114, %188 : vector<16x32xf32>
    %c0_86 = arith.constant 0 : index
    %c0_87 = arith.constant 0 : index
    %190 = vector.load %arg19[%c0_86, %c0_87] : memref<1x32xf32, #tpu.memory_space<vmem>>, vector<1x32xf32>
    %c0_88 = arith.constant 0 : index
    %c0_89 = arith.constant 0 : index
    %191 = vector.load %arg20[%c0_88, %c0_89] : memref<1x32xf32, #tpu.memory_space<vmem>>, vector<1x32xf32>
    %cst_90 = arith.constant dense<0.000000e+00> : vector<16xf32>
    %192 = vector.multi_reduction <add>, %189, %cst_90 [1] : vector<16x32xf32> to vector<16xf32>
    %193 = vector.shape_cast %192 : vector<16xf32> to vector<16x1xf32>
    %cst_91 = arith.constant 3.200000e+01 : f32
    %194 = vector.broadcast %cst_91 : f32 to vector<16x1xf32>
    %195 = arith.divf %193, %194 : vector<16x1xf32>
    %196 = vector.broadcast %195 : vector<16x1xf32> to vector<16x32xf32>
    %197 = arith.subf %189, %196 : vector<16x32xf32>
    %198 = arith.mulf %197, %197 : vector<16x32xf32>
    %cst_92 = arith.constant dense<0.000000e+00> : vector<16xf32>
    %199 = vector.multi_reduction <add>, %198, %cst_92 [1] : vector<16x32xf32> to vector<16xf32>
    %200 = vector.shape_cast %199 : vector<16xf32> to vector<16x1xf32>
    %cst_93 = arith.constant 3.200000e+01 : f32
    %201 = vector.broadcast %cst_93 : f32 to vector<16x1xf32>
    %202 = arith.divf %200, %201 : vector<16x1xf32>
    %cst_94 = arith.constant 9.99999974E-6 : f32
    %203 = vector.broadcast %cst_94 : f32 to vector<16x1xf32>
    %204 = arith.addf %202, %203 : vector<16x1xf32>
    %205 = math.rsqrt %204 : vector<16x1xf32>
    %206 = vector.broadcast %205 : vector<16x1xf32> to vector<16x32xf32>
    %207 = arith.mulf %197, %206 : vector<16x32xf32>
    %208 = vector.broadcast %190 : vector<1x32xf32> to vector<16x32xf32>
    %209 = arith.mulf %207, %208 : vector<16x32xf32>
    %210 = vector.broadcast %191 : vector<1x32xf32> to vector<16x32xf32>
    %211 = arith.addf %209, %210 : vector<16x32xf32>
    %212 = arith.truncf %211 : vector<16x32xf32> to vector<16x32xbf16>
    %c0_95 = arith.constant 0 : index
    %c0_96 = arith.constant 0 : index
    %213 = vector.load %arg21[%c0_95, %c0_96] : memref<32x96xbf16, #tpu.memory_space<vmem>>, vector<32x96xbf16>
    %cst_97 = arith.constant dense<0.000000e+00> : vector<16x96xf32>
    %214 = tpu.matmul %212, %213, %cst_97 {dimension_numbers = #tpu.dot_dimension_numbers<[1], [0], [0], [1], [0, 0, 1, 1], [], []>} : vector<16x32xbf16>, vector<32x96xbf16>, vector<16x96xf32> -> vector<16x96xf32>
    %c0_98 = arith.constant 0 : index
    %c0_99 = arith.constant 0 : index
    %215 = vector.load %arg22[%c0_98, %c0_99] : memref<1x96xf32, #tpu.memory_space<vmem>>, vector<1x96xf32>
    %216 = vector.broadcast %215 : vector<1x96xf32> to vector<16x96xf32>
    %217 = arith.addf %214, %216 : vector<16x96xf32>
    %218 = vector.extract_strided_slice %217 {offsets = [0, 0], sizes = [16, 16], strides = [1, 1]} : vector<16x96xf32> to vector<16x16xf32>
    %219 = vector.extract_strided_slice %217 {offsets = [0, 32], sizes = [16, 16], strides = [1, 1]} : vector<16x96xf32> to vector<16x16xf32>
    %220 = vector.extract_strided_slice %217 {offsets = [0, 64], sizes = [16, 16], strides = [1, 1]} : vector<16x96xf32> to vector<16x16xf32>
    %221 = arith.truncf %218 : vector<16x16xf32> to vector<16x16xbf16>
    %222 = arith.truncf %219 : vector<16x16xf32> to vector<16x16xbf16>
    %cst_100 = arith.constant dense<0.000000e+00> : vector<16x16xf32>
    %223 = tpu.matmul %221, %222, %cst_100 {dimension_numbers = #tpu.dot_dimension_numbers<[1], [1], [0], [0], [0, 0, 1, 0], [], []>} : vector<16x16xbf16>, vector<16x16xbf16>, vector<16x16xf32> -> vector<16x16xf32>
    %c0_101 = arith.constant 0 : index
    %c0_102 = arith.constant 0 : index
    %c0_103 = arith.constant 0 : index
    %224 = vector.load %arg23[%c0_101, %c0_102, %c0_103] : memref<2x16x16xf32, #tpu.memory_space<vmem>>, vector<1x16x16xf32>
    %225 = vector.shape_cast %224 : vector<1x16x16xf32> to vector<16x16xf32>
    %226 = arith.addf %223, %225 : vector<16x16xf32>
    %cst_104 = arith.constant dense<0xFF800000> : vector<16xf32>
    %227 = vector.multi_reduction <maximumf>, %226, %cst_104 [1] : vector<16x16xf32> to vector<16xf32>
    %228 = vector.shape_cast %227 : vector<16xf32> to vector<16x1xf32>
    %229 = vector.broadcast %228 : vector<16x1xf32> to vector<16x16xf32>
    %230 = arith.subf %226, %229 : vector<16x16xf32>
    %231 = math.exp %230 : vector<16x16xf32>
    %cst_105 = arith.constant dense<0.000000e+00> : vector<16xf32>
    %232 = vector.multi_reduction <add>, %231, %cst_105 [1] : vector<16x16xf32> to vector<16xf32>
    %233 = vector.shape_cast %232 : vector<16xf32> to vector<16x1xf32>
    %cst_106 = arith.constant 1.000000e+00 : f32
    %234 = vector.broadcast %cst_106 : f32 to vector<16x1xf32>
    %235 = arith.divf %234, %233 : vector<16x1xf32>
    %236 = vector.broadcast %235 : vector<16x1xf32> to vector<16x16xf32>
    %237 = arith.mulf %231, %236 : vector<16x16xf32>
    %238 = arith.truncf %237 : vector<16x16xf32> to vector<16x16xbf16>
    %239 = arith.truncf %220 : vector<16x16xf32> to vector<16x16xbf16>
    %cst_107 = arith.constant dense<0.000000e+00> : vector<16x16xf32>
    %240 = tpu.matmul %238, %239, %cst_107 {dimension_numbers = #tpu.dot_dimension_numbers<[1], [0], [0], [1], [0, 0, 1, 1], [], []>} : vector<16x16xbf16>, vector<16x16xbf16>, vector<16x16xf32> -> vector<16x16xf32>
    %241 = vector.extract_strided_slice %217 {offsets = [0, 16], sizes = [16, 16], strides = [1, 1]} : vector<16x96xf32> to vector<16x16xf32>
    %242 = vector.extract_strided_slice %217 {offsets = [0, 48], sizes = [16, 16], strides = [1, 1]} : vector<16x96xf32> to vector<16x16xf32>
    %243 = vector.extract_strided_slice %217 {offsets = [0, 80], sizes = [16, 16], strides = [1, 1]} : vector<16x96xf32> to vector<16x16xf32>
    %244 = arith.truncf %241 : vector<16x16xf32> to vector<16x16xbf16>
    %245 = arith.truncf %242 : vector<16x16xf32> to vector<16x16xbf16>
    %cst_108 = arith.constant dense<0.000000e+00> : vector<16x16xf32>
    %246 = tpu.matmul %244, %245, %cst_108 {dimension_numbers = #tpu.dot_dimension_numbers<[1], [1], [0], [0], [0, 0, 1, 0], [], []>} : vector<16x16xbf16>, vector<16x16xbf16>, vector<16x16xf32> -> vector<16x16xf32>
    %c1_109 = arith.constant 1 : index
    %c0_110 = arith.constant 0 : index
    %c0_111 = arith.constant 0 : index
    %247 = vector.load %arg23[%c1_109, %c0_110, %c0_111] : memref<2x16x16xf32, #tpu.memory_space<vmem>>, vector<1x16x16xf32>
    %248 = vector.shape_cast %247 : vector<1x16x16xf32> to vector<16x16xf32>
    %249 = arith.addf %246, %248 : vector<16x16xf32>
    %cst_112 = arith.constant dense<0xFF800000> : vector<16xf32>
    %250 = vector.multi_reduction <maximumf>, %249, %cst_112 [1] : vector<16x16xf32> to vector<16xf32>
    %251 = vector.shape_cast %250 : vector<16xf32> to vector<16x1xf32>
    %252 = vector.broadcast %251 : vector<16x1xf32> to vector<16x16xf32>
    %253 = arith.subf %249, %252 : vector<16x16xf32>
    %254 = math.exp %253 : vector<16x16xf32>
    %cst_113 = arith.constant dense<0.000000e+00> : vector<16xf32>
    %255 = vector.multi_reduction <add>, %254, %cst_113 [1] : vector<16x16xf32> to vector<16xf32>
    %256 = vector.shape_cast %255 : vector<16xf32> to vector<16x1xf32>
    %cst_114 = arith.constant 1.000000e+00 : f32
    %257 = vector.broadcast %cst_114 : f32 to vector<16x1xf32>
    %258 = arith.divf %257, %256 : vector<16x1xf32>
    %259 = vector.broadcast %258 : vector<16x1xf32> to vector<16x16xf32>
    %260 = arith.mulf %254, %259 : vector<16x16xf32>
    %261 = arith.truncf %260 : vector<16x16xf32> to vector<16x16xbf16>
    %262 = arith.truncf %243 : vector<16x16xf32> to vector<16x16xbf16>
    %cst_115 = arith.constant dense<0.000000e+00> : vector<16x16xf32>
    %263 = tpu.matmul %261, %262, %cst_115 {dimension_numbers = #tpu.dot_dimension_numbers<[1], [0], [0], [1], [0, 0, 1, 1], [], []>} : vector<16x16xbf16>, vector<16x16xbf16>, vector<16x16xf32> -> vector<16x16xf32>
    %264 = tpu.concatenate %240, %263 in 1 : vector<16x16xf32>, vector<16x16xf32> -> vector<16x32xf32>
    %265 = arith.truncf %264 : vector<16x32xf32> to vector<16x32xbf16>
    %c0_116 = arith.constant 0 : index
    %c0_117 = arith.constant 0 : index
    %266 = vector.load %arg24[%c0_116, %c0_117] : memref<32x32xbf16, #tpu.memory_space<vmem>>, vector<32x32xbf16>
    %cst_118 = arith.constant dense<0.000000e+00> : vector<16x32xf32>
    %267 = tpu.matmul %265, %266, %cst_118 {dimension_numbers = #tpu.dot_dimension_numbers<[1], [0], [0], [1], [0, 0, 1, 1], [], []>} : vector<16x32xbf16>, vector<32x32xbf16>, vector<16x32xf32> -> vector<16x32xf32>
    %c0_119 = arith.constant 0 : index
    %c0_120 = arith.constant 0 : index
    %268 = vector.load %arg25[%c0_119, %c0_120] : memref<1x32xf32, #tpu.memory_space<vmem>>, vector<1x32xf32>
    %269 = vector.broadcast %268 : vector<1x32xf32> to vector<16x32xf32>
    %270 = arith.addf %267, %269 : vector<16x32xf32>
    %271 = arith.addf %189, %270 : vector<16x32xf32>
    %c0_121 = arith.constant 0 : index
    %c0_122 = arith.constant 0 : index
    %272 = vector.load %arg26[%c0_121, %c0_122] : memref<1x32xf32, #tpu.memory_space<vmem>>, vector<1x32xf32>
    %c0_123 = arith.constant 0 : index
    %c0_124 = arith.constant 0 : index
    %273 = vector.load %arg27[%c0_123, %c0_124] : memref<1x32xf32, #tpu.memory_space<vmem>>, vector<1x32xf32>
    %cst_125 = arith.constant dense<0.000000e+00> : vector<16xf32>
    %274 = vector.multi_reduction <add>, %271, %cst_125 [1] : vector<16x32xf32> to vector<16xf32>
    %275 = vector.shape_cast %274 : vector<16xf32> to vector<16x1xf32>
    %cst_126 = arith.constant 3.200000e+01 : f32
    %276 = vector.broadcast %cst_126 : f32 to vector<16x1xf32>
    %277 = arith.divf %275, %276 : vector<16x1xf32>
    %278 = vector.broadcast %277 : vector<16x1xf32> to vector<16x32xf32>
    %279 = arith.subf %271, %278 : vector<16x32xf32>
    %280 = arith.mulf %279, %279 : vector<16x32xf32>
    %cst_127 = arith.constant dense<0.000000e+00> : vector<16xf32>
    %281 = vector.multi_reduction <add>, %280, %cst_127 [1] : vector<16x32xf32> to vector<16xf32>
    %282 = vector.shape_cast %281 : vector<16xf32> to vector<16x1xf32>
    %cst_128 = arith.constant 3.200000e+01 : f32
    %283 = vector.broadcast %cst_128 : f32 to vector<16x1xf32>
    %284 = arith.divf %282, %283 : vector<16x1xf32>
    %cst_129 = arith.constant 9.99999974E-6 : f32
    %285 = vector.broadcast %cst_129 : f32 to vector<16x1xf32>
    %286 = arith.addf %284, %285 : vector<16x1xf32>
    %287 = math.rsqrt %286 : vector<16x1xf32>
    %288 = vector.broadcast %287 : vector<16x1xf32> to vector<16x32xf32>
    %289 = arith.mulf %279, %288 : vector<16x32xf32>
    %290 = vector.broadcast %272 : vector<1x32xf32> to vector<16x32xf32>
    %291 = arith.mulf %289, %290 : vector<16x32xf32>
    %292 = vector.broadcast %273 : vector<1x32xf32> to vector<16x32xf32>
    %293 = arith.addf %291, %292 : vector<16x32xf32>
    %294 = arith.truncf %293 : vector<16x32xf32> to vector<16x32xbf16>
    %c0_130 = arith.constant 0 : index
    %c0_131 = arith.constant 0 : index
    %295 = vector.load %arg28[%c0_130, %c0_131] : memref<32x128xbf16, #tpu.memory_space<vmem>>, vector<32x128xbf16>
    %cst_132 = arith.constant dense<0.000000e+00> : vector<16x128xf32>
    %296 = tpu.matmul %294, %295, %cst_132 {dimension_numbers = #tpu.dot_dimension_numbers<[1], [0], [0], [1], [0, 0, 1, 1], [], []>} : vector<16x32xbf16>, vector<32x128xbf16>, vector<16x128xf32> -> vector<16x128xf32>
    %c0_133 = arith.constant 0 : index
    %c0_134 = arith.constant 0 : index
    %297 = vector.load %arg29[%c0_133, %c0_134] : memref<1x128xf32, #tpu.memory_space<vmem>>, vector<1x128xf32>
    %298 = vector.broadcast %297 : vector<1x128xf32> to vector<16x128xf32>
    %299 = arith.addf %296, %298 : vector<16x128xf32>
    %cst_135 = arith.constant 5.000000e-01 : f32
    %300 = vector.broadcast %cst_135 : f32 to vector<16x128xf32>
    %301 = arith.mulf %300, %299 : vector<16x128xf32>
    %cst_136 = arith.constant 0.707106769 : f32
    %302 = vector.broadcast %cst_136 : f32 to vector<16x128xf32>
    %303 = arith.mulf %299, %302 : vector<16x128xf32>
    %304 = math.absf %303 : vector<16x128xf32>
    %cst_137 = arith.constant 0.327591091 : f32
    %305 = vector.broadcast %cst_137 : f32 to vector<16x128xf32>
    %306 = arith.mulf %305, %304 : vector<16x128xf32>
    %cst_138 = arith.constant 1.000000e+00 : f32
    %307 = vector.broadcast %cst_138 : f32 to vector<16x128xf32>
    %308 = arith.addf %307, %306 : vector<16x128xf32>
    %cst_139 = arith.constant 1.000000e+00 : f32
    %309 = vector.broadcast %cst_139 : f32 to vector<16x128xf32>
    %310 = arith.divf %309, %308 : vector<16x128xf32>
    %cst_140 = arith.constant 1.06140542 : f32
    %311 = vector.broadcast %cst_140 : f32 to vector<16x128xf32>
    %312 = arith.mulf %311, %310 : vector<16x128xf32>
    %cst_141 = arith.constant -1.45315206 : f32
    %313 = vector.broadcast %cst_141 : f32 to vector<16x128xf32>
    %314 = arith.addf %312, %313 : vector<16x128xf32>
    %315 = arith.mulf %314, %310 : vector<16x128xf32>
    %cst_142 = arith.constant 1.42141378 : f32
    %316 = vector.broadcast %cst_142 : f32 to vector<16x128xf32>
    %317 = arith.addf %315, %316 : vector<16x128xf32>
    %318 = arith.mulf %317, %310 : vector<16x128xf32>
    %cst_143 = arith.constant -0.284496725 : f32
    %319 = vector.broadcast %cst_143 : f32 to vector<16x128xf32>
    %320 = arith.addf %318, %319 : vector<16x128xf32>
    %321 = arith.mulf %320, %310 : vector<16x128xf32>
    %cst_144 = arith.constant 0.254829586 : f32
    %322 = vector.broadcast %cst_144 : f32 to vector<16x128xf32>
    %323 = arith.addf %321, %322 : vector<16x128xf32>
    %324 = arith.mulf %323, %310 : vector<16x128xf32>
    %cst_145 = arith.constant 0.000000e+00 : f32
    %325 = vector.broadcast %cst_145 : f32 to vector<16x128xf32>
    %326 = arith.subf %325, %304 : vector<16x128xf32>
    %327 = arith.mulf %326, %304 : vector<16x128xf32>
    %328 = math.exp %327 : vector<16x128xf32>
    %329 = arith.mulf %324, %328 : vector<16x128xf32>
    %cst_146 = arith.constant 1.000000e+00 : f32
    %330 = vector.broadcast %cst_146 : f32 to vector<16x128xf32>
    %331 = arith.subf %330, %329 : vector<16x128xf32>
    %cst_147 = arith.constant 0.000000e+00 : f32
    %332 = vector.broadcast %cst_147 : f32 to vector<16x128xf32>
    %333 = arith.cmpf olt, %303, %332 : vector<16x128xf32>
    %cst_148 = arith.constant 0.000000e+00 : f32
    %334 = vector.broadcast %cst_148 : f32 to vector<16x128xf32>
    %335 = arith.subf %334, %331 : vector<16x128xf32>
    %336 = arith.select %333, %335, %331 : vector<16x128xi1>, vector<16x128xf32>
    %cst_149 = arith.constant 1.000000e+00 : f32
    %337 = vector.broadcast %cst_149 : f32 to vector<16x128xf32>
    %338 = arith.addf %337, %336 : vector<16x128xf32>
    %339 = arith.mulf %301, %338 : vector<16x128xf32>
    %340 = arith.truncf %339 : vector<16x128xf32> to vector<16x128xbf16>
    %c0_150 = arith.constant 0 : index
    %c0_151 = arith.constant 0 : index
    %341 = vector.load %arg30[%c0_150, %c0_151] : memref<128x32xbf16, #tpu.memory_space<vmem>>, vector<128x32xbf16>
    %cst_152 = arith.constant dense<0.000000e+00> : vector<16x32xf32>
    %342 = tpu.matmul %340, %341, %cst_152 {dimension_numbers = #tpu.dot_dimension_numbers<[1], [0], [0], [1], [0, 0, 1, 1], [], []>} : vector<16x128xbf16>, vector<128x32xbf16>, vector<16x32xf32> -> vector<16x32xf32>
    %c0_153 = arith.constant 0 : index
    %c0_154 = arith.constant 0 : index
    %343 = vector.load %arg31[%c0_153, %c0_154] : memref<1x32xf32, #tpu.memory_space<vmem>>, vector<1x32xf32>
    %344 = vector.broadcast %343 : vector<1x32xf32> to vector<16x32xf32>
    %345 = arith.addf %342, %344 : vector<16x32xf32>
    %346 = arith.addf %271, %345 : vector<16x32xf32>
    %347 = arith.negf %346 : vector<16x32xf32>
    %348 = math.exp %347 : vector<16x32xf32>
    %cst_155 = arith.constant 1.000000e+00 : f32
    %349 = vector.broadcast %cst_155 : f32 to vector<16x32xf32>
    %350 = arith.addf %349, %348 : vector<16x32xf32>
    %351 = arith.divf %349, %350 : vector<16x32xf32>
    %352 = math.tanh %346 : vector<16x32xf32>
    %c0_156 = arith.constant 0 : index
    %c0_157 = arith.constant 0 : index
    %c0_158 = arith.constant 0 : index
    %353 = vector.load %arg3[%c0_156, %c0_157, %c0_158] : memref<1x16x32xf32, #tpu.memory_space<vmem>>, vector<1x16x32xf32>
    %354 = vector.shape_cast %353 : vector<1x16x32xf32> to vector<16x32xf32>
    %355 = arith.addf %354, %352 : vector<16x32xf32>
    %356 = arith.mulf %351, %355 : vector<16x32xf32>
    %357 = math.tanh %356 : vector<16x32xf32>
    %358 = arith.mulf %351, %357 : vector<16x32xf32>
    %c0_159 = arith.constant 0 : index
    %c0_160 = arith.constant 0 : index
    %c0_161 = arith.constant 0 : index
    %359 = vector.load %arg36[%c0_159, %c0_160, %c0_161] : memref<1x16x32xf32, #tpu.memory_space<vmem>>, vector<1x16x32xf32>
    %360 = vector.shape_cast %359 : vector<1x16x32xf32> to vector<16x32xf32>
    %361 = vector.shape_cast %358 : vector<16x32xf32> to vector<1x16x32xf32>
    tpu.vector_store %arg36[%c0_159, %c0_160, %c0_161], %361 {strides = array<i32>} : memref<1x16x32xf32, #tpu.memory_space<vmem>>, vector<1x16x32xf32>,
    %c0_162 = arith.constant 0 : index
    %c0_163 = arith.constant 0 : index
    %c0_164 = arith.constant 0 : index
    %362 = vector.load %arg37[%c0_162, %c0_163, %c0_164] : memref<1x16x32xf32, #tpu.memory_space<vmem>>, vector<1x16x32xf32>
    %363 = vector.shape_cast %362 : vector<1x16x32xf32> to vector<16x32xf32>
    %364 = vector.shape_cast %356 : vector<16x32xf32> to vector<1x16x32xf32>
    tpu.vector_store %arg37[%c0_162, %c0_163, %c0_164], %364 {strides = array<i32>} : memref<1x16x32xf32, #tpu.memory_space<vmem>>, vector<1x16x32xf32>,
    %c0_165 = arith.constant 0 : index
    %c0_166 = arith.constant 0 : index
    %365 = vector.load %arg32[%c0_165, %c0_166] : memref<16x16xf32, #tpu.memory_space<vmem>>, vector<16x16xf32>
    %cst_167 = arith.constant dense<0.000000e+00> : vector<16x32xf32>
    %366 = tpu.matmul %365, %358, %cst_167 {dimension_numbers = #tpu.dot_dimension_numbers<[1], [0], [0], [1], [0, 0, 1, 1], [], []>} : vector<16x16xf32>, vector<16x32xf32>, vector<16x32xf32> -> vector<16x32xf32>
    %367 = vector.extract_strided_slice %366 {offsets = [0, 0], sizes = [4, 32], strides = [1, 1]} : vector<16x32xf32> to vector<4x32xf32>
    %368 = vector.extract_strided_slice %366 {offsets = [4, 0], sizes = [4, 32], strides = [1, 1]} : vector<16x32xf32> to vector<4x32xf32>
    %369 = vector.extract_strided_slice %366 {offsets = [8, 0], sizes = [4, 32], strides = [1, 1]} : vector<16x32xf32> to vector<4x32xf32>
    %370 = vector.extract_strided_slice %366 {offsets = [12, 0], sizes = [4, 32], strides = [1, 1]} : vector<16x32xf32> to vector<4x32xf32>
    %371 = tpu.concatenate %367, %368, %369, %370 in 1 : vector<4x32xf32>, vector<4x32xf32>, vector<4x32xf32>, vector<4x32xf32> -> vector<4x128xf32>
    %c0_168 = arith.constant 0 : index
    %c0_169 = arith.constant 0 : index
    %372 = vector.load %arg33[%c0_168, %c0_169] : memref<1x128xf32, #tpu.memory_space<vmem>>, vector<1x128xf32>
    %c0_170 = arith.constant 0 : index
    %c0_171 = arith.constant 0 : index
    %373 = vector.load %arg34[%c0_170, %c0_171] : memref<1x128xf32, #tpu.memory_space<vmem>>, vector<1x128xf32>
    %cst_172 = arith.constant dense<0.000000e+00> : vector<4xf32>
    %374 = vector.multi_reduction <add>, %371, %cst_172 [1] : vector<4x128xf32> to vector<4xf32>
    %375 = vector.shape_cast %374 : vector<4xf32> to vector<4x1xf32>
    %cst_173 = arith.constant 1.280000e+02 : f32
    %376 = vector.broadcast %cst_173 : f32 to vector<4x1xf32>
    %377 = arith.divf %375, %376 : vector<4x1xf32>
    %378 = vector.broadcast %377 : vector<4x1xf32> to vector<4x128xf32>
    %379 = arith.subf %371, %378 : vector<4x128xf32>
    %380 = arith.mulf %379, %379 : vector<4x128xf32>
    %cst_174 = arith.constant dense<0.000000e+00> : vector<4xf32>
    %381 = vector.multi_reduction <add>, %380, %cst_174 [1] : vector<4x128xf32> to vector<4xf32>
    %382 = vector.shape_cast %381 : vector<4xf32> to vector<4x1xf32>
    %cst_175 = arith.constant 1.280000e+02 : f32
    %383 = vector.broadcast %cst_175 : f32 to vector<4x1xf32>
    %384 = arith.divf %382, %383 : vector<4x1xf32>
    %cst_176 = arith.constant 9.99999974E-6 : f32
    %385 = vector.broadcast %cst_176 : f32 to vector<4x1xf32>
    %386 = arith.addf %384, %385 : vector<4x1xf32>
    %387 = math.rsqrt %386 : vector<4x1xf32>
    %388 = vector.broadcast %387 : vector<4x1xf32> to vector<4x128xf32>
    %389 = arith.mulf %379, %388 : vector<4x128xf32>
    %390 = vector.broadcast %372 : vector<1x128xf32> to vector<4x128xf32>
    %391 = arith.mulf %389, %390 : vector<4x128xf32>
    %392 = vector.broadcast %373 : vector<1x128xf32> to vector<4x128xf32>
    %393 = arith.addf %391, %392 : vector<4x128xf32>
    %394 = arith.truncf %393 : vector<4x128xf32> to vector<4x128xbf16>
    %c0_177 = arith.constant 0 : index
    %c0_178 = arith.constant 0 : index
    %395 = vector.load %arg35[%c0_177, %c0_178] : memref<128x64xbf16, #tpu.memory_space<vmem>>, vector<128x64xbf16>
    %cst_179 = arith.constant dense<0.000000e+00> : vector<4x64xf32>
    %396 = tpu.matmul %394, %395, %cst_179 {dimension_numbers = #tpu.dot_dimension_numbers<[1], [0], [0], [1], [0, 0, 1, 1], [], []>} : vector<4x128xbf16>, vector<128x64xbf16>, vector<4x64xf32> -> vector<4x64xf32>
    %c0_180 = arith.constant 0 : index
    %c0_181 = arith.constant 0 : index
    %c0_182 = arith.constant 0 : index
    %397 = vector.load %arg38[%c0_180, %c0_181, %c0_182] : memref<1x4x64xf32, #tpu.memory_space<vmem>>, vector<1x4x64xf32>
    %398 = vector.shape_cast %397 : vector<1x4x64xf32> to vector<4x64xf32>
    %399 = vector.shape_cast %396 : vector<4x64xf32> to vector<1x4x64xf32>
    tpu.vector_store %arg38[%c0_180, %c0_181, %c0_182], %399 {strides = array<i32>} : memref<1x4x64xf32, #tpu.memory_space<vmem>>, vector<1x4x64xf32>,
    return
  }
  func.func @transform_0(%arg0: i32) -> (i32, i32, i32) {
    %c0_i32 = arith.constant 0 : i32
    %c0_i32_0 = arith.constant 0 : i32
    %c0_i32_1 = arith.constant 0 : i32
    return %arg0, %c0_i32, %c0_i32_0 : i32, i32, i32
  }
  func.func @transform_1(%arg0: i32) -> (i32, i32, i32) {
    %c0_i32 = arith.constant 0 : i32
    %c0_i32_0 = arith.constant 0 : i32
    %c0_i32_1 = arith.constant 0 : i32
    return %arg0, %c0_i32, %c0_i32_0 : i32, i32, i32
  }
  func.func @transform_2(%arg0: i32) -> (i32, i32, i32) {
    %c0_i32 = arith.constant 0 : i32
    %c0_i32_0 = arith.constant 0 : i32
    %c0_i32_1 = arith.constant 0 : i32
    return %arg0, %c0_i32, %c0_i32_0 : i32, i32, i32
  }
  func.func @transform_3(%arg0: i32) -> (i32, i32) {
    %c0_i32 = arith.constant 0 : i32
    %c0_i32_0 = arith.constant 0 : i32
    %c0_i32_1 = arith.constant 0 : i32
    return %c0_i32, %c0_i32_0 : i32, i32
  }
  func.func @transform_4(%arg0: i32) -> (i32, i32) {
    %c0_i32 = arith.constant 0 : i32
    %c0_i32_0 = arith.constant 0 : i32
    %c0_i32_1 = arith.constant 0 : i32
    return %c0_i32, %c0_i32_0 : i32, i32
  }
  func.func @transform_5(%arg0: i32) -> (i32, i32) {
    %c0_i32 = arith.constant 0 : i32
    %c0_i32_0 = arith.constant 0 : i32
    %c0_i32_1 = arith.constant 0 : i32
    return %c0_i32, %c0_i32_0 : i32, i32
  }
  func.func @transform_6(%arg0: i32) -> (i32, i32) {
    %c0_i32 = arith.constant 0 : i32
    %c0_i32_0 = arith.constant 0 : i32
    %c0_i32_1 = arith.constant 0 : i32
    return %c0_i32, %c0_i32_0 : i32, i32
  }
  func.func @transform_7(%arg0: i32) -> (i32, i32) {
    %c0_i32 = arith.constant 0 : i32
    %c0_i32_0 = arith.constant 0 : i32
    %c0_i32_1 = arith.constant 0 : i32
    return %c0_i32, %c0_i32_0 : i32, i32
  }
  func.func @transform_8(%arg0: i32) -> (i32, i32) {
    %c0_i32 = arith.constant 0 : i32
    %c0_i32_0 = arith.constant 0 : i32
    %c0_i32_1 = arith.constant 0 : i32
    return %c0_i32, %c0_i32_0 : i32, i32
  }
  func.func @transform_9(%arg0: i32) -> (i32, i32, i32) {
    %c0_i32 = arith.constant 0 : i32
    %c0_i32_0 = arith.constant 0 : i32
    %c0_i32_1 = arith.constant 0 : i32
    %c0_i32_2 = arith.constant 0 : i32
    return %c0_i32, %c0_i32_0, %c0_i32_1 : i32, i32, i32
  }
  func.func @transform_10(%arg0: i32) -> (i32, i32) {
    %c0_i32 = arith.constant 0 : i32
    %c0_i32_0 = arith.constant 0 : i32
    %c0_i32_1 = arith.constant 0 : i32
    return %c0_i32, %c0_i32_0 : i32, i32
  }
  func.func @transform_11(%arg0: i32) -> (i32, i32) {
    %c0_i32 = arith.constant 0 : i32
    %c0_i32_0 = arith.constant 0 : i32
    %c0_i32_1 = arith.constant 0 : i32
    return %c0_i32, %c0_i32_0 : i32, i32
  }
  func.func @transform_12(%arg0: i32) -> (i32, i32) {
    %c0_i32 = arith.constant 0 : i32
    %c0_i32_0 = arith.constant 0 : i32
    %c0_i32_1 = arith.constant 0 : i32
    return %c0_i32, %c0_i32_0 : i32, i32
  }
  func.func @transform_13(%arg0: i32) -> (i32, i32) {
    %c0_i32 = arith.constant 0 : i32
    %c0_i32_0 = arith.constant 0 : i32
    %c0_i32_1 = arith.constant 0 : i32
    return %c0_i32, %c0_i32_0 : i32, i32
  }
  func.func @transform_14(%arg0: i32) -> (i32, i32) {
    %c0_i32 = arith.constant 0 : i32
    %c0_i32_0 = arith.constant 0 : i32
    %c0_i32_1 = arith.constant 0 : i32
    return %c0_i32, %c0_i32_0 : i32, i32
  }
  func.func @transform_15(%arg0: i32) -> (i32, i32) {
    %c0_i32 = arith.constant 0 : i32
    %c0_i32_0 = arith.constant 0 : i32
    %c0_i32_1 = arith.constant 0 : i32
    return %c0_i32, %c0_i32_0 : i32, i32
  }
  func.func @transform_16(%arg0: i32) -> (i32, i32) {
    %c0_i32 = arith.constant 0 : i32
    %c0_i32_0 = arith.constant 0 : i32
    %c0_i32_1 = arith.constant 0 : i32
    return %c0_i32, %c0_i32_0 : i32, i32
  }
  func.func @transform_17(%arg0: i32) -> (i32, i32) {
    %c0_i32 = arith.constant 0 : i32
    %c0_i32_0 = arith.constant 0 : i32
    %c0_i32_1 = arith.constant 0 : i32
    return %c0_i32, %c0_i32_0 : i32, i32
  }
  func.func @transform_18(%arg0: i32) -> (i32, i32) {
    %c0_i32 = arith.constant 0 : i32
    %c0_i32_0 = arith.constant 0 : i32
    %c0_i32_1 = arith.constant 0 : i32
    return %c0_i32, %c0_i32_0 : i32, i32
  }
  func.func @transform_19(%arg0: i32) -> (i32, i32) {
    %c0_i32 = arith.constant 0 : i32
    %c0_i32_0 = arith.constant 0 : i32
    %c0_i32_1 = arith.constant 0 : i32
    return %c0_i32, %c0_i32_0 : i32, i32
  }
  func.func @transform_20(%arg0: i32) -> (i32, i32) {
    %c0_i32 = arith.constant 0 : i32
    %c0_i32_0 = arith.constant 0 : i32
    %c0_i32_1 = arith.constant 0 : i32
    return %c0_i32, %c0_i32_0 : i32, i32
  }
  func.func @transform_21(%arg0: i32) -> (i32, i32) {
    %c0_i32 = arith.constant 0 : i32
    %c0_i32_0 = arith.constant 0 : i32
    %c0_i32_1 = arith.constant 0 : i32
    return %c0_i32, %c0_i32_0 : i32, i32
  }
  func.func @transform_22(%arg0: i32) -> (i32, i32, i32) {
    %c0_i32 = arith.constant 0 : i32
    %c0_i32_0 = arith.constant 0 : i32
    %c0_i32_1 = arith.constant 0 : i32
    %c0_i32_2 = arith.constant 0 : i32
    return %c0_i32, %c0_i32_0, %c0_i32_1 : i32, i32, i32
  }
  func.func @transform_23(%arg0: i32) -> (i32, i32) {
    %c0_i32 = arith.constant 0 : i32
    %c0_i32_0 = arith.constant 0 : i32
    %c0_i32_1 = arith.constant 0 : i32
    return %c0_i32, %c0_i32_0 : i32, i32
  }
  func.func @transform_24(%arg0: i32) -> (i32, i32) {
    %c0_i32 = arith.constant 0 : i32
    %c0_i32_0 = arith.constant 0 : i32
    %c0_i32_1 = arith.constant 0 : i32
    return %c0_i32, %c0_i32_0 : i32, i32
  }
  func.func @transform_25(%arg0: i32) -> (i32, i32) {
    %c0_i32 = arith.constant 0 : i32
    %c0_i32_0 = arith.constant 0 : i32
    %c0_i32_1 = arith.constant 0 : i32
    return %c0_i32, %c0_i32_0 : i32, i32
  }
  func.func @transform_26(%arg0: i32) -> (i32, i32) {
    %c0_i32 = arith.constant 0 : i32
    %c0_i32_0 = arith.constant 0 : i32
    %c0_i32_1 = arith.constant 0 : i32
    return %c0_i32, %c0_i32_0 : i32, i32
  }
  func.func @transform_27(%arg0: i32) -> (i32, i32) {
    %c0_i32 = arith.constant 0 : i32
    %c0_i32_0 = arith.constant 0 : i32
    %c0_i32_1 = arith.constant 0 : i32
    return %c0_i32, %c0_i32_0 : i32, i32
  }
  func.func @transform_28(%arg0: i32) -> (i32, i32) {
    %c0_i32 = arith.constant 0 : i32
    %c0_i32_0 = arith.constant 0 : i32
    %c0_i32_1 = arith.constant 0 : i32
    return %c0_i32, %c0_i32_0 : i32, i32
  }
  func.func @transform_29(%arg0: i32) -> (i32, i32) {
    %c0_i32 = arith.constant 0 : i32
    %c0_i32_0 = arith.constant 0 : i32
    %c0_i32_1 = arith.constant 0 : i32
    return %c0_i32, %c0_i32_0 : i32, i32
  }
  func.func @transform_30(%arg0: i32) -> (i32, i32) {
    %c0_i32 = arith.constant 0 : i32
    %c0_i32_0 = arith.constant 0 : i32
    %c0_i32_1 = arith.constant 0 : i32
    return %c0_i32, %c0_i32_0 : i32, i32
  }
  func.func @transform_31(%arg0: i32) -> (i32, i32) {
    %c0_i32 = arith.constant 0 : i32
    %c0_i32_0 = arith.constant 0 : i32
    %c0_i32_1 = arith.constant 0 : i32
    return %c0_i32, %c0_i32_0 : i32, i32
  }
  func.func @transform_32(%arg0: i32) -> (i32, i32) {
    %c0_i32 = arith.constant 0 : i32
    %c0_i32_0 = arith.constant 0 : i32
    %c0_i32_1 = arith.constant 0 : i32
    return %c0_i32, %c0_i32_0 : i32, i32
  }
  func.func @transform_33(%arg0: i32) -> (i32, i32) {
    %c0_i32 = arith.constant 0 : i32
    %c0_i32_0 = arith.constant 0 : i32
    %c0_i32_1 = arith.constant 0 : i32
    return %c0_i32, %c0_i32_0 : i32, i32
  }
  func.func @transform_34(%arg0: i32) -> (i32, i32) {
    %c0_i32 = arith.constant 0 : i32
    %c0_i32_0 = arith.constant 0 : i32
    %c0_i32_1 = arith.constant 0 : i32
    return %c0_i32, %c0_i32_0 : i32, i32
  }
  func.func @transform_35(%arg0: i32) -> (i32, i32, i32) {
    %c0_i32 = arith.constant 0 : i32
    %c0_i32_0 = arith.constant 0 : i32
    %c0_i32_1 = arith.constant 0 : i32
    return %arg0, %c0_i32, %c0_i32_0 : i32, i32, i32
  }
  func.func @transform_36(%arg0: i32) -> (i32, i32, i32) {
    %c0_i32 = arith.constant 0 : i32
    %c0_i32_0 = arith.constant 0 : i32
    %c0_i32_1 = arith.constant 0 : i32
    return %arg0, %c0_i32, %c0_i32_0 : i32, i32, i32
  }
  func.func @transform_37(%arg0: i32) -> (i32, i32, i32) {
    %c0_i32 = arith.constant 0 : i32
    %c0_i32_0 = arith.constant 0 : i32
    %c0_i32_1 = arith.constant 0 : i32
    return %arg0, %c0_i32, %c0_i32_0 : i32, i32, i32
  }
}

module attributes {stable_mosaic.version = 11 : i64} {
  func.func @_swin_cell_kernel(%arg0: i32, %arg1: memref<1x4x64xf32, #tpu.memory_space<vmem>>, %arg2: memref<1x4x64xf32, #tpu.memory_space<vmem>>, %arg3: memref<1x4x64xf32, #tpu.memory_space<vmem>>, %arg4: memref<1x64xf32, #tpu.memory_space<vmem>>, %arg5: memref<1x64xf32, #tpu.memory_space<vmem>>, %arg6: memref<128x64xbf16, #tpu.memory_space<vmem>>, %arg7: memref<1x64xf32, #tpu.memory_space<vmem>>, %arg8: memref<64x192xbf16, #tpu.memory_space<vmem>>, %arg9: memref<1x192xf32, #tpu.memory_space<vmem>>, %arg10: memref<4x4x4xf32, #tpu.memory_space<vmem>>, %arg11: memref<64x64xbf16, #tpu.memory_space<vmem>>, %arg12: memref<1x64xf32, #tpu.memory_space<vmem>>, %arg13: memref<1x64xf32, #tpu.memory_space<vmem>>, %arg14: memref<1x64xf32, #tpu.memory_space<vmem>>, %arg15: memref<64x256xbf16, #tpu.memory_space<vmem>>, %arg16: memref<1x256xf32, #tpu.memory_space<vmem>>, %arg17: memref<256x64xbf16, #tpu.memory_space<vmem>>, %arg18: memref<1x64xf32, #tpu.memory_space<vmem>>, %arg19: memref<1x64xf32, #tpu.memory_space<vmem>>, %arg20: memref<1x64xf32, #tpu.memory_space<vmem>>, %arg21: memref<64x192xbf16, #tpu.memory_space<vmem>>, %arg22: memref<1x192xf32, #tpu.memory_space<vmem>>, %arg23: memref<4x4x4xf32, #tpu.memory_space<vmem>>, %arg24: memref<64x64xbf16, #tpu.memory_space<vmem>>, %arg25: memref<1x64xf32, #tpu.memory_space<vmem>>, %arg26: memref<1x64xf32, #tpu.memory_space<vmem>>, %arg27: memref<1x64xf32, #tpu.memory_space<vmem>>, %arg28: memref<64x256xbf16, #tpu.memory_space<vmem>>, %arg29: memref<1x256xf32, #tpu.memory_space<vmem>>, %arg30: memref<256x64xbf16, #tpu.memory_space<vmem>>, %arg31: memref<1x64xf32, #tpu.memory_space<vmem>>, %arg32: memref<4x4xf32, #tpu.memory_space<vmem>>, %arg33: memref<1x256xf32, #tpu.memory_space<vmem>>, %arg34: memref<1x256xf32, #tpu.memory_space<vmem>>, %arg35: memref<256x128xbf16, #tpu.memory_space<vmem>>, %arg36: memref<1x4x64xf32, #tpu.memory_space<vmem>>, %arg37: memref<1x4x64xf32, #tpu.memory_space<vmem>>, %arg38: memref<1x1x128xf32, #tpu.memory_space<vmem>>) attributes {dimension_semantics = [#tpu.dimension_semantics<parallel>], iteration_bounds = array<i64: 2>, scalar_prefetch = 0 : i64, scratch_operands = 0 : i64, tpu.core_type = #tpu.core_type<tc>, window_params = [{transform_indices = @transform_0, window_bounds = array<i64: 1, 4, 64>}, {transform_indices = @transform_1, window_bounds = array<i64: 1, 4, 64>}, {transform_indices = @transform_2, window_bounds = array<i64: 1, 4, 64>}, {pipeline_mode = #tpu.pipeline_mode<synchronous>, transform_indices = @transform_3, window_bounds = array<i64: 1, 64>}, {pipeline_mode = #tpu.pipeline_mode<synchronous>, transform_indices = @transform_4, window_bounds = array<i64: 1, 64>}, {pipeline_mode = #tpu.pipeline_mode<synchronous>, transform_indices = @transform_5, window_bounds = array<i64: 128, 64>}, {pipeline_mode = #tpu.pipeline_mode<synchronous>, transform_indices = @transform_6, window_bounds = array<i64: 1, 64>}, {pipeline_mode = #tpu.pipeline_mode<synchronous>, transform_indices = @transform_7, window_bounds = array<i64: 64, 192>}, {pipeline_mode = #tpu.pipeline_mode<synchronous>, transform_indices = @transform_8, window_bounds = array<i64: 1, 192>}, {pipeline_mode = #tpu.pipeline_mode<synchronous>, transform_indices = @transform_9, window_bounds = array<i64: 4, 4, 4>}, {pipeline_mode = #tpu.pipeline_mode<synchronous>, transform_indices = @transform_10, window_bounds = array<i64: 64, 64>}, {pipeline_mode = #tpu.pipeline_mode<synchronous>, transform_indices = @transform_11, window_bounds = array<i64: 1, 64>}, {pipeline_mode = #tpu.pipeline_mode<synchronous>, transform_indices = @transform_12, window_bounds = array<i64: 1, 64>}, {pipeline_mode = #tpu.pipeline_mode<synchronous>, transform_indices = @transform_13, window_bounds = array<i64: 1, 64>}, {pipeline_mode = #tpu.pipeline_mode<synchronous>, transform_indices = @transform_14, window_bounds = array<i64: 64, 256>}, {pipeline_mode = #tpu.pipeline_mode<synchronous>, transform_indices = @transform_15, window_bounds = array<i64: 1, 256>}, {pipeline_mode = #tpu.pipeline_mode<synchronous>, transform_indices = @transform_16, window_bounds = array<i64: 256, 64>}, {pipeline_mode = #tpu.pipeline_mode<synchronous>, transform_indices = @transform_17, window_bounds = array<i64: 1, 64>}, {pipeline_mode = #tpu.pipeline_mode<synchronous>, transform_indices = @transform_18, window_bounds = array<i64: 1, 64>}, {pipeline_mode = #tpu.pipeline_mode<synchronous>, transform_indices = @transform_19, window_bounds = array<i64: 1, 64>}, {pipeline_mode = #tpu.pipeline_mode<synchronous>, transform_indices = @transform_20, window_bounds = array<i64: 64, 192>}, {pipeline_mode = #tpu.pipeline_mode<synchronous>, transform_indices = @transform_21, window_bounds = array<i64: 1, 192>}, {pipeline_mode = #tpu.pipeline_mode<synchronous>, transform_indices = @transform_22, window_bounds = array<i64: 4, 4, 4>}, {pipeline_mode = #tpu.pipeline_mode<synchronous>, transform_indices = @transform_23, window_bounds = array<i64: 64, 64>}, {pipeline_mode = #tpu.pipeline_mode<synchronous>, transform_indices = @transform_24, window_bounds = array<i64: 1, 64>}, {pipeline_mode = #tpu.pipeline_mode<synchronous>, transform_indices = @transform_25, window_bounds = array<i64: 1, 64>}, {pipeline_mode = #tpu.pipeline_mode<synchronous>, transform_indices = @transform_26, window_bounds = array<i64: 1, 64>}, {pipeline_mode = #tpu.pipeline_mode<synchronous>, transform_indices = @transform_27, window_bounds = array<i64: 64, 256>}, {pipeline_mode = #tpu.pipeline_mode<synchronous>, transform_indices = @transform_28, window_bounds = array<i64: 1, 256>}, {pipeline_mode = #tpu.pipeline_mode<synchronous>, transform_indices = @transform_29, window_bounds = array<i64: 256, 64>}, {pipeline_mode = #tpu.pipeline_mode<synchronous>, transform_indices = @transform_30, window_bounds = array<i64: 1, 64>}, {pipeline_mode = #tpu.pipeline_mode<synchronous>, transform_indices = @transform_31, window_bounds = array<i64: 4, 4>}, {pipeline_mode = #tpu.pipeline_mode<synchronous>, transform_indices = @transform_32, window_bounds = array<i64: 1, 256>}, {pipeline_mode = #tpu.pipeline_mode<synchronous>, transform_indices = @transform_33, window_bounds = array<i64: 1, 256>}, {pipeline_mode = #tpu.pipeline_mode<synchronous>, transform_indices = @transform_34, window_bounds = array<i64: 256, 128>}, {transform_indices = @transform_35, window_bounds = array<i64: 1, 4, 64>}, {transform_indices = @transform_36, window_bounds = array<i64: 1, 4, 64>}, {transform_indices = @transform_37, window_bounds = array<i64: 1, 1, 128>}]} {
    %c0 = arith.constant 0 : index
    %c0_0 = arith.constant 0 : index
    %c0_1 = arith.constant 0 : index
    %0 = vector.load %arg1[%c0, %c0_0, %c0_1] : memref<1x4x64xf32, #tpu.memory_space<vmem>>, vector<1x4x64xf32>
    %1 = vector.shape_cast %0 : vector<1x4x64xf32> to vector<4x64xf32>
    %c0_2 = arith.constant 0 : index
    %c0_3 = arith.constant 0 : index
    %c0_4 = arith.constant 0 : index
    %2 = vector.load %arg2[%c0_2, %c0_3, %c0_4] : memref<1x4x64xf32, #tpu.memory_space<vmem>>, vector<1x4x64xf32>
    %3 = vector.shape_cast %2 : vector<1x4x64xf32> to vector<4x64xf32>
    %c0_5 = arith.constant 0 : index
    %c0_6 = arith.constant 0 : index
    %4 = vector.load %arg4[%c0_5, %c0_6] : memref<1x64xf32, #tpu.memory_space<vmem>>, vector<1x64xf32>
    %c0_7 = arith.constant 0 : index
    %c0_8 = arith.constant 0 : index
    %5 = vector.load %arg5[%c0_7, %c0_8] : memref<1x64xf32, #tpu.memory_space<vmem>>, vector<1x64xf32>
    %cst = arith.constant dense<0.000000e+00> : vector<4xf32>
    %6 = vector.multi_reduction <add>, %1, %cst [1] : vector<4x64xf32> to vector<4xf32>
    %7 = vector.shape_cast %6 : vector<4xf32> to vector<4x1xf32>
    %cst_9 = arith.constant 6.400000e+01 : f32
    %8 = vector.broadcast %cst_9 : f32 to vector<4x1xf32>
    %9 = arith.divf %7, %8 : vector<4x1xf32>
    %10 = vector.broadcast %9 : vector<4x1xf32> to vector<4x64xf32>
    %11 = arith.subf %1, %10 : vector<4x64xf32>
    %12 = arith.mulf %11, %11 : vector<4x64xf32>
    %cst_10 = arith.constant dense<0.000000e+00> : vector<4xf32>
    %13 = vector.multi_reduction <add>, %12, %cst_10 [1] : vector<4x64xf32> to vector<4xf32>
    %14 = vector.shape_cast %13 : vector<4xf32> to vector<4x1xf32>
    %cst_11 = arith.constant 6.400000e+01 : f32
    %15 = vector.broadcast %cst_11 : f32 to vector<4x1xf32>
    %16 = arith.divf %14, %15 : vector<4x1xf32>
    %cst_12 = arith.constant 9.99999974E-6 : f32
    %17 = vector.broadcast %cst_12 : f32 to vector<4x1xf32>
    %18 = arith.addf %16, %17 : vector<4x1xf32>
    %19 = math.rsqrt %18 : vector<4x1xf32>
    %20 = vector.broadcast %19 : vector<4x1xf32> to vector<4x64xf32>
    %21 = arith.mulf %11, %20 : vector<4x64xf32>
    %22 = vector.broadcast %4 : vector<1x64xf32> to vector<4x64xf32>
    %23 = arith.mulf %21, %22 : vector<4x64xf32>
    %24 = vector.broadcast %5 : vector<1x64xf32> to vector<4x64xf32>
    %25 = arith.addf %23, %24 : vector<4x64xf32>
    %c0_13 = arith.constant 0 : index
    %c0_14 = arith.constant 0 : index
    %26 = vector.load %arg4[%c0_13, %c0_14] : memref<1x64xf32, #tpu.memory_space<vmem>>, vector<1x64xf32>
    %c0_15 = arith.constant 0 : index
    %c0_16 = arith.constant 0 : index
    %27 = vector.load %arg5[%c0_15, %c0_16] : memref<1x64xf32, #tpu.memory_space<vmem>>, vector<1x64xf32>
    %cst_17 = arith.constant dense<0.000000e+00> : vector<4xf32>
    %28 = vector.multi_reduction <add>, %3, %cst_17 [1] : vector<4x64xf32> to vector<4xf32>
    %29 = vector.shape_cast %28 : vector<4xf32> to vector<4x1xf32>
    %cst_18 = arith.constant 6.400000e+01 : f32
    %30 = vector.broadcast %cst_18 : f32 to vector<4x1xf32>
    %31 = arith.divf %29, %30 : vector<4x1xf32>
    %32 = vector.broadcast %31 : vector<4x1xf32> to vector<4x64xf32>
    %33 = arith.subf %3, %32 : vector<4x64xf32>
    %34 = arith.mulf %33, %33 : vector<4x64xf32>
    %cst_19 = arith.constant dense<0.000000e+00> : vector<4xf32>
    %35 = vector.multi_reduction <add>, %34, %cst_19 [1] : vector<4x64xf32> to vector<4xf32>
    %36 = vector.shape_cast %35 : vector<4xf32> to vector<4x1xf32>
    %cst_20 = arith.constant 6.400000e+01 : f32
    %37 = vector.broadcast %cst_20 : f32 to vector<4x1xf32>
    %38 = arith.divf %36, %37 : vector<4x1xf32>
    %cst_21 = arith.constant 9.99999974E-6 : f32
    %39 = vector.broadcast %cst_21 : f32 to vector<4x1xf32>
    %40 = arith.addf %38, %39 : vector<4x1xf32>
    %41 = math.rsqrt %40 : vector<4x1xf32>
    %42 = vector.broadcast %41 : vector<4x1xf32> to vector<4x64xf32>
    %43 = arith.mulf %33, %42 : vector<4x64xf32>
    %44 = vector.broadcast %26 : vector<1x64xf32> to vector<4x64xf32>
    %45 = arith.mulf %43, %44 : vector<4x64xf32>
    %46 = vector.broadcast %27 : vector<1x64xf32> to vector<4x64xf32>
    %47 = arith.addf %45, %46 : vector<4x64xf32>
    %48 = tpu.concatenate %25, %47 in 1 : vector<4x64xf32>, vector<4x64xf32> -> vector<4x128xf32>
    %49 = arith.truncf %48 : vector<4x128xf32> to vector<4x128xbf16>
    %c0_22 = arith.constant 0 : index
    %c0_23 = arith.constant 0 : index
    %50 = vector.load %arg6[%c0_22, %c0_23] : memref<128x64xbf16, #tpu.memory_space<vmem>>, vector<128x64xbf16>
    %cst_24 = arith.constant dense<0.000000e+00> : vector<4x64xf32>
    %51 = tpu.matmul %49, %50, %cst_24 {dimension_numbers = #tpu.dot_dimension_numbers<[1], [0], [0], [1], [0, 0, 1, 1], [], []>} : vector<4x128xbf16>, vector<128x64xbf16>, vector<4x64xf32> -> vector<4x64xf32>
    %c0_25 = arith.constant 0 : index
    %c0_26 = arith.constant 0 : index
    %52 = vector.load %arg7[%c0_25, %c0_26] : memref<1x64xf32, #tpu.memory_space<vmem>>, vector<1x64xf32>
    %53 = vector.broadcast %52 : vector<1x64xf32> to vector<4x64xf32>
    %54 = arith.addf %51, %53 : vector<4x64xf32>
    %55 = arith.truncf %54 : vector<4x64xf32> to vector<4x64xbf16>
    %c0_27 = arith.constant 0 : index
    %c0_28 = arith.constant 0 : index
    %56 = vector.load %arg8[%c0_27, %c0_28] : memref<64x192xbf16, #tpu.memory_space<vmem>>, vector<64x192xbf16>
    %cst_29 = arith.constant dense<0.000000e+00> : vector<4x192xf32>
    %57 = tpu.matmul %55, %56, %cst_29 {dimension_numbers = #tpu.dot_dimension_numbers<[1], [0], [0], [1], [0, 0, 1, 1], [], []>} : vector<4x64xbf16>, vector<64x192xbf16>, vector<4x192xf32> -> vector<4x192xf32>
    %c0_30 = arith.constant 0 : index
    %c0_31 = arith.constant 0 : index
    %58 = vector.load %arg9[%c0_30, %c0_31] : memref<1x192xf32, #tpu.memory_space<vmem>>, vector<1x192xf32>
    %59 = vector.broadcast %58 : vector<1x192xf32> to vector<4x192xf32>
    %60 = arith.addf %57, %59 : vector<4x192xf32>
    %61 = vector.extract_strided_slice %60 {offsets = [0, 0], sizes = [4, 16], strides = [1, 1]} : vector<4x192xf32> to vector<4x16xf32>
    %62 = vector.extract_strided_slice %60 {offsets = [0, 64], sizes = [4, 16], strides = [1, 1]} : vector<4x192xf32> to vector<4x16xf32>
    %63 = vector.extract_strided_slice %60 {offsets = [0, 128], sizes = [4, 16], strides = [1, 1]} : vector<4x192xf32> to vector<4x16xf32>
    %64 = arith.truncf %61 : vector<4x16xf32> to vector<4x16xbf16>
    %65 = arith.truncf %62 : vector<4x16xf32> to vector<4x16xbf16>
    %cst_32 = arith.constant dense<0.000000e+00> : vector<4x4xf32>
    %66 = tpu.matmul %64, %65, %cst_32 {dimension_numbers = #tpu.dot_dimension_numbers<[1], [1], [0], [0], [0, 0, 1, 0], [], []>} : vector<4x16xbf16>, vector<4x16xbf16>, vector<4x4xf32> -> vector<4x4xf32>
    %c0_33 = arith.constant 0 : index
    %c0_34 = arith.constant 0 : index
    %c0_35 = arith.constant 0 : index
    %67 = vector.load %arg10[%c0_33, %c0_34, %c0_35] : memref<4x4x4xf32, #tpu.memory_space<vmem>>, vector<1x4x4xf32>
    %68 = vector.shape_cast %67 : vector<1x4x4xf32> to vector<4x4xf32>
    %69 = arith.addf %66, %68 : vector<4x4xf32>
    %cst_36 = arith.constant dense<0xFF800000> : vector<4xf32>
    %70 = vector.multi_reduction <maximumf>, %69, %cst_36 [1] : vector<4x4xf32> to vector<4xf32>
    %71 = vector.shape_cast %70 : vector<4xf32> to vector<4x1xf32>
    %72 = vector.broadcast %71 : vector<4x1xf32> to vector<4x4xf32>
    %73 = arith.subf %69, %72 : vector<4x4xf32>
    %74 = math.exp %73 : vector<4x4xf32>
    %cst_37 = arith.constant dense<0.000000e+00> : vector<4xf32>
    %75 = vector.multi_reduction <add>, %74, %cst_37 [1] : vector<4x4xf32> to vector<4xf32>
    %76 = vector.shape_cast %75 : vector<4xf32> to vector<4x1xf32>
    %cst_38 = arith.constant 1.000000e+00 : f32
    %77 = vector.broadcast %cst_38 : f32 to vector<4x1xf32>
    %78 = arith.divf %77, %76 : vector<4x1xf32>
    %79 = vector.broadcast %78 : vector<4x1xf32> to vector<4x4xf32>
    %80 = arith.mulf %74, %79 : vector<4x4xf32>
    %81 = arith.truncf %80 : vector<4x4xf32> to vector<4x4xbf16>
    %82 = arith.truncf %63 : vector<4x16xf32> to vector<4x16xbf16>
    %cst_39 = arith.constant dense<0.000000e+00> : vector<4x16xf32>
    %83 = tpu.matmul %81, %82, %cst_39 {dimension_numbers = #tpu.dot_dimension_numbers<[1], [0], [0], [1], [0, 0, 1, 1], [], []>} : vector<4x4xbf16>, vector<4x16xbf16>, vector<4x16xf32> -> vector<4x16xf32>
    %84 = vector.extract_strided_slice %60 {offsets = [0, 16], sizes = [4, 16], strides = [1, 1]} : vector<4x192xf32> to vector<4x16xf32>
    %85 = vector.extract_strided_slice %60 {offsets = [0, 80], sizes = [4, 16], strides = [1, 1]} : vector<4x192xf32> to vector<4x16xf32>
    %86 = vector.extract_strided_slice %60 {offsets = [0, 144], sizes = [4, 16], strides = [1, 1]} : vector<4x192xf32> to vector<4x16xf32>
    %87 = arith.truncf %84 : vector<4x16xf32> to vector<4x16xbf16>
    %88 = arith.truncf %85 : vector<4x16xf32> to vector<4x16xbf16>
    %cst_40 = arith.constant dense<0.000000e+00> : vector<4x4xf32>
    %89 = tpu.matmul %87, %88, %cst_40 {dimension_numbers = #tpu.dot_dimension_numbers<[1], [1], [0], [0], [0, 0, 1, 0], [], []>} : vector<4x16xbf16>, vector<4x16xbf16>, vector<4x4xf32> -> vector<4x4xf32>
    %c1 = arith.constant 1 : index
    %c0_41 = arith.constant 0 : index
    %c0_42 = arith.constant 0 : index
    %90 = vector.load %arg10[%c1, %c0_41, %c0_42] : memref<4x4x4xf32, #tpu.memory_space<vmem>>, vector<1x4x4xf32>
    %91 = vector.shape_cast %90 : vector<1x4x4xf32> to vector<4x4xf32>
    %92 = arith.addf %89, %91 : vector<4x4xf32>
    %cst_43 = arith.constant dense<0xFF800000> : vector<4xf32>
    %93 = vector.multi_reduction <maximumf>, %92, %cst_43 [1] : vector<4x4xf32> to vector<4xf32>
    %94 = vector.shape_cast %93 : vector<4xf32> to vector<4x1xf32>
    %95 = vector.broadcast %94 : vector<4x1xf32> to vector<4x4xf32>
    %96 = arith.subf %92, %95 : vector<4x4xf32>
    %97 = math.exp %96 : vector<4x4xf32>
    %cst_44 = arith.constant dense<0.000000e+00> : vector<4xf32>
    %98 = vector.multi_reduction <add>, %97, %cst_44 [1] : vector<4x4xf32> to vector<4xf32>
    %99 = vector.shape_cast %98 : vector<4xf32> to vector<4x1xf32>
    %cst_45 = arith.constant 1.000000e+00 : f32
    %100 = vector.broadcast %cst_45 : f32 to vector<4x1xf32>
    %101 = arith.divf %100, %99 : vector<4x1xf32>
    %102 = vector.broadcast %101 : vector<4x1xf32> to vector<4x4xf32>
    %103 = arith.mulf %97, %102 : vector<4x4xf32>
    %104 = arith.truncf %103 : vector<4x4xf32> to vector<4x4xbf16>
    %105 = arith.truncf %86 : vector<4x16xf32> to vector<4x16xbf16>
    %cst_46 = arith.constant dense<0.000000e+00> : vector<4x16xf32>
    %106 = tpu.matmul %104, %105, %cst_46 {dimension_numbers = #tpu.dot_dimension_numbers<[1], [0], [0], [1], [0, 0, 1, 1], [], []>} : vector<4x4xbf16>, vector<4x16xbf16>, vector<4x16xf32> -> vector<4x16xf32>
    %107 = vector.extract_strided_slice %60 {offsets = [0, 32], sizes = [4, 16], strides = [1, 1]} : vector<4x192xf32> to vector<4x16xf32>
    %108 = vector.extract_strided_slice %60 {offsets = [0, 96], sizes = [4, 16], strides = [1, 1]} : vector<4x192xf32> to vector<4x16xf32>
    %109 = vector.extract_strided_slice %60 {offsets = [0, 160], sizes = [4, 16], strides = [1, 1]} : vector<4x192xf32> to vector<4x16xf32>
    %110 = arith.truncf %107 : vector<4x16xf32> to vector<4x16xbf16>
    %111 = arith.truncf %108 : vector<4x16xf32> to vector<4x16xbf16>
    %cst_47 = arith.constant dense<0.000000e+00> : vector<4x4xf32>
    %112 = tpu.matmul %110, %111, %cst_47 {dimension_numbers = #tpu.dot_dimension_numbers<[1], [1], [0], [0], [0, 0, 1, 0], [], []>} : vector<4x16xbf16>, vector<4x16xbf16>, vector<4x4xf32> -> vector<4x4xf32>
    %c2 = arith.constant 2 : index
    %c0_48 = arith.constant 0 : index
    %c0_49 = arith.constant 0 : index
    %113 = vector.load %arg10[%c2, %c0_48, %c0_49] : memref<4x4x4xf32, #tpu.memory_space<vmem>>, vector<1x4x4xf32>
    %114 = vector.shape_cast %113 : vector<1x4x4xf32> to vector<4x4xf32>
    %115 = arith.addf %112, %114 : vector<4x4xf32>
    %cst_50 = arith.constant dense<0xFF800000> : vector<4xf32>
    %116 = vector.multi_reduction <maximumf>, %115, %cst_50 [1] : vector<4x4xf32> to vector<4xf32>
    %117 = vector.shape_cast %116 : vector<4xf32> to vector<4x1xf32>
    %118 = vector.broadcast %117 : vector<4x1xf32> to vector<4x4xf32>
    %119 = arith.subf %115, %118 : vector<4x4xf32>
    %120 = math.exp %119 : vector<4x4xf32>
    %cst_51 = arith.constant dense<0.000000e+00> : vector<4xf32>
    %121 = vector.multi_reduction <add>, %120, %cst_51 [1] : vector<4x4xf32> to vector<4xf32>
    %122 = vector.shape_cast %121 : vector<4xf32> to vector<4x1xf32>
    %cst_52 = arith.constant 1.000000e+00 : f32
    %123 = vector.broadcast %cst_52 : f32 to vector<4x1xf32>
    %124 = arith.divf %123, %122 : vector<4x1xf32>
    %125 = vector.broadcast %124 : vector<4x1xf32> to vector<4x4xf32>
    %126 = arith.mulf %120, %125 : vector<4x4xf32>
    %127 = arith.truncf %126 : vector<4x4xf32> to vector<4x4xbf16>
    %128 = arith.truncf %109 : vector<4x16xf32> to vector<4x16xbf16>
    %cst_53 = arith.constant dense<0.000000e+00> : vector<4x16xf32>
    %129 = tpu.matmul %127, %128, %cst_53 {dimension_numbers = #tpu.dot_dimension_numbers<[1], [0], [0], [1], [0, 0, 1, 1], [], []>} : vector<4x4xbf16>, vector<4x16xbf16>, vector<4x16xf32> -> vector<4x16xf32>
    %130 = vector.extract_strided_slice %60 {offsets = [0, 48], sizes = [4, 16], strides = [1, 1]} : vector<4x192xf32> to vector<4x16xf32>
    %131 = vector.extract_strided_slice %60 {offsets = [0, 112], sizes = [4, 16], strides = [1, 1]} : vector<4x192xf32> to vector<4x16xf32>
    %132 = vector.extract_strided_slice %60 {offsets = [0, 176], sizes = [4, 16], strides = [1, 1]} : vector<4x192xf32> to vector<4x16xf32>
    %133 = arith.truncf %130 : vector<4x16xf32> to vector<4x16xbf16>
    %134 = arith.truncf %131 : vector<4x16xf32> to vector<4x16xbf16>
    %cst_54 = arith.constant dense<0.000000e+00> : vector<4x4xf32>
    %135 = tpu.matmul %133, %134, %cst_54 {dimension_numbers = #tpu.dot_dimension_numbers<[1], [1], [0], [0], [0, 0, 1, 0], [], []>} : vector<4x16xbf16>, vector<4x16xbf16>, vector<4x4xf32> -> vector<4x4xf32>
    %c3 = arith.constant 3 : index
    %c0_55 = arith.constant 0 : index
    %c0_56 = arith.constant 0 : index
    %136 = vector.load %arg10[%c3, %c0_55, %c0_56] : memref<4x4x4xf32, #tpu.memory_space<vmem>>, vector<1x4x4xf32>
    %137 = vector.shape_cast %136 : vector<1x4x4xf32> to vector<4x4xf32>
    %138 = arith.addf %135, %137 : vector<4x4xf32>
    %cst_57 = arith.constant dense<0xFF800000> : vector<4xf32>
    %139 = vector.multi_reduction <maximumf>, %138, %cst_57 [1] : vector<4x4xf32> to vector<4xf32>
    %140 = vector.shape_cast %139 : vector<4xf32> to vector<4x1xf32>
    %141 = vector.broadcast %140 : vector<4x1xf32> to vector<4x4xf32>
    %142 = arith.subf %138, %141 : vector<4x4xf32>
    %143 = math.exp %142 : vector<4x4xf32>
    %cst_58 = arith.constant dense<0.000000e+00> : vector<4xf32>
    %144 = vector.multi_reduction <add>, %143, %cst_58 [1] : vector<4x4xf32> to vector<4xf32>
    %145 = vector.shape_cast %144 : vector<4xf32> to vector<4x1xf32>
    %cst_59 = arith.constant 1.000000e+00 : f32
    %146 = vector.broadcast %cst_59 : f32 to vector<4x1xf32>
    %147 = arith.divf %146, %145 : vector<4x1xf32>
    %148 = vector.broadcast %147 : vector<4x1xf32> to vector<4x4xf32>
    %149 = arith.mulf %143, %148 : vector<4x4xf32>
    %150 = arith.truncf %149 : vector<4x4xf32> to vector<4x4xbf16>
    %151 = arith.truncf %132 : vector<4x16xf32> to vector<4x16xbf16>
    %cst_60 = arith.constant dense<0.000000e+00> : vector<4x16xf32>
    %152 = tpu.matmul %150, %151, %cst_60 {dimension_numbers = #tpu.dot_dimension_numbers<[1], [0], [0], [1], [0, 0, 1, 1], [], []>} : vector<4x4xbf16>, vector<4x16xbf16>, vector<4x16xf32> -> vector<4x16xf32>
    %153 = tpu.concatenate %83, %106, %129, %152 in 1 : vector<4x16xf32>, vector<4x16xf32>, vector<4x16xf32>, vector<4x16xf32> -> vector<4x64xf32>
    %154 = arith.truncf %153 : vector<4x64xf32> to vector<4x64xbf16>
    %c0_61 = arith.constant 0 : index
    %c0_62 = arith.constant 0 : index
    %155 = vector.load %arg11[%c0_61, %c0_62] : memref<64x64xbf16, #tpu.memory_space<vmem>>, vector<64x64xbf16>
    %cst_63 = arith.constant dense<0.000000e+00> : vector<4x64xf32>
    %156 = tpu.matmul %154, %155, %cst_63 {dimension_numbers = #tpu.dot_dimension_numbers<[1], [0], [0], [1], [0, 0, 1, 1], [], []>} : vector<4x64xbf16>, vector<64x64xbf16>, vector<4x64xf32> -> vector<4x64xf32>
    %c0_64 = arith.constant 0 : index
    %c0_65 = arith.constant 0 : index
    %157 = vector.load %arg12[%c0_64, %c0_65] : memref<1x64xf32, #tpu.memory_space<vmem>>, vector<1x64xf32>
    %158 = vector.broadcast %157 : vector<1x64xf32> to vector<4x64xf32>
    %159 = arith.addf %156, %158 : vector<4x64xf32>
    %160 = arith.addf %1, %159 : vector<4x64xf32>
    %c0_66 = arith.constant 0 : index
    %c0_67 = arith.constant 0 : index
    %161 = vector.load %arg13[%c0_66, %c0_67] : memref<1x64xf32, #tpu.memory_space<vmem>>, vector<1x64xf32>
    %c0_68 = arith.constant 0 : index
    %c0_69 = arith.constant 0 : index
    %162 = vector.load %arg14[%c0_68, %c0_69] : memref<1x64xf32, #tpu.memory_space<vmem>>, vector<1x64xf32>
    %cst_70 = arith.constant dense<0.000000e+00> : vector<4xf32>
    %163 = vector.multi_reduction <add>, %160, %cst_70 [1] : vector<4x64xf32> to vector<4xf32>
    %164 = vector.shape_cast %163 : vector<4xf32> to vector<4x1xf32>
    %cst_71 = arith.constant 6.400000e+01 : f32
    %165 = vector.broadcast %cst_71 : f32 to vector<4x1xf32>
    %166 = arith.divf %164, %165 : vector<4x1xf32>
    %167 = vector.broadcast %166 : vector<4x1xf32> to vector<4x64xf32>
    %168 = arith.subf %160, %167 : vector<4x64xf32>
    %169 = arith.mulf %168, %168 : vector<4x64xf32>
    %cst_72 = arith.constant dense<0.000000e+00> : vector<4xf32>
    %170 = vector.multi_reduction <add>, %169, %cst_72 [1] : vector<4x64xf32> to vector<4xf32>
    %171 = vector.shape_cast %170 : vector<4xf32> to vector<4x1xf32>
    %cst_73 = arith.constant 6.400000e+01 : f32
    %172 = vector.broadcast %cst_73 : f32 to vector<4x1xf32>
    %173 = arith.divf %171, %172 : vector<4x1xf32>
    %cst_74 = arith.constant 9.99999974E-6 : f32
    %174 = vector.broadcast %cst_74 : f32 to vector<4x1xf32>
    %175 = arith.addf %173, %174 : vector<4x1xf32>
    %176 = math.rsqrt %175 : vector<4x1xf32>
    %177 = vector.broadcast %176 : vector<4x1xf32> to vector<4x64xf32>
    %178 = arith.mulf %168, %177 : vector<4x64xf32>
    %179 = vector.broadcast %161 : vector<1x64xf32> to vector<4x64xf32>
    %180 = arith.mulf %178, %179 : vector<4x64xf32>
    %181 = vector.broadcast %162 : vector<1x64xf32> to vector<4x64xf32>
    %182 = arith.addf %180, %181 : vector<4x64xf32>
    %183 = arith.truncf %182 : vector<4x64xf32> to vector<4x64xbf16>
    %c0_75 = arith.constant 0 : index
    %c0_76 = arith.constant 0 : index
    %184 = vector.load %arg15[%c0_75, %c0_76] : memref<64x256xbf16, #tpu.memory_space<vmem>>, vector<64x256xbf16>
    %cst_77 = arith.constant dense<0.000000e+00> : vector<4x256xf32>
    %185 = tpu.matmul %183, %184, %cst_77 {dimension_numbers = #tpu.dot_dimension_numbers<[1], [0], [0], [1], [0, 0, 1, 1], [], []>} : vector<4x64xbf16>, vector<64x256xbf16>, vector<4x256xf32> -> vector<4x256xf32>
    %c0_78 = arith.constant 0 : index
    %c0_79 = arith.constant 0 : index
    %186 = vector.load %arg16[%c0_78, %c0_79] : memref<1x256xf32, #tpu.memory_space<vmem>>, vector<1x256xf32>
    %187 = vector.broadcast %186 : vector<1x256xf32> to vector<4x256xf32>
    %188 = arith.addf %185, %187 : vector<4x256xf32>
    %cst_80 = arith.constant 5.000000e-01 : f32
    %189 = vector.broadcast %cst_80 : f32 to vector<4x256xf32>
    %190 = arith.mulf %189, %188 : vector<4x256xf32>
    %cst_81 = arith.constant 0.707106769 : f32
    %191 = vector.broadcast %cst_81 : f32 to vector<4x256xf32>
    %192 = arith.mulf %188, %191 : vector<4x256xf32>
    %193 = math.absf %192 : vector<4x256xf32>
    %cst_82 = arith.constant 0.327591091 : f32
    %194 = vector.broadcast %cst_82 : f32 to vector<4x256xf32>
    %195 = arith.mulf %194, %193 : vector<4x256xf32>
    %cst_83 = arith.constant 1.000000e+00 : f32
    %196 = vector.broadcast %cst_83 : f32 to vector<4x256xf32>
    %197 = arith.addf %196, %195 : vector<4x256xf32>
    %cst_84 = arith.constant 1.000000e+00 : f32
    %198 = vector.broadcast %cst_84 : f32 to vector<4x256xf32>
    %199 = arith.divf %198, %197 : vector<4x256xf32>
    %cst_85 = arith.constant 1.06140542 : f32
    %200 = vector.broadcast %cst_85 : f32 to vector<4x256xf32>
    %201 = arith.mulf %200, %199 : vector<4x256xf32>
    %cst_86 = arith.constant -1.45315206 : f32
    %202 = vector.broadcast %cst_86 : f32 to vector<4x256xf32>
    %203 = arith.addf %201, %202 : vector<4x256xf32>
    %204 = arith.mulf %203, %199 : vector<4x256xf32>
    %cst_87 = arith.constant 1.42141378 : f32
    %205 = vector.broadcast %cst_87 : f32 to vector<4x256xf32>
    %206 = arith.addf %204, %205 : vector<4x256xf32>
    %207 = arith.mulf %206, %199 : vector<4x256xf32>
    %cst_88 = arith.constant -0.284496725 : f32
    %208 = vector.broadcast %cst_88 : f32 to vector<4x256xf32>
    %209 = arith.addf %207, %208 : vector<4x256xf32>
    %210 = arith.mulf %209, %199 : vector<4x256xf32>
    %cst_89 = arith.constant 0.254829586 : f32
    %211 = vector.broadcast %cst_89 : f32 to vector<4x256xf32>
    %212 = arith.addf %210, %211 : vector<4x256xf32>
    %213 = arith.mulf %212, %199 : vector<4x256xf32>
    %cst_90 = arith.constant 0.000000e+00 : f32
    %214 = vector.broadcast %cst_90 : f32 to vector<4x256xf32>
    %215 = arith.subf %214, %193 : vector<4x256xf32>
    %216 = arith.mulf %215, %193 : vector<4x256xf32>
    %217 = math.exp %216 : vector<4x256xf32>
    %218 = arith.mulf %213, %217 : vector<4x256xf32>
    %cst_91 = arith.constant 1.000000e+00 : f32
    %219 = vector.broadcast %cst_91 : f32 to vector<4x256xf32>
    %220 = arith.subf %219, %218 : vector<4x256xf32>
    %cst_92 = arith.constant 0.000000e+00 : f32
    %221 = vector.broadcast %cst_92 : f32 to vector<4x256xf32>
    %222 = arith.cmpf olt, %192, %221 : vector<4x256xf32>
    %cst_93 = arith.constant 0.000000e+00 : f32
    %223 = vector.broadcast %cst_93 : f32 to vector<4x256xf32>
    %224 = arith.subf %223, %220 : vector<4x256xf32>
    %225 = arith.select %222, %224, %220 : vector<4x256xi1>, vector<4x256xf32>
    %cst_94 = arith.constant 1.000000e+00 : f32
    %226 = vector.broadcast %cst_94 : f32 to vector<4x256xf32>
    %227 = arith.addf %226, %225 : vector<4x256xf32>
    %228 = arith.mulf %190, %227 : vector<4x256xf32>
    %229 = arith.truncf %228 : vector<4x256xf32> to vector<4x256xbf16>
    %c0_95 = arith.constant 0 : index
    %c0_96 = arith.constant 0 : index
    %230 = vector.load %arg17[%c0_95, %c0_96] : memref<256x64xbf16, #tpu.memory_space<vmem>>, vector<256x64xbf16>
    %cst_97 = arith.constant dense<0.000000e+00> : vector<4x64xf32>
    %231 = tpu.matmul %229, %230, %cst_97 {dimension_numbers = #tpu.dot_dimension_numbers<[1], [0], [0], [1], [0, 0, 1, 1], [], []>} : vector<4x256xbf16>, vector<256x64xbf16>, vector<4x64xf32> -> vector<4x64xf32>
    %c0_98 = arith.constant 0 : index
    %c0_99 = arith.constant 0 : index
    %232 = vector.load %arg18[%c0_98, %c0_99] : memref<1x64xf32, #tpu.memory_space<vmem>>, vector<1x64xf32>
    %233 = vector.broadcast %232 : vector<1x64xf32> to vector<4x64xf32>
    %234 = arith.addf %231, %233 : vector<4x64xf32>
    %235 = arith.addf %160, %234 : vector<4x64xf32>
    %c0_100 = arith.constant 0 : index
    %c0_101 = arith.constant 0 : index
    %236 = vector.load %arg19[%c0_100, %c0_101] : memref<1x64xf32, #tpu.memory_space<vmem>>, vector<1x64xf32>
    %c0_102 = arith.constant 0 : index
    %c0_103 = arith.constant 0 : index
    %237 = vector.load %arg20[%c0_102, %c0_103] : memref<1x64xf32, #tpu.memory_space<vmem>>, vector<1x64xf32>
    %cst_104 = arith.constant dense<0.000000e+00> : vector<4xf32>
    %238 = vector.multi_reduction <add>, %235, %cst_104 [1] : vector<4x64xf32> to vector<4xf32>
    %239 = vector.shape_cast %238 : vector<4xf32> to vector<4x1xf32>
    %cst_105 = arith.constant 6.400000e+01 : f32
    %240 = vector.broadcast %cst_105 : f32 to vector<4x1xf32>
    %241 = arith.divf %239, %240 : vector<4x1xf32>
    %242 = vector.broadcast %241 : vector<4x1xf32> to vector<4x64xf32>
    %243 = arith.subf %235, %242 : vector<4x64xf32>
    %244 = arith.mulf %243, %243 : vector<4x64xf32>
    %cst_106 = arith.constant dense<0.000000e+00> : vector<4xf32>
    %245 = vector.multi_reduction <add>, %244, %cst_106 [1] : vector<4x64xf32> to vector<4xf32>
    %246 = vector.shape_cast %245 : vector<4xf32> to vector<4x1xf32>
    %cst_107 = arith.constant 6.400000e+01 : f32
    %247 = vector.broadcast %cst_107 : f32 to vector<4x1xf32>
    %248 = arith.divf %246, %247 : vector<4x1xf32>
    %cst_108 = arith.constant 9.99999974E-6 : f32
    %249 = vector.broadcast %cst_108 : f32 to vector<4x1xf32>
    %250 = arith.addf %248, %249 : vector<4x1xf32>
    %251 = math.rsqrt %250 : vector<4x1xf32>
    %252 = vector.broadcast %251 : vector<4x1xf32> to vector<4x64xf32>
    %253 = arith.mulf %243, %252 : vector<4x64xf32>
    %254 = vector.broadcast %236 : vector<1x64xf32> to vector<4x64xf32>
    %255 = arith.mulf %253, %254 : vector<4x64xf32>
    %256 = vector.broadcast %237 : vector<1x64xf32> to vector<4x64xf32>
    %257 = arith.addf %255, %256 : vector<4x64xf32>
    %258 = arith.truncf %257 : vector<4x64xf32> to vector<4x64xbf16>
    %c0_109 = arith.constant 0 : index
    %c0_110 = arith.constant 0 : index
    %259 = vector.load %arg21[%c0_109, %c0_110] : memref<64x192xbf16, #tpu.memory_space<vmem>>, vector<64x192xbf16>
    %cst_111 = arith.constant dense<0.000000e+00> : vector<4x192xf32>
    %260 = tpu.matmul %258, %259, %cst_111 {dimension_numbers = #tpu.dot_dimension_numbers<[1], [0], [0], [1], [0, 0, 1, 1], [], []>} : vector<4x64xbf16>, vector<64x192xbf16>, vector<4x192xf32> -> vector<4x192xf32>
    %c0_112 = arith.constant 0 : index
    %c0_113 = arith.constant 0 : index
    %261 = vector.load %arg22[%c0_112, %c0_113] : memref<1x192xf32, #tpu.memory_space<vmem>>, vector<1x192xf32>
    %262 = vector.broadcast %261 : vector<1x192xf32> to vector<4x192xf32>
    %263 = arith.addf %260, %262 : vector<4x192xf32>
    %264 = vector.extract_strided_slice %263 {offsets = [0, 0], sizes = [4, 16], strides = [1, 1]} : vector<4x192xf32> to vector<4x16xf32>
    %265 = vector.extract_strided_slice %263 {offsets = [0, 64], sizes = [4, 16], strides = [1, 1]} : vector<4x192xf32> to vector<4x16xf32>
    %266 = vector.extract_strided_slice %263 {offsets = [0, 128], sizes = [4, 16], strides = [1, 1]} : vector<4x192xf32> to vector<4x16xf32>
    %267 = arith.truncf %264 : vector<4x16xf32> to vector<4x16xbf16>
    %268 = arith.truncf %265 : vector<4x16xf32> to vector<4x16xbf16>
    %cst_114 = arith.constant dense<0.000000e+00> : vector<4x4xf32>
    %269 = tpu.matmul %267, %268, %cst_114 {dimension_numbers = #tpu.dot_dimension_numbers<[1], [1], [0], [0], [0, 0, 1, 0], [], []>} : vector<4x16xbf16>, vector<4x16xbf16>, vector<4x4xf32> -> vector<4x4xf32>
    %c0_115 = arith.constant 0 : index
    %c0_116 = arith.constant 0 : index
    %c0_117 = arith.constant 0 : index
    %270 = vector.load %arg23[%c0_115, %c0_116, %c0_117] : memref<4x4x4xf32, #tpu.memory_space<vmem>>, vector<1x4x4xf32>
    %271 = vector.shape_cast %270 : vector<1x4x4xf32> to vector<4x4xf32>
    %272 = arith.addf %269, %271 : vector<4x4xf32>
    %cst_118 = arith.constant dense<0xFF800000> : vector<4xf32>
    %273 = vector.multi_reduction <maximumf>, %272, %cst_118 [1] : vector<4x4xf32> to vector<4xf32>
    %274 = vector.shape_cast %273 : vector<4xf32> to vector<4x1xf32>
    %275 = vector.broadcast %274 : vector<4x1xf32> to vector<4x4xf32>
    %276 = arith.subf %272, %275 : vector<4x4xf32>
    %277 = math.exp %276 : vector<4x4xf32>
    %cst_119 = arith.constant dense<0.000000e+00> : vector<4xf32>
    %278 = vector.multi_reduction <add>, %277, %cst_119 [1] : vector<4x4xf32> to vector<4xf32>
    %279 = vector.shape_cast %278 : vector<4xf32> to vector<4x1xf32>
    %cst_120 = arith.constant 1.000000e+00 : f32
    %280 = vector.broadcast %cst_120 : f32 to vector<4x1xf32>
    %281 = arith.divf %280, %279 : vector<4x1xf32>
    %282 = vector.broadcast %281 : vector<4x1xf32> to vector<4x4xf32>
    %283 = arith.mulf %277, %282 : vector<4x4xf32>
    %284 = arith.truncf %283 : vector<4x4xf32> to vector<4x4xbf16>
    %285 = arith.truncf %266 : vector<4x16xf32> to vector<4x16xbf16>
    %cst_121 = arith.constant dense<0.000000e+00> : vector<4x16xf32>
    %286 = tpu.matmul %284, %285, %cst_121 {dimension_numbers = #tpu.dot_dimension_numbers<[1], [0], [0], [1], [0, 0, 1, 1], [], []>} : vector<4x4xbf16>, vector<4x16xbf16>, vector<4x16xf32> -> vector<4x16xf32>
    %287 = vector.extract_strided_slice %263 {offsets = [0, 16], sizes = [4, 16], strides = [1, 1]} : vector<4x192xf32> to vector<4x16xf32>
    %288 = vector.extract_strided_slice %263 {offsets = [0, 80], sizes = [4, 16], strides = [1, 1]} : vector<4x192xf32> to vector<4x16xf32>
    %289 = vector.extract_strided_slice %263 {offsets = [0, 144], sizes = [4, 16], strides = [1, 1]} : vector<4x192xf32> to vector<4x16xf32>
    %290 = arith.truncf %287 : vector<4x16xf32> to vector<4x16xbf16>
    %291 = arith.truncf %288 : vector<4x16xf32> to vector<4x16xbf16>
    %cst_122 = arith.constant dense<0.000000e+00> : vector<4x4xf32>
    %292 = tpu.matmul %290, %291, %cst_122 {dimension_numbers = #tpu.dot_dimension_numbers<[1], [1], [0], [0], [0, 0, 1, 0], [], []>} : vector<4x16xbf16>, vector<4x16xbf16>, vector<4x4xf32> -> vector<4x4xf32>
    %c1_123 = arith.constant 1 : index
    %c0_124 = arith.constant 0 : index
    %c0_125 = arith.constant 0 : index
    %293 = vector.load %arg23[%c1_123, %c0_124, %c0_125] : memref<4x4x4xf32, #tpu.memory_space<vmem>>, vector<1x4x4xf32>
    %294 = vector.shape_cast %293 : vector<1x4x4xf32> to vector<4x4xf32>
    %295 = arith.addf %292, %294 : vector<4x4xf32>
    %cst_126 = arith.constant dense<0xFF800000> : vector<4xf32>
    %296 = vector.multi_reduction <maximumf>, %295, %cst_126 [1] : vector<4x4xf32> to vector<4xf32>
    %297 = vector.shape_cast %296 : vector<4xf32> to vector<4x1xf32>
    %298 = vector.broadcast %297 : vector<4x1xf32> to vector<4x4xf32>
    %299 = arith.subf %295, %298 : vector<4x4xf32>
    %300 = math.exp %299 : vector<4x4xf32>
    %cst_127 = arith.constant dense<0.000000e+00> : vector<4xf32>
    %301 = vector.multi_reduction <add>, %300, %cst_127 [1] : vector<4x4xf32> to vector<4xf32>
    %302 = vector.shape_cast %301 : vector<4xf32> to vector<4x1xf32>
    %cst_128 = arith.constant 1.000000e+00 : f32
    %303 = vector.broadcast %cst_128 : f32 to vector<4x1xf32>
    %304 = arith.divf %303, %302 : vector<4x1xf32>
    %305 = vector.broadcast %304 : vector<4x1xf32> to vector<4x4xf32>
    %306 = arith.mulf %300, %305 : vector<4x4xf32>
    %307 = arith.truncf %306 : vector<4x4xf32> to vector<4x4xbf16>
    %308 = arith.truncf %289 : vector<4x16xf32> to vector<4x16xbf16>
    %cst_129 = arith.constant dense<0.000000e+00> : vector<4x16xf32>
    %309 = tpu.matmul %307, %308, %cst_129 {dimension_numbers = #tpu.dot_dimension_numbers<[1], [0], [0], [1], [0, 0, 1, 1], [], []>} : vector<4x4xbf16>, vector<4x16xbf16>, vector<4x16xf32> -> vector<4x16xf32>
    %310 = vector.extract_strided_slice %263 {offsets = [0, 32], sizes = [4, 16], strides = [1, 1]} : vector<4x192xf32> to vector<4x16xf32>
    %311 = vector.extract_strided_slice %263 {offsets = [0, 96], sizes = [4, 16], strides = [1, 1]} : vector<4x192xf32> to vector<4x16xf32>
    %312 = vector.extract_strided_slice %263 {offsets = [0, 160], sizes = [4, 16], strides = [1, 1]} : vector<4x192xf32> to vector<4x16xf32>
    %313 = arith.truncf %310 : vector<4x16xf32> to vector<4x16xbf16>
    %314 = arith.truncf %311 : vector<4x16xf32> to vector<4x16xbf16>
    %cst_130 = arith.constant dense<0.000000e+00> : vector<4x4xf32>
    %315 = tpu.matmul %313, %314, %cst_130 {dimension_numbers = #tpu.dot_dimension_numbers<[1], [1], [0], [0], [0, 0, 1, 0], [], []>} : vector<4x16xbf16>, vector<4x16xbf16>, vector<4x4xf32> -> vector<4x4xf32>
    %c2_131 = arith.constant 2 : index
    %c0_132 = arith.constant 0 : index
    %c0_133 = arith.constant 0 : index
    %316 = vector.load %arg23[%c2_131, %c0_132, %c0_133] : memref<4x4x4xf32, #tpu.memory_space<vmem>>, vector<1x4x4xf32>
    %317 = vector.shape_cast %316 : vector<1x4x4xf32> to vector<4x4xf32>
    %318 = arith.addf %315, %317 : vector<4x4xf32>
    %cst_134 = arith.constant dense<0xFF800000> : vector<4xf32>
    %319 = vector.multi_reduction <maximumf>, %318, %cst_134 [1] : vector<4x4xf32> to vector<4xf32>
    %320 = vector.shape_cast %319 : vector<4xf32> to vector<4x1xf32>
    %321 = vector.broadcast %320 : vector<4x1xf32> to vector<4x4xf32>
    %322 = arith.subf %318, %321 : vector<4x4xf32>
    %323 = math.exp %322 : vector<4x4xf32>
    %cst_135 = arith.constant dense<0.000000e+00> : vector<4xf32>
    %324 = vector.multi_reduction <add>, %323, %cst_135 [1] : vector<4x4xf32> to vector<4xf32>
    %325 = vector.shape_cast %324 : vector<4xf32> to vector<4x1xf32>
    %cst_136 = arith.constant 1.000000e+00 : f32
    %326 = vector.broadcast %cst_136 : f32 to vector<4x1xf32>
    %327 = arith.divf %326, %325 : vector<4x1xf32>
    %328 = vector.broadcast %327 : vector<4x1xf32> to vector<4x4xf32>
    %329 = arith.mulf %323, %328 : vector<4x4xf32>
    %330 = arith.truncf %329 : vector<4x4xf32> to vector<4x4xbf16>
    %331 = arith.truncf %312 : vector<4x16xf32> to vector<4x16xbf16>
    %cst_137 = arith.constant dense<0.000000e+00> : vector<4x16xf32>
    %332 = tpu.matmul %330, %331, %cst_137 {dimension_numbers = #tpu.dot_dimension_numbers<[1], [0], [0], [1], [0, 0, 1, 1], [], []>} : vector<4x4xbf16>, vector<4x16xbf16>, vector<4x16xf32> -> vector<4x16xf32>
    %333 = vector.extract_strided_slice %263 {offsets = [0, 48], sizes = [4, 16], strides = [1, 1]} : vector<4x192xf32> to vector<4x16xf32>
    %334 = vector.extract_strided_slice %263 {offsets = [0, 112], sizes = [4, 16], strides = [1, 1]} : vector<4x192xf32> to vector<4x16xf32>
    %335 = vector.extract_strided_slice %263 {offsets = [0, 176], sizes = [4, 16], strides = [1, 1]} : vector<4x192xf32> to vector<4x16xf32>
    %336 = arith.truncf %333 : vector<4x16xf32> to vector<4x16xbf16>
    %337 = arith.truncf %334 : vector<4x16xf32> to vector<4x16xbf16>
    %cst_138 = arith.constant dense<0.000000e+00> : vector<4x4xf32>
    %338 = tpu.matmul %336, %337, %cst_138 {dimension_numbers = #tpu.dot_dimension_numbers<[1], [1], [0], [0], [0, 0, 1, 0], [], []>} : vector<4x16xbf16>, vector<4x16xbf16>, vector<4x4xf32> -> vector<4x4xf32>
    %c3_139 = arith.constant 3 : index
    %c0_140 = arith.constant 0 : index
    %c0_141 = arith.constant 0 : index
    %339 = vector.load %arg23[%c3_139, %c0_140, %c0_141] : memref<4x4x4xf32, #tpu.memory_space<vmem>>, vector<1x4x4xf32>
    %340 = vector.shape_cast %339 : vector<1x4x4xf32> to vector<4x4xf32>
    %341 = arith.addf %338, %340 : vector<4x4xf32>
    %cst_142 = arith.constant dense<0xFF800000> : vector<4xf32>
    %342 = vector.multi_reduction <maximumf>, %341, %cst_142 [1] : vector<4x4xf32> to vector<4xf32>
    %343 = vector.shape_cast %342 : vector<4xf32> to vector<4x1xf32>
    %344 = vector.broadcast %343 : vector<4x1xf32> to vector<4x4xf32>
    %345 = arith.subf %341, %344 : vector<4x4xf32>
    %346 = math.exp %345 : vector<4x4xf32>
    %cst_143 = arith.constant dense<0.000000e+00> : vector<4xf32>
    %347 = vector.multi_reduction <add>, %346, %cst_143 [1] : vector<4x4xf32> to vector<4xf32>
    %348 = vector.shape_cast %347 : vector<4xf32> to vector<4x1xf32>
    %cst_144 = arith.constant 1.000000e+00 : f32
    %349 = vector.broadcast %cst_144 : f32 to vector<4x1xf32>
    %350 = arith.divf %349, %348 : vector<4x1xf32>
    %351 = vector.broadcast %350 : vector<4x1xf32> to vector<4x4xf32>
    %352 = arith.mulf %346, %351 : vector<4x4xf32>
    %353 = arith.truncf %352 : vector<4x4xf32> to vector<4x4xbf16>
    %354 = arith.truncf %335 : vector<4x16xf32> to vector<4x16xbf16>
    %cst_145 = arith.constant dense<0.000000e+00> : vector<4x16xf32>
    %355 = tpu.matmul %353, %354, %cst_145 {dimension_numbers = #tpu.dot_dimension_numbers<[1], [0], [0], [1], [0, 0, 1, 1], [], []>} : vector<4x4xbf16>, vector<4x16xbf16>, vector<4x16xf32> -> vector<4x16xf32>
    %356 = tpu.concatenate %286, %309, %332, %355 in 1 : vector<4x16xf32>, vector<4x16xf32>, vector<4x16xf32>, vector<4x16xf32> -> vector<4x64xf32>
    %357 = arith.truncf %356 : vector<4x64xf32> to vector<4x64xbf16>
    %c0_146 = arith.constant 0 : index
    %c0_147 = arith.constant 0 : index
    %358 = vector.load %arg24[%c0_146, %c0_147] : memref<64x64xbf16, #tpu.memory_space<vmem>>, vector<64x64xbf16>
    %cst_148 = arith.constant dense<0.000000e+00> : vector<4x64xf32>
    %359 = tpu.matmul %357, %358, %cst_148 {dimension_numbers = #tpu.dot_dimension_numbers<[1], [0], [0], [1], [0, 0, 1, 1], [], []>} : vector<4x64xbf16>, vector<64x64xbf16>, vector<4x64xf32> -> vector<4x64xf32>
    %c0_149 = arith.constant 0 : index
    %c0_150 = arith.constant 0 : index
    %360 = vector.load %arg25[%c0_149, %c0_150] : memref<1x64xf32, #tpu.memory_space<vmem>>, vector<1x64xf32>
    %361 = vector.broadcast %360 : vector<1x64xf32> to vector<4x64xf32>
    %362 = arith.addf %359, %361 : vector<4x64xf32>
    %363 = arith.addf %235, %362 : vector<4x64xf32>
    %c0_151 = arith.constant 0 : index
    %c0_152 = arith.constant 0 : index
    %364 = vector.load %arg26[%c0_151, %c0_152] : memref<1x64xf32, #tpu.memory_space<vmem>>, vector<1x64xf32>
    %c0_153 = arith.constant 0 : index
    %c0_154 = arith.constant 0 : index
    %365 = vector.load %arg27[%c0_153, %c0_154] : memref<1x64xf32, #tpu.memory_space<vmem>>, vector<1x64xf32>
    %cst_155 = arith.constant dense<0.000000e+00> : vector<4xf32>
    %366 = vector.multi_reduction <add>, %363, %cst_155 [1] : vector<4x64xf32> to vector<4xf32>
    %367 = vector.shape_cast %366 : vector<4xf32> to vector<4x1xf32>
    %cst_156 = arith.constant 6.400000e+01 : f32
    %368 = vector.broadcast %cst_156 : f32 to vector<4x1xf32>
    %369 = arith.divf %367, %368 : vector<4x1xf32>
    %370 = vector.broadcast %369 : vector<4x1xf32> to vector<4x64xf32>
    %371 = arith.subf %363, %370 : vector<4x64xf32>
    %372 = arith.mulf %371, %371 : vector<4x64xf32>
    %cst_157 = arith.constant dense<0.000000e+00> : vector<4xf32>
    %373 = vector.multi_reduction <add>, %372, %cst_157 [1] : vector<4x64xf32> to vector<4xf32>
    %374 = vector.shape_cast %373 : vector<4xf32> to vector<4x1xf32>
    %cst_158 = arith.constant 6.400000e+01 : f32
    %375 = vector.broadcast %cst_158 : f32 to vector<4x1xf32>
    %376 = arith.divf %374, %375 : vector<4x1xf32>
    %cst_159 = arith.constant 9.99999974E-6 : f32
    %377 = vector.broadcast %cst_159 : f32 to vector<4x1xf32>
    %378 = arith.addf %376, %377 : vector<4x1xf32>
    %379 = math.rsqrt %378 : vector<4x1xf32>
    %380 = vector.broadcast %379 : vector<4x1xf32> to vector<4x64xf32>
    %381 = arith.mulf %371, %380 : vector<4x64xf32>
    %382 = vector.broadcast %364 : vector<1x64xf32> to vector<4x64xf32>
    %383 = arith.mulf %381, %382 : vector<4x64xf32>
    %384 = vector.broadcast %365 : vector<1x64xf32> to vector<4x64xf32>
    %385 = arith.addf %383, %384 : vector<4x64xf32>
    %386 = arith.truncf %385 : vector<4x64xf32> to vector<4x64xbf16>
    %c0_160 = arith.constant 0 : index
    %c0_161 = arith.constant 0 : index
    %387 = vector.load %arg28[%c0_160, %c0_161] : memref<64x256xbf16, #tpu.memory_space<vmem>>, vector<64x256xbf16>
    %cst_162 = arith.constant dense<0.000000e+00> : vector<4x256xf32>
    %388 = tpu.matmul %386, %387, %cst_162 {dimension_numbers = #tpu.dot_dimension_numbers<[1], [0], [0], [1], [0, 0, 1, 1], [], []>} : vector<4x64xbf16>, vector<64x256xbf16>, vector<4x256xf32> -> vector<4x256xf32>
    %c0_163 = arith.constant 0 : index
    %c0_164 = arith.constant 0 : index
    %389 = vector.load %arg29[%c0_163, %c0_164] : memref<1x256xf32, #tpu.memory_space<vmem>>, vector<1x256xf32>
    %390 = vector.broadcast %389 : vector<1x256xf32> to vector<4x256xf32>
    %391 = arith.addf %388, %390 : vector<4x256xf32>
    %cst_165 = arith.constant 5.000000e-01 : f32
    %392 = vector.broadcast %cst_165 : f32 to vector<4x256xf32>
    %393 = arith.mulf %392, %391 : vector<4x256xf32>
    %cst_166 = arith.constant 0.707106769 : f32
    %394 = vector.broadcast %cst_166 : f32 to vector<4x256xf32>
    %395 = arith.mulf %391, %394 : vector<4x256xf32>
    %396 = math.absf %395 : vector<4x256xf32>
    %cst_167 = arith.constant 0.327591091 : f32
    %397 = vector.broadcast %cst_167 : f32 to vector<4x256xf32>
    %398 = arith.mulf %397, %396 : vector<4x256xf32>
    %cst_168 = arith.constant 1.000000e+00 : f32
    %399 = vector.broadcast %cst_168 : f32 to vector<4x256xf32>
    %400 = arith.addf %399, %398 : vector<4x256xf32>
    %cst_169 = arith.constant 1.000000e+00 : f32
    %401 = vector.broadcast %cst_169 : f32 to vector<4x256xf32>
    %402 = arith.divf %401, %400 : vector<4x256xf32>
    %cst_170 = arith.constant 1.06140542 : f32
    %403 = vector.broadcast %cst_170 : f32 to vector<4x256xf32>
    %404 = arith.mulf %403, %402 : vector<4x256xf32>
    %cst_171 = arith.constant -1.45315206 : f32
    %405 = vector.broadcast %cst_171 : f32 to vector<4x256xf32>
    %406 = arith.addf %404, %405 : vector<4x256xf32>
    %407 = arith.mulf %406, %402 : vector<4x256xf32>
    %cst_172 = arith.constant 1.42141378 : f32
    %408 = vector.broadcast %cst_172 : f32 to vector<4x256xf32>
    %409 = arith.addf %407, %408 : vector<4x256xf32>
    %410 = arith.mulf %409, %402 : vector<4x256xf32>
    %cst_173 = arith.constant -0.284496725 : f32
    %411 = vector.broadcast %cst_173 : f32 to vector<4x256xf32>
    %412 = arith.addf %410, %411 : vector<4x256xf32>
    %413 = arith.mulf %412, %402 : vector<4x256xf32>
    %cst_174 = arith.constant 0.254829586 : f32
    %414 = vector.broadcast %cst_174 : f32 to vector<4x256xf32>
    %415 = arith.addf %413, %414 : vector<4x256xf32>
    %416 = arith.mulf %415, %402 : vector<4x256xf32>
    %cst_175 = arith.constant 0.000000e+00 : f32
    %417 = vector.broadcast %cst_175 : f32 to vector<4x256xf32>
    %418 = arith.subf %417, %396 : vector<4x256xf32>
    %419 = arith.mulf %418, %396 : vector<4x256xf32>
    %420 = math.exp %419 : vector<4x256xf32>
    %421 = arith.mulf %416, %420 : vector<4x256xf32>
    %cst_176 = arith.constant 1.000000e+00 : f32
    %422 = vector.broadcast %cst_176 : f32 to vector<4x256xf32>
    %423 = arith.subf %422, %421 : vector<4x256xf32>
    %cst_177 = arith.constant 0.000000e+00 : f32
    %424 = vector.broadcast %cst_177 : f32 to vector<4x256xf32>
    %425 = arith.cmpf olt, %395, %424 : vector<4x256xf32>
    %cst_178 = arith.constant 0.000000e+00 : f32
    %426 = vector.broadcast %cst_178 : f32 to vector<4x256xf32>
    %427 = arith.subf %426, %423 : vector<4x256xf32>
    %428 = arith.select %425, %427, %423 : vector<4x256xi1>, vector<4x256xf32>
    %cst_179 = arith.constant 1.000000e+00 : f32
    %429 = vector.broadcast %cst_179 : f32 to vector<4x256xf32>
    %430 = arith.addf %429, %428 : vector<4x256xf32>
    %431 = arith.mulf %393, %430 : vector<4x256xf32>
    %432 = arith.truncf %431 : vector<4x256xf32> to vector<4x256xbf16>
    %c0_180 = arith.constant 0 : index
    %c0_181 = arith.constant 0 : index
    %433 = vector.load %arg30[%c0_180, %c0_181] : memref<256x64xbf16, #tpu.memory_space<vmem>>, vector<256x64xbf16>
    %cst_182 = arith.constant dense<0.000000e+00> : vector<4x64xf32>
    %434 = tpu.matmul %432, %433, %cst_182 {dimension_numbers = #tpu.dot_dimension_numbers<[1], [0], [0], [1], [0, 0, 1, 1], [], []>} : vector<4x256xbf16>, vector<256x64xbf16>, vector<4x64xf32> -> vector<4x64xf32>
    %c0_183 = arith.constant 0 : index
    %c0_184 = arith.constant 0 : index
    %435 = vector.load %arg31[%c0_183, %c0_184] : memref<1x64xf32, #tpu.memory_space<vmem>>, vector<1x64xf32>
    %436 = vector.broadcast %435 : vector<1x64xf32> to vector<4x64xf32>
    %437 = arith.addf %434, %436 : vector<4x64xf32>
    %438 = arith.addf %363, %437 : vector<4x64xf32>
    %439 = arith.negf %438 : vector<4x64xf32>
    %440 = math.exp %439 : vector<4x64xf32>
    %cst_185 = arith.constant 1.000000e+00 : f32
    %441 = vector.broadcast %cst_185 : f32 to vector<4x64xf32>
    %442 = arith.addf %441, %440 : vector<4x64xf32>
    %443 = arith.divf %441, %442 : vector<4x64xf32>
    %444 = math.tanh %438 : vector<4x64xf32>
    %c0_186 = arith.constant 0 : index
    %c0_187 = arith.constant 0 : index
    %c0_188 = arith.constant 0 : index
    %445 = vector.load %arg3[%c0_186, %c0_187, %c0_188] : memref<1x4x64xf32, #tpu.memory_space<vmem>>, vector<1x4x64xf32>
    %446 = vector.shape_cast %445 : vector<1x4x64xf32> to vector<4x64xf32>
    %447 = arith.addf %446, %444 : vector<4x64xf32>
    %448 = arith.mulf %443, %447 : vector<4x64xf32>
    %449 = math.tanh %448 : vector<4x64xf32>
    %450 = arith.mulf %443, %449 : vector<4x64xf32>
    %c0_189 = arith.constant 0 : index
    %c0_190 = arith.constant 0 : index
    %c0_191 = arith.constant 0 : index
    %451 = vector.load %arg36[%c0_189, %c0_190, %c0_191] : memref<1x4x64xf32, #tpu.memory_space<vmem>>, vector<1x4x64xf32>
    %452 = vector.shape_cast %451 : vector<1x4x64xf32> to vector<4x64xf32>
    %453 = vector.shape_cast %450 : vector<4x64xf32> to vector<1x4x64xf32>
    tpu.vector_store %arg36[%c0_189, %c0_190, %c0_191], %453 {strides = array<i32>} : memref<1x4x64xf32, #tpu.memory_space<vmem>>, vector<1x4x64xf32>,
    %c0_192 = arith.constant 0 : index
    %c0_193 = arith.constant 0 : index
    %c0_194 = arith.constant 0 : index
    %454 = vector.load %arg37[%c0_192, %c0_193, %c0_194] : memref<1x4x64xf32, #tpu.memory_space<vmem>>, vector<1x4x64xf32>
    %455 = vector.shape_cast %454 : vector<1x4x64xf32> to vector<4x64xf32>
    %456 = vector.shape_cast %448 : vector<4x64xf32> to vector<1x4x64xf32>
    tpu.vector_store %arg37[%c0_192, %c0_193, %c0_194], %456 {strides = array<i32>} : memref<1x4x64xf32, #tpu.memory_space<vmem>>, vector<1x4x64xf32>,
    %c0_195 = arith.constant 0 : index
    %c0_196 = arith.constant 0 : index
    %457 = vector.load %arg32[%c0_195, %c0_196] : memref<4x4xf32, #tpu.memory_space<vmem>>, vector<4x4xf32>
    %cst_197 = arith.constant dense<0.000000e+00> : vector<4x64xf32>
    %458 = tpu.matmul %457, %450, %cst_197 {dimension_numbers = #tpu.dot_dimension_numbers<[1], [0], [0], [1], [0, 0, 1, 1], [], []>} : vector<4x4xf32>, vector<4x64xf32>, vector<4x64xf32> -> vector<4x64xf32>
    %459 = vector.extract_strided_slice %458 {offsets = [0, 0], sizes = [1, 64], strides = [1, 1]} : vector<4x64xf32> to vector<1x64xf32>
    %460 = vector.extract_strided_slice %458 {offsets = [1, 0], sizes = [1, 64], strides = [1, 1]} : vector<4x64xf32> to vector<1x64xf32>
    %461 = vector.extract_strided_slice %458 {offsets = [2, 0], sizes = [1, 64], strides = [1, 1]} : vector<4x64xf32> to vector<1x64xf32>
    %462 = vector.extract_strided_slice %458 {offsets = [3, 0], sizes = [1, 64], strides = [1, 1]} : vector<4x64xf32> to vector<1x64xf32>
    %463 = tpu.concatenate %459, %460, %461, %462 in 1 : vector<1x64xf32>, vector<1x64xf32>, vector<1x64xf32>, vector<1x64xf32> -> vector<1x256xf32>
    %c0_198 = arith.constant 0 : index
    %c0_199 = arith.constant 0 : index
    %464 = vector.load %arg33[%c0_198, %c0_199] : memref<1x256xf32, #tpu.memory_space<vmem>>, vector<1x256xf32>
    %c0_200 = arith.constant 0 : index
    %c0_201 = arith.constant 0 : index
    %465 = vector.load %arg34[%c0_200, %c0_201] : memref<1x256xf32, #tpu.memory_space<vmem>>, vector<1x256xf32>
    %cst_202 = arith.constant dense<0.000000e+00> : vector<1xf32>
    %466 = vector.multi_reduction <add>, %463, %cst_202 [1] : vector<1x256xf32> to vector<1xf32>
    %467 = vector.shape_cast %466 : vector<1xf32> to vector<1x1xf32>
    %cst_203 = arith.constant 2.560000e+02 : f32
    %468 = vector.broadcast %cst_203 : f32 to vector<1x1xf32>
    %469 = arith.divf %467, %468 : vector<1x1xf32>
    %470 = vector.broadcast %469 : vector<1x1xf32> to vector<1x256xf32>
    %471 = arith.subf %463, %470 : vector<1x256xf32>
    %472 = arith.mulf %471, %471 : vector<1x256xf32>
    %cst_204 = arith.constant dense<0.000000e+00> : vector<1xf32>
    %473 = vector.multi_reduction <add>, %472, %cst_204 [1] : vector<1x256xf32> to vector<1xf32>
    %474 = vector.shape_cast %473 : vector<1xf32> to vector<1x1xf32>
    %cst_205 = arith.constant 2.560000e+02 : f32
    %475 = vector.broadcast %cst_205 : f32 to vector<1x1xf32>
    %476 = arith.divf %474, %475 : vector<1x1xf32>
    %cst_206 = arith.constant 9.99999974E-6 : f32
    %477 = vector.broadcast %cst_206 : f32 to vector<1x1xf32>
    %478 = arith.addf %476, %477 : vector<1x1xf32>
    %479 = math.rsqrt %478 : vector<1x1xf32>
    %480 = vector.broadcast %479 : vector<1x1xf32> to vector<1x256xf32>
    %481 = arith.mulf %471, %480 : vector<1x256xf32>
    %482 = arith.mulf %481, %464 : vector<1x256xf32>
    %483 = arith.addf %482, %465 : vector<1x256xf32>
    %484 = arith.truncf %483 : vector<1x256xf32> to vector<1x256xbf16>
    %c0_207 = arith.constant 0 : index
    %c0_208 = arith.constant 0 : index
    %485 = vector.load %arg35[%c0_207, %c0_208] : memref<256x128xbf16, #tpu.memory_space<vmem>>, vector<256x128xbf16>
    %cst_209 = arith.constant dense<0.000000e+00> : vector<1x128xf32>
    %486 = tpu.matmul %484, %485, %cst_209 {dimension_numbers = #tpu.dot_dimension_numbers<[1], [0], [0], [1], [0, 0, 1, 1], [], []>} : vector<1x256xbf16>, vector<256x128xbf16>, vector<1x128xf32> -> vector<1x128xf32>
    %c0_210 = arith.constant 0 : index
    %c0_211 = arith.constant 0 : index
    %c0_212 = arith.constant 0 : index
    %487 = vector.load %arg38[%c0_210, %c0_211, %c0_212] : memref<1x1x128xf32, #tpu.memory_space<vmem>>, vector<1x1x128xf32>
    %488 = vector.shape_cast %487 : vector<1x1x128xf32> to vector<1x128xf32>
    %489 = vector.shape_cast %486 : vector<1x128xf32> to vector<1x1x128xf32>
    tpu.vector_store %arg38[%c0_210, %c0_211, %c0_212], %489 {strides = array<i32>} : memref<1x1x128xf32, #tpu.memory_space<vmem>>, vector<1x1x128xf32>,
    return
  }
  func.func @transform_0(%arg0: i32) -> (i32, i32, i32) {
    %c0_i32 = arith.constant 0 : i32
    %c0_i32_0 = arith.constant 0 : i32
    %c0_i32_1 = arith.constant 0 : i32
    return %arg0, %c0_i32, %c0_i32_0 : i32, i32, i32
  }
  func.func @transform_1(%arg0: i32) -> (i32, i32, i32) {
    %c0_i32 = arith.constant 0 : i32
    %c0_i32_0 = arith.constant 0 : i32
    %c0_i32_1 = arith.constant 0 : i32
    return %arg0, %c0_i32, %c0_i32_0 : i32, i32, i32
  }
  func.func @transform_2(%arg0: i32) -> (i32, i32, i32) {
    %c0_i32 = arith.constant 0 : i32
    %c0_i32_0 = arith.constant 0 : i32
    %c0_i32_1 = arith.constant 0 : i32
    return %arg0, %c0_i32, %c0_i32_0 : i32, i32, i32
  }
  func.func @transform_3(%arg0: i32) -> (i32, i32) {
    %c0_i32 = arith.constant 0 : i32
    %c0_i32_0 = arith.constant 0 : i32
    %c0_i32_1 = arith.constant 0 : i32
    return %c0_i32, %c0_i32_0 : i32, i32
  }
  func.func @transform_4(%arg0: i32) -> (i32, i32) {
    %c0_i32 = arith.constant 0 : i32
    %c0_i32_0 = arith.constant 0 : i32
    %c0_i32_1 = arith.constant 0 : i32
    return %c0_i32, %c0_i32_0 : i32, i32
  }
  func.func @transform_5(%arg0: i32) -> (i32, i32) {
    %c0_i32 = arith.constant 0 : i32
    %c0_i32_0 = arith.constant 0 : i32
    %c0_i32_1 = arith.constant 0 : i32
    return %c0_i32, %c0_i32_0 : i32, i32
  }
  func.func @transform_6(%arg0: i32) -> (i32, i32) {
    %c0_i32 = arith.constant 0 : i32
    %c0_i32_0 = arith.constant 0 : i32
    %c0_i32_1 = arith.constant 0 : i32
    return %c0_i32, %c0_i32_0 : i32, i32
  }
  func.func @transform_7(%arg0: i32) -> (i32, i32) {
    %c0_i32 = arith.constant 0 : i32
    %c0_i32_0 = arith.constant 0 : i32
    %c0_i32_1 = arith.constant 0 : i32
    return %c0_i32, %c0_i32_0 : i32, i32
  }
  func.func @transform_8(%arg0: i32) -> (i32, i32) {
    %c0_i32 = arith.constant 0 : i32
    %c0_i32_0 = arith.constant 0 : i32
    %c0_i32_1 = arith.constant 0 : i32
    return %c0_i32, %c0_i32_0 : i32, i32
  }
  func.func @transform_9(%arg0: i32) -> (i32, i32, i32) {
    %c0_i32 = arith.constant 0 : i32
    %c0_i32_0 = arith.constant 0 : i32
    %c0_i32_1 = arith.constant 0 : i32
    %c0_i32_2 = arith.constant 0 : i32
    return %c0_i32, %c0_i32_0, %c0_i32_1 : i32, i32, i32
  }
  func.func @transform_10(%arg0: i32) -> (i32, i32) {
    %c0_i32 = arith.constant 0 : i32
    %c0_i32_0 = arith.constant 0 : i32
    %c0_i32_1 = arith.constant 0 : i32
    return %c0_i32, %c0_i32_0 : i32, i32
  }
  func.func @transform_11(%arg0: i32) -> (i32, i32) {
    %c0_i32 = arith.constant 0 : i32
    %c0_i32_0 = arith.constant 0 : i32
    %c0_i32_1 = arith.constant 0 : i32
    return %c0_i32, %c0_i32_0 : i32, i32
  }
  func.func @transform_12(%arg0: i32) -> (i32, i32) {
    %c0_i32 = arith.constant 0 : i32
    %c0_i32_0 = arith.constant 0 : i32
    %c0_i32_1 = arith.constant 0 : i32
    return %c0_i32, %c0_i32_0 : i32, i32
  }
  func.func @transform_13(%arg0: i32) -> (i32, i32) {
    %c0_i32 = arith.constant 0 : i32
    %c0_i32_0 = arith.constant 0 : i32
    %c0_i32_1 = arith.constant 0 : i32
    return %c0_i32, %c0_i32_0 : i32, i32
  }
  func.func @transform_14(%arg0: i32) -> (i32, i32) {
    %c0_i32 = arith.constant 0 : i32
    %c0_i32_0 = arith.constant 0 : i32
    %c0_i32_1 = arith.constant 0 : i32
    return %c0_i32, %c0_i32_0 : i32, i32
  }
  func.func @transform_15(%arg0: i32) -> (i32, i32) {
    %c0_i32 = arith.constant 0 : i32
    %c0_i32_0 = arith.constant 0 : i32
    %c0_i32_1 = arith.constant 0 : i32
    return %c0_i32, %c0_i32_0 : i32, i32
  }
  func.func @transform_16(%arg0: i32) -> (i32, i32) {
    %c0_i32 = arith.constant 0 : i32
    %c0_i32_0 = arith.constant 0 : i32
    %c0_i32_1 = arith.constant 0 : i32
    return %c0_i32, %c0_i32_0 : i32, i32
  }
  func.func @transform_17(%arg0: i32) -> (i32, i32) {
    %c0_i32 = arith.constant 0 : i32
    %c0_i32_0 = arith.constant 0 : i32
    %c0_i32_1 = arith.constant 0 : i32
    return %c0_i32, %c0_i32_0 : i32, i32
  }
  func.func @transform_18(%arg0: i32) -> (i32, i32) {
    %c0_i32 = arith.constant 0 : i32
    %c0_i32_0 = arith.constant 0 : i32
    %c0_i32_1 = arith.constant 0 : i32
    return %c0_i32, %c0_i32_0 : i32, i32
  }
  func.func @transform_19(%arg0: i32) -> (i32, i32) {
    %c0_i32 = arith.constant 0 : i32
    %c0_i32_0 = arith.constant 0 : i32
    %c0_i32_1 = arith.constant 0 : i32
    return %c0_i32, %c0_i32_0 : i32, i32
  }
  func.func @transform_20(%arg0: i32) -> (i32, i32) {
    %c0_i32 = arith.constant 0 : i32
    %c0_i32_0 = arith.constant 0 : i32
    %c0_i32_1 = arith.constant 0 : i32
    return %c0_i32, %c0_i32_0 : i32, i32
  }
  func.func @transform_21(%arg0: i32) -> (i32, i32) {
    %c0_i32 = arith.constant 0 : i32
    %c0_i32_0 = arith.constant 0 : i32
    %c0_i32_1 = arith.constant 0 : i32
    return %c0_i32, %c0_i32_0 : i32, i32
  }
  func.func @transform_22(%arg0: i32) -> (i32, i32, i32) {
    %c0_i32 = arith.constant 0 : i32
    %c0_i32_0 = arith.constant 0 : i32
    %c0_i32_1 = arith.constant 0 : i32
    %c0_i32_2 = arith.constant 0 : i32
    return %c0_i32, %c0_i32_0, %c0_i32_1 : i32, i32, i32
  }
  func.func @transform_23(%arg0: i32) -> (i32, i32) {
    %c0_i32 = arith.constant 0 : i32
    %c0_i32_0 = arith.constant 0 : i32
    %c0_i32_1 = arith.constant 0 : i32
    return %c0_i32, %c0_i32_0 : i32, i32
  }
  func.func @transform_24(%arg0: i32) -> (i32, i32) {
    %c0_i32 = arith.constant 0 : i32
    %c0_i32_0 = arith.constant 0 : i32
    %c0_i32_1 = arith.constant 0 : i32
    return %c0_i32, %c0_i32_0 : i32, i32
  }
  func.func @transform_25(%arg0: i32) -> (i32, i32) {
    %c0_i32 = arith.constant 0 : i32
    %c0_i32_0 = arith.constant 0 : i32
    %c0_i32_1 = arith.constant 0 : i32
    return %c0_i32, %c0_i32_0 : i32, i32
  }
  func.func @transform_26(%arg0: i32) -> (i32, i32) {
    %c0_i32 = arith.constant 0 : i32
    %c0_i32_0 = arith.constant 0 : i32
    %c0_i32_1 = arith.constant 0 : i32
    return %c0_i32, %c0_i32_0 : i32, i32
  }
  func.func @transform_27(%arg0: i32) -> (i32, i32) {
    %c0_i32 = arith.constant 0 : i32
    %c0_i32_0 = arith.constant 0 : i32
    %c0_i32_1 = arith.constant 0 : i32
    return %c0_i32, %c0_i32_0 : i32, i32
  }
  func.func @transform_28(%arg0: i32) -> (i32, i32) {
    %c0_i32 = arith.constant 0 : i32
    %c0_i32_0 = arith.constant 0 : i32
    %c0_i32_1 = arith.constant 0 : i32
    return %c0_i32, %c0_i32_0 : i32, i32
  }
  func.func @transform_29(%arg0: i32) -> (i32, i32) {
    %c0_i32 = arith.constant 0 : i32
    %c0_i32_0 = arith.constant 0 : i32
    %c0_i32_1 = arith.constant 0 : i32
    return %c0_i32, %c0_i32_0 : i32, i32
  }
  func.func @transform_30(%arg0: i32) -> (i32, i32) {
    %c0_i32 = arith.constant 0 : i32
    %c0_i32_0 = arith.constant 0 : i32
    %c0_i32_1 = arith.constant 0 : i32
    return %c0_i32, %c0_i32_0 : i32, i32
  }
  func.func @transform_31(%arg0: i32) -> (i32, i32) {
    %c0_i32 = arith.constant 0 : i32
    %c0_i32_0 = arith.constant 0 : i32
    %c0_i32_1 = arith.constant 0 : i32
    return %c0_i32, %c0_i32_0 : i32, i32
  }
  func.func @transform_32(%arg0: i32) -> (i32, i32) {
    %c0_i32 = arith.constant 0 : i32
    %c0_i32_0 = arith.constant 0 : i32
    %c0_i32_1 = arith.constant 0 : i32
    return %c0_i32, %c0_i32_0 : i32, i32
  }
  func.func @transform_33(%arg0: i32) -> (i32, i32) {
    %c0_i32 = arith.constant 0 : i32
    %c0_i32_0 = arith.constant 0 : i32
    %c0_i32_1 = arith.constant 0 : i32
    return %c0_i32, %c0_i32_0 : i32, i32
  }
  func.func @transform_34(%arg0: i32) -> (i32, i32) {
    %c0_i32 = arith.constant 0 : i32
    %c0_i32_0 = arith.constant 0 : i32
    %c0_i32_1 = arith.constant 0 : i32
    return %c0_i32, %c0_i32_0 : i32, i32
  }
  func.func @transform_35(%arg0: i32) -> (i32, i32, i32) {
    %c0_i32 = arith.constant 0 : i32
    %c0_i32_0 = arith.constant 0 : i32
    %c0_i32_1 = arith.constant 0 : i32
    return %arg0, %c0_i32, %c0_i32_0 : i32, i32, i32
  }
  func.func @transform_36(%arg0: i32) -> (i32, i32, i32) {
    %c0_i32 = arith.constant 0 : i32
    %c0_i32_0 = arith.constant 0 : i32
    %c0_i32_1 = arith.constant 0 : i32
    return %arg0, %c0_i32, %c0_i32_0 : i32, i32, i32
  }
  func.func @transform_37(%arg0: i32) -> (i32, i32, i32) {
    %c0_i32 = arith.constant 0 : i32
    %c0_i32_0 = arith.constant 0 : i32
    %c0_i32_1 = arith.constant 0 : i32
    return %arg0, %c0_i32, %c0_i32_0 : i32, i32, i32
  }
}

</mosaic_0001>

<llo_original>
// kernel: fwd.3
$region0: #{fwd.3}
  #allocation0 [shape = 'u32[]', space=smem, size = 0x4, offset = 0x4, fixed_abs, tag = 'smem constant byte address 0x4 - core index']
  #allocation1 [shape = 'u32[144,128]{1,0:T(1,128)}', space=vmem, size = 0x12000, scoped, tag = 'internal scratch']
  %s0 = inlined_call_operand.vmem [shape: f32[2,16,64], index: 0, kind: input, shape index: {}]
  %s1 = inlined_call_operand.vmem [shape: bf16[64,32], index: 1, kind: input, shape index: {}]
  %s2 = inlined_call_operand.vmem [shape: f32[1,32], index: 2, kind: input, shape index: {}]
  %s3 = inlined_call_operand.vmem [shape: f32[1,32], index: 3, kind: input, shape index: {}]
  %s4 = inlined_call_operand.vmem [shape: f32[1,32], index: 4, kind: input, shape index: {}]
  %s5 = inlined_call_operand.vmem [shape: f32[2,16,32], index: 5, kind: output, shape index: {}]
  %s6 = sld [smem:[#allocation0]]
  $region53: #{fwd.3} parent=0
    _
  %s8 = ssub.s32 1, %s6
  %s9 = scalar_select 0, %s8, %s6
  loop: start=0, step=1, limit=4
  $region2: #{fwd.3} parent=0 // loop_pre_header
    _
  $region3: #{fwd.3} parent=0 // loop_header
    %s11 = sphi 0, %s15
    %p12 = scmp.ge.s32.totalorder %s11, 4
    %s21 = sphi 0, %s23
    %s24 = sphi 0, %s21
    %s25 = sphi 0, %s24
    %s41 = sphi 0, %s25
    %s45 = sphi 0, %s45
    %s47 = sphi 0, %s45
    %s48 = sphi 0, %s47
    %s62 = sphi 0, %s48
    %s66 = sphi 0, %s66
    %s68 = sphi 0, %s66
    %s69 = sphi 0, %s68
    %s83 = sphi 0, %s69
    %s87 = sphi 0, %s87
    %s89 = sphi 0, %s87
    %s90 = sphi 0, %s89
    %s104 = sphi 0, %s90
    %s108 = sphi 0, %s108
    %s110 = sphi 0, %s108
    %s111 = sphi 0, %s110
    %s125 = sphi 0, %s111
    %s131 = sphi 0, %s133
    %s134 = sphi 0, %s131
    %s135 = sphi 0, %s134
    %s151 = sphi 0, %s135
  $region4: #{fwd.3} parent=0 // loop_header_branch
    %14 = sbr.rel (%p12) target = $region8
  $region5: #{fwd.3} parent=0 // loop_body
    %s16 = ssub.s32 %s11, 1
    %s17 = ssub.s32 %s11, 2
    %s18 = sadd.s32 %s11, 1
    %s19 = ssub.s32 %s11, %s18
    %p20 = scmp.eq.s32.totalorder %s19, 0
    %s22 = sadd.s32 %s21, 1
    %s23 = scalar_select %p20, %s21, %s22
    %p26 = pneg %p20
    %p27 = scmp.eq.s32.totalorder %s11, 1
    %p28 = por %p26, %p27
    %p29 = scmp.ne.s32.totalorder %s21, %s24
    %p30 = scmp.eq.s32.totalorder %s11, 0
    %p31 = por %p29, %p30
    %p32 = scmp.ne.s32.totalorder %s21, %s24
    %p33 = scmp.eq.s32.totalorder %s16, 1
    %p34 = por %p32, %p33
    %p35 = scmp.ne.s32.totalorder %s24, %s25
    %p36 = scmp.eq.s32.totalorder %s16, 0
    %p37 = por %p35, %p36
    %p38 = scmp.ne.s32.totalorder %s24, %s25
    %p39 = scmp.eq.s32.totalorder %s17, 1
    %p40 = por %p38, %p39
    %p42 = scmp.ne.s32.totalorder %s25, %s41
    %p43 = scmp.eq.s32.totalorder %s17, 0
    %p44 = por %p42, %p43
    %s46 = sadd.s32 %s45, 1
    %p49 = scmp.eq.s32.totalorder %s11, 1
    %p50 = scmp.ne.s32.totalorder %s45, %s47
    %p51 = scmp.eq.s32.totalorder %s11, 0
    %p52 = por %p50, %p51
    %p53 = scmp.ne.s32.totalorder %s45, %s47
    %p54 = scmp.eq.s32.totalorder %s16, 1
    %p55 = por %p53, %p54
    %p56 = scmp.ne.s32.totalorder %s47, %s48
    %p57 = scmp.eq.s32.totalorder %s16, 0
    %p58 = por %p56, %p57
    %p59 = scmp.ne.s32.totalorder %s47, %s48
    %p60 = scmp.eq.s32.totalorder %s17, 1
    %p61 = por %p59, %p60
    %p63 = scmp.ne.s32.totalorder %s48, %s62
    %p64 = scmp.eq.s32.totalorder %s17, 0
    %p65 = por %p63, %p64
    %s67 = sadd.s32 %s66, 1
    %p70 = scmp.eq.s32.totalorder %s11, 1
    %p71 = scmp.ne.s32.totalorder %s66, %s68
    %p72 = scmp.eq.s32.totalorder %s11, 0
    %p73 = por %p71, %p72
    %p74 = scmp.ne.s32.totalorder %s66, %s68
    %p75 = scmp.eq.s32.totalorder %s16, 1
    %p76 = por %p74, %p75
    %p77 = scmp.ne.s32.totalorder %s68, %s69
    %p78 = scmp.eq.s32.totalorder %s16, 0
    %p79 = por %p77, %p78
    %p80 = scmp.ne.s32.totalorder %s68, %s69
    %p81 = scmp.eq.s32.totalorder %s17, 1
    %p82 = por %p80, %p81
    %p84 = scmp.ne.s32.totalorder %s69, %s83
    %p85 = scmp.eq.s32.totalorder %s17, 0
    %p86 = por %p84, %p85
    %s88 = sadd.s32 %s87, 1
    %p91 = scmp.eq.s32.totalorder %s11, 1
    %p92 = scmp.ne.s32.totalorder %s87, %s89
    %p93 = scmp.eq.s32.totalorder %s11, 0
    %p94 = por %p92, %p93
    %p95 = scmp.ne.s32.totalorder %s87, %s89
    %p96 = scmp.eq.s32.totalorder %s16, 1
    %p97 = por %p95, %p96
    %p98 = scmp.ne.s32.totalorder %s89, %s90
    %p99 = scmp.eq.s32.totalorder %s16, 0
    %p100 = por %p98, %p99
    %p101 = scmp.ne.s32.totalorder %s89, %s90
    %p102 = scmp.eq.s32.totalorder %s17, 1
    %p103 = por %p101, %p102
    %p105 = scmp.ne.s32.totalorder %s90, %s104
    %p106 = scmp.eq.s32.totalorder %s17, 0
    %p107 = por %p105, %p106
    %s109 = sadd.s32 %s108, 1
    %p112 = scmp.eq.s32.totalorder %s11, 1
    %p113 = scmp.ne.s32.totalorder %s108, %s110
    %p114 = scmp.eq.s32.totalorder %s11, 0
    %p115 = por %p113, %p114
    %p116 = scmp.ne.s32.totalorder %s108, %s110
    %p117 = scmp.eq.s32.totalorder %s16, 1
    %p118 = por %p116, %p117
    %p119 = scmp.ne.s32.totalorder %s110, %s111
    %p120 = scmp.eq.s32.totalorder %s16, 0
    %p121 = por %p119, %p120
    %p122 = scmp.ne.s32.totalorder %s110, %s111
    %p123 = scmp.eq.s32.totalorder %s17, 1
    %p124 = por %p122, %p123
    %p126 = scmp.ne.s32.totalorder %s111, %s125
    %p127 = scmp.eq.s32.totalorder %s17, 0
    %p128 = por %p126, %p127
    %s129 = ssub.s32 %s11, %s18
    %p130 = scmp.eq.s32.totalorder %s129, 0
    %s132 = sadd.s32 %s131, 1
    %s133 = scalar_select %p130, %s131, %s132
    %p136 = pneg %p130
    %p137 = scmp.eq.s32.totalorder %s11, 1
    %p138 = por %p136, %p137
    %p139 = scmp.ne.s32.totalorder %s131, %s134
    %p140 = scmp.eq.s32.totalorder %s11, 0
    %p141 = por %p139, %p140
    %p142 = scmp.ne.s32.totalorder %s131, %s134
    %p143 = scmp.eq.s32.totalorder %s16, 1
    %p144 = por %p142, %p143
    %p145 = scmp.ne.s32.totalorder %s134, %s135
    %p146 = scmp.eq.s32.totalorder %s16, 0
    %p147 = por %p145, %p146
    %p148 = scmp.ne.s32.totalorder %s134, %s135
    %p149 = scmp.eq.s32.totalorder %s17, 1
    %p150 = por %p148, %p149
    %p152 = scmp.ne.s32.totalorder %s135, %s151
    %p153 = scmp.eq.s32.totalorder %s17, 0
    %p154 = por %p152, %p153
    %p155 = scmp.le.s32.totalorder 1, %s11
    %p156 = scmp.lt.s32.totalorder %s11, 3
    %p157 = pnand %p155, %p156
    %p158 = pneg %p157
    // Predicated region
    $region9: #{fwd.3} parent=5 // pred_check
      _
    $region10: #{fwd.3} parent=5 // pred_check_branch
      %160 = sbr.rel (%p157) target = $region12
    $region11: #{fwd.3} parent=5 // pred_region
      %s161 = ssub.s32 %s11, 1
      // Predicated region
      $region13: #{fwd.3} parent=11 // pred_check
        %p162 = pneg %p58
      $region14: #{fwd.3} parent=11 // pred_check_branch
        %164 = sbr.rel (%p162) target = $region16
      $region15: #{fwd.3} parent=11 // pred_region
        _
      $region16: #{fwd.3} parent=11 // pred_fallthru
        _
      // Predicated region
      $region17: #{fwd.3} parent=11 // pred_check
        %p165 = pneg %p79
      $region18: #{fwd.3} parent=11 // pred_check_branch
        %167 = sbr.rel (%p165) target = $region20
      $region19: #{fwd.3} parent=11 // pred_region
        _
      $region20: #{fwd.3} parent=11 // pred_fallthru
        _
      // Predicated region
      $region21: #{fwd.3} parent=11 // pred_check
        %p168 = pneg %p100
      $region22: #{fwd.3} parent=11 // pred_check_branch
        %170 = sbr.rel (%p168) target = $region24
      $region23: #{fwd.3} parent=11 // pred_region
        _
      $region24: #{fwd.3} parent=11 // pred_fallthru
        _
      // Predicated region
      $region25: #{fwd.3} parent=11 // pred_check
        %p171 = pneg %p121
      $region26: #{fwd.3} parent=11 // pred_check_branch
        %173 = sbr.rel (%p171) target = $region28
      $region27: #{fwd.3} parent=11 // pred_region
        _
      $region28: #{fwd.3} parent=11 // pred_fallthru
        _
    $region12: #{fwd.3} parent=5 // pred_fallthru
      _
    %p174 = scmp.lt.s32.totalorder %s11, 2
    // Predicated region
    $region29: #{fwd.3} parent=5 // pred_check
      %p175 = pneg %p174
    $region30: #{fwd.3} parent=5 // pred_check_branch
      %177 = sbr.rel (%p175) target = $region32
    $region31: #{fwd.3} parent=5 // pred_region
      // Predicated region
      $region33: #{fwd.3} parent=31 // pred_check
        %p178 = pneg %p31
      $region34: #{fwd.3} parent=31 // pred_check_branch
        %180 = sbr.rel (%p178) target = $region36
      $region35: #{fwd.3} parent=31 // pred_region
        %p181 = scmp.lt.s32.totalorder %s11, 1
        %s182 = scalar_select %p181, %s11, 1
        %s183 = smul.addr %s182, 2
        %s184 = smul.addr %s183, 8
        %s185 = scalar_lea.vmem %s0, %s184
      $region36: #{fwd.3} parent=31 // pred_fallthru
        _
    $region32: #{fwd.3} parent=5 // pred_fallthru
      _
    %p186 = scmp.le.s32.totalorder 1, %s11
    %p187 = scmp.lt.s32.totalorder %s11, 3
    %p188 = pnand %p186, %p187
    %p189 = pneg %p188
    // Predicated region
    $region37: #{fwd.3} parent=5 // pred_check
      _
    $region38: #{fwd.3} parent=5 // pred_check_branch
      %191 = sbr.rel (%p188) target = $region40
    $region39: #{fwd.3} parent=5 // pred_region
      %s192 = ssub.s32 %s11, 1
      %p193 = scmp.lt.s32.totalorder %s16, 1
      %s194 = scalar_select %p193, %s16, 1
      %s195 = smul.addr %s194, 2
      %s196 = smul.addr %s195, 8
      %s197 = scalar_lea.vmem %s0, %s196
      %p198 = pneg %p37
      %p199 = pneg %p34
      %p200 = pneg %p58
      %p201 = pneg %p55
      %p202 = pneg %p79
      %p203 = pneg %p76
      %p204 = pneg %p100
      %p205 = pneg %p97
      %p206 = pneg %p121
      %p207 = pneg %p118
      %p208 = pneg %p147
      %p209 = pneg %p144
      %p210 = scmp.lt.s32.totalorder %s16, 1
      %s211 = scalar_select %p210, %s16, 1
      %s212 = smul.addr %s211, 2
      %s213 = smul.addr %s212, 8
      %s214 = scalar_lea.vmem %s5, %s213
      %p215 = scmp.lt.s32.totalorder %s16, 1
      %s216 = scalar_select %p215, %s16, 1
      %s217 = smul.addr %s216, 2
      %s218 = smul.addr %s217, 8
      %s219 = scalar_lea.vmem %s0, %s218
      %p220 = scmp.lt.s32.totalorder %s16, 1
      %s221 = scalar_select %p220, %s16, 1
      %s222 = smul.addr %s221, 2
      %s223 = smul.addr %s222, 8
      %s224 = scalar_lea.vmem %s5, %s223
      %v226 = vld [vmem:[%s219] sm:$0xff]
      %v227 = vld [vmem:[%s219 + $0x8] sm:$0xff]
      %v228 = vpack.c.bf16 %v227, %v226
      %v229 = vld [vmem:[%s1] sm:$0xf]
      %v230 = vld [vmem:[%s1 + $0x4] sm:$0xf]
      %v231 = vld [vmem:[%s1 + $0x8] sm:$0xf]
      %v232 = vld [vmem:[%s1 + $0xc] sm:$0xf]
      %v233 = vld [vmem:[%s1 + $0x10] sm:$0xf]
      %v234 = vld [vmem:[%s1 + $0x14] sm:$0xf]
      %v235 = vld [vmem:[%s1 + $0x18] sm:$0xf]
      %v236 = vld [vmem:[%s1 + $0x1c] sm:$0xf]
      %v237 = vld [vmem:[%s2] sm:$0x1]
      %v239 = vlaneseq
      %v240 = vshrl.u32 %v239, 7
      %v241 = vsub.s32 0, %v240
      %v242 = vrot.slane %v237, %v241
      %v252 = vunpack.c.l.b16 %v229
      %v253 = vunpack.c.l.b16 %v230
      %v254 = vunpack.c.l.b16 %v231
      %v255 = vunpack.c.l.b16 %v232
      %v256 = vunpack.c.l.b16 %v233
      %v257 = vunpack.c.l.b16 %v234
      %v258 = vunpack.c.l.b16 %v235
      %v259 = vunpack.c.l.b16 %v236
      %v260 = vpack.c.b16 %v253, %v252
      %v261 = vpack.c.b16 %v255, %v254
      %v262 = vpack.c.b16 %v257, %v256
      %v263 = vpack.c.b16 %v259, %v258
      %vm268 = vcmask 523264
      %v270 = vsel %vm268, %v228, 0
      %272 = vmatprep.subr.bf16.mxu0 0
      %273 = vmatpush1.bf16.msra.mxu0 %v260
      %274 = vmatprep.subr.bf16.mxu0 0
      %275 = vmatpush1.bf16.msra.mxu0 %v261
      %276 = vmatprep.subr.bf16.mxu0 0
      %277 = vmatpush1.bf16.msra.mxu0 %v262
      %278 = vmatprep.subr.bf16.mxu0 0
      %279 = vmatpush1.bf16.msra.mxu0 %v263
      %280 = vmatprep.subr.bf16.mxu0 0
      %281 = vmatpush1.bf16.msra.mxu0 0
      %282 = vmatprep.subr.bf16.mxu0 0
      %283 = vmatpush1.bf16.msra.mxu0 0
      %284 = vmatprep.subr.bf16.mxu0 0
      %285 = vmatpush1.bf16.msra.mxu0 0
      %286 = vmatprep.subr.bf16.mxu0 0
      %287 = vmatpush1.bf16.msra.mxu0 0
      %288 = vmatprep.subr.bf16.mxu0 0
      %289 = vmatpush1.bf16.msra.mxu0 0
      %290 = vmatprep.subr.bf16.mxu0 0
      %291 = vmatpush1.bf16.msra.mxu0 0
      %292 = vmatprep.subr.bf16.mxu0 0
      %293 = vmatpush1.bf16.msra.mxu0 0
      %294 = vmatprep.subr.bf16.mxu0 0
      %295 = vmatpush1.bf16.msra.mxu0 0
      %296 = vmatprep.subr.bf16.mxu0 0
      %297 = vmatpush1.bf16.msra.mxu0 0
      %298 = vmatprep.subr.bf16.mxu0 0
      %299 = vmatpush1.bf16.msra.mxu0 0
      %300 = vmatprep.subr.bf16.mxu0 0
      %301 = vmatpush1.bf16.msra.mxu0 0
      %302 = vmatprep.subr.bf16.mxu0 0
      %303 = vmatpush1.bf16.msra.mxu0 0
      %304 = vmatprep.mubr.bf16.mxu0 0
      %305 = vmatmul.mubr.bf16.gmra.mrb[0].mxu0 %v270
      %v306 = vpop.f32.mrb[0].mxu0
      %v307 = vadd.f32 %v242, %v306
      %v308 = vpop.f32.mrb[0].mxu0
      %v309 = vpop.f32.mrb[0].mxu0
      %v310 = vadd.f32 %v242, %v309
      %v311 = vpop.f32.mrb[0].mxu0
      %312 = vdwg.mxu0
      %v313 = vld [vmem:[%s3] sm:$0x1]
      %v314 = vld [vmem:[%s4] sm:$0x1]
      %vm315 = vcmask 261120
      %v316 = vsel %vm315, %v307, 0.0
      %317 = vadd.xlane.f32.xlu0 %v316
      %v318 = vpop.xlane.xlu0 %317
      %v319 = vsel %vm315, %v310, 0.0
      %320 = vadd.xlane.f32.xlu0 %v319
      %v321 = vpop.xlane.xlu0 %320
      %v322 = vrcp.pop 32.0
      %v323 = vmul.f32 %v318, %v322
      %v324 = vmul.f32 %v321, %v322
      %v325 = vsub.f32 %v307, %v323
      %v326 = vsub.f32 %v310, %v324
      %v327 = vmul.f32 %v325, %v325
      %v328 = vmul.f32 %v326, %v326
      %v329 = vsel %vm315, %v327, 0.0
      %330 = vadd.xlane.f32.xlu0 %v329
      %v331 = vpop.xlane.xlu0 %330
      %v332 = vsel %vm315, %v328, 0.0
      %333 = vadd.xlane.f32.xlu0 %v332
      %v334 = vpop.xlane.xlu0 %333
      %v335 = vmul.f32 %v331, %v322
      %v336 = vmul.f32 %v334, %v322
      %v337 = vadd.f32 %v335, 1e-05
      %v338 = vadd.f32 %v336, 1e-05
      %v339 = vrsqrt.pop %v337
      %v340 = vrsqrt.pop %v338
      %v341 = vmul.f32 %v325, %v339
      %v342 = vmul.f32 %v326, %v340
      %v344 = vlaneseq
      %v345 = vshrl.u32 %v344, 7
      %v346 = vsub.s32 0, %v345
      %v347 = vrot.slane %v313, %v346
      %v349 = vmul.f32 %v341, %v347
      %v350 = vmul.f32 %v342, %v347
      %v352 = vlaneseq
      %v353 = vshrl.u32 %v352, 7
      %v354 = vsub.s32 0, %v353
      %v355 = vrot.slane %v314, %v354
      %v357 = vadd.f32 %v349, %v355
      %v358 = vadd.f32 %v350, %v355
      %359 = vst.msk [vmem:[%s224] sm:$0xff] %vm315, %v357
      %360 = vst.msk [vmem:[%s224 + $0x8] sm:$0xff] %vm315, %v358
      %p361 = scmp.lt.s32.totalorder %s16, 1
      %s362 = scalar_select %p361, %s16, 1
      %s363 = smul.addr %s362, 2
      %s364 = smul.addr %s363, 8
      %s365 = scalar_lea.vmem %s5, %s364
      // Predicated region
      $region41: #{fwd.3} parent=39 // pred_check
        %p366 = pneg %p144
      $region42: #{fwd.3} parent=39 // pred_check_branch
        %368 = sbr.rel (%p366) target = $region44
      $region43: #{fwd.3} parent=39 // pred_region
        _
      $region44: #{fwd.3} parent=39 // pred_fallthru
        _
    $region40: #{fwd.3} parent=5 // pred_fallthru
      _
    %p369 = scmp.le.s32.totalorder 2, %s11
    // Predicated region
    $region45: #{fwd.3} parent=5 // pred_check
      %p370 = pneg %p369
    $region46: #{fwd.3} parent=5 // pred_check_branch
      %372 = sbr.rel (%p370) target = $region48
    $region47: #{fwd.3} parent=5 // pred_region
      %s373 = ssub.s32 %s11, 2
      // Predicated region
      $region49: #{fwd.3} parent=47 // pred_check
        %p374 = pneg %p150
      $region50: #{fwd.3} parent=47 // pred_check_branch
        %376 = sbr.rel (%p374) target = $region52
      $region51: #{fwd.3} parent=47 // pred_region
        %p377 = scmp.lt.s32.totalorder %s17, 1
        %s378 = scalar_select %p377, %s17, 1
        %s379 = smul.addr %s378, 2
        %s380 = smul.addr %s379, 8
        %s381 = scalar_lea.vmem %s5, %s380
      $region52: #{fwd.3} parent=47 // pred_fallthru
        _
    $region48: #{fwd.3} parent=5 // pred_fallthru
      _
  $region6: #{fwd.3} parent=0 // loop_footer
    %s15 = sadd.s32 1, %s11
  $region7: #{fwd.3} parent=0 // loop_footer_branch
    %10 = sbr.rel target = $region3
  $region8: #{fwd.3} parent=0 // loop_exit
    _

// kernel: fwd.4
$region0: #{fwd.4}
  #allocation0 [shape = 'u32[]', space=smem, size = 0x4, offset = 0x4, fixed_abs, tag = 'smem constant byte address 0x4 - core index']
  #allocation1 [shape = 'u32[144,128]{1,0:T(1,128)}', space=vmem, size = 0x12000, scoped, tag = 'internal scratch']
  %s0 = inlined_call_operand.smem [shape: u32[38], index: -1, kind: input, shape index: {}]
  %s1 = sld [smem:[%s0]]
  %s2 = scalar_lea.smem %s0, 1
  %s3 = sld [smem:[%s2]]
  %s4 = scalar_lea.smem %s0, 2
  %s5 = sld [smem:[%s4]]
  %s6 = scalar_lea.smem %s0, 3
  %s7 = sld [smem:[%s6]]
  %s8 = scalar_lea.smem %s0, 4
  %s9 = sld [smem:[%s8]]
  %s10 = scalar_lea.smem %s0, 5
  %s11 = sld [smem:[%s10]]
  %s12 = scalar_lea.smem %s0, 6
  %s13 = sld [smem:[%s12]]
  %s14 = scalar_lea.smem %s0, 7
  %s15 = sld [smem:[%s14]]
  %s16 = scalar_lea.smem %s0, 8
  %s17 = sld [smem:[%s16]]
  %s18 = scalar_lea.smem %s0, 9
  %s19 = sld [smem:[%s18]]
  %s20 = scalar_lea.smem %s0, 10
  %s21 = sld [smem:[%s20]]
  %s22 = scalar_lea.smem %s0, 11
  %s23 = sld [smem:[%s22]]
  %s24 = scalar_lea.smem %s0, 12
  %s25 = sld [smem:[%s24]]
  %s26 = scalar_lea.smem %s0, 13
  %s27 = sld [smem:[%s26]]
  %s28 = scalar_lea.smem %s0, 14
  %s29 = sld [smem:[%s28]]
  %s30 = scalar_lea.smem %s0, 15
  %s31 = sld [smem:[%s30]]
  %s32 = scalar_lea.smem %s0, 16
  %s33 = sld [smem:[%s32]]
  %s34 = scalar_lea.smem %s0, 17
  %s35 = sld [smem:[%s34]]
  %s36 = scalar_lea.smem %s0, 18
  %s37 = sld [smem:[%s36]]
  %s38 = scalar_lea.smem %s0, 19
  %s39 = sld [smem:[%s38]]
  %s40 = scalar_lea.smem %s0, 20
  %s41 = sld [smem:[%s40]]
  %s42 = scalar_lea.smem %s0, 21
  %s43 = sld [smem:[%s42]]
  %s44 = scalar_lea.smem %s0, 22
  %s45 = sld [smem:[%s44]]
  %s46 = scalar_lea.smem %s0, 23
  %s47 = sld [smem:[%s46]]
  %s48 = scalar_lea.smem %s0, 24
  %s49 = sld [smem:[%s48]]
  %s50 = scalar_lea.smem %s0, 25
  %s51 = sld [smem:[%s50]]
  %s52 = scalar_lea.smem %s0, 26
  %s53 = sld [smem:[%s52]]
  %s54 = scalar_lea.smem %s0, 27
  %s55 = sld [smem:[%s54]]
  %s56 = scalar_lea.smem %s0, 28
  %s57 = sld [smem:[%s56]]
  %s58 = scalar_lea.smem %s0, 29
  %s59 = sld [smem:[%s58]]
  %s60 = scalar_lea.smem %s0, 30
  %s61 = sld [smem:[%s60]]
  %s62 = scalar_lea.smem %s0, 31
  %s63 = sld [smem:[%s62]]
  %s64 = scalar_lea.smem %s0, 32
  %s65 = sld [smem:[%s64]]
  %s66 = scalar_lea.smem %s0, 33
  %s67 = sld [smem:[%s66]]
  %s68 = scalar_lea.smem %s0, 34
  %s69 = sld [smem:[%s68]]
  %s70 = scalar_lea.smem %s0, 35
  %s71 = sld [smem:[%s70]]
  %s72 = scalar_lea.smem %s0, 36
  %s73 = sld [smem:[%s72]]
  %s74 = scalar_lea.smem %s0, 37
  %s75 = sld [smem:[%s74]]
  %76 = xla_tuple %s71, %s73, %s75
  %s77 = sld [smem:[#allocation0]]
  $region193: #{fwd.4} parent=0
    _
  %s79 = ssub.s32 1, %s77
  %s80 = scalar_select 0, %s79, %s77
  $region1: #{fwd.4} parent=0
    #allocation2 [shape = 'u8[512]{0}', space=vmem, size = 0x400, scoped, tag = 'input window, operand 33, single buffered']
    #allocation3 [shape = 's32[2]{0}', space=sflag, size = 0x8, scoped, tag = 'scoped memory for fwd.4']
    #allocation4 [shape = 's32[2]{0}', space=sflag, size = 0x8, scoped, tag = 'scoped memory for fwd.4']
    #allocation5 [shape = 'u8[16384]{0}', space=vmem, size = 0x4000, scoped, tag = 'output window, operand 0']
    #allocation6 [shape = 'u8[16384]{0}', space=vmem, size = 0x4000, scoped, tag = 'output window, operand 1']
    #allocation7 [shape = 's32[2]{0}', space=sflag, size = 0x8, scoped, tag = 'scoped memory for fwd.4']
    %81 = vsyncpa [#allocation3], 0
    %82 = vsyncpa [#allocation4], 0
    %s83 = scalar_lea.sflag [#allocation4], 1
    %84 = vsyncpa %s83, 0
    %85 = vsyncpa [#allocation7], 0
    %s86 = scalar_lea.sflag [#allocation7], 1
    %87 = vsyncpa %s86, 0
    loop: start=0, step=1, limit=4
    $region2: #{fwd.4} parent=1 // loop_pre_header
      _
    $region3: #{fwd.4} parent=1 // loop_header
      %s89 = sphi 0, %s93
      %p90 = scmp.ge.s32.totalorder %s89, 4
      %s99 = sphi 0, %s101
      %s102 = sphi 0, %s99
      %s103 = sphi 0, %s102
      %s119 = sphi 0, %s103
      %s125 = sphi 0, %s127
      %s128 = sphi 0, %s125
      %s129 = sphi 0, %s128
      %s145 = sphi 0, %s129
      %s151 = sphi 0, %s153
      %s154 = sphi 0, %s151
      %s155 = sphi 0, %s154
      %s171 = sphi 0, %s155
      %s175 = sphi 0, %s175
      %s177 = sphi 0, %s175
      %s178 = sphi 0, %s177
      %s192 = sphi 0, %s178
      %s196 = sphi 0, %s196
      %s198 = sphi 0, %s196
      %s199 = sphi 0, %s198
      %s213 = sphi 0, %s199
      %s217 = sphi 0, %s217
      %s219 = sphi 0, %s217
      %s220 = sphi 0, %s219
      %s234 = sphi 0, %s220
      %s238 = sphi 0, %s238
      %s240 = sphi 0, %s238
      %s241 = sphi 0, %s240
      %s255 = sphi 0, %s241
      %s259 = sphi 0, %s259
      %s261 = sphi 0, %s259
      %s262 = sphi 0, %s261
      %s276 = sphi 0, %s262
      %s280 = sphi 0, %s280
      %s282 = sphi 0, %s280
      %s283 = sphi 0, %s282
      %s297 = sphi 0, %s283
      %s301 = sphi 0, %s301
      %s303 = sphi 0, %s301
      %s304 = sphi 0, %s303
      %s318 = sphi 0, %s304
      %s322 = sphi 0, %s322
      %s324 = sphi 0, %s322
      %s325 = sphi 0, %s324
      %s339 = sphi 0, %s325
      %s343 = sphi 0, %s343
      %s345 = sphi 0, %s343
      %s346 = sphi 0, %s345
      %s360 = sphi 0, %s346
      %s364 = sphi 0, %s364
      %s366 = sphi 0, %s364
      %s367 = sphi 0, %s366
      %s381 = sphi 0, %s367
      %s385 = sphi 0, %s385
      %s387 = sphi 0, %s385
      %s388 = sphi 0, %s387
      %s402 = sphi 0, %s388
      %s406 = sphi 0, %s406
      %s408 = sphi 0, %s406
      %s409 = sphi 0, %s408
      %s423 = sphi 0, %s409
      %s427 = sphi 0, %s427
      %s429 = sphi 0, %s427
      %s430 = sphi 0, %s429
      %s444 = sphi 0, %s430
      %s448 = sphi 0, %s448
      %s450 = sphi 0, %s448
      %s451 = sphi 0, %s450
      %s465 = sphi 0, %s451
      %s469 = sphi 0, %s469
      %s471 = sphi 0, %s469
      %s472 = sphi 0, %s471
      %s486 = sphi 0, %s472
      %s490 = sphi 0, %s490
      %s492 = sphi 0, %s490
      %s493 = sphi 0, %s492
      %s507 = sphi 0, %s493
      %s511 = sphi 0, %s511
      %s513 = sphi 0, %s511
      %s514 = sphi 0, %s513
      %s528 = sphi 0, %s514
      %s532 = sphi 0, %s532
      %s534 = sphi 0, %s532
      %s535 = sphi 0, %s534
      %s549 = sphi 0, %s535
      %s553 = sphi 0, %s553
      %s555 = sphi 0, %s553
      %s556 = sphi 0, %s555
      %s570 = sphi 0, %s556
      %s574 = sphi 0, %s574
      %s576 = sphi 0, %s574
      %s577 = sphi 0, %s576
      %s591 = sphi 0, %s577
      %s595 = sphi 0, %s595
      %s597 = sphi 0, %s595
      %s598 = sphi 0, %s597
      %s612 = sphi 0, %s598
      %s616 = sphi 0, %s616
      %s618 = sphi 0, %s616
      %s619 = sphi 0, %s618
      %s633 = sphi 0, %s619
      %s637 = sphi 0, %s637
      %s639 = sphi 0, %s637
      %s640 = sphi 0, %s639
      %s654 = sphi 0, %s640
      %s658 = sphi 0, %s658
      %s660 = sphi 0, %s658
      %s661 = sphi 0, %s660
      %s675 = sphi 0, %s661
      %s679 = sphi 0, %s679
      %s681 = sphi 0, %s679
      %s682 = sphi 0, %s681
      %s696 = sphi 0, %s682
      %s700 = sphi 0, %s700
      %s702 = sphi 0, %s700
      %s703 = sphi 0, %s702
      %s717 = sphi 0, %s703
      %s721 = sphi 0, %s721
      %s723 = sphi 0, %s721
      %s724 = sphi 0, %s723
      %s738 = sphi 0, %s724
      %s742 = sphi 0, %s742
      %s744 = sphi 0, %s742
      %s745 = sphi 0, %s744
      %s759 = sphi 0, %s745
      %s763 = sphi 0, %s763
      %s765 = sphi 0, %s763
      %s766 = sphi 0, %s765
      %s780 = sphi 0, %s766
      %s784 = sphi 0, %s784
      %s786 = sphi 0, %s784
      %s787 = sphi 0, %s786
      %s801 = sphi 0, %s787
      %s805 = sphi 0, %s805
      %s807 = sphi 0, %s805
      %s808 = sphi 0, %s807
      %s822 = sphi 0, %s808
      %s826 = sphi 0, %s826
      %s828 = sphi 0, %s826
      %s829 = sphi 0, %s828
      %s843 = sphi 0, %s829
      %s849 = sphi 0, %s851
      %s852 = sphi 0, %s849
      %s853 = sphi 0, %s852
      %s869 = sphi 0, %s853
      %s875 = sphi 0, %s877
      %s878 = sphi 0, %s875
      %s879 = sphi 0, %s878
      %s895 = sphi 0, %s879
      %s901 = sphi 0, %s903
      %s904 = sphi 0, %s901
      %s905 = sphi 0, %s904
      %s921 = sphi 0, %s905
    $region4: #{fwd.4} parent=1 // loop_header_branch
      %92 = sbr.rel (%p90) target = $region8
    $region5: #{fwd.4} parent=1 // loop_body
      %s94 = ssub.s32 %s89, 1
      %s95 = ssub.s32 %s89, 2
      %s96 = sadd.s32 %s89, 1
      %s97 = ssub.s32 %s89, %s96
      %p98 = scmp.eq.s32.totalorder %s97, 0
      %s100 = sadd.s32 %s99, 1
      %s101 = scalar_select %p98, %s99, %s100
      %p104 = pneg %p98
      %p105 = scmp.eq.s32.totalorder %s89, 1
      %p106 = por %p104, %p105
      %p107 = scmp.ne.s32.totalorder %s99, %s102
      %p108 = scmp.eq.s32.totalorder %s89, 0
      %p109 = por %p107, %p108
      %p110 = scmp.ne.s32.totalorder %s99, %s102
      %p111 = scmp.eq.s32.totalorder %s94, 1
      %p112 = por %p110, %p111
      %p113 = scmp.ne.s32.totalorder %s102, %s103
      %p114 = scmp.eq.s32.totalorder %s94, 0
      %p115 = por %p113, %p114
      %p116 = scmp.ne.s32.totalorder %s102, %s103
      %p117 = scmp.eq.s32.totalorder %s95, 1
      %p118 = por %p116, %p117
      %p120 = scmp.ne.s32.totalorder %s103, %s119
      %p121 = scmp.eq.s32.totalorder %s95, 0
      %p122 = por %p120, %p121
      %s123 = ssub.s32 %s89, %s96
      %p124 = scmp.eq.s32.totalorder %s123, 0
      %s126 = sadd.s32 %s125, 1
      %s127 = scalar_select %p124, %s125, %s126
      %p130 = pneg %p124
      %p131 = scmp.eq.s32.totalorder %s89, 1
      %p132 = por %p130, %p131
      %p133 = scmp.ne.s32.totalorder %s125, %s128
      %p134 = scmp.eq.s32.totalorder %s89, 0
      %p135 = por %p133, %p134
      %p136 = scmp.ne.s32.totalorder %s125, %s128
      %p137 = scmp.eq.s32.totalorder %s94, 1
      %p138 = por %p136, %p137
      %p139 = scmp.ne.s32.totalorder %s128, %s129
      %p140 = scmp.eq.s32.totalorder %s94, 0
      %p141 = por %p139, %p140
      %p142 = scmp.ne.s32.totalorder %s128, %s129
      %p143 = scmp.eq.s32.totalorder %s95, 1
      %p144 = por %p142, %p143
      %p146 = scmp.ne.s32.totalorder %s129, %s145
      %p147 = scmp.eq.s32.totalorder %s95, 0
      %p148 = por %p146, %p147
      %s149 = ssub.s32 %s89, %s96
      %p150 = scmp.eq.s32.totalorder %s149, 0
      %s152 = sadd.s32 %s151, 1
      %s153 = scalar_select %p150, %s151, %s152
      %p156 = pneg %p150
      %p157 = scmp.eq.s32.totalorder %s89, 1
      %p158 = por %p156, %p157
      %p159 = scmp.ne.s32.totalorder %s151, %s154
      %p160 = scmp.eq.s32.totalorder %s89, 0
      %p161 = por %p159, %p160
      %p162 = scmp.ne.s32.totalorder %s151, %s154
      %p163 = scmp.eq.s32.totalorder %s94, 1
      %p164 = por %p162, %p163
      %p165 = scmp.ne.s32.totalorder %s154, %s155
      %p166 = scmp.eq.s32.totalorder %s94, 0
      %p167 = por %p165, %p166
      %p168 = scmp.ne.s32.totalorder %s154, %s155
      %p169 = scmp.eq.s32.totalorder %s95, 1
      %p170 = por %p168, %p169
      %p172 = scmp.ne.s32.totalorder %s155, %s171
      %p173 = scmp.eq.s32.totalorder %s95, 0
      %p174 = por %p172, %p173
      %s176 = sadd.s32 %s175, 1
      %p179 = scmp.eq.s32.totalorder %s89, 1
      %p180 = scmp.ne.s32.totalorder %s175, %s177
      %p181 = scmp.eq.s32.totalorder %s89, 0
      %p182 = por %p180, %p181
      %p183 = scmp.ne.s32.totalorder %s175, %s177
      %p184 = scmp.eq.s32.totalorder %s94, 1
      %p185 = por %p183, %p184
      %p186 = scmp.ne.s32.totalorder %s177, %s178
      %p187 = scmp.eq.s32.totalorder %s94, 0
      %p188 = por %p186, %p187
      %p189 = scmp.ne.s32.totalorder %s177, %s178
      %p190 = scmp.eq.s32.totalorder %s95, 1
      %p191 = por %p189, %p190
      %p193 = scmp.ne.s32.totalorder %s178, %s192
      %p194 = scmp.eq.s32.totalorder %s95, 0
      %p195 = por %p193, %p194
      %s197 = sadd.s32 %s196, 1
      %p200 = scmp.eq.s32.totalorder %s89, 1
      %p201 = scmp.ne.s32.totalorder %s196, %s198
      %p202 = scmp.eq.s32.totalorder %s89, 0
      %p203 = por %p201, %p202
      %p204 = scmp.ne.s32.totalorder %s196, %s198
      %p205 = scmp.eq.s32.totalorder %s94, 1
      %p206 = por %p204, %p205
      %p207 = scmp.ne.s32.totalorder %s198, %s199
      %p208 = scmp.eq.s32.totalorder %s94, 0
      %p209 = por %p207, %p208
      %p210 = scmp.ne.s32.totalorder %s198, %s199
      %p211 = scmp.eq.s32.totalorder %s95, 1
      %p212 = por %p210, %p211
      %p214 = scmp.ne.s32.totalorder %s199, %s213
      %p215 = scmp.eq.s32.totalorder %s95, 0
      %p216 = por %p214, %p215
      %s218 = sadd.s32 %s217, 1
      %p221 = scmp.eq.s32.totalorder %s89, 1
      %p222 = scmp.ne.s32.totalorder %s217, %s219
      %p223 = scmp.eq.s32.totalorder %s89, 0
      %p224 = por %p222, %p223
      %p225 = scmp.ne.s32.totalorder %s217, %s219
      %p226 = scmp.eq.s32.totalorder %s94, 1
      %p227 = por %p225, %p226
      %p228 = scmp.ne.s32.totalorder %s219, %s220
      %p229 = scmp.eq.s32.totalorder %s94, 0
      %p230 = por %p228, %p229
      %p231 = scmp.ne.s32.totalorder %s219, %s220
      %p232 = scmp.eq.s32.totalorder %s95, 1
      %p233 = por %p231, %p232
      %p235 = scmp.ne.s32.totalorder %s220, %s234
      %p236 = scmp.eq.s32.totalorder %s95, 0
      %p237 = por %p235, %p236
      %s239 = sadd.s32 %s238, 1
      %p242 = scmp.eq.s32.totalorder %s89, 1
      %p243 = scmp.ne.s32.totalorder %s238, %s240
      %p244 = scmp.eq.s32.totalorder %s89, 0
      %p245 = por %p243, %p244
      %p246 = scmp.ne.s32.totalorder %s238, %s240
      %p247 = scmp.eq.s32.totalorder %s94, 1
      %p248 = por %p246, %p247
      %p249 = scmp.ne.s32.totalorder %s240, %s241
      %p250 = scmp.eq.s32.totalorder %s94, 0
      %p251 = por %p249, %p250
      %p252 = scmp.ne.s32.totalorder %s240, %s241
      %p253 = scmp.eq.s32.totalorder %s95, 1
      %p254 = por %p252, %p253
      %p256 = scmp.ne.s32.totalorder %s241, %s255
      %p257 = scmp.eq.s32.totalorder %s95, 0
      %p258 = por %p256, %p257
      %s260 = sadd.s32 %s259, 1
      %p263 = scmp.eq.s32.totalorder %s89, 1
      %p264 = scmp.ne.s32.totalorder %s259, %s261
      %p265 = scmp.eq.s32.totalorder %s89, 0
      %p266 = por %p264, %p265
      %p267 = scmp.ne.s32.totalorder %s259, %s261
      %p268 = scmp.eq.s32.totalorder %s94, 1
      %p269 = por %p267, %p268
      %p270 = scmp.ne.s32.totalorder %s261, %s262
      %p271 = scmp.eq.s32.totalorder %s94, 0
      %p272 = por %p270, %p271
      %p273 = scmp.ne.s32.totalorder %s261, %s262
      %p274 = scmp.eq.s32.totalorder %s95, 1
      %p275 = por %p273, %p274
      %p277 = scmp.ne.s32.totalorder %s262, %s276
      %p278 = scmp.eq.s32.totalorder %s95, 0
      %p279 = por %p277, %p278
      %s281 = sadd.s32 %s280, 1
      %p284 = scmp.eq.s32.totalorder %s89, 1
      %p285 = scmp.ne.s32.totalorder %s280, %s282
      %p286 = scmp.eq.s32.totalorder %s89, 0
      %p287 = por %p285, %p286
      %p288 = scmp.ne.s32.totalorder %s280, %s282
      %p289 = scmp.eq.s32.totalorder %s94, 1
      %p290 = por %p288, %p289
      %p291 = scmp.ne.s32.totalorder %s282, %s283
      %p292 = scmp.eq.s32.totalorder %s94, 0
      %p293 = por %p291, %p292
      %p294 = scmp.ne.s32.totalorder %s282, %s283
      %p295 = scmp.eq.s32.totalorder %s95, 1
      %p296 = por %p294, %p295
      %p298 = scmp.ne.s32.totalorder %s283, %s297
      %p299 = scmp.eq.s32.totalorder %s95, 0
      %p300 = por %p298, %p299
      %s302 = sadd.s32 %s301, 1
      %p305 = scmp.eq.s32.totalorder %s89, 1
      %p306 = scmp.ne.s32.totalorder %s301, %s303
      %p307 = scmp.eq.s32.totalorder %s89, 0
      %p308 = por %p306, %p307
      %p309 = scmp.ne.s32.totalorder %s301, %s303
      %p310 = scmp.eq.s32.totalorder %s94, 1
      %p311 = por %p309, %p310
      %p312 = scmp.ne.s32.totalorder %s303, %s304
      %p313 = scmp.eq.s32.totalorder %s94, 0
      %p314 = por %p312, %p313
      %p315 = scmp.ne.s32.totalorder %s303, %s304
      %p316 = scmp.eq.s32.totalorder %s95, 1
      %p317 = por %p315, %p316
      %p319 = scmp.ne.s32.totalorder %s304, %s318
      %p320 = scmp.eq.s32.totalorder %s95, 0
      %p321 = por %p319, %p320
      %s323 = sadd.s32 %s322, 1
      %p326 = scmp.eq.s32.totalorder %s89, 1
      %p327 = scmp.ne.s32.totalorder %s322, %s324
      %p328 = scmp.eq.s32.totalorder %s89, 0
      %p329 = por %p327, %p328
      %p330 = scmp.ne.s32.totalorder %s322, %s324
      %p331 = scmp.eq.s32.totalorder %s94, 1
      %p332 = por %p330, %p331
      %p333 = scmp.ne.s32.totalorder %s324, %s325
      %p334 = scmp.eq.s32.totalorder %s94, 0
      %p335 = por %p333, %p334
      %p336 = scmp.ne.s32.totalorder %s324, %s325
      %p337 = scmp.eq.s32.totalorder %s95, 1
      %p338 = por %p336, %p337
      %p340 = scmp.ne.s32.totalorder %s325, %s339
      %p341 = scmp.eq.s32.totalorder %s95, 0
      %p342 = por %p340, %p341
      %s344 = sadd.s32 %s343, 1
      %p347 = scmp.eq.s32.totalorder %s89, 1
      %p348 = scmp.ne.s32.totalorder %s343, %s345
      %p349 = scmp.eq.s32.totalorder %s89, 0
      %p350 = por %p348, %p349
      %p351 = scmp.ne.s32.totalorder %s343, %s345
      %p352 = scmp.eq.s32.totalorder %s94, 1
      %p353 = por %p351, %p352
      %p354 = scmp.ne.s32.totalorder %s345, %s346
      %p355 = scmp.eq.s32.totalorder %s94, 0
      %p356 = por %p354, %p355
      %p357 = scmp.ne.s32.totalorder %s345, %s346
      %p358 = scmp.eq.s32.totalorder %s95, 1
      %p359 = por %p357, %p358
      %p361 = scmp.ne.s32.totalorder %s346, %s360
      %p362 = scmp.eq.s32.totalorder %s95, 0
      %p363 = por %p361, %p362
      %s365 = sadd.s32 %s364, 1
      %p368 = scmp.eq.s32.totalorder %s89, 1
      %p369 = scmp.ne.s32.totalorder %s364, %s366
      %p370 = scmp.eq.s32.totalorder %s89, 0
      %p371 = por %p369, %p370
      %p372 = scmp.ne.s32.totalorder %s364, %s366
      %p373 = scmp.eq.s32.totalorder %s94, 1
      %p374 = por %p372, %p373
      %p375 = scmp.ne.s32.totalorder %s366, %s367
      %p376 = scmp.eq.s32.totalorder %s94, 0
      %p377 = por %p375, %p376
      %p378 = scmp.ne.s32.totalorder %s366, %s367
      %p379 = scmp.eq.s32.totalorder %s95, 1
      %p380 = por %p378, %p379
      %p382 = scmp.ne.s32.totalorder %s367, %s381
      %p383 = scmp.eq.s32.totalorder %s95, 0
      %p384 = por %p382, %p383
      %s386 = sadd.s32 %s385, 1
      %p389 = scmp.eq.s32.totalorder %s89, 1
      %p390 = scmp.ne.s32.totalorder %s385, %s387
      %p391 = scmp.eq.s32.totalorder %s89, 0
      %p392 = por %p390, %p391
      %p393 = scmp.ne.s32.totalorder %s385, %s387
      %p394 = scmp.eq.s32.totalorder %s94, 1
      %p395 = por %p393, %p394
      %p396 = scmp.ne.s32.totalorder %s387, %s388
      %p397 = scmp.eq.s32.totalorder %s94, 0
      %p398 = por %p396, %p397
      %p399 = scmp.ne.s32.totalorder %s387, %s388
      %p400 = scmp.eq.s32.totalorder %s95, 1
      %p401 = por %p399, %p400
      %p403 = scmp.ne.s32.totalorder %s388, %s402
      %p404 = scmp.eq.s32.totalorder %s95, 0
      %p405 = por %p403, %p404
      %s407 = sadd.s32 %s406, 1
      %p410 = scmp.eq.s32.totalorder %s89, 1
      %p411 = scmp.ne.s32.totalorder %s406, %s408
      %p412 = scmp.eq.s32.totalorder %s89, 0
      %p413 = por %p411, %p412
      %p414 = scmp.ne.s32.totalorder %s406, %s408
      %p415 = scmp.eq.s32.totalorder %s94, 1
      %p416 = por %p414, %p415
      %p417 = scmp.ne.s32.totalorder %s408, %s409
      %p418 = scmp.eq.s32.totalorder %s94, 0
      %p419 = por %p417, %p418
      %p420 = scmp.ne.s32.totalorder %s408, %s409
      %p421 = scmp.eq.s32.totalorder %s95, 1
      %p422 = por %p420, %p421
      %p424 = scmp.ne.s32.totalorder %s409, %s423
      %p425 = scmp.eq.s32.totalorder %s95, 0
      %p426 = por %p424, %p425
      %s428 = sadd.s32 %s427, 1
      %p431 = scmp.eq.s32.totalorder %s89, 1
      %p432 = scmp.ne.s32.totalorder %s427, %s429
      %p433 = scmp.eq.s32.totalorder %s89, 0
      %p434 = por %p432, %p433
      %p435 = scmp.ne.s32.totalorder %s427, %s429
      %p436 = scmp.eq.s32.totalorder %s94, 1
      %p437 = por %p435, %p436
      %p438 = scmp.ne.s32.totalorder %s429, %s430
      %p439 = scmp.eq.s32.totalorder %s94, 0
      %p440 = por %p438, %p439
      %p441 = scmp.ne.s32.totalorder %s429, %s430
      %p442 = scmp.eq.s32.totalorder %s95, 1
      %p443 = por %p441, %p442
      %p445 = scmp.ne.s32.totalorder %s430, %s444
      %p446 = scmp.eq.s32.totalorder %s95, 0
      %p447 = por %p445, %p446
      %s449 = sadd.s32 %s448, 1
      %p452 = scmp.eq.s32.totalorder %s89, 1
      %p453 = scmp.ne.s32.totalorder %s448, %s450
      %p454 = scmp.eq.s32.totalorder %s89, 0
      %p455 = por %p453, %p454
      %p456 = scmp.ne.s32.totalorder %s448, %s450
      %p457 = scmp.eq.s32.totalorder %s94, 1
      %p458 = por %p456, %p457
      %p459 = scmp.ne.s32.totalorder %s450, %s451
      %p460 = scmp.eq.s32.totalorder %s94, 0
      %p461 = por %p459, %p460
      %p462 = scmp.ne.s32.totalorder %s450, %s451
      %p463 = scmp.eq.s32.totalorder %s95, 1
      %p464 = por %p462, %p463
      %p466 = scmp.ne.s32.totalorder %s451, %s465
      %p467 = scmp.eq.s32.totalorder %s95, 0
      %p468 = por %p466, %p467
      %s470 = sadd.s32 %s469, 1
      %p473 = scmp.eq.s32.totalorder %s89, 1
      %p474 = scmp.ne.s32.totalorder %s469, %s471
      %p475 = scmp.eq.s32.totalorder %s89, 0
      %p476 = por %p474, %p475
      %p477 = scmp.ne.s32.totalorder %s469, %s471
      %p478 = scmp.eq.s32.totalorder %s94, 1
      %p479 = por %p477, %p478
      %p480 = scmp.ne.s32.totalorder %s471, %s472
      %p481 = scmp.eq.s32.totalorder %s94, 0
      %p482 = por %p480, %p481
      %p483 = scmp.ne.s32.totalorder %s471, %s472
      %p484 = scmp.eq.s32.totalorder %s95, 1
      %p485 = por %p483, %p484
      %p487 = scmp.ne.s32.totalorder %s472, %s486
      %p488 = scmp.eq.s32.totalorder %s95, 0
      %p489 = por %p487, %p488
      %s491 = sadd.s32 %s490, 1
      %p494 = scmp.eq.s32.totalorder %s89, 1
      %p495 = scmp.ne.s32.totalorder %s490, %s492
      %p496 = scmp.eq.s32.totalorder %s89, 0
      %p497 = por %p495, %p496
      %p498 = scmp.ne.s32.totalorder %s490, %s492
      %p499 = scmp.eq.s32.totalorder %s94, 1
      %p500 = por %p498, %p499
      %p501 = scmp.ne.s32.totalorder %s492, %s493
      %p502 = scmp.eq.s32.totalorder %s94, 0
      %p503 = por %p501, %p502
      %p504 = scmp.ne.s32.totalorder %s492, %s493
      %p505 = scmp.eq.s32.totalorder %s95, 1
      %p506 = por %p504, %p505
      %p508 = scmp.ne.s32.totalorder %s493, %s507
      %p509 = scmp.eq.s32.totalorder %s95, 0
      %p510 = por %p508, %p509
      %s512 = sadd.s32 %s511, 1
      %p515 = scmp.eq.s32.totalorder %s89, 1
      %p516 = scmp.ne.s32.totalorder %s511, %s513
      %p517 = scmp.eq.s32.totalorder %s89, 0
      %p518 = por %p516, %p517
      %p519 = scmp.ne.s32.totalorder %s511, %s513
      %p520 = scmp.eq.s32.totalorder %s94, 1
      %p521 = por %p519, %p520
      %p522 = scmp.ne.s32.totalorder %s513, %s514
      %p523 = scmp.eq.s32.totalorder %s94, 0
      %p524 = por %p522, %p523
      %p525 = scmp.ne.s32.totalorder %s513, %s514
      %p526 = scmp.eq.s32.totalorder %s95, 1
      %p527 = por %p525, %p526
      %p529 = scmp.ne.s32.totalorder %s514, %s528
      %p530 = scmp.eq.s32.totalorder %s95, 0
      %p531 = por %p529, %p530
      %s533 = sadd.s32 %s532, 1
      %p536 = scmp.eq.s32.totalorder %s89, 1
      %p537 = scmp.ne.s32.totalorder %s532, %s534
      %p538 = scmp.eq.s32.totalorder %s89, 0
      %p539 = por %p537, %p538
      %p540 = scmp.ne.s32.totalorder %s532, %s534
      %p541 = scmp.eq.s32.totalorder %s94, 1
      %p542 = por %p540, %p541
      %p543 = scmp.ne.s32.totalorder %s534, %s535
      %p544 = scmp.eq.s32.totalorder %s94, 0
      %p545 = por %p543, %p544
      %p546 = scmp.ne.s32.totalorder %s534, %s535
      %p547 = scmp.eq.s32.totalorder %s95, 1
      %p548 = por %p546, %p547
      %p550 = scmp.ne.s32.totalorder %s535, %s549
      %p551 = scmp.eq.s32.totalorder %s95, 0
      %p552 = por %p550, %p551
      %s554 = sadd.s32 %s553, 1
      %p557 = scmp.eq.s32.totalorder %s89, 1
      %p558 = scmp.ne.s32.totalorder %s553, %s555
      %p559 = scmp.eq.s32.totalorder %s89, 0
      %p560 = por %p558, %p559
      %p561 = scmp.ne.s32.totalorder %s553, %s555
      %p562 = scmp.eq.s32.totalorder %s94, 1
      %p563 = por %p561, %p562
      %p564 = scmp.ne.s32.totalorder %s555, %s556
      %p565 = scmp.eq.s32.totalorder %s94, 0
      %p566 = por %p564, %p565
      %p567 = scmp.ne.s32.totalorder %s555, %s556
      %p568 = scmp.eq.s32.totalorder %s95, 1
      %p569 = por %p567, %p568
      %p571 = scmp.ne.s32.totalorder %s556, %s570
      %p572 = scmp.eq.s32.totalorder %s95, 0
      %p573 = por %p571, %p572
      %s575 = sadd.s32 %s574, 1
      %p578 = scmp.eq.s32.totalorder %s89, 1
      %p579 = scmp.ne.s32.totalorder %s574, %s576
      %p580 = scmp.eq.s32.totalorder %s89, 0
      %p581 = por %p579, %p580
      %p582 = scmp.ne.s32.totalorder %s574, %s576
      %p583 = scmp.eq.s32.totalorder %s94, 1
      %p584 = por %p582, %p583
      %p585 = scmp.ne.s32.totalorder %s576, %s577
      %p586 = scmp.eq.s32.totalorder %s94, 0
      %p587 = por %p585, %p586
      %p588 = scmp.ne.s32.totalorder %s576, %s577
      %p589 = scmp.eq.s32.totalorder %s95, 1
      %p590 = por %p588, %p589
      %p592 = scmp.ne.s32.totalorder %s577, %s591
      %p593 = scmp.eq.s32.totalorder %s95, 0
      %p594 = por %p592, %p593
      %s596 = sadd.s32 %s595, 1
      %p599 = scmp.eq.s32.totalorder %s89, 1
      %p600 = scmp.ne.s32.totalorder %s595, %s597
      %p601 = scmp.eq.s32.totalorder %s89, 0
      %p602 = por %p600, %p601
      %p603 = scmp.ne.s32.totalorder %s595, %s597
      %p604 = scmp.eq.s32.totalorder %s94, 1
      %p605 = por %p603, %p604
      %p606 = scmp.ne.s32.totalorder %s597, %s598
      %p607 = scmp.eq.s32.totalorder %s94, 0
      %p608 = por %p606, %p607
      %p609 = scmp.ne.s32.totalorder %s597, %s598
      %p610 = scmp.eq.s32.totalorder %s95, 1
      %p611 = por %p609, %p610
      %p613 = scmp.ne.s32.totalorder %s598, %s612
      %p614 = scmp.eq.s32.totalorder %s95, 0
      %p615 = por %p613, %p614
      %s617 = sadd.s32 %s616, 1
      %p620 = scmp.eq.s32.totalorder %s89, 1
      %p621 = scmp.ne.s32.totalorder %s616, %s618
      %p622 = scmp.eq.s32.totalorder %s89, 0
      %p623 = por %p621, %p622
      %p624 = scmp.ne.s32.totalorder %s616, %s618
      %p625 = scmp.eq.s32.totalorder %s94, 1
      %p626 = por %p624, %p625
      %p627 = scmp.ne.s32.totalorder %s618, %s619
      %p628 = scmp.eq.s32.totalorder %s94, 0
      %p629 = por %p627, %p628
      %p630 = scmp.ne.s32.totalorder %s618, %s619
      %p631 = scmp.eq.s32.totalorder %s95, 1
      %p632 = por %p630, %p631
      %p634 = scmp.ne.s32.totalorder %s619, %s633
      %p635 = scmp.eq.s32.totalorder %s95, 0
      %p636 = por %p634, %p635
      %s638 = sadd.s32 %s637, 1
      %p641 = scmp.eq.s32.totalorder %s89, 1
      %p642 = scmp.ne.s32.totalorder %s637, %s639
      %p643 = scmp.eq.s32.totalorder %s89, 0
      %p644 = por %p642, %p643
      %p645 = scmp.ne.s32.totalorder %s637, %s639
      %p646 = scmp.eq.s32.totalorder %s94, 1
      %p647 = por %p645, %p646
      %p648 = scmp.ne.s32.totalorder %s639, %s640
      %p649 = scmp.eq.s32.totalorder %s94, 0
      %p650 = por %p648, %p649
      %p651 = scmp.ne.s32.totalorder %s639, %s640
      %p652 = scmp.eq.s32.totalorder %s95, 1
      %p653 = por %p651, %p652
      %p655 = scmp.ne.s32.totalorder %s640, %s654
      %p656 = scmp.eq.s32.totalorder %s95, 0
      %p657 = por %p655, %p656
      %s659 = sadd.s32 %s658, 1
      %p662 = scmp.eq.s32.totalorder %s89, 1
      %p663 = scmp.ne.s32.totalorder %s658, %s660
      %p664 = scmp.eq.s32.totalorder %s89, 0
      %p665 = por %p663, %p664
      %p666 = scmp.ne.s32.totalorder %s658, %s660
      %p667 = scmp.eq.s32.totalorder %s94, 1
      %p668 = por %p666, %p667
      %p669 = scmp.ne.s32.totalorder %s660, %s661
      %p670 = scmp.eq.s32.totalorder %s94, 0
      %p671 = por %p669, %p670
      %p672 = scmp.ne.s32.totalorder %s660, %s661
      %p673 = scmp.eq.s32.totalorder %s95, 1
      %p674 = por %p672, %p673
      %p676 = scmp.ne.s32.totalorder %s661, %s675
      %p677 = scmp.eq.s32.totalorder %s95, 0
      %p678 = por %p676, %p677
      %s680 = sadd.s32 %s679, 1
      %p683 = scmp.eq.s32.totalorder %s89, 1
      %p684 = scmp.ne.s32.totalorder %s679, %s681
      %p685 = scmp.eq.s32.totalorder %s89, 0
      %p686 = por %p684, %p685
      %p687 = scmp.ne.s32.totalorder %s679, %s681
      %p688 = scmp.eq.s32.totalorder %s94, 1
      %p689 = por %p687, %p688
      %p690 = scmp.ne.s32.totalorder %s681, %s682
      %p691 = scmp.eq.s32.totalorder %s94, 0
      %p692 = por %p690, %p691
      %p693 = scmp.ne.s32.totalorder %s681, %s682
      %p694 = scmp.eq.s32.totalorder %s95, 1
      %p695 = por %p693, %p694
      %p697 = scmp.ne.s32.totalorder %s682, %s696
      %p698 = scmp.eq.s32.totalorder %s95, 0
      %p699 = por %p697, %p698
      %s701 = sadd.s32 %s700, 1
      %p704 = scmp.eq.s32.totalorder %s89, 1
      %p705 = scmp.ne.s32.totalorder %s700, %s702
      %p706 = scmp.eq.s32.totalorder %s89, 0
      %p707 = por %p705, %p706
      %p708 = scmp.ne.s32.totalorder %s700, %s702
      %p709 = scmp.eq.s32.totalorder %s94, 1
      %p710 = por %p708, %p709
      %p711 = scmp.ne.s32.totalorder %s702, %s703
      %p712 = scmp.eq.s32.totalorder %s94, 0
      %p713 = por %p711, %p712
      %p714 = scmp.ne.s32.totalorder %s702, %s703
      %p715 = scmp.eq.s32.totalorder %s95, 1
      %p716 = por %p714, %p715
      %p718 = scmp.ne.s32.totalorder %s703, %s717
      %p719 = scmp.eq.s32.totalorder %s95, 0
      %p720 = por %p718, %p719
      %s722 = sadd.s32 %s721, 1
      %p725 = scmp.eq.s32.totalorder %s89, 1
      %p726 = scmp.ne.s32.totalorder %s721, %s723
      %p727 = scmp.eq.s32.totalorder %s89, 0
      %p728 = por %p726, %p727
      %p729 = scmp.ne.s32.totalorder %s721, %s723
      %p730 = scmp.eq.s32.totalorder %s94, 1
      %p731 = por %p729, %p730
      %p732 = scmp.ne.s32.totalorder %s723, %s724
      %p733 = scmp.eq.s32.totalorder %s94, 0
      %p734 = por %p732, %p733
      %p735 = scmp.ne.s32.totalorder %s723, %s724
      %p736 = scmp.eq.s32.totalorder %s95, 1
      %p737 = por %p735, %p736
      %p739 = scmp.ne.s32.totalorder %s724, %s738
      %p740 = scmp.eq.s32.totalorder %s95, 0
      %p741 = por %p739, %p740
      %s743 = sadd.s32 %s742, 1
      %p746 = scmp.eq.s32.totalorder %s89, 1
      %p747 = scmp.ne.s32.totalorder %s742, %s744
      %p748 = scmp.eq.s32.totalorder %s89, 0
      %p749 = por %p747, %p748
      %p750 = scmp.ne.s32.totalorder %s742, %s744
      %p751 = scmp.eq.s32.totalorder %s94, 1
      %p752 = por %p750, %p751
      %p753 = scmp.ne.s32.totalorder %s744, %s745
      %p754 = scmp.eq.s32.totalorder %s94, 0
      %p755 = por %p753, %p754
      %p756 = scmp.ne.s32.totalorder %s744, %s745
      %p757 = scmp.eq.s32.totalorder %s95, 1
      %p758 = por %p756, %p757
      %p760 = scmp.ne.s32.totalorder %s745, %s759
      %p761 = scmp.eq.s32.totalorder %s95, 0
      %p762 = por %p760, %p761
      %s764 = sadd.s32 %s763, 1
      %p767 = scmp.eq.s32.totalorder %s89, 1
      %p768 = scmp.ne.s32.totalorder %s763, %s765
      %p769 = scmp.eq.s32.totalorder %s89, 0
      %p770 = por %p768, %p769
      %p771 = scmp.ne.s32.totalorder %s763, %s765
      %p772 = scmp.eq.s32.totalorder %s94, 1
      %p773 = por %p771, %p772
      %p774 = scmp.ne.s32.totalorder %s765, %s766
      %p775 = scmp.eq.s32.totalorder %s94, 0
      %p776 = por %p774, %p775
      %p777 = scmp.ne.s32.totalorder %s765, %s766
      %p778 = scmp.eq.s32.totalorder %s95, 1
      %p779 = por %p777, %p778
      %p781 = scmp.ne.s32.totalorder %s766, %s780
      %p782 = scmp.eq.s32.totalorder %s95, 0
      %p783 = por %p781, %p782
      %s785 = sadd.s32 %s784, 1
      %p788 = scmp.eq.s32.totalorder %s89, 1
      %p789 = scmp.ne.s32.totalorder %s784, %s786
      %p790 = scmp.eq.s32.totalorder %s89, 0
      %p791 = por %p789, %p790
      %p792 = scmp.ne.s32.totalorder %s784, %s786
      %p793 = scmp.eq.s32.totalorder %s94, 1
      %p794 = por %p792, %p793
      %p795 = scmp.ne.s32.totalorder %s786, %s787
      %p796 = scmp.eq.s32.totalorder %s94, 0
      %p797 = por %p795, %p796
      %p798 = scmp.ne.s32.totalorder %s786, %s787
      %p799 = scmp.eq.s32.totalorder %s95, 1
      %p800 = por %p798, %p799
      %p802 = scmp.ne.s32.totalorder %s787, %s801
      %p803 = scmp.eq.s32.totalorder %s95, 0
      %p804 = por %p802, %p803
      %s806 = sadd.s32 %s805, 1
      %p809 = scmp.eq.s32.totalorder %s89, 1
      %p810 = scmp.ne.s32.totalorder %s805, %s807
      %p811 = scmp.eq.s32.totalorder %s89, 0
      %p812 = por %p810, %p811
      %p813 = scmp.ne.s32.totalorder %s805, %s807
      %p814 = scmp.eq.s32.totalorder %s94, 1
      %p815 = por %p813, %p814
      %p816 = scmp.ne.s32.totalorder %s807, %s808
      %p817 = scmp.eq.s32.totalorder %s94, 0
      %p818 = por %p816, %p817
      %p819 = scmp.ne.s32.totalorder %s807, %s808
      %p820 = scmp.eq.s32.totalorder %s95, 1
      %p821 = por %p819, %p820
      %p823 = scmp.ne.s32.totalorder %s808, %s822
      %p824 = scmp.eq.s32.totalorder %s95, 0
      %p825 = por %p823, %p824
      %s827 = sadd.s32 %s826, 1
      %p830 = scmp.eq.s32.totalorder %s89, 1
      %p831 = scmp.ne.s32.totalorder %s826, %s828
      %p832 = scmp.eq.s32.totalorder %s89, 0
      %p833 = por %p831, %p832
      %p834 = scmp.ne.s32.totalorder %s826, %s828
      %p835 = scmp.eq.s32.totalorder %s94, 1
      %p836 = por %p834, %p835
      %p837 = scmp.ne.s32.totalorder %s828, %s829
      %p838 = scmp.eq.s32.totalorder %s94, 0
      %p839 = por %p837, %p838
      %p840 = scmp.ne.s32.totalorder %s828, %s829
      %p841 = scmp.eq.s32.totalorder %s95, 1
      %p842 = por %p840, %p841
      %p844 = scmp.ne.s32.totalorder %s829, %s843
      %p845 = scmp.eq.s32.totalorder %s95, 0
      %p846 = por %p844, %p845
      %s847 = ssub.s32 %s89, %s96
      %p848 = scmp.eq.s32.totalorder %s847, 0
      %s850 = sadd.s32 %s849, 1
      %s851 = scalar_select %p848, %s849, %s850
      %p854 = pneg %p848
      %p855 = scmp.eq.s32.totalorder %s89, 1
      %p856 = por %p854, %p855
      %p857 = scmp.ne.s32.totalorder %s849, %s852
      %p858 = scmp.eq.s32.totalorder %s89, 0
      %p859 = por %p857, %p858
      %p860 = scmp.ne.s32.totalorder %s849, %s852
      %p861 = scmp.eq.s32.totalorder %s94, 1
      %p862 = por %p860, %p861
      %p863 = scmp.ne.s32.totalorder %s852, %s853
      %p864 = scmp.eq.s32.totalorder %s94, 0
      %p865 = por %p863, %p864
      %p866 = scmp.ne.s32.totalorder %s852, %s853
      %p867 = scmp.eq.s32.totalorder %s95, 1
      %p868 = por %p866, %p867
      %p870 = scmp.ne.s32.totalorder %s853, %s869
      %p871 = scmp.eq.s32.totalorder %s95, 0
      %p872 = por %p870, %p871
      %s873 = ssub.s32 %s89, %s96
      %p874 = scmp.eq.s32.totalorder %s873, 0
      %s876 = sadd.s32 %s875, 1
      %s877 = scalar_select %p874, %s875, %s876
      %p880 = pneg %p874
      %p881 = scmp.eq.s32.totalorder %s89, 1
      %p882 = por %p880, %p881
      %p883 = scmp.ne.s32.totalorder %s875, %s878
      %p884 = scmp.eq.s32.totalorder %s89, 0
      %p885 = por %p883, %p884
      %p886 = scmp.ne.s32.totalorder %s875, %s878
      %p887 = scmp.eq.s32.totalorder %s94, 1
      %p888 = por %p886, %p887
      %p889 = scmp.ne.s32.totalorder %s878, %s879
      %p890 = scmp.eq.s32.totalorder %s94, 0
      %p891 = por %p889, %p890
      %p892 = scmp.ne.s32.totalorder %s878, %s879
      %p893 = scmp.eq.s32.totalorder %s95, 1
      %p894 = por %p892, %p893
      %p896 = scmp.ne.s32.totalorder %s879, %s895
      %p897 = scmp.eq.s32.totalorder %s95, 0
      %p898 = por %p896, %p897
      %s899 = ssub.s32 %s89, %s96
      %p900 = scmp.eq.s32.totalorder %s899, 0
      %s902 = sadd.s32 %s901, 1
      %s903 = scalar_select %p900, %s901, %s902
      %p906 = pneg %p900
      %p907 = scmp.eq.s32.totalorder %s89, 1
      %p908 = por %p906, %p907
      %p909 = scmp.ne.s32.totalorder %s901, %s904
      %p910 = scmp.eq.s32.totalorder %s89, 0
      %p911 = por %p909, %p910
      %p912 = scmp.ne.s32.totalorder %s901, %s904
      %p913 = scmp.eq.s32.totalorder %s94, 1
      %p914 = por %p912, %p913
      %p915 = scmp.ne.s32.totalorder %s904, %s905
      %p916 = scmp.eq.s32.totalorder %s94, 0
      %p917 = por %p915, %p916
      %p918 = scmp.ne.s32.totalorder %s904, %s905
      %p919 = scmp.eq.s32.totalorder %s95, 1
      %p920 = por %p918, %p919
      %p922 = scmp.ne.s32.totalorder %s905, %s921
      %p923 = scmp.eq.s32.totalorder %s95, 0
      %p924 = por %p922, %p923
      %p925 = scmp.le.s32.totalorder 1, %s89
      %p926 = scmp.lt.s32.totalorder %s89, 3
      %p927 = pnand %p925, %p926
      %p928 = pneg %p927
      // Predicated region
      $region9: #{fwd.4} parent=5 // pred_check
        _
      $region10: #{fwd.4} parent=5 // pred_check_branch
        %930 = sbr.rel (%p927) target = $region12
      $region11: #{fwd.4} parent=5 // pred_region
        %s931 = ssub.s32 %s89, 1
        // Predicated region
        $region13: #{fwd.4} parent=11 // pred_check
          %p932 = pneg %p188
        $region14: #{fwd.4} parent=11 // pred_check_branch
          %934 = sbr.rel (%p932) target = $region16
        $region15: #{fwd.4} parent=11 // pred_region
          _
        $region16: #{fwd.4} parent=11 // pred_fallthru
          _
        // Predicated region
        $region17: #{fwd.4} parent=11 // pred_check
          %p935 = pneg %p209
        $region18: #{fwd.4} parent=11 // pred_check_branch
          %937 = sbr.rel (%p935) target = $region20
        $region19: #{fwd.4} parent=11 // pred_region
          _
        $region20: #{fwd.4} parent=11 // pred_fallthru
          _
        // Predicated region
        $region21: #{fwd.4} parent=11 // pred_check
          %p938 = pneg %p230
        $region22: #{fwd.4} parent=11 // pred_check_branch
          %940 = sbr.rel (%p938) target = $region24
        $region23: #{fwd.4} parent=11 // pred_region
          _
        $region24: #{fwd.4} parent=11 // pred_fallthru
          _
        // Predicated region
        $region25: #{fwd.4} parent=11 // pred_check
          %p941 = pneg %p251
        $region26: #{fwd.4} parent=11 // pred_check_branch
          %943 = sbr.rel (%p941) target = $region28
        $region27: #{fwd.4} parent=11 // pred_region
          _
        $region28: #{fwd.4} parent=11 // pred_fallthru
          _
        // Predicated region
        $region29: #{fwd.4} parent=11 // pred_check
          %p944 = pneg %p272
        $region30: #{fwd.4} parent=11 // pred_check_branch
          %946 = sbr.rel (%p944) target = $region32
        $region31: #{fwd.4} parent=11 // pred_region
          _
        $region32: #{fwd.4} parent=11 // pred_fallthru
          _
        // Predicated region
        $region33: #{fwd.4} parent=11 // pred_check
          %p947 = pneg %p293
        $region34: #{fwd.4} parent=11 // pred_check_branch
          %949 = sbr.rel (%p947) target = $region36
        $region35: #{fwd.4} parent=11 // pred_region
          _
        $region36: #{fwd.4} parent=11 // pred_fallthru
          _
        // Predicated region
        $region37: #{fwd.4} parent=11 // pred_check
          %p950 = pneg %p314
        $region38: #{fwd.4} parent=11 // pred_check_branch
          %952 = sbr.rel (%p950) target = $region40
        $region39: #{fwd.4} parent=11 // pred_region
          _
        $region40: #{fwd.4} parent=11 // pred_fallthru
          _
        // Predicated region
        $region41: #{fwd.4} parent=11 // pred_check
          %p953 = pneg %p335
        $region42: #{fwd.4} parent=11 // pred_check_branch
          %955 = sbr.rel (%p953) target = $region44
        $region43: #{fwd.4} parent=11 // pred_region
          _
        $region44: #{fwd.4} parent=11 // pred_fallthru
          _
        // Predicated region
        $region45: #{fwd.4} parent=11 // pred_check
          %p956 = pneg %p356
        $region46: #{fwd.4} parent=11 // pred_check_branch
          %958 = sbr.rel (%p956) target = $region48
        $region47: #{fwd.4} parent=11 // pred_region
          _
        $region48: #{fwd.4} parent=11 // pred_fallthru
          _
        // Predicated region
        $region49: #{fwd.4} parent=11 // pred_check
          %p959 = pneg %p377
        $region50: #{fwd.4} parent=11 // pred_check_branch
          %961 = sbr.rel (%p959) target = $region52
        $region51: #{fwd.4} parent=11 // pred_region
          _
        $region52: #{fwd.4} parent=11 // pred_fallthru
          _
        // Predicated region
        $region53: #{fwd.4} parent=11 // pred_check
          %p962 = pneg %p398
        $region54: #{fwd.4} parent=11 // pred_check_branch
          %964 = sbr.rel (%p962) target = $region56
        $region55: #{fwd.4} parent=11 // pred_region
          _
        $region56: #{fwd.4} parent=11 // pred_fallthru
          _
        // Predicated region
        $region57: #{fwd.4} parent=11 // pred_check
          %p965 = pneg %p419
        $region58: #{fwd.4} parent=11 // pred_check_branch
          %967 = sbr.rel (%p965) target = $region60
        $region59: #{fwd.4} parent=11 // pred_region
          _
        $region60: #{fwd.4} parent=11 // pred_fallthru
          _
        // Predicated region
        $region61: #{fwd.4} parent=11 // pred_check
          %p968 = pneg %p440
        $region62: #{fwd.4} parent=11 // pred_check_branch
          %970 = sbr.rel (%p968) target = $region64
        $region63: #{fwd.4} parent=11 // pred_region
          _
        $region64: #{fwd.4} parent=11 // pred_fallthru
          _
        // Predicated region
        $region65: #{fwd.4} parent=11 // pred_check
          %p971 = pneg %p461
        $region66: #{fwd.4} parent=11 // pred_check_branch
          %973 = sbr.rel (%p971) target = $region68
        $region67: #{fwd.4} parent=11 // pred_region
          _
        $region68: #{fwd.4} parent=11 // pred_fallthru
          _
        // Predicated region
        $region69: #{fwd.4} parent=11 // pred_check
          %p974 = pneg %p482
        $region70: #{fwd.4} parent=11 // pred_check_branch
          %976 = sbr.rel (%p974) target = $region72
        $region71: #{fwd.4} parent=11 // pred_region
          _
        $region72: #{fwd.4} parent=11 // pred_fallthru
          _
        // Predicated region
        $region73: #{fwd.4} parent=11 // pred_check
          %p977 = pneg %p503
        $region74: #{fwd.4} parent=11 // pred_check_branch
          %979 = sbr.rel (%p977) target = $region76
        $region75: #{fwd.4} parent=11 // pred_region
          _
        $region76: #{fwd.4} parent=11 // pred_fallthru
          _
        // Predicated region
        $region77: #{fwd.4} parent=11 // pred_check
          %p980 = pneg %p524
        $region78: #{fwd.4} parent=11 // pred_check_branch
          %982 = sbr.rel (%p980) target = $region80
        $region79: #{fwd.4} parent=11 // pred_region
          _
        $region80: #{fwd.4} parent=11 // pred_fallthru
          _
        // Predicated region
        $region81: #{fwd.4} parent=11 // pred_check
          %p983 = pneg %p545
        $region82: #{fwd.4} parent=11 // pred_check_branch
          %985 = sbr.rel (%p983) target = $region84
        $region83: #{fwd.4} parent=11 // pred_region
          _
        $region84: #{fwd.4} parent=11 // pred_fallthru
          _
        // Predicated region
        $region85: #{fwd.4} parent=11 // pred_check
          %p986 = pneg %p566
        $region86: #{fwd.4} parent=11 // pred_check_branch
          %988 = sbr.rel (%p986) target = $region88
        $region87: #{fwd.4} parent=11 // pred_region
          _
        $region88: #{fwd.4} parent=11 // pred_fallthru
          _
        // Predicated region
        $region89: #{fwd.4} parent=11 // pred_check
          %p989 = pneg %p587
        $region90: #{fwd.4} parent=11 // pred_check_branch
          %991 = sbr.rel (%p989) target = $region92
        $region91: #{fwd.4} parent=11 // pred_region
          _
        $region92: #{fwd.4} parent=11 // pred_fallthru
          _
        // Predicated region
        $region93: #{fwd.4} parent=11 // pred_check
          %p992 = pneg %p608
        $region94: #{fwd.4} parent=11 // pred_check_branch
          %994 = sbr.rel (%p992) target = $region96
        $region95: #{fwd.4} parent=11 // pred_region
          _
        $region96: #{fwd.4} parent=11 // pred_fallthru
          _
        // Predicated region
        $region97: #{fwd.4} parent=11 // pred_check
          %p995 = pneg %p629
        $region98: #{fwd.4} parent=11 // pred_check_branch
          %997 = sbr.rel (%p995) target = $region100
        $region99: #{fwd.4} parent=11 // pred_region
          _
        $region100: #{fwd.4} parent=11 // pred_fallthru
          _
        // Predicated region
        $region101: #{fwd.4} parent=11 // pred_check
          %p998 = pneg %p650
        $region102: #{fwd.4} parent=11 // pred_check_branch
          %1000 = sbr.rel (%p998) target = $region104
        $region103: #{fwd.4} parent=11 // pred_region
          _
        $region104: #{fwd.4} parent=11 // pred_fallthru
          _
        // Predicated region
        $region105: #{fwd.4} parent=11 // pred_check
          %p1001 = pneg %p671
        $region106: #{fwd.4} parent=11 // pred_check_branch
          %1003 = sbr.rel (%p1001) target = $region108
        $region107: #{fwd.4} parent=11 // pred_region
          _
        $region108: #{fwd.4} parent=11 // pred_fallthru
          _
        // Predicated region
        $region109: #{fwd.4} parent=11 // pred_check
          %p1004 = pneg %p692
        $region110: #{fwd.4} parent=11 // pred_check_branch
          %1006 = sbr.rel (%p1004) target = $region112
        $region111: #{fwd.4} parent=11 // pred_region
          _
        $region112: #{fwd.4} parent=11 // pred_fallthru
          _
        // Predicated region
        $region113: #{fwd.4} parent=11 // pred_check
          %p1007 = pneg %p713
        $region114: #{fwd.4} parent=11 // pred_check_branch
          %1009 = sbr.rel (%p1007) target = $region116
        $region115: #{fwd.4} parent=11 // pred_region
          _
        $region116: #{fwd.4} parent=11 // pred_fallthru
          _
        // Predicated region
        $region117: #{fwd.4} parent=11 // pred_check
          %p1010 = pneg %p734
        $region118: #{fwd.4} parent=11 // pred_check_branch
          %1012 = sbr.rel (%p1010) target = $region120
        $region119: #{fwd.4} parent=11 // pred_region
          _
        $region120: #{fwd.4} parent=11 // pred_fallthru
          _
        // Predicated region
        $region121: #{fwd.4} parent=11 // pred_check
          %p1013 = pneg %p755
        $region122: #{fwd.4} parent=11 // pred_check_branch
          %1015 = sbr.rel (%p1013) target = $region124
        $region123: #{fwd.4} parent=11 // pred_region
          _
        $region124: #{fwd.4} parent=11 // pred_fallthru
          _
        // Predicated region
        $region125: #{fwd.4} parent=11 // pred_check
          %p1016 = pneg %p776
        $region126: #{fwd.4} parent=11 // pred_check_branch
          %1018 = sbr.rel (%p1016) target = $region128
        $region127: #{fwd.4} parent=11 // pred_region
          _
        $region128: #{fwd.4} parent=11 // pred_fallthru
          _
        // Predicated region
        $region129: #{fwd.4} parent=11 // pred_check
          %p1019 = pneg %p797
        $region130: #{fwd.4} parent=11 // pred_check_branch
          %1021 = sbr.rel (%p1019) target = $region132
        $region131: #{fwd.4} parent=11 // pred_region
          _
        $region132: #{fwd.4} parent=11 // pred_fallthru
          _
        // Predicated region
        $region133: #{fwd.4} parent=11 // pred_check
          %p1022 = pneg %p818
        $region134: #{fwd.4} parent=11 // pred_check_branch
          %1024 = sbr.rel (%p1022) target = $region136
        $region135: #{fwd.4} parent=11 // pred_region
          %s1026 = ssub.s32 16, 16
          %1027 = vsyncadd [#allocation3], %s1026
          %s1029 = sshll.u32 [#allocation2], 4
          %s1030 = int_to_ptr.vmem [resolvable:$true] %s1029
          %1032 = dma.hbm_to_vmem [thread:$0]  %s67, 16, %s1030, [#allocation3]
        $region136: #{fwd.4} parent=11 // pred_fallthru
          _
        // Predicated region
        $region137: #{fwd.4} parent=11 // pred_check
          %p1033 = pneg %p839
        $region138: #{fwd.4} parent=11 // pred_check_branch
          %1035 = sbr.rel (%p1033) target = $region140
        $region139: #{fwd.4} parent=11 // pred_region
          _
        $region140: #{fwd.4} parent=11 // pred_fallthru
          _
      $region12: #{fwd.4} parent=5 // pred_fallthru
        _
      %p1036 = scmp.lt.s32.totalorder %s89, 2
      // Predicated region
      $region141: #{fwd.4} parent=5 // pred_check
        %p1037 = pneg %p1036
      $region142: #{fwd.4} parent=5 // pred_check_branch
        %1039 = sbr.rel (%p1037) target = $region144
      $region143: #{fwd.4} parent=5 // pred_region
        // Predicated region
        $region145: #{fwd.4} parent=143 // pred_check
          %p1040 = pneg %p109
        $region146: #{fwd.4} parent=143 // pred_check_branch
          %1042 = sbr.rel (%p1040) target = $region148
        $region147: #{fwd.4} parent=143 // pred_region
          %p1043 = scmp.lt.s32.totalorder %s89, 1
          %s1044 = scalar_select %p1043, %s89, 1
          %s1045 = smul.addr %s1044, 2
          %s1046 = smul.addr %s1045, 8
          %s1047 = scalar_lea.vmem %s1, %s1046
        $region148: #{fwd.4} parent=143 // pred_fallthru
          _
        // Predicated region
        $region149: #{fwd.4} parent=143 // pred_check
          %p1048 = pneg %p135
        $region150: #{fwd.4} parent=143 // pred_check_branch
          %1050 = sbr.rel (%p1048) target = $region152
        $region151: #{fwd.4} parent=143 // pred_region
          %p1051 = scmp.lt.s32.totalorder %s89, 1
          %s1052 = scalar_select %p1051, %s89, 1
          %s1053 = smul.addr %s1052, 2
          %s1054 = smul.addr %s1053, 8
          %s1055 = scalar_lea.vmem %s3, %s1054
        $region152: #{fwd.4} parent=143 // pred_fallthru
          _
        // Predicated region
        $region153: #{fwd.4} parent=143 // pred_check
          %p1056 = pneg %p161
        $region154: #{fwd.4} parent=143 // pred_check_branch
          %1058 = sbr.rel (%p1056) target = $region156
        $region155: #{fwd.4} parent=143 // pred_region
          %p1059 = scmp.lt.s32.totalorder %s89, 1
          %s1060 = scalar_select %p1059, %s89, 1
          %s1061 = smul.addr %s1060, 2
          %s1062 = smul.addr %s1061, 8
          %s1063 = scalar_lea.vmem %s5, %s1062
        $region156: #{fwd.4} parent=143 // pred_fallthru
          _
      $region144: #{fwd.4} parent=5 // pred_fallthru
        _
      %p1064 = scmp.le.s32.totalorder 1, %s89
      %p1065 = scmp.lt.s32.totalorder %s89, 3
      %p1066 = pnand %p1064, %p1065
      %p1067 = pneg %p1066
      // Predicated region
      $region157: #{fwd.4} parent=5 // pred_check
        _
      $region158: #{fwd.4} parent=5 // pred_check_branch
        %1069 = sbr.rel (%p1066) target = $region160
      $region159: #{fwd.4} parent=5 // pred_region
        %s1070 = ssub.s32 %s89, 1
        // Predicated region
        $region161: #{fwd.4} parent=159 // pred_check
          %p1071 = pneg %p818
        $region162: #{fwd.4} parent=159 // pred_check_branch
          %1073 = sbr.rel (%p1071) target = $region164
        $region163: #{fwd.4} parent=159 // pred_region
          %1074 = dma.done [#allocation3], 16
        $region164: #{fwd.4} parent=159 // pred_fallthru
          _
        %p1075 = scmp.lt.s32.totalorder %s94, 1
        %s1076 = scalar_select %p1075, %s94, 1
        %s1077 = smul.addr %s1076, 2
        %s1078 = smul.addr %s1077, 8
        %s1079 = scalar_lea.vmem %s1, %s1078
        %p1080 = pneg %p115
        %p1081 = pneg %p112
        %p1082 = scmp.lt.s32.totalorder %s94, 1
        %s1083 = scalar_select %p1082, %s94, 1
        %s1084 = smul.addr %s1083, 2
        %s1085 = smul.addr %s1084, 8
        %s1086 = scalar_lea.vmem %s3, %s1085
        %p1087 = pneg %p141
        %p1088 = pneg %p138
        %p1089 = scmp.lt.s32.totalorder %s94, 1
        %s1090 = scalar_select %p1089, %s94, 1
        %s1091 = smul.addr %s1090, 2
        %s1092 = smul.addr %s1091, 8
        %s1093 = scalar_lea.vmem %s5, %s1092
        %p1094 = pneg %p167
        %p1095 = pneg %p164
        %p1096 = pneg %p188
        %p1097 = pneg %p185
        %p1098 = pneg %p209
        %p1099 = pneg %p206
        %p1100 = pneg %p230
        %p1101 = pneg %p227
        %p1102 = pneg %p251
        %p1103 = pneg %p248
        %p1104 = pneg %p272
        %p1105 = pneg %p269
        %p1106 = pneg %p293
        %p1107 = pneg %p290
        %p1108 = pneg %p314
        %p1109 = pneg %p311
        %p1110 = pneg %p335
        %p1111 = pneg %p332
        %p1112 = pneg %p356
        %p1113 = pneg %p353
        %p1114 = pneg %p377
        %p1115 = pneg %p374
        %p1116 = pneg %p398
        %p1117 = pneg %p395
        %p1118 = pneg %p419
        %p1119 = pneg %p416
        %p1120 = pneg %p440
        %p1121 = pneg %p437
        %p1122 = pneg %p461
        %p1123 = pneg %p458
        %p1124 = pneg %p482
        %p1125 = pneg %p479
        %p1126 = pneg %p503
        %p1127 = pneg %p500
        %p1128 = pneg %p524
        %p1129 = pneg %p521
        %p1130 = pneg %p545
        %p1131 = pneg %p542
        %p1132 = pneg %p566
        %p1133 = pneg %p563
        %p1134 = pneg %p587
        %p1135 = pneg %p584
        %p1136 = pneg %p608
        %p1137 = pneg %p605
        %p1138 = pneg %p629
        %p1139 = pneg %p626
        %p1140 = pneg %p650
        %p1141 = pneg %p647
        %p1142 = pneg %p671
        %p1143 = pneg %p668
        %p1144 = pneg %p692
        %p1145 = pneg %p689
        %p1146 = pneg %p713
        %p1147 = pneg %p710
        %p1148 = pneg %p734
        %p1149 = pneg %p731
        %p1150 = pneg %p755
        %p1151 = pneg %p752
        %p1152 = pneg %p776
        %p1153 = pneg %p773
        %p1154 = pneg %p797
        %p1155 = pneg %p794
        %p1156 = pneg %p818
        %p1157 = pneg %p815
        %p1158 = pneg %p839
        %p1159 = pneg %p836
        %p1160 = pneg %p865
        %p1161 = pneg %p862
        %s1162 = sand.u32 %s852, 1
        %s1163 = scalar_lea.sflag [#allocation4], %s1162
        %s1164 = sand.u32 %s852, 1
        %s1165 = smul.addr %s1164, 16
        %s1166 = scalar_lea.vmem [#allocation5], %s1165
        %p1167 = pneg %p891
        %p1168 = pneg %p888
        %s1169 = sand.u32 %s878, 1
        %s1170 = scalar_lea.sflag [#allocation7], %s1169
        %s1171 = sand.u32 %s878, 1
        %s1172 = smul.addr %s1171, 16
        %s1173 = scalar_lea.vmem [#allocation6], %s1172
        %p1174 = pneg %p917
        %p1175 = pneg %p914
        %p1176 = scmp.lt.s32.totalorder %s94, 1
        %s1177 = scalar_select %p1176, %s94, 1
        %s1178 = smul.addr %s1177, 4
        %s1179 = scalar_lea.vmem %s75, %s1178
        %p1180 = scmp.lt.s32.totalorder %s94, 1
        %s1181 = scalar_select %p1180, %s94, 1
        %s1182 = smul.addr %s1181, 2
        %s1183 = smul.addr %s1182, 8
        %s1184 = scalar_lea.vmem %s1, %s1183
        %p1185 = scmp.lt.s32.totalorder %s94, 1
        %s1186 = scalar_select %p1185, %s94, 1
        %s1187 = smul.addr %s1186, 2
        %s1188 = smul.addr %s1187, 8
        %s1189 = scalar_lea.vmem %s3, %s1188
        %p1190 = scmp.lt.s32.totalorder %s94, 1
        %s1191 = scalar_select %p1190, %s94, 1
        %s1192 = smul.addr %s1191, 2
        %s1193 = smul.addr %s1192, 8
        %s1194 = scalar_lea.vmem %s5, %s1193
        %p1195 = scmp.lt.s32.totalorder %s94, 1
        %s1196 = scalar_select %p1195, %s94, 1
        %s1197 = smul.addr %s1196, 4
        %s1198 = scalar_lea.vmem %s75, %s1197
        %v1200 = vld [vmem:[%s1184] sm:$0xff]
        %v1201 = vld [vmem:[%s1184 + $0x8] sm:$0xff]
        %v1202 = vld [vmem:[%s1189] sm:$0xff]
        %v1203 = vld [vmem:[%s1189 + $0x8] sm:$0xff]
        %v1204 = vld [vmem:[%s7] sm:$0x1]
        %v1205 = vld [vmem:[%s9] sm:$0x1]
        %vm1206 = vcmask 261120
        %v1207 = vsel %vm1206, %v1200, 0.0
        %1208 = vadd.xlane.f32.xlu0 %v1207
        %v1209 = vpop.xlane.xlu0 %1208
        %v1210 = vsel %vm1206, %v1201, 0.0
        %1211 = vadd.xlane.f32.xlu0 %v1210
        %v1212 = vpop.xlane.xlu0 %1211
        %v1213 = vrcp.pop 32.0
        %v1214 = vmul.f32 %v1209, %v1213
        %v1215 = vmul.f32 %v1212, %v1213
        %v1216 = vsub.f32 %v1200, %v1214
        %v1217 = vsub.f32 %v1201, %v1215
        %v1218 = vmul.f32 %v1216, %v1216
        %v1219 = vmul.f32 %v1217, %v1217
        %v1220 = vsel %vm1206, %v1218, 0.0
        %1221 = vadd.xlane.f32.xlu0 %v1220
        %v1222 = vpop.xlane.xlu0 %1221
        %v1223 = vsel %vm1206, %v1219, 0.0
        %1224 = vadd.xlane.f32.xlu0 %v1223
        %v1225 = vpop.xlane.xlu0 %1224
        %v1226 = vmul.f32 %v1222, %v1213
        %v1227 = vmul.f32 %v1225, %v1213
        %v1228 = vadd.f32 %v1226, 1e-05
        %v1229 = vadd.f32 %v1227, 1e-05
        %v1230 = vrsqrt.pop %v1228
        %v1231 = vrsqrt.pop %v1229
        %v1232 = vmul.f32 %v1216, %v1230
        %v1233 = vmul.f32 %v1217, %v1231
        %v1235 = vlaneseq
        %v1236 = vshrl.u32 %v1235, 7
        %v1237 = vsub.s32 0, %v1236
        %v1238 = vrot.slane %v1204, %v1237
        %v1240 = vmul.f32 %v1232, %v1238
        %v1241 = vmul.f32 %v1233, %v1238
        %v1243 = vlaneseq
        %v1244 = vshrl.u32 %v1243, 7
        %v1245 = vsub.s32 0, %v1244
        %v1246 = vrot.slane %v1205, %v1245
        %v1248 = vadd.f32 %v1240, %v1246
        %v1249 = vadd.f32 %v1241, %v1246
        %v1250 = vsel %vm1206, %v1202, 0.0
        %1251 = vadd.xlane.f32.xlu0 %v1250
        %v1252 = vpop.xlane.xlu0 %1251
        %v1253 = vsel %vm1206, %v1203, 0.0
        %1254 = vadd.xlane.f32.xlu0 %v1253
        %v1255 = vpop.xlane.xlu0 %1254
        %v1256 = vmul.f32 %v1252, %v1213
        %v1257 = vmul.f32 %v1255, %v1213
        %v1258 = vsub.f32 %v1202, %v1256
        %v1259 = vsub.f32 %v1203, %v1257
        %v1260 = vmul.f32 %v1258, %v1258
        %v1261 = vmul.f32 %v1259, %v1259
        %v1262 = vsel %vm1206, %v1260, 0.0
        %1263 = vadd.xlane.f32.xlu0 %v1262
        %v1264 = vpop.xlane.xlu0 %1263
        %v1265 = vsel %vm1206, %v1261, 0.0
        %1266 = vadd.xlane.f32.xlu0 %v1265
        %v1267 = vpop.xlane.xlu0 %1266
        %v1268 = vmul.f32 %v1264, %v1213
        %v1269 = vmul.f32 %v1267, %v1213
        %v1270 = vadd.f32 %v1268, 1e-05
        %v1271 = vadd.f32 %v1269, 1e-05
        %v1272 = vrsqrt.pop %v1270
        %v1273 = vrsqrt.pop %v1271
        %v1274 = vmul.f32 %v1258, %v1272
        %v1275 = vmul.f32 %v1259, %v1273
        %v1276 = vmul.f32 %v1274, %v1238
        %v1277 = vmul.f32 %v1275, %v1238
        %v1278 = vadd.f32 %v1276, %v1246
        %v1279 = vadd.f32 %v1277, %v1246
        %1282 = vrot.lane.b32.xlu0 %v1278, 32
        %v1283 = vpop.permute.xlu0 %1282
        %1284 = vrot.lane.b32.xlu0 %v1279, 32
        %v1285 = vpop.permute.xlu0 %1284
        %v1288 = vsel %vm1206, %v1248, %v1283
        %v1289 = vsel %vm1206, %v1249, %v1285
        %v1290 = vpack.c.bf16 %v1289, %v1288
        %v1291 = vld [vmem:[%s11] sm:$0xf]
        %v1292 = vld [vmem:[%s11 + $0x4] sm:$0xf]
        %v1293 = vld [vmem:[%s11 + $0x8] sm:$0xf]
        %v1294 = vld [vmem:[%s11 + $0xc] sm:$0xf]
        %v1295 = vld [vmem:[%s11 + $0x10] sm:$0xf]
        %v1296 = vld [vmem:[%s11 + $0x14] sm:$0xf]
        %v1297 = vld [vmem:[%s11 + $0x18] sm:$0xf]
        %v1298 = vld [vmem:[%s11 + $0x1c] sm:$0xf]
        %v1299 = vld [vmem:[%s13] sm:$0x1]
        %v1301 = vlaneseq
        %v1302 = vshrl.u32 %v1301, 7
        %v1303 = vsub.s32 0, %v1302
        %v1304 = vrot.slane %v1299, %v1303
        %v1314 = vunpack.c.l.b16 %v1291
        %v1315 = vunpack.c.l.b16 %v1292
        %v1316 = vunpack.c.l.b16 %v1293
        %v1317 = vunpack.c.l.b16 %v1294
        %v1318 = vunpack.c.l.b16 %v1295
        %v1319 = vunpack.c.l.b16 %v1296
        %v1320 = vunpack.c.l.b16 %v1297
        %v1321 = vunpack.c.l.b16 %v1298
        %v1322 = vpack.c.b16 %v1315, %v1314
        %v1323 = vpack.c.b16 %v1317, %v1316
        %v1324 = vpack.c.b16 %v1319, %v1318
        %v1325 = vpack.c.b16 %v1321, %v1320
        %vm1330 = vcmask 523264
        %v1332 = vsel %vm1330, %v1290, 0
        %1334 = vmatprep.subr.bf16.mxu0 0
        %1335 = vmatpush1.bf16.msra.mxu0 %v1322
        %1336 = vmatprep.subr.bf16.mxu0 0
        %1337 = vmatpush1.bf16.msra.mxu0 %v1323
        %1338 = vmatprep.subr.bf16.mxu0 0
        %1339 = vmatpush1.bf16.msra.mxu0 %v1324
        %1340 = vmatprep.subr.bf16.mxu0 0
        %1341 = vmatpush1.bf16.msra.mxu0 %v1325
        %1342 = vmatprep.subr.bf16.mxu0 0
        %1343 = vmatpush1.bf16.msra.mxu0 0
        %1344 = vmatprep.subr.bf16.mxu0 0
        %1345 = vmatpush1.bf16.msra.mxu0 0
        %1346 = vmatprep.subr.bf16.mxu0 0
        %1347 = vmatpush1.bf16.msra.mxu0 0
        %1348 = vmatprep.subr.bf16.mxu0 0
        %1349 = vmatpush1.bf16.msra.mxu0 0
        %1350 = vmatprep.subr.bf16.mxu0 0
        %1351 = vmatpush1.bf16.msra.mxu0 0
        %1352 = vmatprep.subr.bf16.mxu0 0
        %1353 = vmatpush1.bf16.msra.mxu0 0
        %1354 = vmatprep.subr.bf16.mxu0 0
        %1355 = vmatpush1.bf16.msra.mxu0 0
        %1356 = vmatprep.subr.bf16.mxu0 0
        %1357 = vmatpush1.bf16.msra.mxu0 0
        %1358 = vmatprep.subr.bf16.mxu0 0
        %1359 = vmatpush1.bf16.msra.mxu0 0
        %1360 = vmatprep.subr.bf16.mxu0 0
        %1361 = vmatpush1.bf16.msra.mxu0 0
        %1362 = vmatprep.subr.bf16.mxu0 0
        %1363 = vmatpush1.bf16.msra.mxu0 0
        %1364 = vmatprep.subr.bf16.mxu0 0
        %1365 = vmatpush1.bf16.msra.mxu0 0
        %1366 = vmatprep.mubr.bf16.mxu0 0
        %1367 = vmatmul.mubr.bf16.gmra.mrb[0].mxu0 %v1332
        %v1368 = vpop.f32.mrb[0].mxu0
        %v1369 = vadd.f32 %v1304, %v1368
        %v1370 = vpop.f32.mrb[0].mxu0
        %v1371 = vpop.f32.mrb[0].mxu0
        %v1372 = vadd.f32 %v1304, %v1371
        %v1373 = vpop.f32.mrb[0].mxu0
        %1374 = vdwg.mxu0
        %v1375 = vpack.c.bf16 %v1372, %v1369
        %v1376 = vld [vmem:[%s15] sm:$0xf]
        %v1377 = vld [vmem:[%s15 + $0x4] sm:$0xf]
        %v1378 = vld [vmem:[%s15 + $0x8] sm:$0xf]
        %v1379 = vld [vmem:[%s15 + $0xc] sm:$0xf]
        %v1380 = vld [vmem:[%s17] sm:$0x1]
        %v1382 = vlaneseq
        %v1383 = vshrl.u32 %v1382, 7
        %v1384 = vsub.s32 0, %v1383
        %v1385 = vrot.slane %v1380, %v1384
        %v1391 = vunpack.c.l.b16 %v1376
        %v1392 = vunpack.c.l.b16 %v1377
        %v1393 = vunpack.c.l.b16 %v1378
        %v1394 = vunpack.c.l.b16 %v1379
        %v1395 = vpack.c.b16 %v1392, %v1391
        %v1396 = vpack.c.b16 %v1394, %v1393
        %v1400 = vsel %vm1206, %v1375, 0
        %1402 = vmatprep.subr.bf16.mxu0 0
        %1403 = vmatpush1.bf16.msra.mxu0 %v1395
        %1404 = vmatprep.subr.bf16.mxu0 0
        %1405 = vmatpush1.bf16.msra.mxu0 %v1396
        %1406 = vmatprep.subr.bf16.mxu0 0
        %1407 = vmatpush1.bf16.msra.mxu0 0
        %1408 = vmatprep.subr.bf16.mxu0 0
        %1409 = vmatpush1.bf16.msra.mxu0 0
        %1410 = vmatprep.subr.bf16.mxu0 0
        %1411 = vmatpush1.bf16.msra.mxu0 0
        %1412 = vmatprep.subr.bf16.mxu0 0
        %1413 = vmatpush1.bf16.msra.mxu0 0
        %1414 = vmatprep.subr.bf16.mxu0 0
        %1415 = vmatpush1.bf16.msra.mxu0 0
        %1416 = vmatprep.subr.bf16.mxu0 0
        %1417 = vmatpush1.bf16.msra.mxu0 0
        %1418 = vmatprep.subr.bf16.mxu0 0
        %1419 = vmatpush1.bf16.msra.mxu0 0
        %1420 = vmatprep.subr.bf16.mxu0 0
        %1421 = vmatpush1.bf16.msra.mxu0 0
        %1422 = vmatprep.subr.bf16.mxu0 0
        %1423 = vmatpush1.bf16.msra.mxu0 0
        %1424 = vmatprep.subr.bf16.mxu0 0
        %1425 = vmatpush1.bf16.msra.mxu0 0
        %1426 = vmatprep.subr.bf16.mxu0 0
        %1427 = vmatpush1.bf16.msra.mxu0 0
        %1428 = vmatprep.subr.bf16.mxu0 0
        %1429 = vmatpush1.bf16.msra.mxu0 0
        %1430 = vmatprep.subr.bf16.mxu0 0
        %1431 = vmatpush1.bf16.msra.mxu0 0
        %1432 = vmatprep.subr.bf16.mxu0 0
        %1433 = vmatpush1.bf16.msra.mxu0 0
        %1434 = vmatprep.mubr.bf16.mxu0 0
        %1435 = vmatmul.mubr.bf16.gmra.mrb[0].mxu0 %v1400
        %v1436 = vpop.f32.mrb[0].mxu0
        %v1437 = vadd.f32 %v1385, %v1436
        %v1438 = vpop.f32.mrb[0].mxu0
        %v1439 = vpop.f32.mrb[0].mxu0
        %v1440 = vadd.f32 %v1385, %v1439
        %v1441 = vpop.f32.mrb[0].mxu0
        %1442 = vdwg.mxu0
        %v1443 = vpack.c.bf16 %v1440, %v1437
        %v1444 = vld [vmem:[%s19] sm:$0xff]
        %v1445 = vld [vmem:[%s19 + $0x8] sm:$0xff]
        %1447 = vrot.lane.b32.xlu0 %v1443, 96
        %v1448 = vpop.permute.xlu0 %1447
        %vm1449 = vcmask 130048
        %v1451 = vsel %vm1449, %v1443, 0
        %v1454 = vsel %vm1449, %v1448, 0
        %1456 = vmatprep.subr.bf16.mxu0 0
        %1457 = vmatpush1.bf16.xpose.msra.mxu0 %v1454
        %1458 = vmatprep.subr.bf16.mxu0 0
        %1459 = vmatpush1.bf16.xpose.msra.mxu0 0
        %1460 = vmatprep.subr.bf16.mxu0 0
        %1461 = vmatpush1.bf16.xpose.msra.mxu0 0
        %1462 = vmatprep.subr.bf16.mxu0 0
        %1463 = vmatpush1.bf16.xpose.msra.mxu0 0
        %1464 = vmatprep.subr.bf16.mxu0 0
        %1465 = vmatpush1.bf16.xpose.msra.mxu0 0
        %1466 = vmatprep.subr.bf16.mxu0 0
        %1467 = vmatpush1.bf16.xpose.msra.mxu0 0
        %1468 = vmatprep.subr.bf16.mxu0 0
        %1469 = vmatpush1.bf16.xpose.msra.mxu0 0
        %1470 = vmatprep.subr.bf16.mxu0 0
        %1471 = vmatpush1.bf16.xpose.msra.mxu0 0
        %1472 = vmatprep.subr.bf16.mxu0 0
        %1473 = vmatpush1.bf16.xpose.msra.mxu0 0
        %1474 = vmatprep.subr.bf16.mxu0 0
        %1475 = vmatpush1.bf16.xpose.msra.mxu0 0
        %1476 = vmatprep.subr.bf16.mxu0 0
        %1477 = vmatpush1.bf16.xpose.msra.mxu0 0
        %1478 = vmatprep.subr.bf16.mxu0 0
        %1479 = vmatpush1.bf16.xpose.msra.mxu0 0
        %1480 = vmatprep.subr.bf16.mxu0 0
        %1481 = vmatpush1.bf16.xpose.msra.mxu0 0
        %1482 = vmatprep.subr.bf16.mxu0 0
        %1483 = vmatpush1.bf16.xpose.msra.mxu0 0
        %1484 = vmatprep.subr.bf16.mxu0 0
        %1485 = vmatpush1.bf16.xpose.msra.mxu0 0
        %1486 = vmatprep.subr.bf16.mxu0 0
        %1487 = vmatpush1.bf16.xpose.msra.mxu0 0
        %1488 = vmatprep.mubr.bf16.mxu0 0
        %1489 = vmatmul.mubr.bf16.gmra.mrb[0].mxu0 %v1451
        %v1490 = vpop.f32.mrb[0].mxu0
        %v1491 = vadd.f32 %v1444, %v1490
        %v1492 = vpop.f32.mrb[0].mxu0
        %v1493 = vpop.f32.mrb[0].mxu0
        %v1494 = vadd.f32 %v1445, %v1493
        %v1495 = vpop.f32.mrb[0].mxu0
        %1496 = vdwg.mxu0
        %v1497 = vsel %vm1449, %v1491, -inf
        %1498 = vmax.xlane.f32.xlu0 %v1497
        %v1499 = vpop.xlane.xlu0 %1498
        %v1500 = vsel %vm1449, %v1494, -inf
        %1501 = vmax.xlane.f32.xlu0 %v1500
        %v1502 = vpop.xlane.xlu0 %1501
        %v1503 = vsub.f32 %v1491, %v1499
        %v1504 = vsub.f32 %v1494, %v1502
        %v1505 = vmul.f32 %v1503, 1.442695
        %v1506 = vpow.pop %v1505
        %v1507 = vmul.f32 %v1504, 1.442695
        %v1508 = vpow.pop %v1507
        %v1509 = vsel %vm1449, %v1506, 0.0
        %1510 = vadd.xlane.f32.xlu0 %v1509
        %v1511 = vpop.xlane.xlu0 %1510
        %v1512 = vsel %vm1449, %v1508, 0.0
        %1513 = vadd.xlane.f32.xlu0 %v1512
        %v1514 = vpop.xlane.xlu0 %1513
        %v1515 = vrcp.pop %v1511
        %v1516 = vmul.f32 1.0, %v1515
        %v1517 = vrcp.pop %v1514
        %v1518 = vmul.f32 1.0, %v1517
        %v1519 = vmul.f32 %v1506, %v1516
        %v1520 = vmul.f32 %v1508, %v1518
        %v1521 = vpack.c.bf16 %v1520, %v1519
        %1522 = vrot.lane.b32.xlu0 %v1443, 64
        %v1523 = vpop.permute.xlu0 %1522
        %v1526 = vsel %vm1449, %v1521, 0
        %1528 = vmatprep.subr.bf16.mxu0 0
        %1529 = vmatpush1.bf16.msra.mxu0 %v1523
        %1530 = vmatprep.subr.bf16.mxu0 0
        %1531 = vmatpush1.bf16.msra.mxu0 0
        %1532 = vmatprep.subr.bf16.mxu0 0
        %1533 = vmatpush1.bf16.msra.mxu0 0
        %1534 = vmatprep.subr.bf16.mxu0 0
        %1535 = vmatpush1.bf16.msra.mxu0 0
        %1536 = vmatprep.subr.bf16.mxu0 0
        %1537 = vmatpush1.bf16.msra.mxu0 0
        %1538 = vmatprep.subr.bf16.mxu0 0
        %1539 = vmatpush1.bf16.msra.mxu0 0
        %1540 = vmatprep.subr.bf16.mxu0 0
        %1541 = vmatpush1.bf16.msra.mxu0 0
        %1542 = vmatprep.subr.bf16.mxu0 0
        %1543 = vmatpush1.bf16.msra.mxu0 0
        %1544 = vmatprep.subr.bf16.mxu0 0
        %1545 = vmatpush1.bf16.msra.mxu0 0
        %1546 = vmatprep.subr.bf16.mxu0 0
        %1547 = vmatpush1.bf16.msra.mxu0 0
        %1548 = vmatprep.subr.bf16.mxu0 0
        %1549 = vmatpush1.bf16.msra.mxu0 0
        %1550 = vmatprep.subr.bf16.mxu0 0
        %1551 = vmatpush1.bf16.msra.mxu0 0
        %1552 = vmatprep.subr.bf16.mxu0 0
        %1553 = vmatpush1.bf16.msra.mxu0 0
        %1554 = vmatprep.subr.bf16.mxu0 0
        %1555 = vmatpush1.bf16.msra.mxu0 0
        %1556 = vmatprep.subr.bf16.mxu0 0
        %1557 = vmatpush1.bf16.msra.mxu0 0
        %1558 = vmatprep.subr.bf16.mxu0 0
        %1559 = vmatpush1.bf16.msra.mxu0 0
        %1560 = vmatprep.mubr.bf16.mxu0 0
        %1561 = vmatmul.mubr.bf16.gmra.mrb[0].mxu0 %v1526
        %v1562 = vpop.f32.mrb[0].mxu0
        %v1563 = vadd.f32 0.0, %v1562
        %v1564 = vpop.f32.mrb[0].mxu0
        %v1565 = vpop.f32.mrb[0].mxu0
        %v1566 = vadd.f32 0.0, %v1565
        %v1567 = vpop.f32.mrb[0].mxu0
        %1568 = vdwg.mxu0
        %s1569 = scalar_lea.vmem %s19, 16
        %v1570 = vld [vmem:[%s1569] sm:$0xff]
        %v1571 = vld [vmem:[%s1569 + $0x8] sm:$0xff]
        %1572 = vrot.lane.b32.xlu0 %v1443, 112
        %v1573 = vpop.permute.xlu0 %1572
        %1574 = vrot.lane.b32.xlu0 %v1443, 80
        %v1575 = vpop.permute.xlu0 %1574
        %v1577 = vsel %vm1449, %v1573, 0
        %v1580 = vsel %vm1449, %v1575, 0
        %1582 = vmatprep.subr.bf16.mxu0 0
        %1583 = vmatpush1.bf16.xpose.msra.mxu0 %v1580
        %1584 = vmatprep.subr.bf16.mxu0 0
        %1585 = vmatpush1.bf16.xpose.msra.mxu0 0
        %1586 = vmatprep.subr.bf16.mxu0 0
        %1587 = vmatpush1.bf16.xpose.msra.mxu0 0
        %1588 = vmatprep.subr.bf16.mxu0 0
        %1589 = vmatpush1.bf16.xpose.msra.mxu0 0
        %1590 = vmatprep.subr.bf16.mxu0 0
        %1591 = vmatpush1.bf16.xpose.msra.mxu0 0
        %1592 = vmatprep.subr.bf16.mxu0 0
        %1593 = vmatpush1.bf16.xpose.msra.mxu0 0
        %1594 = vmatprep.subr.bf16.mxu0 0
        %1595 = vmatpush1.bf16.xpose.msra.mxu0 0
        %1596 = vmatprep.subr.bf16.mxu0 0
        %1597 = vmatpush1.bf16.xpose.msra.mxu0 0
        %1598 = vmatprep.subr.bf16.mxu0 0
        %1599 = vmatpush1.bf16.xpose.msra.mxu0 0
        %1600 = vmatprep.subr.bf16.mxu0 0
        %1601 = vmatpush1.bf16.xpose.msra.mxu0 0
        %1602 = vmatprep.subr.bf16.mxu0 0
        %1603 = vmatpush1.bf16.xpose.msra.mxu0 0
        %1604 = vmatprep.subr.bf16.mxu0 0
        %1605 = vmatpush1.bf16.xpose.msra.mxu0 0
        %1606 = vmatprep.subr.bf16.mxu0 0
        %1607 = vmatpush1.bf16.xpose.msra.mxu0 0
        %1608 = vmatprep.subr.bf16.mxu0 0
        %1609 = vmatpush1.bf16.xpose.msra.mxu0 0
        %1610 = vmatprep.subr.bf16.mxu0 0
        %1611 = vmatpush1.bf16.xpose.msra.mxu0 0
        %1612 = vmatprep.subr.bf16.mxu0 0
        %1613 = vmatpush1.bf16.xpose.msra.mxu0 0
        %1614 = vmatprep.mubr.bf16.mxu0 0
        %1615 = vmatmul.mubr.bf16.gmra.mrb[0].mxu0 %v1577
        %v1616 = vpop.f32.mrb[0].mxu0
        %v1617 = vadd.f32 %v1570, %v1616
        %v1618 = vpop.f32.mrb[0].mxu0
        %v1619 = vpop.f32.mrb[0].mxu0
        %v1620 = vadd.f32 %v1571, %v1619
        %v1621 = vpop.f32.mrb[0].mxu0
        %1622 = vdwg.mxu0
        %v1623 = vsel %vm1449, %v1617, -inf
        %1624 = vmax.xlane.f32.xlu0 %v1623
        %v1625 = vpop.xlane.xlu0 %1624
        %v1626 = vsel %vm1449, %v1620, -inf
        %1627 = vmax.xlane.f32.xlu0 %v1626
        %v1628 = vpop.xlane.xlu0 %1627
        %v1629 = vsub.f32 %v1617, %v1625
        %v1630 = vsub.f32 %v1620, %v1628
        %v1631 = vmul.f32 %v1629, 1.442695
        %v1632 = vpow.pop %v1631
        %v1633 = vmul.f32 %v1630, 1.442695
        %v1634 = vpow.pop %v1633
        %v1635 = vsel %vm1449, %v1632, 0.0
        %1636 = vadd.xlane.f32.xlu0 %v1635
        %v1637 = vpop.xlane.xlu0 %1636
        %v1638 = vsel %vm1449, %v1634, 0.0
        %1639 = vadd.xlane.f32.xlu0 %v1638
        %v1640 = vpop.xlane.xlu0 %1639
        %v1641 = vrcp.pop %v1637
        %v1642 = vmul.f32 1.0, %v1641
        %v1643 = vrcp.pop %v1640
        %v1644 = vmul.f32 1.0, %v1643
        %v1645 = vmul.f32 %v1632, %v1642
        %v1646 = vmul.f32 %v1634, %v1644
        %v1647 = vpack.c.bf16 %v1646, %v1645
        %1648 = vrot.lane.b32.xlu0 %v1443, 48
        %v1649 = vpop.permute.xlu0 %1648
        %v1652 = vsel %vm1449, %v1647, 0
        %1654 = vmatprep.subr.bf16.mxu0 0
        %1655 = vmatpush1.bf16.msra.mxu0 %v1649
        %1656 = vmatprep.subr.bf16.mxu0 0
        %1657 = vmatpush1.bf16.msra.mxu0 0
        %1658 = vmatprep.subr.bf16.mxu0 0
        %1659 = vmatpush1.bf16.msra.mxu0 0
        %1660 = vmatprep.subr.bf16.mxu0 0
        %1661 = vmatpush1.bf16.msra.mxu0 0
        %1662 = vmatprep.subr.bf16.mxu0 0
        %1663 = vmatpush1.bf16.msra.mxu0 0
        %1664 = vmatprep.subr.bf16.mxu0 0
        %1665 = vmatpush1.bf16.msra.mxu0 0
        %1666 = vmatprep.subr.bf16.mxu0 0
        %1667 = vmatpush1.bf16.msra.mxu0 0
        %1668 = vmatprep.subr.bf16.mxu0 0
        %1669 = vmatpush1.bf16.msra.mxu0 0
        %1670 = vmatprep.subr.bf16.mxu0 0
        %1671 = vmatpush1.bf16.msra.mxu0 0
        %1672 = vmatprep.subr.bf16.mxu0 0
        %1673 = vmatpush1.bf16.msra.mxu0 0
        %1674 = vmatprep.subr.bf16.mxu0 0
        %1675 = vmatpush1.bf16.msra.mxu0 0
        %1676 = vmatprep.subr.bf16.mxu0 0
        %1677 = vmatpush1.bf16.msra.mxu0 0
        %1678 = vmatprep.subr.bf16.mxu0 0
        %1679 = vmatpush1.bf16.msra.mxu0 0
        %1680 = vmatprep.subr.bf16.mxu0 0
        %1681 = vmatpush1.bf16.msra.mxu0 0
        %1682 = vmatprep.subr.bf16.mxu0 0
        %1683 = vmatpush1.bf16.msra.mxu0 0
        %1684 = vmatprep.subr.bf16.mxu0 0
        %1685 = vmatpush1.bf16.msra.mxu0 0
        %1686 = vmatprep.mubr.bf16.mxu0 0
        %1687 = vmatmul.mubr.bf16.gmra.mrb[0].mxu0 %v1652
        %v1688 = vpop.f32.mrb[0].mxu0
        %v1689 = vadd.f32 0.0, %v1688
        %v1690 = vpop.f32.mrb[0].mxu0
        %v1691 = vpop.f32.mrb[0].mxu0
        %v1692 = vadd.f32 0.0, %v1691
        %v1693 = vpop.f32.mrb[0].mxu0
        %1694 = vdwg.mxu0
        %1697 = vrot.lane.b32.xlu0 %v1689, 16
        %v1698 = vpop.permute.xlu0 %1697
        %1699 = vrot.lane.b32.xlu0 %v1692, 16
        %v1700 = vpop.permute.xlu0 %1699
        %v1703 = vsel %vm1449, %v1563, %v1698
        %v1704 = vsel %vm1449, %v1566, %v1700
        %v1705 = vpack.c.bf16 %v1704, %v1703
        %v1706 = vld [vmem:[%s21] sm:$0xf]
        %v1707 = vld [vmem:[%s21 + $0x4] sm:$0xf]
        %v1708 = vld [vmem:[%s21 + $0x8] sm:$0xf]
        %v1709 = vld [vmem:[%s21 + $0xc] sm:$0xf]
        %v1710 = vld [vmem:[%s23] sm:$0x1]
        %v1712 = vlaneseq
        %v1713 = vshrl.u32 %v1712, 7
        %v1714 = vsub.s32 0, %v1713
        %v1715 = vrot.slane %v1710, %v1714
        %v1721 = vunpack.c.l.b16 %v1706
        %v1722 = vunpack.c.l.b16 %v1707
        %v1723 = vunpack.c.l.b16 %v1708
        %v1724 = vunpack.c.l.b16 %v1709
        %v1725 = vpack.c.b16 %v1722, %v1721
        %v1726 = vpack.c.b16 %v1724, %v1723
        %v1730 = vsel %vm1206, %v1705, 0
        %1732 = vmatprep.subr.bf16.mxu0 0
        %1733 = vmatpush1.bf16.msra.mxu0 %v1725
        %1734 = vmatprep.subr.bf16.mxu0 0
        %1735 = vmatpush1.bf16.msra.mxu0 %v1726
        %1736 = vmatprep.subr.bf16.mxu0 0
        %1737 = vmatpush1.bf16.msra.mxu0 0
        %1738 = vmatprep.subr.bf16.mxu0 0
        %1739 = vmatpush1.bf16.msra.mxu0 0
        %1740 = vmatprep.subr.bf16.mxu0 0
        %1741 = vmatpush1.bf16.msra.mxu0 0
        %1742 = vmatprep.subr.bf16.mxu0 0
        %1743 = vmatpush1.bf16.msra.mxu0 0
        %1744 = vmatprep.subr.bf16.mxu0 0
        %1745 = vmatpush1.bf16.msra.mxu0 0
        %1746 = vmatprep.subr.bf16.mxu0 0
        %1747 = vmatpush1.bf16.msra.mxu0 0
        %1748 = vmatprep.subr.bf16.mxu0 0
        %1749 = vmatpush1.bf16.msra.mxu0 0
        %1750 = vmatprep.subr.bf16.mxu0 0
        %1751 = vmatpush1.bf16.msra.mxu0 0
        %1752 = vmatprep.subr.bf16.mxu0 0
        %1753 = vmatpush1.bf16.msra.mxu0 0
        %1754 = vmatprep.subr.bf16.mxu0 0
        %1755 = vmatpush1.bf16.msra.mxu0 0
        %1756 = vmatprep.subr.bf16.mxu0 0
        %1757 = vmatpush1.bf16.msra.mxu0 0
        %1758 = vmatprep.subr.bf16.mxu0 0
        %1759 = vmatpush1.bf16.msra.mxu0 0
        %1760 = vmatprep.subr.bf16.mxu0 0
        %1761 = vmatpush1.bf16.msra.mxu0 0
        %1762 = vmatprep.subr.bf16.mxu0 0
        %1763 = vmatpush1.bf16.msra.mxu0 0
        %1764 = vmatprep.mubr.bf16.mxu0 0
        %1765 = vmatmul.mubr.bf16.gmra.mrb[0].mxu0 %v1730
        %v1766 = vpop.f32.mrb[0].mxu0
        %v1767 = vadd.f32 %v1715, %v1766
        %v1768 = vpop.f32.mrb[0].mxu0
        %v1769 = vpop.f32.mrb[0].mxu0
        %v1770 = vadd.f32 %v1715, %v1769
        %v1771 = vpop.f32.mrb[0].mxu0
        %1772 = vdwg.mxu0
        %v1773 = vadd.f32 %v1200, %v1767
        %v1774 = vadd.f32 %v1201, %v1770
        %v1775 = vld [vmem:[%s25] sm:$0x1]
        %v1776 = vld [vmem:[%s27] sm:$0x1]
        %v1777 = vsel %vm1206, %v1773, 0.0
        %1778 = vadd.xlane.f32.xlu0 %v1777
        %v1779 = vpop.xlane.xlu0 %1778
        %v1780 = vsel %vm1206, %v1774, 0.0
        %1781 = vadd.xlane.f32.xlu0 %v1780
        %v1782 = vpop.xlane.xlu0 %1781
        %v1783 = vmul.f32 %v1779, %v1213
        %v1784 = vmul.f32 %v1782, %v1213
        %v1785 = vsub.f32 %v1773, %v1783
        %v1786 = vsub.f32 %v1774, %v1784
        %v1787 = vmul.f32 %v1785, %v1785
        %v1788 = vmul.f32 %v1786, %v1786
        %v1789 = vsel %vm1206, %v1787, 0.0
        %1790 = vadd.xlane.f32.xlu0 %v1789
        %v1791 = vpop.xlane.xlu0 %1790
        %v1792 = vsel %vm1206, %v1788, 0.0
        %1793 = vadd.xlane.f32.xlu0 %v1792
        %v1794 = vpop.xlane.xlu0 %1793
        %v1795 = vmul.f32 %v1791, %v1213
        %v1796 = vmul.f32 %v1794, %v1213
        %v1797 = vadd.f32 %v1795, 1e-05
        %v1798 = vadd.f32 %v1796, 1e-05
        %v1799 = vrsqrt.pop %v1797
        %v1800 = vrsqrt.pop %v1798
        %v1801 = vmul.f32 %v1785, %v1799
        %v1802 = vmul.f32 %v1786, %v1800
        %v1804 = vlaneseq
        %v1805 = vshrl.u32 %v1804, 7
        %v1806 = vsub.s32 0, %v1805
        %v1807 = vrot.slane %v1775, %v1806
        %v1809 = vmul.f32 %v1801, %v1807
        %v1810 = vmul.f32 %v1802, %v1807
        %v1812 = vlaneseq
        %v1813 = vshrl.u32 %v1812, 7
        %v1814 = vsub.s32 0, %v1813
        %v1815 = vrot.slane %v1776, %v1814
        %v1817 = vadd.f32 %v1809, %v1815
        %v1818 = vadd.f32 %v1810, %v1815
        %v1819 = vpack.c.bf16 %v1818, %v1817
        %v1820 = vld [vmem:[%s29] sm:$0xf]
        %v1821 = vld [vmem:[%s29 + $0x4] sm:$0xf]
        %v1822 = vld [vmem:[%s29 + $0x8] sm:$0xf]
        %v1823 = vld [vmem:[%s29 + $0xc] sm:$0xf]
        %v1824 = vld [vmem:[%s31] sm:$0x1]
        %v1826 = vlaneseq
        %v1827 = vshrl.u32 %v1826, 7
        %v1828 = vsub.s32 0, %v1827
        %v1829 = vrot.slane %v1824, %v1828
        %v1835 = vunpack.c.l.b16 %v1820
        %v1836 = vunpack.c.l.b16 %v1821
        %v1837 = vunpack.c.l.b16 %v1822
        %v1838 = vunpack.c.l.b16 %v1823
        %v1839 = vpack.c.b16 %v1836, %v1835
        %v1840 = vpack.c.b16 %v1838, %v1837
        %v1844 = vsel %vm1206, %v1819, 0
        %1846 = vmatprep.subr.bf16.mxu0 0
        %1847 = vmatpush1.bf16.msra.mxu0 %v1839
        %1848 = vmatprep.subr.bf16.mxu0 0
        %1849 = vmatpush1.bf16.msra.mxu0 %v1840
        %1850 = vmatprep.subr.bf16.mxu0 0
        %1851 = vmatpush1.bf16.msra.mxu0 0
        %1852 = vmatprep.subr.bf16.mxu0 0
        %1853 = vmatpush1.bf16.msra.mxu0 0
        %1854 = vmatprep.subr.bf16.mxu0 0
        %1855 = vmatpush1.bf16.msra.mxu0 0
        %1856 = vmatprep.subr.bf16.mxu0 0
        %1857 = vmatpush1.bf16.msra.mxu0 0
        %1858 = vmatprep.subr.bf16.mxu0 0
        %1859 = vmatpush1.bf16.msra.mxu0 0
        %1860 = vmatprep.subr.bf16.mxu0 0
        %1861 = vmatpush1.bf16.msra.mxu0 0
        %1862 = vmatprep.subr.bf16.mxu0 0
        %1863 = vmatpush1.bf16.msra.mxu0 0
        %1864 = vmatprep.subr.bf16.mxu0 0
        %1865 = vmatpush1.bf16.msra.mxu0 0
        %1866 = vmatprep.subr.bf16.mxu0 0
        %1867 = vmatpush1.bf16.msra.mxu0 0
        %1868 = vmatprep.subr.bf16.mxu0 0
        %1869 = vmatpush1.bf16.msra.mxu0 0
        %1870 = vmatprep.subr.bf16.mxu0 0
        %1871 = vmatpush1.bf16.msra.mxu0 0
        %1872 = vmatprep.subr.bf16.mxu0 0
        %1873 = vmatpush1.bf16.msra.mxu0 0
        %1874 = vmatprep.subr.bf16.mxu0 0
        %1875 = vmatpush1.bf16.msra.mxu0 0
        %1876 = vmatprep.subr.bf16.mxu0 0
        %1877 = vmatpush1.bf16.msra.mxu0 0
        %1878 = vmatprep.mubr.bf16.mxu0 0
        %1879 = vmatmul.mubr.bf16.gmra.mrb[0].mxu0 %v1844
        %v1880 = vpop.f32.mrb[0].mxu0
        %v1881 = vadd.f32 %v1829, %v1880
        %v1882 = vpop.f32.mrb[0].mxu0
        %v1883 = vpop.f32.mrb[0].mxu0
        %v1884 = vadd.f32 %v1829, %v1883
        %v1885 = vpop.f32.mrb[0].mxu0
        %1886 = vdwg.mxu0
        %v1887 = vmul.f32 %v1881, 0.5
        %v1888 = vmul.f32 %v1884, 0.5
        %v1889 = vmul.f32 %v1881, 0.70710677
        %v1890 = vmul.f32 %v1884, 0.70710677
        %v1891 = vand.u32 2147483647, %v1889
        %v1892 = vand.u32 2147483647, %v1890
        %v1893 = vmul.f32 %v1891, 0.3275911
        %v1894 = vmul.f32 %v1892, 0.3275911
        %v1895 = vadd.f32 %v1893, 1.0
        %v1896 = vadd.f32 %v1894, 1.0
        %v1897 = vrcp.pop %v1895
        %v1898 = vmul.f32 1.0, %v1897
        %v1899 = vrcp.pop %v1896
        %v1900 = vmul.f32 1.0, %v1899
        %v1901 = vmul.f32 %v1898, 1.0614054
        %v1902 = vmul.f32 %v1900, 1.0614054
        %v1903 = vadd.f32 %v1901, -1.4531521
        %v1904 = vadd.f32 %v1902, -1.4531521
        %v1905 = vmul.f32 %v1903, %v1898
        %v1906 = vmul.f32 %v1904, %v1900
        %v1907 = vadd.f32 %v1905, 1.4214138
        %v1908 = vadd.f32 %v1906, 1.4214138
        %v1909 = vmul.f32 %v1907, %v1898
        %v1910 = vmul.f32 %v1908, %v1900
        %v1911 = vadd.f32 %v1909, -0.28449672
        %v1912 = vadd.f32 %v1910, -0.28449672
        %v1913 = vmul.f32 %v1911, %v1898
        %v1914 = vmul.f32 %v1912, %v1900
        %v1915 = vadd.f32 %v1913, 0.2548296
        %v1916 = vadd.f32 %v1914, 0.2548296
        %v1917 = vmul.f32 %v1915, %v1898
        %v1918 = vmul.f32 %v1916, %v1900
        %v1919 = vsub.f32 0.0, %v1891
        %v1920 = vsub.f32 0.0, %v1892
        %v1921 = vmul.f32 %v1919, %v1891
        %v1922 = vmul.f32 %v1920, %v1892
        %v1923 = vmul.f32 %v1921, 1.442695
        %v1924 = vpow.pop %v1923
        %v1925 = vmul.f32 %v1922, 1.442695
        %v1926 = vpow.pop %v1925
        %v1927 = vmul.f32 %v1917, %v1924
        %v1928 = vmul.f32 %v1918, %v1926
        %v1929 = vsub.f32 1.0, %v1927
        %v1930 = vsub.f32 1.0, %v1928
        %vm1931 = vcmp.lt.f32.partialorder %v1889, 0.0
        %vm1932 = vcmp.lt.f32.partialorder %v1890, 0.0
        %v1933 = vsub.f32 0.0, %v1929
        %v1934 = vsub.f32 0.0, %v1930
        %v1935 = vsel %vm1931, %v1933, %v1929
        %v1936 = vsel %vm1932, %v1934, %v1930
        %v1937 = vadd.f32 %v1935, 1.0
        %v1938 = vadd.f32 %v1936, 1.0
        %v1939 = vmul.f32 %v1887, %v1937
        %v1940 = vmul.f32 %v1888, %v1938
        %v1941 = vpack.c.bf16 %v1940, %v1939
        %v1942 = vld [vmem:[%s33] sm:$0xf]
        %v1943 = vld [vmem:[%s33 + $0x4] sm:$0xf]
        %v1944 = vld [vmem:[%s33 + $0x8] sm:$0xf]
        %v1945 = vld [vmem:[%s33 + $0xc] sm:$0xf]
        %v1946 = vld [vmem:[%s33 + $0x10] sm:$0xf]
        %v1947 = vld [vmem:[%s33 + $0x14] sm:$0xf]
        %v1948 = vld [vmem:[%s33 + $0x18] sm:$0xf]
        %v1949 = vld [vmem:[%s33 + $0x1c] sm:$0xf]
        %v1950 = vld [vmem:[%s33 + $0x20] sm:$0xf]
        %v1951 = vld [vmem:[%s33 + $0x24] sm:$0xf]
        %v1952 = vld [vmem:[%s33 + $0x28] sm:$0xf]
        %v1953 = vld [vmem:[%s33 + $0x2c] sm:$0xf]
        %v1954 = vld [vmem:[%s33 + $0x30] sm:$0xf]
        %v1955 = vld [vmem:[%s33 + $0x34] sm:$0xf]
        %v1956 = vld [vmem:[%s33 + $0x38] sm:$0xf]
        %v1957 = vld [vmem:[%s33 + $0x3c] sm:$0xf]
        %v1958 = vld [vmem:[%s35] sm:$0x1]
        %v1960 = vlaneseq
        %v1961 = vshrl.u32 %v1960, 7
        %v1962 = vsub.s32 0, %v1961
        %v1963 = vrot.slane %v1958, %v1962
        %v1981 = vunpack.c.l.b16 %v1942
        %v1982 = vunpack.c.l.b16 %v1943
        %v1983 = vunpack.c.l.b16 %v1944
        %v1984 = vunpack.c.l.b16 %v1945
        %v1985 = vunpack.c.l.b16 %v1946
        %v1986 = vunpack.c.l.b16 %v1947
        %v1987 = vunpack.c.l.b16 %v1948
        %v1988 = vunpack.c.l.b16 %v1949
        %v1989 = vunpack.c.l.b16 %v1950
        %v1990 = vunpack.c.l.b16 %v1951
        %v1991 = vunpack.c.l.b16 %v1952
        %v1992 = vunpack.c.l.b16 %v1953
        %v1993 = vunpack.c.l.b16 %v1954
        %v1994 = vunpack.c.l.b16 %v1955
        %v1995 = vunpack.c.l.b16 %v1956
        %v1996 = vunpack.c.l.b16 %v1957
        %v1997 = vpack.c.b16 %v1982, %v1981
        %v1998 = vpack.c.b16 %v1984, %v1983
        %v1999 = vpack.c.b16 %v1986, %v1985
        %v2000 = vpack.c.b16 %v1988, %v1987
        %v2001 = vpack.c.b16 %v1990, %v1989
        %v2002 = vpack.c.b16 %v1992, %v1991
        %v2003 = vpack.c.b16 %v1994, %v1993
        %v2004 = vpack.c.b16 %v1996, %v1995
        %2013 = vmatprep.subr.bf16.mxu0 0
        %2014 = vmatpush1.bf16.msra.mxu0 %v1997
        %2015 = vmatprep.subr.bf16.mxu0 0
        %2016 = vmatpush1.bf16.msra.mxu0 %v1998
        %2017 = vmatprep.subr.bf16.mxu0 0
        %2018 = vmatpush1.bf16.msra.mxu0 %v1999
        %2019 = vmatprep.subr.bf16.mxu0 0
        %2020 = vmatpush1.bf16.msra.mxu0 %v2000
        %2021 = vmatprep.subr.bf16.mxu0 0
        %2022 = vmatpush1.bf16.msra.mxu0 %v2001
        %2023 = vmatprep.subr.bf16.mxu0 0
        %2024 = vmatpush1.bf16.msra.mxu0 %v2002
        %2025 = vmatprep.subr.bf16.mxu0 0
        %2026 = vmatpush1.bf16.msra.mxu0 %v2003
        %2027 = vmatprep.subr.bf16.mxu0 0
        %2028 = vmatpush1.bf16.msra.mxu0 %v2004
        %2029 = vmatprep.subr.bf16.mxu0 0
        %2030 = vmatpush1.bf16.msra.mxu0 0
        %2031 = vmatprep.subr.bf16.mxu0 0
        %2032 = vmatpush1.bf16.msra.mxu0 0
        %2033 = vmatprep.subr.bf16.mxu0 0
        %2034 = vmatpush1.bf16.msra.mxu0 0
        %2035 = vmatprep.subr.bf16.mxu0 0
        %2036 = vmatpush1.bf16.msra.mxu0 0
        %2037 = vmatprep.subr.bf16.mxu0 0
        %2038 = vmatpush1.bf16.msra.mxu0 0
        %2039 = vmatprep.subr.bf16.mxu0 0
        %2040 = vmatpush1.bf16.msra.mxu0 0
        %2041 = vmatprep.subr.bf16.mxu0 0
        %2042 = vmatpush1.bf16.msra.mxu0 0
        %2043 = vmatprep.subr.bf16.mxu0 0
        %2044 = vmatpush1.bf16.msra.mxu0 0
        %2045 = vmatprep.mubr.bf16.mxu0 0
        %2046 = vmatmul.mubr.bf16.gmra.mrb[0].mxu0 %v1941
        %v2047 = vpop.f32.mrb[0].mxu0
        %v2048 = vadd.f32 %v1963, %v2047
        %v2049 = vpop.f32.mrb[0].mxu0
        %v2050 = vpop.f32.mrb[0].mxu0
        %v2051 = vadd.f32 %v1963, %v2050
        %v2052 = vpop.f32.mrb[0].mxu0
        %2053 = vdwg.mxu0
        %v2054 = vadd.f32 %v1773, %v2048
        %v2055 = vadd.f32 %v1774, %v2051
        %v2056 = vld [vmem:[%s37] sm:$0x1]
        %v2057 = vld [vmem:[%s39] sm:$0x1]
        %v2058 = vsel %vm1206, %v2054, 0.0
        %2059 = vadd.xlane.f32.xlu0 %v2058
        %v2060 = vpop.xlane.xlu0 %2059
        %v2061 = vsel %vm1206, %v2055, 0.0
        %2062 = vadd.xlane.f32.xlu0 %v2061
        %v2063 = vpop.xlane.xlu0 %2062
        %v2064 = vmul.f32 %v2060, %v1213
        %v2065 = vmul.f32 %v2063, %v1213
        %v2066 = vsub.f32 %v2054, %v2064
        %v2067 = vsub.f32 %v2055, %v2065
        %v2068 = vmul.f32 %v2066, %v2066
        %v2069 = vmul.f32 %v2067, %v2067
        %v2070 = vsel %vm1206, %v2068, 0.0
        %2071 = vadd.xlane.f32.xlu0 %v2070
        %v2072 = vpop.xlane.xlu0 %2071
        %v2073 = vsel %vm1206, %v2069, 0.0
        %2074 = vadd.xlane.f32.xlu0 %v2073
        %v2075 = vpop.xlane.xlu0 %2074
        %v2076 = vmul.f32 %v2072, %v1213
        %v2077 = vmul.f32 %v2075, %v1213
        %v2078 = vadd.f32 %v2076, 1e-05
        %v2079 = vadd.f32 %v2077, 1e-05
        %v2080 = vrsqrt.pop %v2078
        %v2081 = vrsqrt.pop %v2079
        %v2082 = vmul.f32 %v2066, %v2080
        %v2083 = vmul.f32 %v2067, %v2081
        %v2085 = vlaneseq
        %v2086 = vshrl.u32 %v2085, 7
        %v2087 = vsub.s32 0, %v2086
        %v2088 = vrot.slane %v2056, %v2087
        %v2090 = vmul.f32 %v2082, %v2088
        %v2091 = vmul.f32 %v2083, %v2088
        %v2093 = vlaneseq
        %v2094 = vshrl.u32 %v2093, 7
        %v2095 = vsub.s32 0, %v2094
        %v2096 = vrot.slane %v2057, %v2095
        %v2098 = vadd.f32 %v2090, %v2096
        %v2099 = vadd.f32 %v2091, %v2096
        %v2100 = vpack.c.bf16 %v2099, %v2098
        %v2101 = vld [vmem:[%s41] sm:$0xf]
        %v2102 = vld [vmem:[%s41 + $0x4] sm:$0xf]
        %v2103 = vld [vmem:[%s41 + $0x8] sm:$0xf]
        %v2104 = vld [vmem:[%s41 + $0xc] sm:$0xf]
        %v2105 = vld [vmem:[%s43] sm:$0x1]
        %v2107 = vlaneseq
        %v2108 = vshrl.u32 %v2107, 7
        %v2109 = vsub.s32 0, %v2108
        %v2110 = vrot.slane %v2105, %v2109
        %v2116 = vunpack.c.l.b16 %v2101
        %v2117 = vunpack.c.l.b16 %v2102
        %v2118 = vunpack.c.l.b16 %v2103
        %v2119 = vunpack.c.l.b16 %v2104
        %v2120 = vpack.c.b16 %v2117, %v2116
        %v2121 = vpack.c.b16 %v2119, %v2118
        %v2125 = vsel %vm1206, %v2100, 0
        %2127 = vmatprep.subr.bf16.mxu0 0
        %2128 = vmatpush1.bf16.msra.mxu0 %v2120
        %2129 = vmatprep.subr.bf16.mxu0 0
        %2130 = vmatpush1.bf16.msra.mxu0 %v2121
        %2131 = vmatprep.subr.bf16.mxu0 0
        %2132 = vmatpush1.bf16.msra.mxu0 0
        %2133 = vmatprep.subr.bf16.mxu0 0
        %2134 = vmatpush1.bf16.msra.mxu0 0
        %2135 = vmatprep.subr.bf16.mxu0 0
        %2136 = vmatpush1.bf16.msra.mxu0 0
        %2137 = vmatprep.subr.bf16.mxu0 0
        %2138 = vmatpush1.bf16.msra.mxu0 0
        %2139 = vmatprep.subr.bf16.mxu0 0
        %2140 = vmatpush1.bf16.msra.mxu0 0
        %2141 = vmatprep.subr.bf16.mxu0 0
        %2142 = vmatpush1.bf16.msra.mxu0 0
        %2143 = vmatprep.subr.bf16.mxu0 0
        %2144 = vmatpush1.bf16.msra.mxu0 0
        %2145 = vmatprep.subr.bf16.mxu0 0
        %2146 = vmatpush1.bf16.msra.mxu0 0
        %2147 = vmatprep.subr.bf16.mxu0 0
        %2148 = vmatpush1.bf16.msra.mxu0 0
        %2149 = vmatprep.subr.bf16.mxu0 0
        %2150 = vmatpush1.bf16.msra.mxu0 0
        %2151 = vmatprep.subr.bf16.mxu0 0
        %2152 = vmatpush1.bf16.msra.mxu0 0
        %2153 = vmatprep.subr.bf16.mxu0 0
        %2154 = vmatpush1.bf16.msra.mxu0 0
        %2155 = vmatprep.subr.bf16.mxu0 0
        %2156 = vmatpush1.bf16.msra.mxu0 0
        %2157 = vmatprep.subr.bf16.mxu0 0
        %2158 = vmatpush1.bf16.msra.mxu0 0
        %2159 = vmatprep.mubr.bf16.mxu0 0
        %2160 = vmatmul.mubr.bf16.gmra.mrb[0].mxu0 %v2125
        %v2161 = vpop.f32.mrb[0].mxu0
        %v2162 = vadd.f32 %v2110, %v2161
        %v2163 = vpop.f32.mrb[0].mxu0
        %v2164 = vpop.f32.mrb[0].mxu0
        %v2165 = vadd.f32 %v2110, %v2164
        %v2166 = vpop.f32.mrb[0].mxu0
        %2167 = vdwg.mxu0
        %v2168 = vpack.c.bf16 %v2165, %v2162
        %v2169 = vld [vmem:[%s45] sm:$0xff]
        %v2170 = vld [vmem:[%s45 + $0x8] sm:$0xff]
        %2172 = vrot.lane.b32.xlu0 %v2168, 96
        %v2173 = vpop.permute.xlu0 %2172
        %v2175 = vsel %vm1449, %v2168, 0
        %v2178 = vsel %vm1449, %v2173, 0
        %2180 = vmatprep.subr.bf16.mxu0 0
        %2181 = vmatpush1.bf16.xpose.msra.mxu0 %v2178
        %2182 = vmatprep.subr.bf16.mxu0 0
        %2183 = vmatpush1.bf16.xpose.msra.mxu0 0
        %2184 = vmatprep.subr.bf16.mxu0 0
        %2185 = vmatpush1.bf16.xpose.msra.mxu0 0
        %2186 = vmatprep.subr.bf16.mxu0 0
        %2187 = vmatpush1.bf16.xpose.msra.mxu0 0
        %2188 = vmatprep.subr.bf16.mxu0 0
        %2189 = vmatpush1.bf16.xpose.msra.mxu0 0
        %2190 = vmatprep.subr.bf16.mxu0 0
        %2191 = vmatpush1.bf16.xpose.msra.mxu0 0
        %2192 = vmatprep.subr.bf16.mxu0 0
        %2193 = vmatpush1.bf16.xpose.msra.mxu0 0
        %2194 = vmatprep.subr.bf16.mxu0 0
        %2195 = vmatpush1.bf16.xpose.msra.mxu0 0
        %2196 = vmatprep.subr.bf16.mxu0 0
        %2197 = vmatpush1.bf16.xpose.msra.mxu0 0
        %2198 = vmatprep.subr.bf16.mxu0 0
        %2199 = vmatpush1.bf16.xpose.msra.mxu0 0
        %2200 = vmatprep.subr.bf16.mxu0 0
        %2201 = vmatpush1.bf16.xpose.msra.mxu0 0
        %2202 = vmatprep.subr.bf16.mxu0 0
        %2203 = vmatpush1.bf16.xpose.msra.mxu0 0
        %2204 = vmatprep.subr.bf16.mxu0 0
        %2205 = vmatpush1.bf16.xpose.msra.mxu0 0
        %2206 = vmatprep.subr.bf16.mxu0 0
        %2207 = vmatpush1.bf16.xpose.msra.mxu0 0
        %2208 = vmatprep.subr.bf16.mxu0 0
        %2209 = vmatpush1.bf16.xpose.msra.mxu0 0
        %2210 = vmatprep.subr.bf16.mxu0 0
        %2211 = vmatpush1.bf16.xpose.msra.mxu0 0
        %2212 = vmatprep.mubr.bf16.mxu0 0
        %2213 = vmatmul.mubr.bf16.gmra.mrb[0].mxu0 %v2175
        %v2214 = vpop.f32.mrb[0].mxu0
        %v2215 = vadd.f32 %v2169, %v2214
        %v2216 = vpop.f32.mrb[0].mxu0
        %v2217 = vpop.f32.mrb[0].mxu0
        %v2218 = vadd.f32 %v2170, %v2217
        %v2219 = vpop.f32.mrb[0].mxu0
        %2220 = vdwg.mxu0
        %v2221 = vsel %vm1449, %v2215, -inf
        %2222 = vmax.xlane.f32.xlu0 %v2221
        %v2223 = vpop.xlane.xlu0 %2222
        %v2224 = vsel %vm1449, %v2218, -inf
        %2225 = vmax.xlane.f32.xlu0 %v2224
        %v2226 = vpop.xlane.xlu0 %2225
        %v2227 = vsub.f32 %v2215, %v2223
        %v2228 = vsub.f32 %v2218, %v2226
        %v2229 = vmul.f32 %v2227, 1.442695
        %v2230 = vpow.pop %v2229
        %v2231 = vmul.f32 %v2228, 1.442695
        %v2232 = vpow.pop %v2231
        %v2233 = vsel %vm1449, %v2230, 0.0
        %2234 = vadd.xlane.f32.xlu0 %v2233
        %v2235 = vpop.xlane.xlu0 %2234
        %v2236 = vsel %vm1449, %v2232, 0.0
        %2237 = vadd.xlane.f32.xlu0 %v2236
        %v2238 = vpop.xlane.xlu0 %2237
        %v2239 = vrcp.pop %v2235
        %v2240 = vmul.f32 1.0, %v2239
        %v2241 = vrcp.pop %v2238
        %v2242 = vmul.f32 1.0, %v2241
        %v2243 = vmul.f32 %v2230, %v2240
        %v2244 = vmul.f32 %v2232, %v2242
        %v2245 = vpack.c.bf16 %v2244, %v2243
        %2246 = vrot.lane.b32.xlu0 %v2168, 64
        %v2247 = vpop.permute.xlu0 %2246
        %v2250 = vsel %vm1449, %v2245, 0
        %2252 = vmatprep.subr.bf16.mxu0 0
        %2253 = vmatpush1.bf16.msra.mxu0 %v2247
        %2254 = vmatprep.subr.bf16.mxu0 0
        %2255 = vmatpush1.bf16.msra.mxu0 0
        %2256 = vmatprep.subr.bf16.mxu0 0
        %2257 = vmatpush1.bf16.msra.mxu0 0
        %2258 = vmatprep.subr.bf16.mxu0 0
        %2259 = vmatpush1.bf16.msra.mxu0 0
        %2260 = vmatprep.subr.bf16.mxu0 0
        %2261 = vmatpush1.bf16.msra.mxu0 0
        %2262 = vmatprep.subr.bf16.mxu0 0
        %2263 = vmatpush1.bf16.msra.mxu0 0
        %2264 = vmatprep.subr.bf16.mxu0 0
        %2265 = vmatpush1.bf16.msra.mxu0 0
        %2266 = vmatprep.subr.bf16.mxu0 0
        %2267 = vmatpush1.bf16.msra.mxu0 0
        %2268 = vmatprep.subr.bf16.mxu0 0
        %2269 = vmatpush1.bf16.msra.mxu0 0
        %2270 = vmatprep.subr.bf16.mxu0 0
        %2271 = vmatpush1.bf16.msra.mxu0 0
        %2272 = vmatprep.subr.bf16.mxu0 0
        %2273 = vmatpush1.bf16.msra.mxu0 0
        %2274 = vmatprep.subr.bf16.mxu0 0
        %2275 = vmatpush1.bf16.msra.mxu0 0
        %2276 = vmatprep.subr.bf16.mxu0 0
        %2277 = vmatpush1.bf16.msra.mxu0 0
        %2278 = vmatprep.subr.bf16.mxu0 0
        %2279 = vmatpush1.bf16.msra.mxu0 0
        %2280 = vmatprep.subr.bf16.mxu0 0
        %2281 = vmatpush1.bf16.msra.mxu0 0
        %2282 = vmatprep.subr.bf16.mxu0 0
        %2283 = vmatpush1.bf16.msra.mxu0 0
        %2284 = vmatprep.mubr.bf16.mxu0 0
        %2285 = vmatmul.mubr.bf16.gmra.mrb[0].mxu0 %v2250
        %v2286 = vpop.f32.mrb[0].mxu0
        %v2287 = vadd.f32 0.0, %v2286
        %v2288 = vpop.f32.mrb[0].mxu0
        %v2289 = vpop.f32.mrb[0].mxu0
        %v2290 = vadd.f32 0.0, %v2289
        %v2291 = vpop.f32.mrb[0].mxu0
        %2292 = vdwg.mxu0
        %s2293 = scalar_lea.vmem %s45, 16
        %v2294 = vld [vmem:[%s2293] sm:$0xff]
        %v2295 = vld [vmem:[%s2293 + $0x8] sm:$0xff]
        %2296 = vrot.lane.b32.xlu0 %v2168, 112
        %v2297 = vpop.permute.xlu0 %2296
        %2298 = vrot.lane.b32.xlu0 %v2168, 80
        %v2299 = vpop.permute.xlu0 %2298
        %v2301 = vsel %vm1449, %v2297, 0
        %v2304 = vsel %vm1449, %v2299, 0
        %2306 = vmatprep.subr.bf16.mxu0 0
        %2307 = vmatpush1.bf16.xpose.msra.mxu0 %v2304
        %2308 = vmatprep.subr.bf16.mxu0 0
        %2309 = vmatpush1.bf16.xpose.msra.mxu0 0
        %2310 = vmatprep.subr.bf16.mxu0 0
        %2311 = vmatpush1.bf16.xpose.msra.mxu0 0
        %2312 = vmatprep.subr.bf16.mxu0 0
        %2313 = vmatpush1.bf16.xpose.msra.mxu0 0
        %2314 = vmatprep.subr.bf16.mxu0 0
        %2315 = vmatpush1.bf16.xpose.msra.mxu0 0
        %2316 = vmatprep.subr.bf16.mxu0 0
        %2317 = vmatpush1.bf16.xpose.msra.mxu0 0
        %2318 = vmatprep.subr.bf16.mxu0 0
        %2319 = vmatpush1.bf16.xpose.msra.mxu0 0
        %2320 = vmatprep.subr.bf16.mxu0 0
        %2321 = vmatpush1.bf16.xpose.msra.mxu0 0
        %2322 = vmatprep.subr.bf16.mxu0 0
        %2323 = vmatpush1.bf16.xpose.msra.mxu0 0
        %2324 = vmatprep.subr.bf16.mxu0 0
        %2325 = vmatpush1.bf16.xpose.msra.mxu0 0
        %2326 = vmatprep.subr.bf16.mxu0 0
        %2327 = vmatpush1.bf16.xpose.msra.mxu0 0
        %2328 = vmatprep.subr.bf16.mxu0 0
        %2329 = vmatpush1.bf16.xpose.msra.mxu0 0
        %2330 = vmatprep.subr.bf16.mxu0 0
        %2331 = vmatpush1.bf16.xpose.msra.mxu0 0
        %2332 = vmatprep.subr.bf16.mxu0 0
        %2333 = vmatpush1.bf16.xpose.msra.mxu0 0
        %2334 = vmatprep.subr.bf16.mxu0 0
        %2335 = vmatpush1.bf16.xpose.msra.mxu0 0
        %2336 = vmatprep.subr.bf16.mxu0 0
        %2337 = vmatpush1.bf16.xpose.msra.mxu0 0
        %2338 = vmatprep.mubr.bf16.mxu0 0
        %2339 = vmatmul.mubr.bf16.gmra.mrb[0].mxu0 %v2301
        %v2340 = vpop.f32.mrb[0].mxu0
        %v2341 = vadd.f32 %v2294, %v2340
        %v2342 = vpop.f32.mrb[0].mxu0
        %v2343 = vpop.f32.mrb[0].mxu0
        %v2344 = vadd.f32 %v2295, %v2343
        %v2345 = vpop.f32.mrb[0].mxu0
        %2346 = vdwg.mxu0
        %v2347 = vsel %vm1449, %v2341, -inf
        %2348 = vmax.xlane.f32.xlu0 %v2347
        %v2349 = vpop.xlane.xlu0 %2348
        %v2350 = vsel %vm1449, %v2344, -inf
        %2351 = vmax.xlane.f32.xlu0 %v2350
        %v2352 = vpop.xlane.xlu0 %2351
        %v2353 = vsub.f32 %v2341, %v2349
        %v2354 = vsub.f32 %v2344, %v2352
        %v2355 = vmul.f32 %v2353, 1.442695
        %v2356 = vpow.pop %v2355
        %v2357 = vmul.f32 %v2354, 1.442695
        %v2358 = vpow.pop %v2357
        %v2359 = vsel %vm1449, %v2356, 0.0
        %2360 = vadd.xlane.f32.xlu0 %v2359
        %v2361 = vpop.xlane.xlu0 %2360
        %v2362 = vsel %vm1449, %v2358, 0.0
        %2363 = vadd.xlane.f32.xlu0 %v2362
        %v2364 = vpop.xlane.xlu0 %2363
        %v2365 = vrcp.pop %v2361
        %v2366 = vmul.f32 1.0, %v2365
        %v2367 = vrcp.pop %v2364
        %v2368 = vmul.f32 1.0, %v2367
        %v2369 = vmul.f32 %v2356, %v2366
        %v2370 = vmul.f32 %v2358, %v2368
        %v2371 = vpack.c.bf16 %v2370, %v2369
        %2372 = vrot.lane.b32.xlu0 %v2168, 48
        %v2373 = vpop.permute.xlu0 %2372
        %v2376 = vsel %vm1449, %v2371, 0
        %2378 = vmatprep.subr.bf16.mxu0 0
        %2379 = vmatpush1.bf16.msra.mxu0 %v2373
        %2380 = vmatprep.subr.bf16.mxu0 0
        %2381 = vmatpush1.bf16.msra.mxu0 0
        %2382 = vmatprep.subr.bf16.mxu0 0
        %2383 = vmatpush1.bf16.msra.mxu0 0
        %2384 = vmatprep.subr.bf16.mxu0 0
        %2385 = vmatpush1.bf16.msra.mxu0 0
        %2386 = vmatprep.subr.bf16.mxu0 0
        %2387 = vmatpush1.bf16.msra.mxu0 0
        %2388 = vmatprep.subr.bf16.mxu0 0
        %2389 = vmatpush1.bf16.msra.mxu0 0
        %2390 = vmatprep.subr.bf16.mxu0 0
        %2391 = vmatpush1.bf16.msra.mxu0 0
        %2392 = vmatprep.subr.bf16.mxu0 0
        %2393 = vmatpush1.bf16.msra.mxu0 0
        %2394 = vmatprep.subr.bf16.mxu0 0
        %2395 = vmatpush1.bf16.msra.mxu0 0
        %2396 = vmatprep.subr.bf16.mxu0 0
        %2397 = vmatpush1.bf16.msra.mxu0 0
        %2398 = vmatprep.subr.bf16.mxu0 0
        %2399 = vmatpush1.bf16.msra.mxu0 0
        %2400 = vmatprep.subr.bf16.mxu0 0
        %2401 = vmatpush1.bf16.msra.mxu0 0
        %2402 = vmatprep.subr.bf16.mxu0 0
        %2403 = vmatpush1.bf16.msra.mxu0 0
        %2404 = vmatprep.subr.bf16.mxu0 0
        %2405 = vmatpush1.bf16.msra.mxu0 0
        %2406 = vmatprep.subr.bf16.mxu0 0
        %2407 = vmatpush1.bf16.msra.mxu0 0
        %2408 = vmatprep.subr.bf16.mxu0 0
        %2409 = vmatpush1.bf16.msra.mxu0 0
        %2410 = vmatprep.mubr.bf16.mxu0 0
        %2411 = vmatmul.mubr.bf16.gmra.mrb[0].mxu0 %v2376
        %v2412 = vpop.f32.mrb[0].mxu0
        %v2413 = vadd.f32 0.0, %v2412
        %v2414 = vpop.f32.mrb[0].mxu0
        %v2415 = vpop.f32.mrb[0].mxu0
        %v2416 = vadd.f32 0.0, %v2415
        %v2417 = vpop.f32.mrb[0].mxu0
        %2418 = vdwg.mxu0
        %2421 = vrot.lane.b32.xlu0 %v2413, 16
        %v2422 = vpop.permute.xlu0 %2421
        %2423 = vrot.lane.b32.xlu0 %v2416, 16
        %v2424 = vpop.permute.xlu0 %2423
        %v2427 = vsel %vm1449, %v2287, %v2422
        %v2428 = vsel %vm1449, %v2290, %v2424
        %v2429 = vpack.c.bf16 %v2428, %v2427
        %v2430 = vld [vmem:[%s47] sm:$0xf]
        %v2431 = vld [vmem:[%s47 + $0x4] sm:$0xf]
        %v2432 = vld [vmem:[%s47 + $0x8] sm:$0xf]
        %v2433 = vld [vmem:[%s47 + $0xc] sm:$0xf]
        %v2434 = vld [vmem:[%s49] sm:$0x1]
        %v2436 = vlaneseq
        %v2437 = vshrl.u32 %v2436, 7
        %v2438 = vsub.s32 0, %v2437
        %v2439 = vrot.slane %v2434, %v2438
        %v2445 = vunpack.c.l.b16 %v2430
        %v2446 = vunpack.c.l.b16 %v2431
        %v2447 = vunpack.c.l.b16 %v2432
        %v2448 = vunpack.c.l.b16 %v2433
        %v2449 = vpack.c.b16 %v2446, %v2445
        %v2450 = vpack.c.b16 %v2448, %v2447
        %v2454 = vsel %vm1206, %v2429, 0
        %2456 = vmatprep.subr.bf16.mxu0 0
        %2457 = vmatpush1.bf16.msra.mxu0 %v2449
        %2458 = vmatprep.subr.bf16.mxu0 0
        %2459 = vmatpush1.bf16.msra.mxu0 %v2450
        %2460 = vmatprep.subr.bf16.mxu0 0
        %2461 = vmatpush1.bf16.msra.mxu0 0
        %2462 = vmatprep.subr.bf16.mxu0 0
        %2463 = vmatpush1.bf16.msra.mxu0 0
        %2464 = vmatprep.subr.bf16.mxu0 0
        %2465 = vmatpush1.bf16.msra.mxu0 0
        %2466 = vmatprep.subr.bf16.mxu0 0
        %2467 = vmatpush1.bf16.msra.mxu0 0
        %2468 = vmatprep.subr.bf16.mxu0 0
        %2469 = vmatpush1.bf16.msra.mxu0 0
        %2470 = vmatprep.subr.bf16.mxu0 0
        %2471 = vmatpush1.bf16.msra.mxu0 0
        %2472 = vmatprep.subr.bf16.mxu0 0
        %2473 = vmatpush1.bf16.msra.mxu0 0
        %2474 = vmatprep.subr.bf16.mxu0 0
        %2475 = vmatpush1.bf16.msra.mxu0 0
        %2476 = vmatprep.subr.bf16.mxu0 0
        %2477 = vmatpush1.bf16.msra.mxu0 0
        %2478 = vmatprep.subr.bf16.mxu0 0
        %2479 = vmatpush1.bf16.msra.mxu0 0
        %2480 = vmatprep.subr.bf16.mxu0 0
        %2481 = vmatpush1.bf16.msra.mxu0 0
        %2482 = vmatprep.subr.bf16.mxu0 0
        %2483 = vmatpush1.bf16.msra.mxu0 0
        %2484 = vmatprep.subr.bf16.mxu0 0
        %2485 = vmatpush1.bf16.msra.mxu0 0
        %2486 = vmatprep.subr.bf16.mxu0 0
        %2487 = vmatpush1.bf16.msra.mxu0 0
        %2488 = vmatprep.mubr.bf16.mxu0 0
        %2489 = vmatmul.mubr.bf16.gmra.mrb[0].mxu0 %v2454
        %v2490 = vpop.f32.mrb[0].mxu0
        %v2491 = vadd.f32 %v2439, %v2490
        %v2492 = vpop.f32.mrb[0].mxu0
        %v2493 = vpop.f32.mrb[0].mxu0
        %v2494 = vadd.f32 %v2439, %v2493
        %v2495 = vpop.f32.mrb[0].mxu0
        %2496 = vdwg.mxu0
        %v2497 = vadd.f32 %v2054, %v2491
        %v2498 = vadd.f32 %v2055, %v2494
        %v2499 = vld [vmem:[%s51] sm:$0x1]
        %v2500 = vld [vmem:[%s53] sm:$0x1]
        %v2501 = vsel %vm1206, %v2497, 0.0
        %2502 = vadd.xlane.f32.xlu0 %v2501
        %v2503 = vpop.xlane.xlu0 %2502
        %v2504 = vsel %vm1206, %v2498, 0.0
        %2505 = vadd.xlane.f32.xlu0 %v2504
        %v2506 = vpop.xlane.xlu0 %2505
        %v2507 = vmul.f32 %v2503, %v1213
        %v2508 = vmul.f32 %v2506, %v1213
        %v2509 = vsub.f32 %v2497, %v2507
        %v2510 = vsub.f32 %v2498, %v2508
        %v2511 = vmul.f32 %v2509, %v2509
        %v2512 = vmul.f32 %v2510, %v2510
        %v2513 = vsel %vm1206, %v2511, 0.0
        %2514 = vadd.xlane.f32.xlu0 %v2513
        %v2515 = vpop.xlane.xlu0 %2514
        %v2516 = vsel %vm1206, %v2512, 0.0
        %2517 = vadd.xlane.f32.xlu0 %v2516
        %v2518 = vpop.xlane.xlu0 %2517
        %v2519 = vmul.f32 %v2515, %v1213
        %v2520 = vmul.f32 %v2518, %v1213
        %v2521 = vadd.f32 %v2519, 1e-05
        %v2522 = vadd.f32 %v2520, 1e-05
        %v2523 = vrsqrt.pop %v2521
        %v2524 = vrsqrt.pop %v2522
        %v2525 = vmul.f32 %v2509, %v2523
        %v2526 = vmul.f32 %v2510, %v2524
        %v2528 = vlaneseq
        %v2529 = vshrl.u32 %v2528, 7
        %v2530 = vsub.s32 0, %v2529
        %v2531 = vrot.slane %v2499, %v2530
        %v2533 = vmul.f32 %v2525, %v2531
        %v2534 = vmul.f32 %v2526, %v2531
        %v2536 = vlaneseq
        %v2537 = vshrl.u32 %v2536, 7
        %v2538 = vsub.s32 0, %v2537
        %v2539 = vrot.slane %v2500, %v2538
        %v2541 = vadd.f32 %v2533, %v2539
        %v2542 = vadd.f32 %v2534, %v2539
        %v2543 = vpack.c.bf16 %v2542, %v2541
        %v2544 = vld [vmem:[%s55] sm:$0xf]
        %v2545 = vld [vmem:[%s55 + $0x4] sm:$0xf]
        %v2546 = vld [vmem:[%s55 + $0x8] sm:$0xf]
        %v2547 = vld [vmem:[%s55 + $0xc] sm:$0xf]
        %v2548 = vld [vmem:[%s57] sm:$0x1]
        %v2550 = vlaneseq
        %v2551 = vshrl.u32 %v2550, 7
        %v2552 = vsub.s32 0, %v2551
        %v2553 = vrot.slane %v2548, %v2552
        %v2559 = vunpack.c.l.b16 %v2544
        %v2560 = vunpack.c.l.b16 %v2545
        %v2561 = vunpack.c.l.b16 %v2546
        %v2562 = vunpack.c.l.b16 %v2547
        %v2563 = vpack.c.b16 %v2560, %v2559
        %v2564 = vpack.c.b16 %v2562, %v2561
        %v2568 = vsel %vm1206, %v2543, 0
        %2570 = vmatprep.subr.bf16.mxu0 0
        %2571 = vmatpush1.bf16.msra.mxu0 %v2563
        %2572 = vmatprep.subr.bf16.mxu0 0
        %2573 = vmatpush1.bf16.msra.mxu0 %v2564
        %2574 = vmatprep.subr.bf16.mxu0 0
        %2575 = vmatpush1.bf16.msra.mxu0 0
        %2576 = vmatprep.subr.bf16.mxu0 0
        %2577 = vmatpush1.bf16.msra.mxu0 0
        %2578 = vmatprep.subr.bf16.mxu0 0
        %2579 = vmatpush1.bf16.msra.mxu0 0
        %2580 = vmatprep.subr.bf16.mxu0 0
        %2581 = vmatpush1.bf16.msra.mxu0 0
        %2582 = vmatprep.subr.bf16.mxu0 0
        %2583 = vmatpush1.bf16.msra.mxu0 0
        %2584 = vmatprep.subr.bf16.mxu0 0
        %2585 = vmatpush1.bf16.msra.mxu0 0
        %2586 = vmatprep.subr.bf16.mxu0 0
        %2587 = vmatpush1.bf16.msra.mxu0 0
        %2588 = vmatprep.subr.bf16.mxu0 0
        %2589 = vmatpush1.bf16.msra.mxu0 0
        %2590 = vmatprep.subr.bf16.mxu0 0
        %2591 = vmatpush1.bf16.msra.mxu0 0
        %2592 = vmatprep.subr.bf16.mxu0 0
        %2593 = vmatpush1.bf16.msra.mxu0 0
        %2594 = vmatprep.subr.bf16.mxu0 0
        %2595 = vmatpush1.bf16.msra.mxu0 0
        %2596 = vmatprep.subr.bf16.mxu0 0
        %2597 = vmatpush1.bf16.msra.mxu0 0
        %2598 = vmatprep.subr.bf16.mxu0 0
        %2599 = vmatpush1.bf16.msra.mxu0 0
        %2600 = vmatprep.subr.bf16.mxu0 0
        %2601 = vmatpush1.bf16.msra.mxu0 0
        %2602 = vmatprep.mubr.bf16.mxu0 0
        %2603 = vmatmul.mubr.bf16.gmra.mrb[0].mxu0 %v2568
        %v2604 = vpop.f32.mrb[0].mxu0
        %v2605 = vadd.f32 %v2553, %v2604
        %v2606 = vpop.f32.mrb[0].mxu0
        %v2607 = vpop.f32.mrb[0].mxu0
        %v2608 = vadd.f32 %v2553, %v2607
        %v2609 = vpop.f32.mrb[0].mxu0
        %2610 = vdwg.mxu0
        %v2611 = vmul.f32 %v2605, 0.5
        %v2612 = vmul.f32 %v2608, 0.5
        %v2613 = vmul.f32 %v2605, 0.70710677
        %v2614 = vmul.f32 %v2608, 0.70710677
        %v2615 = vand.u32 2147483647, %v2613
        %v2616 = vand.u32 2147483647, %v2614
        %v2617 = vmul.f32 %v2615, 0.3275911
        %v2618 = vmul.f32 %v2616, 0.3275911
        %v2619 = vadd.f32 %v2617, 1.0
        %v2620 = vadd.f32 %v2618, 1.0
        %v2621 = vrcp.pop %v2619
        %v2622 = vmul.f32 1.0, %v2621
        %v2623 = vrcp.pop %v2620
        %v2624 = vmul.f32 1.0, %v2623
        %v2625 = vmul.f32 %v2622, 1.0614054
        %v2626 = vmul.f32 %v2624, 1.0614054
        %v2627 = vadd.f32 %v2625, -1.4531521
        %v2628 = vadd.f32 %v2626, -1.4531521
        %v2629 = vmul.f32 %v2627, %v2622
        %v2630 = vmul.f32 %v2628, %v2624
        %v2631 = vadd.f32 %v2629, 1.4214138
        %v2632 = vadd.f32 %v2630, 1.4214138
        %v2633 = vmul.f32 %v2631, %v2622
        %v2634 = vmul.f32 %v2632, %v2624
        %v2635 = vadd.f32 %v2633, -0.28449672
        %v2636 = vadd.f32 %v2634, -0.28449672
        %v2637 = vmul.f32 %v2635, %v2622
        %v2638 = vmul.f32 %v2636, %v2624
        %v2639 = vadd.f32 %v2637, 0.2548296
        %v2640 = vadd.f32 %v2638, 0.2548296
        %v2641 = vmul.f32 %v2639, %v2622
        %v2642 = vmul.f32 %v2640, %v2624
        %v2643 = vsub.f32 0.0, %v2615
        %v2644 = vsub.f32 0.0, %v2616
        %v2645 = vmul.f32 %v2643, %v2615
        %v2646 = vmul.f32 %v2644, %v2616
        %v2647 = vmul.f32 %v2645, 1.442695
        %v2648 = vpow.pop %v2647
        %v2649 = vmul.f32 %v2646, 1.442695
        %v2650 = vpow.pop %v2649
        %v2651 = vmul.f32 %v2641, %v2648
        %v2652 = vmul.f32 %v2642, %v2650
        %v2653 = vsub.f32 1.0, %v2651
        %v2654 = vsub.f32 1.0, %v2652
        %vm2655 = vcmp.lt.f32.partialorder %v2613, 0.0
        %vm2656 = vcmp.lt.f32.partialorder %v2614, 0.0
        %v2657 = vsub.f32 0.0, %v2653
        %v2658 = vsub.f32 0.0, %v2654
        %v2659 = vsel %vm2655, %v2657, %v2653
        %v2660 = vsel %vm2656, %v2658, %v2654
        %v2661 = vadd.f32 %v2659, 1.0
        %v2662 = vadd.f32 %v2660, 1.0
        %v2663 = vmul.f32 %v2611, %v2661
        %v2664 = vmul.f32 %v2612, %v2662
        %v2665 = vpack.c.bf16 %v2664, %v2663
        %v2666 = vld [vmem:[%s59] sm:$0xf]
        %v2667 = vld [vmem:[%s59 + $0x4] sm:$0xf]
        %v2668 = vld [vmem:[%s59 + $0x8] sm:$0xf]
        %v2669 = vld [vmem:[%s59 + $0xc] sm:$0xf]
        %v2670 = vld [vmem:[%s59 + $0x10] sm:$0xf]
        %v2671 = vld [vmem:[%s59 + $0x14] sm:$0xf]
        %v2672 = vld [vmem:[%s59 + $0x18] sm:$0xf]
        %v2673 = vld [vmem:[%s59 + $0x1c] sm:$0xf]
        %v2674 = vld [vmem:[%s59 + $0x20] sm:$0xf]
        %v2675 = vld [vmem:[%s59 + $0x24] sm:$0xf]
        %v2676 = vld [vmem:[%s59 + $0x28] sm:$0xf]
        %v2677 = vld [vmem:[%s59 + $0x2c] sm:$0xf]
        %v2678 = vld [vmem:[%s59 + $0x30] sm:$0xf]
        %v2679 = vld [vmem:[%s59 + $0x34] sm:$0xf]
        %v2680 = vld [vmem:[%s59 + $0x38] sm:$0xf]
        %v2681 = vld [vmem:[%s59 + $0x3c] sm:$0xf]
        %v2682 = vld [vmem:[%s61] sm:$0x1]
        %v2684 = vlaneseq
        %v2685 = vshrl.u32 %v2684, 7
        %v2686 = vsub.s32 0, %v2685
        %v2687 = vrot.slane %v2682, %v2686
        %v2705 = vunpack.c.l.b16 %v2666
        %v2706 = vunpack.c.l.b16 %v2667
        %v2707 = vunpack.c.l.b16 %v2668
        %v2708 = vunpack.c.l.b16 %v2669
        %v2709 = vunpack.c.l.b16 %v2670
        %v2710 = vunpack.c.l.b16 %v2671
        %v2711 = vunpack.c.l.b16 %v2672
        %v2712 = vunpack.c.l.b16 %v2673
        %v2713 = vunpack.c.l.b16 %v2674
        %v2714 = vunpack.c.l.b16 %v2675
        %v2715 = vunpack.c.l.b16 %v2676
        %v2716 = vunpack.c.l.b16 %v2677
        %v2717 = vunpack.c.l.b16 %v2678
        %v2718 = vunpack.c.l.b16 %v2679
        %v2719 = vunpack.c.l.b16 %v2680
        %v2720 = vunpack.c.l.b16 %v2681
        %v2721 = vpack.c.b16 %v2706, %v2705
        %v2722 = vpack.c.b16 %v2708, %v2707
        %v2723 = vpack.c.b16 %v2710, %v2709
        %v2724 = vpack.c.b16 %v2712, %v2711
        %v2725 = vpack.c.b16 %v2714, %v2713
        %v2726 = vpack.c.b16 %v2716, %v2715
        %v2727 = vpack.c.b16 %v2718, %v2717
        %v2728 = vpack.c.b16 %v2720, %v2719
        %2737 = vmatprep.subr.bf16.mxu0 0
        %2738 = vmatpush1.bf16.msra.mxu0 %v2721
        %2739 = vmatprep.subr.bf16.mxu0 0
        %2740 = vmatpush1.bf16.msra.mxu0 %v2722
        %2741 = vmatprep.subr.bf16.mxu0 0
        %2742 = vmatpush1.bf16.msra.mxu0 %v2723
        %2743 = vmatprep.subr.bf16.mxu0 0
        %2744 = vmatpush1.bf16.msra.mxu0 %v2724
        %2745 = vmatprep.subr.bf16.mxu0 0
        %2746 = vmatpush1.bf16.msra.mxu0 %v2725
        %2747 = vmatprep.subr.bf16.mxu0 0
        %2748 = vmatpush1.bf16.msra.mxu0 %v2726
        %2749 = vmatprep.subr.bf16.mxu0 0
        %2750 = vmatpush1.bf16.msra.mxu0 %v2727
        %2751 = vmatprep.subr.bf16.mxu0 0
        %2752 = vmatpush1.bf16.msra.mxu0 %v2728
        %2753 = vmatprep.subr.bf16.mxu0 0
        %2754 = vmatpush1.bf16.msra.mxu0 0
        %2755 = vmatprep.subr.bf16.mxu0 0
        %2756 = vmatpush1.bf16.msra.mxu0 0
        %2757 = vmatprep.subr.bf16.mxu0 0
        %2758 = vmatpush1.bf16.msra.mxu0 0
        %2759 = vmatprep.subr.bf16.mxu0 0
        %2760 = vmatpush1.bf16.msra.mxu0 0
        %2761 = vmatprep.subr.bf16.mxu0 0
        %2762 = vmatpush1.bf16.msra.mxu0 0
        %2763 = vmatprep.subr.bf16.mxu0 0
        %2764 = vmatpush1.bf16.msra.mxu0 0
        %2765 = vmatprep.subr.bf16.mxu0 0
        %2766 = vmatpush1.bf16.msra.mxu0 0
        %2767 = vmatprep.subr.bf16.mxu0 0
        %2768 = vmatpush1.bf16.msra.mxu0 0
        %2769 = vmatprep.mubr.bf16.mxu0 0
        %2770 = vmatmul.mubr.bf16.gmra.mrb[0].mxu0 %v2665
        %v2771 = vpop.f32.mrb[0].mxu0
        %v2772 = vadd.f32 %v2687, %v2771
        %v2773 = vpop.f32.mrb[0].mxu0
        %v2774 = vpop.f32.mrb[0].mxu0
        %v2775 = vadd.f32 %v2687, %v2774
        %v2776 = vpop.f32.mrb[0].mxu0
        %2777 = vdwg.mxu0
        %v2778 = vadd.f32 %v2497, %v2772
        %v2779 = vadd.f32 %v2498, %v2775
        %v2780 = vxor.u32 %v2778, 2147483648
        %v2781 = vxor.u32 %v2779, 2147483648
        %v2782 = vmul.f32 %v2780, 1.442695
        %v2783 = vpow.pop %v2782
        %v2784 = vmul.f32 %v2781, 1.442695
        %v2785 = vpow.pop %v2784
        %v2786 = vadd.f32 %v2783, 1.0
        %v2787 = vadd.f32 %v2785, 1.0
        %v2788 = vrcp.pop %v2786
        %v2789 = vmul.f32 1.0, %v2788
        %v2790 = vrcp.pop %v2787
        %v2791 = vmul.f32 1.0, %v2790
        %v2792 = vtanh.pop %v2778
        %v2793 = vtanh.pop %v2779
        %v2794 = vld [vmem:[%s1194] sm:$0xff]
        %v2795 = vld [vmem:[%s1194 + $0x8] sm:$0xff]
        %v2796 = vadd.f32 %v2794, %v2792
        %v2797 = vadd.f32 %v2795, %v2793
        %v2798 = vmul.f32 %v2789, %v2796
        %v2799 = vmul.f32 %v2791, %v2797
        %v2800 = vtanh.pop %v2798
        %v2801 = vtanh.pop %v2799
        %v2802 = vmul.f32 %v2789, %v2800
        %v2803 = vmul.f32 %v2791, %v2801
        %2804 = vst.msk [vmem:[%s1166] sm:$0xff] %vm1206, %v2802
        %2805 = vst.msk [vmem:[%s1166 + $0x8] sm:$0xff] %vm1206, %v2803
        %2806 = vst.msk [vmem:[%s1173] sm:$0xff] %vm1206, %v2798
        %2807 = vst.msk [vmem:[%s1173 + $0x8] sm:$0xff] %vm1206, %v2799
        %v2808 = vld [vmem:[%s63] sm:$0xff]
        %v2809 = vld [vmem:[%s63 + $0x8] sm:$0xff]
        %v2811 = vsel %vm1449, %v2808, 0
        %v2814 = vsel %vm1449, %v2809, 0
        %2816 = vmatprep.subr.mxu0 0.0
        %2817 = vmatpush1.msra.mxu0 %v2802
        %2818 = vmatprep.subr.mxu0 0.0
        %2819 = vmatpush1.msra.mxu0 %v2803
        %2820 = vmatprep.subr.mxu0 0.0
        %2821 = vmatpush1.msra.mxu0 0.0
        %2822 = vmatprep.subr.mxu0 0.0
        %2823 = vmatpush1.msra.mxu0 0.0
        %2824 = vmatprep.subr.mxu0 0.0
        %2825 = vmatpush1.msra.mxu0 0.0
        %2826 = vmatprep.subr.mxu0 0.0
        %2827 = vmatpush1.msra.mxu0 0.0
        %2828 = vmatprep.subr.mxu0 0.0
        %2829 = vmatpush1.msra.mxu0 0.0
        %2830 = vmatprep.subr.mxu0 0.0
        %2831 = vmatpush1.msra.mxu0 0.0
        %2832 = vmatprep.subr.mxu0 0.0
        %2833 = vmatpush1.msra.mxu0 0.0
        %2834 = vmatprep.subr.mxu0 0.0
        %2835 = vmatpush1.msra.mxu0 0.0
        %2836 = vmatprep.subr.mxu0 0.0
        %2837 = vmatpush1.msra.mxu0 0.0
        %2838 = vmatprep.subr.mxu0 0.0
        %2839 = vmatpush1.msra.mxu0 0.0
        %2840 = vmatprep.subr.mxu0 0.0
        %2841 = vmatpush1.msra.mxu0 0.0
        %2842 = vmatprep.subr.mxu0 0.0
        %2843 = vmatpush1.msra.mxu0 0.0
        %2844 = vmatprep.subr.mxu0 0.0
        %2845 = vmatpush1.msra.mxu0 0.0
        %2846 = vmatprep.subr.mxu0 0.0
        %2847 = vmatpush1.msra.mxu0 0.0
        %2848 = vmatprep.subr.mxu0 0.0
        %2849 = vmatpush1.msra.mxu0 0.0
        %2850 = vmatprep.subr.mxu0 0.0
        %2851 = vmatpush1.msra.mxu0 0.0
        %2852 = vmatprep.subr.mxu0 0.0
        %2853 = vmatpush1.msra.mxu0 0.0
        %2854 = vmatprep.subr.mxu0 0.0
        %2855 = vmatpush1.msra.mxu0 0.0
        %2856 = vmatprep.subr.mxu0 0.0
        %2857 = vmatpush1.msra.mxu0 0.0
        %2858 = vmatprep.subr.mxu0 0.0
        %2859 = vmatpush1.msra.mxu0 0.0
        %2860 = vmatprep.subr.mxu0 0.0
        %2861 = vmatpush1.msra.mxu0 0.0
        %2862 = vmatprep.subr.mxu0 0.0
        %2863 = vmatpush1.msra.mxu0 0.0
        %2864 = vmatprep.subr.mxu0 0.0
        %2865 = vmatpush1.msra.mxu0 0.0
        %2866 = vmatprep.subr.mxu0 0.0
        %2867 = vmatpush1.msra.mxu0 0.0
        %2868 = vmatprep.subr.mxu0 0.0
        %2869 = vmatpush1.msra.mxu0 0.0
        %2870 = vmatprep.subr.mxu0 0.0
        %2871 = vmatpush1.msra.mxu0 0.0
        %2872 = vmatprep.subr.mxu0 0.0
        %2873 = vmatpush1.msra.mxu0 0.0
        %2874 = vmatprep.subr.mxu0 0.0
        %2875 = vmatpush1.msra.mxu0 0.0
        %2876 = vmatprep.subr.mxu0 0.0
        %2877 = vmatpush1.msra.mxu0 0.0
        %2878 = vmatprep.subr.mxu0 0.0
        %2879 = vmatpush1.msra.mxu0 0.0
        %2880 = vmatprep.mubr.f32.mxu0 0.0
        %2881 = vmatmul.mubr.f32.gmra.mrb[0].mxu0 %v2811
        %v2882 = vpop.f32.mrb[0].mxu0
        %v2883 = vadd.f32 0.0, %v2882
        %v2884 = vpop.f32.mrb[0].mxu0
        %2885 = vmatprep.mubr.f32.mxu0 0.0
        %2886 = vmatmul.mubr.f32.gmra.mrb[0].mxu0 %v2814
        %v2887 = vpop.f32.mrb[0].mxu0
        %v2888 = vadd.f32 0.0, %v2887
        %v2889 = vpop.f32.mrb[0].mxu0
        %2890 = vdwg.mxu0
        %v2892 = vrot.slane %v2883, 4
        %2893 = vrot.lane.b32.xlu0 %v2892, 32
        %v2894 = vpop.permute.xlu0 %2893
        %2897 = vrot.lane.b32.xlu0 %v2888, 64
        %v2898 = vpop.permute.xlu0 %2897
        %v2900 = vrot.slane %v2888, 4
        %2901 = vrot.lane.b32.xlu0 %v2900, 96
        %v2902 = vpop.permute.xlu0 %2901
        %v2904 = vsel %vm1206, %v2883, %v2894
        %v2905 = vsel %vm1330, %v2904, %v2898
        %vm2906 = vcmask 785408
        %v2907 = vsel %vm2906, %v2905, %v2902
        %v2908 = vld [vmem:[%s65] sm:$0x1]
        %v2909 = vld [vmem:[#allocation2] sm:$0x1]
        %vm2910 = vcmask 1043456
        %v2911 = vsel %vm2910, %v2907, 0.0
        %2912 = vadd.xlane.f32.xlu0 %v2911
        %v2913 = vpop.xlane.xlu0 %2912
        %v2914 = vrcp.pop 128.0
        %v2915 = vmul.f32 %v2913, %v2914
        %v2916 = vsub.f32 %v2907, %v2915
        %v2917 = vmul.f32 %v2916, %v2916
        %v2918 = vsel %vm2910, %v2917, 0.0
        %2919 = vadd.xlane.f32.xlu0 %v2918
        %v2920 = vpop.xlane.xlu0 %2919
        %v2921 = vmul.f32 %v2920, %v2914
        %v2922 = vadd.f32 %v2921, 1e-05
        %v2923 = vrsqrt.pop %v2922
        %v2924 = vmul.f32 %v2916, %v2923
        %v2926 = vlaneseq
        %v2927 = vshrl.u32 %v2926, 7
        %v2928 = vsub.s32 0, %v2927
        %v2929 = vrot.slane %v2908, %v2928
        %v2931 = vmul.f32 %v2924, %v2929
        %v2933 = vlaneseq
        %v2934 = vshrl.u32 %v2933, 7
        %v2935 = vsub.s32 0, %v2934
        %v2936 = vrot.slane %v2909, %v2935
        %v2938 = vadd.f32 %v2931, %v2936
        %v2939 = vpack.c.bf16 %v2938, %v2938
        %v2940 = vld [vmem:[%s69] sm:$0xf]
        %v2941 = vld [vmem:[%s69 + $0x4] sm:$0xf]
        %v2942 = vld [vmem:[%s69 + $0x8] sm:$0xf]
        %v2943 = vld [vmem:[%s69 + $0xc] sm:$0xf]
        %v2944 = vld [vmem:[%s69 + $0x10] sm:$0xf]
        %v2945 = vld [vmem:[%s69 + $0x14] sm:$0xf]
        %v2946 = vld [vmem:[%s69 + $0x18] sm:$0xf]
        %v2947 = vld [vmem:[%s69 + $0x1c] sm:$0xf]
        %v2948 = vld [vmem:[%s69 + $0x20] sm:$0xf]
        %v2949 = vld [vmem:[%s69 + $0x24] sm:$0xf]
        %v2950 = vld [vmem:[%s69 + $0x28] sm:$0xf]
        %v2951 = vld [vmem:[%s69 + $0x2c] sm:$0xf]
        %v2952 = vld [vmem:[%s69 + $0x30] sm:$0xf]
        %v2953 = vld [vmem:[%s69 + $0x34] sm:$0xf]
        %v2954 = vld [vmem:[%s69 + $0x38] sm:$0xf]
        %v2955 = vld [vmem:[%s69 + $0x3c] sm:$0xf]
        %v2972 = vunpack.c.l.b16 %v2940
        %v2973 = vunpack.c.l.b16 %v2941
        %v2974 = vunpack.c.l.b16 %v2942
        %v2975 = vunpack.c.l.b16 %v2943
        %v2976 = vunpack.c.l.b16 %v2944
        %v2977 = vunpack.c.l.b16 %v2945
        %v2978 = vunpack.c.l.b16 %v2946
        %v2979 = vunpack.c.l.b16 %v2947
        %v2980 = vunpack.c.l.b16 %v2948
        %v2981 = vunpack.c.l.b16 %v2949
        %v2982 = vunpack.c.l.b16 %v2950
        %v2983 = vunpack.c.l.b16 %v2951
        %v2984 = vunpack.c.l.b16 %v2952
        %v2985 = vunpack.c.l.b16 %v2953
        %v2986 = vunpack.c.l.b16 %v2954
        %v2987 = vunpack.c.l.b16 %v2955
        %v2988 = vpack.c.b16 %v2973, %v2972
        %v2989 = vpack.c.b16 %v2975, %v2974
        %v2990 = vpack.c.b16 %v2977, %v2976
        %v2991 = vpack.c.b16 %v2979, %v2978
        %v2992 = vpack.c.b16 %v2981, %v2980
        %v2993 = vpack.c.b16 %v2983, %v2982
        %v2994 = vpack.c.b16 %v2985, %v2984
        %v2995 = vpack.c.b16 %v2987, %v2986
        %3004 = vmatprep.subr.bf16.mxu0 0
        %3005 = vmatpush1.bf16.msra.mxu0 %v2988
        %3006 = vmatprep.subr.bf16.mxu0 0
        %3007 = vmatpush1.bf16.msra.mxu0 %v2989
        %3008 = vmatprep.subr.bf16.mxu0 0
        %3009 = vmatpush1.bf16.msra.mxu0 %v2990
        %3010 = vmatprep.subr.bf16.mxu0 0
        %3011 = vmatpush1.bf16.msra.mxu0 %v2991
        %3012 = vmatprep.subr.bf16.mxu0 0
        %3013 = vmatpush1.bf16.msra.mxu0 %v2992
        %3014 = vmatprep.subr.bf16.mxu0 0
        %3015 = vmatpush1.bf16.msra.mxu0 %v2993
        %3016 = vmatprep.subr.bf16.mxu0 0
        %3017 = vmatpush1.bf16.msra.mxu0 %v2994
        %3018 = vmatprep.subr.bf16.mxu0 0
        %3019 = vmatpush1.bf16.msra.mxu0 %v2995
        %3020 = vmatprep.subr.bf16.mxu0 0
        %3021 = vmatpush1.bf16.msra.mxu0 0
        %3022 = vmatprep.subr.bf16.mxu0 0
        %3023 = vmatpush1.bf16.msra.mxu0 0
        %3024 = vmatprep.subr.bf16.mxu0 0
        %3025 = vmatpush1.bf16.msra.mxu0 0
        %3026 = vmatprep.subr.bf16.mxu0 0
        %3027 = vmatpush1.bf16.msra.mxu0 0
        %3028 = vmatprep.subr.bf16.mxu0 0
        %3029 = vmatpush1.bf16.msra.mxu0 0
        %3030 = vmatprep.subr.bf16.mxu0 0
        %3031 = vmatpush1.bf16.msra.mxu0 0
        %3032 = vmatprep.subr.bf16.mxu0 0
        %3033 = vmatpush1.bf16.msra.mxu0 0
        %3034 = vmatprep.subr.bf16.mxu0 0
        %3035 = vmatpush1.bf16.msra.mxu0 0
        %3036 = vmatprep.mubr.bf16.mxu0 0
        %3037 = vmatmul.mubr.bf16.gmra.mrb[0].mxu0 %v2939
        %v3038 = vpop.f32.mrb[0].mxu0
        %v3039 = vadd.f32 0.0, %v3038
        %v3040 = vpop.f32.mrb[0].mxu0
        %v3041 = vpop.f32.mrb[0].mxu0
        %v3042 = vpop.f32.mrb[0].mxu0
        %3043 = vdwg.mxu0
        %vm3044 = vcmask 519168
        %3045 = vst.msk [vmem:[%s1198] sm:$0xf] %vm3044, %v3039
        %s3046 = sand.u32 %s852, 1
        %s3047 = scalar_lea.sflag [#allocation4], %s3046
        %s3048 = sand.u32 %s852, 1
        %s3049 = smul.addr %s3048, 16
        %s3050 = scalar_lea.vmem [#allocation5], %s3049
        %s3051 = sand.u32 %s878, 1
        %s3052 = scalar_lea.sflag [#allocation7], %s3051
        %s3053 = sand.u32 %s878, 1
        %s3054 = smul.addr %s3053, 16
        %s3055 = scalar_lea.vmem [#allocation6], %s3054
        %p3056 = scmp.lt.s32.totalorder %s94, 1
        %s3057 = scalar_select %p3056, %s94, 1
        %s3058 = smul.addr %s3057, 4
        %s3059 = scalar_lea.vmem %s75, %s3058
        // Predicated region
        $region165: #{fwd.4} parent=159 // pred_check
          %p3060 = pneg %p862
        $region166: #{fwd.4} parent=159 // pred_check_branch
          %3062 = sbr.rel (%p3060) target = $region168
        $region167: #{fwd.4} parent=159 // pred_region
          %s3064 = ssub.s32 256, 256
          %3065 = vsyncadd %s3047, %s3064
          %s3066 = smul.addr %s94, 2
          %s3067 = smul.addr %s3066, 128
          %s3068 = scalar_lea.hbm %s71, %s3067
          %s3069 = sshll.u32 %s3050, 4
          %s3070 = int_to_ptr.vmem [resolvable:$true] %s3069
          %3075 = dma.vmem_to_hbm [thread:$0]  %s3070, 256, %s3068, %s3047, 128, 128, 8
        $region168: #{fwd.4} parent=159 // pred_fallthru
          _
        // Predicated region
        $region169: #{fwd.4} parent=159 // pred_check
          %p3076 = pneg %p888
        $region170: #{fwd.4} parent=159 // pred_check_branch
          %3078 = sbr.rel (%p3076) target = $region172
        $region171: #{fwd.4} parent=159 // pred_region
          %s3080 = ssub.s32 256, 256
          %3081 = vsyncadd %s3052, %s3080
          %s3082 = smul.addr %s94, 2
          %s3083 = smul.addr %s3082, 128
          %s3084 = scalar_lea.hbm %s73, %s3083
          %s3085 = sshll.u32 %s3055, 4
          %s3086 = int_to_ptr.vmem [resolvable:$true] %s3085
          %3091 = dma.vmem_to_hbm [thread:$0]  %s3086, 256, %s3084, %s3052, 128, 128, 8
        $region172: #{fwd.4} parent=159 // pred_fallthru
          _
        // Predicated region
        $region173: #{fwd.4} parent=159 // pred_check
          %p3092 = pneg %p914
        $region174: #{fwd.4} parent=159 // pred_check_branch
          %3094 = sbr.rel (%p3092) target = $region176
        $region175: #{fwd.4} parent=159 // pred_region
          _
        $region176: #{fwd.4} parent=159 // pred_fallthru
          _
      $region160: #{fwd.4} parent=5 // pred_fallthru
        _
      %p3095 = scmp.le.s32.totalorder 2, %s89
      // Predicated region
      $region177: #{fwd.4} parent=5 // pred_check
        %p3096 = pneg %p3095
      $region178: #{fwd.4} parent=5 // pred_check_branch
        %3098 = sbr.rel (%p3096) target = $region180
      $region179: #{fwd.4} parent=5 // pred_region
        %s3099 = ssub.s32 %s89, 2
        // Predicated region
        $region181: #{fwd.4} parent=179 // pred_check
          %p3100 = pneg %p868
        $region182: #{fwd.4} parent=179 // pred_check_branch
          %3102 = sbr.rel (%p3100) target = $region184
        $region183: #{fwd.4} parent=179 // pred_region
          %s3103 = sand.u32 %s853, 1
          %s3104 = scalar_lea.sflag [#allocation4], %s3103
          %s3105 = sand.u32 %s853, 1
          %s3106 = smul.addr %s3105, 16
          %s3107 = scalar_lea.vmem [#allocation5], %s3106
          %3108 = dma.done %s3104, 256
        $region184: #{fwd.4} parent=179 // pred_fallthru
          _
        // Predicated region
        $region185: #{fwd.4} parent=179 // pred_check
          %p3109 = pneg %p894
        $region186: #{fwd.4} parent=179 // pred_check_branch
          %3111 = sbr.rel (%p3109) target = $region188
        $region187: #{fwd.4} parent=179 // pred_region
          %s3112 = sand.u32 %s879, 1
          %s3113 = scalar_lea.sflag [#allocation7], %s3112
          %s3114 = sand.u32 %s879, 1
          %s3115 = smul.addr %s3114, 16
          %s3116 = scalar_lea.vmem [#allocation6], %s3115
          %3117 = dma.done %s3113, 256
        $region188: #{fwd.4} parent=179 // pred_fallthru
          _
        // Predicated region
        $region189: #{fwd.4} parent=179 // pred_check
          %p3118 = pneg %p920
        $region190: #{fwd.4} parent=179 // pred_check_branch
          %3120 = sbr.rel (%p3118) target = $region192
        $region191: #{fwd.4} parent=179 // pred_region
          %p3121 = scmp.lt.s32.totalorder %s95, 1
          %s3122 = scalar_select %p3121, %s95, 1
          %s3123 = smul.addr %s3122, 4
          %s3124 = scalar_lea.vmem %s75, %s3123
        $region192: #{fwd.4} parent=179 // pred_fallthru
          _
      $region180: #{fwd.4} parent=5 // pred_fallthru
        _
    $region6: #{fwd.4} parent=1 // loop_footer
      %s93 = sadd.s32 1, %s89
    $region7: #{fwd.4} parent=1 // loop_footer_branch
      %88 = sbr.rel target = $region3
    $region8: #{fwd.4} parent=1 // loop_exit
      _
    %3125 = vsyncpa [#allocation3], 1
    %s3126 = scalar_lea.sflag [#allocation3], 1
    %3127 = vsyncpa %s3126, 1
    %3128 = vsyncpa [#allocation4], 1
    %s3129 = scalar_lea.sflag [#allocation4], 1
    %3130 = vsyncpa %s3129, 1
    %3131 = vsyncpa [#allocation7], 1
    %s3132 = scalar_lea.sflag [#allocation7], 1
    %3133 = vsyncpa %s3132, 1

// kernel: fwd.5
$region0: #{fwd.5}
  #allocation0 [shape = 'u32[]', space=smem, size = 0x4, offset = 0x4, fixed_abs, tag = 'smem constant byte address 0x4 - core index']
  #allocation1 [shape = 'u32[144,128]{1,0:T(1,128)}', space=vmem, size = 0x12000, scoped, tag = 'internal scratch']
  %s0 = inlined_call_operand.smem [shape: u32[38], index: -1, kind: input, shape index: {}]
  %s1 = sld [smem:[%s0]]
  %s2 = scalar_lea.smem %s0, 1
  %s3 = sld [smem:[%s2]]
  %s4 = scalar_lea.smem %s0, 2
  %s5 = sld [smem:[%s4]]
  %s6 = scalar_lea.smem %s0, 3
  %s7 = sld [smem:[%s6]]
  %s8 = scalar_lea.smem %s0, 4
  %s9 = sld [smem:[%s8]]
  %s10 = scalar_lea.smem %s0, 5
  %s11 = sld [smem:[%s10]]
  %s12 = scalar_lea.smem %s0, 6
  %s13 = sld [smem:[%s12]]
  %s14 = scalar_lea.smem %s0, 7
  %s15 = sld [smem:[%s14]]
  %s16 = scalar_lea.smem %s0, 8
  %s17 = sld [smem:[%s16]]
  %s18 = scalar_lea.smem %s0, 9
  %s19 = sld [smem:[%s18]]
  %s20 = scalar_lea.smem %s0, 10
  %s21 = sld [smem:[%s20]]
  %s22 = scalar_lea.smem %s0, 11
  %s23 = sld [smem:[%s22]]
  %s24 = scalar_lea.smem %s0, 12
  %s25 = sld [smem:[%s24]]
  %s26 = scalar_lea.smem %s0, 13
  %s27 = sld [smem:[%s26]]
  %s28 = scalar_lea.smem %s0, 14
  %s29 = sld [smem:[%s28]]
  %s30 = scalar_lea.smem %s0, 15
  %s31 = sld [smem:[%s30]]
  %s32 = scalar_lea.smem %s0, 16
  %s33 = sld [smem:[%s32]]
  %s34 = scalar_lea.smem %s0, 17
  %s35 = sld [smem:[%s34]]
  %s36 = scalar_lea.smem %s0, 18
  %s37 = sld [smem:[%s36]]
  %s38 = scalar_lea.smem %s0, 19
  %s39 = sld [smem:[%s38]]
  %s40 = scalar_lea.smem %s0, 20
  %s41 = sld [smem:[%s40]]
  %s42 = scalar_lea.smem %s0, 21
  %s43 = sld [smem:[%s42]]
  %s44 = scalar_lea.smem %s0, 22
  %s45 = sld [smem:[%s44]]
  %s46 = scalar_lea.smem %s0, 23
  %s47 = sld [smem:[%s46]]
  %s48 = scalar_lea.smem %s0, 24
  %s49 = sld [smem:[%s48]]
  %s50 = scalar_lea.smem %s0, 25
  %s51 = sld [smem:[%s50]]
  %s52 = scalar_lea.smem %s0, 26
  %s53 = sld [smem:[%s52]]
  %s54 = scalar_lea.smem %s0, 27
  %s55 = sld [smem:[%s54]]
  %s56 = scalar_lea.smem %s0, 28
  %s57 = sld [smem:[%s56]]
  %s58 = scalar_lea.smem %s0, 29
  %s59 = sld [smem:[%s58]]
  %s60 = scalar_lea.smem %s0, 30
  %s61 = sld [smem:[%s60]]
  %s62 = scalar_lea.smem %s0, 31
  %s63 = sld [smem:[%s62]]
  %s64 = scalar_lea.smem %s0, 32
  %s65 = sld [smem:[%s64]]
  %s66 = scalar_lea.smem %s0, 33
  %s67 = sld [smem:[%s66]]
  %s68 = scalar_lea.smem %s0, 34
  %s69 = sld [smem:[%s68]]
  %s70 = scalar_lea.smem %s0, 35
  %s71 = sld [smem:[%s70]]
  %s72 = scalar_lea.smem %s0, 36
  %s73 = sld [smem:[%s72]]
  %s74 = scalar_lea.smem %s0, 37
  %s75 = sld [smem:[%s74]]
  %76 = xla_tuple %s71, %s73, %s75
  %s77 = sld [smem:[#allocation0]]
  $region237: #{fwd.5} parent=0
    _
  %s79 = ssub.s32 1, %s77
  %s80 = scalar_select 0, %s79, %s77
  $region1: #{fwd.5} parent=0
    #allocation2 [shape = 'u8[512]{0}', space=vmem, size = 0x400, scoped, tag = 'input window, operand 4, single buffered']
    #allocation3 [shape = 's32[2]{0}', space=sflag, size = 0x8, scoped, tag = 'scoped memory for fwd.5']
    #allocation4 [shape = 's32[2]{0}', space=sflag, size = 0x8, scoped, tag = 'scoped memory for fwd.5']
    #allocation5 [shape = 'u8[512]{0}', space=vmem, size = 0x400, scoped, tag = 'input window, operand 6, single buffered']
    #allocation6 [shape = 's32[1]{0}', space=sflag, size = 0x4, scoped, tag = 'scoped memory for fwd.5']
    #allocation7 [shape = 'u8[512]{0}', space=vmem, size = 0x400, scoped, tag = 'input window, operand 11, single buffered']
    #allocation8 [shape = 'u8[512]{0}', space=vmem, size = 0x400, scoped, tag = 'input window, operand 12, single buffered']
    #allocation9 [shape = 's32[1]{0}', space=sflag, size = 0x4, scoped, tag = 'scoped memory for fwd.5']
    #allocation10 [shape = 'u8[512]{0}', space=vmem, size = 0x400, scoped, tag = 'input window, operand 13, single buffered']
    #allocation11 [shape = 'u8[512]{0}', space=vmem, size = 0x400, scoped, tag = 'input window, operand 17, single buffered']
    #allocation12 [shape = 's32[1]{0}', space=sflag, size = 0x4, scoped, tag = 'scoped memory for fwd.5']
    #allocation13 [shape = 'u8[512]{0}', space=vmem, size = 0x400, scoped, tag = 'input window, operand 18, single buffered']
    #allocation14 [shape = 'u8[512]{0}', space=vmem, size = 0x400, scoped, tag = 'input window, operand 19, single buffered']
    #allocation15 [shape = 's32[1]{0}', space=sflag, size = 0x4, scoped, tag = 'scoped memory for fwd.5']
    #allocation16 [shape = 'u8[512]{0}', space=vmem, size = 0x400, scoped, tag = 'input window, operand 24, single buffered']
    #allocation17 [shape = 'u8[512]{0}', space=vmem, size = 0x400, scoped, tag = 'input window, operand 25, single buffered']
    #allocation18 [shape = 's32[1]{0}', space=sflag, size = 0x4, scoped, tag = 'scoped memory for fwd.5']
    #allocation19 [shape = 'u8[512]{0}', space=vmem, size = 0x400, scoped, tag = 'input window, operand 26, single buffered']
    #allocation20 [shape = 'u8[512]{0}', space=vmem, size = 0x400, scoped, tag = 'input window, operand 30, single buffered']
    #allocation21 [shape = 's32[1]{0}', space=sflag, size = 0x4, scoped, tag = 'scoped memory for fwd.5']
    #allocation22 [shape = 'u8[4096]{0}', space=vmem, size = 0x1000, scoped, tag = 'output window, operand 0']
    #allocation23 [shape = 'u8[4096]{0}', space=vmem, size = 0x1000, scoped, tag = 'output window, operand 1']
    #allocation24 [shape = 's32[2]{0}', space=sflag, size = 0x8, scoped, tag = 'scoped memory for fwd.5']
    #allocation25 [shape = 'u8[1024]{0}', space=vmem, size = 0x400, scoped, tag = 'output window, operand 2']
    %81 = vsyncpa [#allocation3], 0
    %82 = vsyncpa [#allocation6], 0
    %83 = vsyncpa [#allocation9], 0
    %84 = vsyncpa [#allocation12], 0
    %85 = vsyncpa [#allocation15], 0
    %86 = vsyncpa [#allocation18], 0
    %87 = vsyncpa [#allocation21], 0
    %88 = vsyncpa [#allocation4], 0
    %s89 = scalar_lea.sflag [#allocation4], 1
    %90 = vsyncpa %s89, 0
    %91 = vsyncpa [#allocation24], 0
    %s92 = scalar_lea.sflag [#allocation24], 1
    %93 = vsyncpa %s92, 0
    loop: start=0, step=1, limit=4
    $region2: #{fwd.5} parent=1 // loop_pre_header
      _
    $region3: #{fwd.5} parent=1 // loop_header
      %s95 = sphi 0, %s99
      %p96 = scmp.ge.s32.totalorder %s95, 4
      %s105 = sphi 0, %s107
      %s108 = sphi 0, %s105
      %s109 = sphi 0, %s108
      %s125 = sphi 0, %s109
      %s131 = sphi 0, %s133
      %s134 = sphi 0, %s131
      %s135 = sphi 0, %s134
      %s151 = sphi 0, %s135
      %s157 = sphi 0, %s159
      %s160 = sphi 0, %s157
      %s161 = sphi 0, %s160
      %s177 = sphi 0, %s161
      %s181 = sphi 0, %s181
      %s183 = sphi 0, %s181
      %s184 = sphi 0, %s183
      %s198 = sphi 0, %s184
      %s202 = sphi 0, %s202
      %s204 = sphi 0, %s202
      %s205 = sphi 0, %s204
      %s219 = sphi 0, %s205
      %s223 = sphi 0, %s223
      %s225 = sphi 0, %s223
      %s226 = sphi 0, %s225
      %s240 = sphi 0, %s226
      %s244 = sphi 0, %s244
      %s246 = sphi 0, %s244
      %s247 = sphi 0, %s246
      %s261 = sphi 0, %s247
      %s265 = sphi 0, %s265
      %s267 = sphi 0, %s265
      %s268 = sphi 0, %s267
      %s282 = sphi 0, %s268
      %s286 = sphi 0, %s286
      %s288 = sphi 0, %s286
      %s289 = sphi 0, %s288
      %s303 = sphi 0, %s289
      %s307 = sphi 0, %s307
      %s309 = sphi 0, %s307
      %s310 = sphi 0, %s309
      %s324 = sphi 0, %s310
      %s328 = sphi 0, %s328
      %s330 = sphi 0, %s328
      %s331 = sphi 0, %s330
      %s345 = sphi 0, %s331
      %s349 = sphi 0, %s349
      %s351 = sphi 0, %s349
      %s352 = sphi 0, %s351
      %s366 = sphi 0, %s352
      %s370 = sphi 0, %s370
      %s372 = sphi 0, %s370
      %s373 = sphi 0, %s372
      %s387 = sphi 0, %s373
      %s391 = sphi 0, %s391
      %s393 = sphi 0, %s391
      %s394 = sphi 0, %s393
      %s408 = sphi 0, %s394
      %s412 = sphi 0, %s412
      %s414 = sphi 0, %s412
      %s415 = sphi 0, %s414
      %s429 = sphi 0, %s415
      %s433 = sphi 0, %s433
      %s435 = sphi 0, %s433
      %s436 = sphi 0, %s435
      %s450 = sphi 0, %s436
      %s454 = sphi 0, %s454
      %s456 = sphi 0, %s454
      %s457 = sphi 0, %s456
      %s471 = sphi 0, %s457
      %s475 = sphi 0, %s475
      %s477 = sphi 0, %s475
      %s478 = sphi 0, %s477
      %s492 = sphi 0, %s478
      %s496 = sphi 0, %s496
      %s498 = sphi 0, %s496
      %s499 = sphi 0, %s498
      %s513 = sphi 0, %s499
      %s517 = sphi 0, %s517
      %s519 = sphi 0, %s517
      %s520 = sphi 0, %s519
      %s534 = sphi 0, %s520
      %s538 = sphi 0, %s538
      %s540 = sphi 0, %s538
      %s541 = sphi 0, %s540
      %s555 = sphi 0, %s541
      %s559 = sphi 0, %s559
      %s561 = sphi 0, %s559
      %s562 = sphi 0, %s561
      %s576 = sphi 0, %s562
      %s580 = sphi 0, %s580
      %s582 = sphi 0, %s580
      %s583 = sphi 0, %s582
      %s597 = sphi 0, %s583
      %s601 = sphi 0, %s601
      %s603 = sphi 0, %s601
      %s604 = sphi 0, %s603
      %s618 = sphi 0, %s604
      %s622 = sphi 0, %s622
      %s624 = sphi 0, %s622
      %s625 = sphi 0, %s624
      %s639 = sphi 0, %s625
      %s643 = sphi 0, %s643
      %s645 = sphi 0, %s643
      %s646 = sphi 0, %s645
      %s660 = sphi 0, %s646
      %s664 = sphi 0, %s664
      %s666 = sphi 0, %s664
      %s667 = sphi 0, %s666
      %s681 = sphi 0, %s667
      %s685 = sphi 0, %s685
      %s687 = sphi 0, %s685
      %s688 = sphi 0, %s687
      %s702 = sphi 0, %s688
      %s706 = sphi 0, %s706
      %s708 = sphi 0, %s706
      %s709 = sphi 0, %s708
      %s723 = sphi 0, %s709
      %s727 = sphi 0, %s727
      %s729 = sphi 0, %s727
      %s730 = sphi 0, %s729
      %s744 = sphi 0, %s730
      %s748 = sphi 0, %s748
      %s750 = sphi 0, %s748
      %s751 = sphi 0, %s750
      %s765 = sphi 0, %s751
      %s769 = sphi 0, %s769
      %s771 = sphi 0, %s769
      %s772 = sphi 0, %s771
      %s786 = sphi 0, %s772
      %s790 = sphi 0, %s790
      %s792 = sphi 0, %s790
      %s793 = sphi 0, %s792
      %s807 = sphi 0, %s793
      %s811 = sphi 0, %s811
      %s813 = sphi 0, %s811
      %s814 = sphi 0, %s813
      %s828 = sphi 0, %s814
      %s832 = sphi 0, %s832
      %s834 = sphi 0, %s832
      %s835 = sphi 0, %s834
      %s849 = sphi 0, %s835
      %s855 = sphi 0, %s857
      %s858 = sphi 0, %s855
      %s859 = sphi 0, %s858
      %s875 = sphi 0, %s859
      %s881 = sphi 0, %s883
      %s884 = sphi 0, %s881
      %s885 = sphi 0, %s884
      %s901 = sphi 0, %s885
      %s907 = sphi 0, %s909
      %s910 = sphi 0, %s907
      %s911 = sphi 0, %s910
      %s927 = sphi 0, %s911
    $region4: #{fwd.5} parent=1 // loop_header_branch
      %98 = sbr.rel (%p96) target = $region8
    $region5: #{fwd.5} parent=1 // loop_body
      %s100 = ssub.s32 %s95, 1
      %s101 = ssub.s32 %s95, 2
      %s102 = sadd.s32 %s95, 1
      %s103 = ssub.s32 %s95, %s102
      %p104 = scmp.eq.s32.totalorder %s103, 0
      %s106 = sadd.s32 %s105, 1
      %s107 = scalar_select %p104, %s105, %s106
      %p110 = pneg %p104
      %p111 = scmp.eq.s32.totalorder %s95, 1
      %p112 = por %p110, %p111
      %p113 = scmp.ne.s32.totalorder %s105, %s108
      %p114 = scmp.eq.s32.totalorder %s95, 0
      %p115 = por %p113, %p114
      %p116 = scmp.ne.s32.totalorder %s105, %s108
      %p117 = scmp.eq.s32.totalorder %s100, 1
      %p118 = por %p116, %p117
      %p119 = scmp.ne.s32.totalorder %s108, %s109
      %p120 = scmp.eq.s32.totalorder %s100, 0
      %p121 = por %p119, %p120
      %p122 = scmp.ne.s32.totalorder %s108, %s109
      %p123 = scmp.eq.s32.totalorder %s101, 1
      %p124 = por %p122, %p123
      %p126 = scmp.ne.s32.totalorder %s109, %s125
      %p127 = scmp.eq.s32.totalorder %s101, 0
      %p128 = por %p126, %p127
      %s129 = ssub.s32 %s95, %s102
      %p130 = scmp.eq.s32.totalorder %s129, 0
      %s132 = sadd.s32 %s131, 1
      %s133 = scalar_select %p130, %s131, %s132
      %p136 = pneg %p130
      %p137 = scmp.eq.s32.totalorder %s95, 1
      %p138 = por %p136, %p137
      %p139 = scmp.ne.s32.totalorder %s131, %s134
      %p140 = scmp.eq.s32.totalorder %s95, 0
      %p141 = por %p139, %p140
      %p142 = scmp.ne.s32.totalorder %s131, %s134
      %p143 = scmp.eq.s32.totalorder %s100, 1
      %p144 = por %p142, %p143
      %p145 = scmp.ne.s32.totalorder %s134, %s135
      %p146 = scmp.eq.s32.totalorder %s100, 0
      %p147 = por %p145, %p146
      %p148 = scmp.ne.s32.totalorder %s134, %s135
      %p149 = scmp.eq.s32.totalorder %s101, 1
      %p150 = por %p148, %p149
      %p152 = scmp.ne.s32.totalorder %s135, %s151
      %p153 = scmp.eq.s32.totalorder %s101, 0
      %p154 = por %p152, %p153
      %s155 = ssub.s32 %s95, %s102
      %p156 = scmp.eq.s32.totalorder %s155, 0
      %s158 = sadd.s32 %s157, 1
      %s159 = scalar_select %p156, %s157, %s158
      %p162 = pneg %p156
      %p163 = scmp.eq.s32.totalorder %s95, 1
      %p164 = por %p162, %p163
      %p165 = scmp.ne.s32.totalorder %s157, %s160
      %p166 = scmp.eq.s32.totalorder %s95, 0
      %p167 = por %p165, %p166
      %p168 = scmp.ne.s32.totalorder %s157, %s160
      %p169 = scmp.eq.s32.totalorder %s100, 1
      %p170 = por %p168, %p169
      %p171 = scmp.ne.s32.totalorder %s160, %s161
      %p172 = scmp.eq.s32.totalorder %s100, 0
      %p173 = por %p171, %p172
      %p174 = scmp.ne.s32.totalorder %s160, %s161
      %p175 = scmp.eq.s32.totalorder %s101, 1
      %p176 = por %p174, %p175
      %p178 = scmp.ne.s32.totalorder %s161, %s177
      %p179 = scmp.eq.s32.totalorder %s101, 0
      %p180 = por %p178, %p179
      %s182 = sadd.s32 %s181, 1
      %p185 = scmp.eq.s32.totalorder %s95, 1
      %p186 = scmp.ne.s32.totalorder %s181, %s183
      %p187 = scmp.eq.s32.totalorder %s95, 0
      %p188 = por %p186, %p187
      %p189 = scmp.ne.s32.totalorder %s181, %s183
      %p190 = scmp.eq.s32.totalorder %s100, 1
      %p191 = por %p189, %p190
      %p192 = scmp.ne.s32.totalorder %s183, %s184
      %p193 = scmp.eq.s32.totalorder %s100, 0
      %p194 = por %p192, %p193
      %p195 = scmp.ne.s32.totalorder %s183, %s184
      %p196 = scmp.eq.s32.totalorder %s101, 1
      %p197 = por %p195, %p196
      %p199 = scmp.ne.s32.totalorder %s184, %s198
      %p200 = scmp.eq.s32.totalorder %s101, 0
      %p201 = por %p199, %p200
      %s203 = sadd.s32 %s202, 1
      %p206 = scmp.eq.s32.totalorder %s95, 1
      %p207 = scmp.ne.s32.totalorder %s202, %s204
      %p208 = scmp.eq.s32.totalorder %s95, 0
      %p209 = por %p207, %p208
      %p210 = scmp.ne.s32.totalorder %s202, %s204
      %p211 = scmp.eq.s32.totalorder %s100, 1
      %p212 = por %p210, %p211
      %p213 = scmp.ne.s32.totalorder %s204, %s205
      %p214 = scmp.eq.s32.totalorder %s100, 0
      %p215 = por %p213, %p214
      %p216 = scmp.ne.s32.totalorder %s204, %s205
      %p217 = scmp.eq.s32.totalorder %s101, 1
      %p218 = por %p216, %p217
      %p220 = scmp.ne.s32.totalorder %s205, %s219
      %p221 = scmp.eq.s32.totalorder %s101, 0
      %p222 = por %p220, %p221
      %s224 = sadd.s32 %s223, 1
      %p227 = scmp.eq.s32.totalorder %s95, 1
      %p228 = scmp.ne.s32.totalorder %s223, %s225
      %p229 = scmp.eq.s32.totalorder %s95, 0
      %p230 = por %p228, %p229
      %p231 = scmp.ne.s32.totalorder %s223, %s225
      %p232 = scmp.eq.s32.totalorder %s100, 1
      %p233 = por %p231, %p232
      %p234 = scmp.ne.s32.totalorder %s225, %s226
      %p235 = scmp.eq.s32.totalorder %s100, 0
      %p236 = por %p234, %p235
      %p237 = scmp.ne.s32.totalorder %s225, %s226
      %p238 = scmp.eq.s32.totalorder %s101, 1
      %p239 = por %p237, %p238
      %p241 = scmp.ne.s32.totalorder %s226, %s240
      %p242 = scmp.eq.s32.totalorder %s101, 0
      %p243 = por %p241, %p242
      %s245 = sadd.s32 %s244, 1
      %p248 = scmp.eq.s32.totalorder %s95, 1
      %p249 = scmp.ne.s32.totalorder %s244, %s246
      %p250 = scmp.eq.s32.totalorder %s95, 0
      %p251 = por %p249, %p250
      %p252 = scmp.ne.s32.totalorder %s244, %s246
      %p253 = scmp.eq.s32.totalorder %s100, 1
      %p254 = por %p252, %p253
      %p255 = scmp.ne.s32.totalorder %s246, %s247
      %p256 = scmp.eq.s32.totalorder %s100, 0
      %p257 = por %p255, %p256
      %p258 = scmp.ne.s32.totalorder %s246, %s247
      %p259 = scmp.eq.s32.totalorder %s101, 1
      %p260 = por %p258, %p259
      %p262 = scmp.ne.s32.totalorder %s247, %s261
      %p263 = scmp.eq.s32.totalorder %s101, 0
      %p264 = por %p262, %p263
      %s266 = sadd.s32 %s265, 1
      %p269 = scmp.eq.s32.totalorder %s95, 1
      %p270 = scmp.ne.s32.totalorder %s265, %s267
      %p271 = scmp.eq.s32.totalorder %s95, 0
      %p272 = por %p270, %p271
      %p273 = scmp.ne.s32.totalorder %s265, %s267
      %p274 = scmp.eq.s32.totalorder %s100, 1
      %p275 = por %p273, %p274
      %p276 = scmp.ne.s32.totalorder %s267, %s268
      %p277 = scmp.eq.s32.totalorder %s100, 0
      %p278 = por %p276, %p277
      %p279 = scmp.ne.s32.totalorder %s267, %s268
      %p280 = scmp.eq.s32.totalorder %s101, 1
      %p281 = por %p279, %p280
      %p283 = scmp.ne.s32.totalorder %s268, %s282
      %p284 = scmp.eq.s32.totalorder %s101, 0
      %p285 = por %p283, %p284
      %s287 = sadd.s32 %s286, 1
      %p290 = scmp.eq.s32.totalorder %s95, 1
      %p291 = scmp.ne.s32.totalorder %s286, %s288
      %p292 = scmp.eq.s32.totalorder %s95, 0
      %p293 = por %p291, %p292
      %p294 = scmp.ne.s32.totalorder %s286, %s288
      %p295 = scmp.eq.s32.totalorder %s100, 1
      %p296 = por %p294, %p295
      %p297 = scmp.ne.s32.totalorder %s288, %s289
      %p298 = scmp.eq.s32.totalorder %s100, 0
      %p299 = por %p297, %p298
      %p300 = scmp.ne.s32.totalorder %s288, %s289
      %p301 = scmp.eq.s32.totalorder %s101, 1
      %p302 = por %p300, %p301
      %p304 = scmp.ne.s32.totalorder %s289, %s303
      %p305 = scmp.eq.s32.totalorder %s101, 0
      %p306 = por %p304, %p305
      %s308 = sadd.s32 %s307, 1
      %p311 = scmp.eq.s32.totalorder %s95, 1
      %p312 = scmp.ne.s32.totalorder %s307, %s309
      %p313 = scmp.eq.s32.totalorder %s95, 0
      %p314 = por %p312, %p313
      %p315 = scmp.ne.s32.totalorder %s307, %s309
      %p316 = scmp.eq.s32.totalorder %s100, 1
      %p317 = por %p315, %p316
      %p318 = scmp.ne.s32.totalorder %s309, %s310
      %p319 = scmp.eq.s32.totalorder %s100, 0
      %p320 = por %p318, %p319
      %p321 = scmp.ne.s32.totalorder %s309, %s310
      %p322 = scmp.eq.s32.totalorder %s101, 1
      %p323 = por %p321, %p322
      %p325 = scmp.ne.s32.totalorder %s310, %s324
      %p326 = scmp.eq.s32.totalorder %s101, 0
      %p327 = por %p325, %p326
      %s329 = sadd.s32 %s328, 1
      %p332 = scmp.eq.s32.totalorder %s95, 1
      %p333 = scmp.ne.s32.totalorder %s328, %s330
      %p334 = scmp.eq.s32.totalorder %s95, 0
      %p335 = por %p333, %p334
      %p336 = scmp.ne.s32.totalorder %s328, %s330
      %p337 = scmp.eq.s32.totalorder %s100, 1
      %p338 = por %p336, %p337
      %p339 = scmp.ne.s32.totalorder %s330, %s331
      %p340 = scmp.eq.s32.totalorder %s100, 0
      %p341 = por %p339, %p340
      %p342 = scmp.ne.s32.totalorder %s330, %s331
      %p343 = scmp.eq.s32.totalorder %s101, 1
      %p344 = por %p342, %p343
      %p346 = scmp.ne.s32.totalorder %s331, %s345
      %p347 = scmp.eq.s32.totalorder %s101, 0
      %p348 = por %p346, %p347
      %s350 = sadd.s32 %s349, 1
      %p353 = scmp.eq.s32.totalorder %s95, 1
      %p354 = scmp.ne.s32.totalorder %s349, %s351
      %p355 = scmp.eq.s32.totalorder %s95, 0
      %p356 = por %p354, %p355
      %p357 = scmp.ne.s32.totalorder %s349, %s351
      %p358 = scmp.eq.s32.totalorder %s100, 1
      %p359 = por %p357, %p358
      %p360 = scmp.ne.s32.totalorder %s351, %s352
      %p361 = scmp.eq.s32.totalorder %s100, 0
      %p362 = por %p360, %p361
      %p363 = scmp.ne.s32.totalorder %s351, %s352
      %p364 = scmp.eq.s32.totalorder %s101, 1
      %p365 = por %p363, %p364
      %p367 = scmp.ne.s32.totalorder %s352, %s366
      %p368 = scmp.eq.s32.totalorder %s101, 0
      %p369 = por %p367, %p368
      %s371 = sadd.s32 %s370, 1
      %p374 = scmp.eq.s32.totalorder %s95, 1
      %p375 = scmp.ne.s32.totalorder %s370, %s372
      %p376 = scmp.eq.s32.totalorder %s95, 0
      %p377 = por %p375, %p376
      %p378 = scmp.ne.s32.totalorder %s370, %s372
      %p379 = scmp.eq.s32.totalorder %s100, 1
      %p380 = por %p378, %p379
      %p381 = scmp.ne.s32.totalorder %s372, %s373
      %p382 = scmp.eq.s32.totalorder %s100, 0
      %p383 = por %p381, %p382
      %p384 = scmp.ne.s32.totalorder %s372, %s373
      %p385 = scmp.eq.s32.totalorder %s101, 1
      %p386 = por %p384, %p385
      %p388 = scmp.ne.s32.totalorder %s373, %s387
      %p389 = scmp.eq.s32.totalorder %s101, 0
      %p390 = por %p388, %p389
      %s392 = sadd.s32 %s391, 1
      %p395 = scmp.eq.s32.totalorder %s95, 1
      %p396 = scmp.ne.s32.totalorder %s391, %s393
      %p397 = scmp.eq.s32.totalorder %s95, 0
      %p398 = por %p396, %p397
      %p399 = scmp.ne.s32.totalorder %s391, %s393
      %p400 = scmp.eq.s32.totalorder %s100, 1
      %p401 = por %p399, %p400
      %p402 = scmp.ne.s32.totalorder %s393, %s394
      %p403 = scmp.eq.s32.totalorder %s100, 0
      %p404 = por %p402, %p403
      %p405 = scmp.ne.s32.totalorder %s393, %s394
      %p406 = scmp.eq.s32.totalorder %s101, 1
      %p407 = por %p405, %p406
      %p409 = scmp.ne.s32.totalorder %s394, %s408
      %p410 = scmp.eq.s32.totalorder %s101, 0
      %p411 = por %p409, %p410
      %s413 = sadd.s32 %s412, 1
      %p416 = scmp.eq.s32.totalorder %s95, 1
      %p417 = scmp.ne.s32.totalorder %s412, %s414
      %p418 = scmp.eq.s32.totalorder %s95, 0
      %p419 = por %p417, %p418
      %p420 = scmp.ne.s32.totalorder %s412, %s414
      %p421 = scmp.eq.s32.totalorder %s100, 1
      %p422 = por %p420, %p421
      %p423 = scmp.ne.s32.totalorder %s414, %s415
      %p424 = scmp.eq.s32.totalorder %s100, 0
      %p425 = por %p423, %p424
      %p426 = scmp.ne.s32.totalorder %s414, %s415
      %p427 = scmp.eq.s32.totalorder %s101, 1
      %p428 = por %p426, %p427
      %p430 = scmp.ne.s32.totalorder %s415, %s429
      %p431 = scmp.eq.s32.totalorder %s101, 0
      %p432 = por %p430, %p431
      %s434 = sadd.s32 %s433, 1
      %p437 = scmp.eq.s32.totalorder %s95, 1
      %p438 = scmp.ne.s32.totalorder %s433, %s435
      %p439 = scmp.eq.s32.totalorder %s95, 0
      %p440 = por %p438, %p439
      %p441 = scmp.ne.s32.totalorder %s433, %s435
      %p442 = scmp.eq.s32.totalorder %s100, 1
      %p443 = por %p441, %p442
      %p444 = scmp.ne.s32.totalorder %s435, %s436
      %p445 = scmp.eq.s32.totalorder %s100, 0
      %p446 = por %p444, %p445
      %p447 = scmp.ne.s32.totalorder %s435, %s436
      %p448 = scmp.eq.s32.totalorder %s101, 1
      %p449 = por %p447, %p448
      %p451 = scmp.ne.s32.totalorder %s436, %s450
      %p452 = scmp.eq.s32.totalorder %s101, 0
      %p453 = por %p451, %p452
      %s455 = sadd.s32 %s454, 1
      %p458 = scmp.eq.s32.totalorder %s95, 1
      %p459 = scmp.ne.s32.totalorder %s454, %s456
      %p460 = scmp.eq.s32.totalorder %s95, 0
      %p461 = por %p459, %p460
      %p462 = scmp.ne.s32.totalorder %s454, %s456
      %p463 = scmp.eq.s32.totalorder %s100, 1
      %p464 = por %p462, %p463
      %p465 = scmp.ne.s32.totalorder %s456, %s457
      %p466 = scmp.eq.s32.totalorder %s100, 0
      %p467 = por %p465, %p466
      %p468 = scmp.ne.s32.totalorder %s456, %s457
      %p469 = scmp.eq.s32.totalorder %s101, 1
      %p470 = por %p468, %p469
      %p472 = scmp.ne.s32.totalorder %s457, %s471
      %p473 = scmp.eq.s32.totalorder %s101, 0
      %p474 = por %p472, %p473
      %s476 = sadd.s32 %s475, 1
      %p479 = scmp.eq.s32.totalorder %s95, 1
      %p480 = scmp.ne.s32.totalorder %s475, %s477
      %p481 = scmp.eq.s32.totalorder %s95, 0
      %p482 = por %p480, %p481
      %p483 = scmp.ne.s32.totalorder %s475, %s477
      %p484 = scmp.eq.s32.totalorder %s100, 1
      %p485 = por %p483, %p484
      %p486 = scmp.ne.s32.totalorder %s477, %s478
      %p487 = scmp.eq.s32.totalorder %s100, 0
      %p488 = por %p486, %p487
      %p489 = scmp.ne.s32.totalorder %s477, %s478
      %p490 = scmp.eq.s32.totalorder %s101, 1
      %p491 = por %p489, %p490
      %p493 = scmp.ne.s32.totalorder %s478, %s492
      %p494 = scmp.eq.s32.totalorder %s101, 0
      %p495 = por %p493, %p494
      %s497 = sadd.s32 %s496, 1
      %p500 = scmp.eq.s32.totalorder %s95, 1
      %p501 = scmp.ne.s32.totalorder %s496, %s498
      %p502 = scmp.eq.s32.totalorder %s95, 0
      %p503 = por %p501, %p502
      %p504 = scmp.ne.s32.totalorder %s496, %s498
      %p505 = scmp.eq.s32.totalorder %s100, 1
      %p506 = por %p504, %p505
      %p507 = scmp.ne.s32.totalorder %s498, %s499
      %p508 = scmp.eq.s32.totalorder %s100, 0
      %p509 = por %p507, %p508
      %p510 = scmp.ne.s32.totalorder %s498, %s499
      %p511 = scmp.eq.s32.totalorder %s101, 1
      %p512 = por %p510, %p511
      %p514 = scmp.ne.s32.totalorder %s499, %s513
      %p515 = scmp.eq.s32.totalorder %s101, 0
      %p516 = por %p514, %p515
      %s518 = sadd.s32 %s517, 1
      %p521 = scmp.eq.s32.totalorder %s95, 1
      %p522 = scmp.ne.s32.totalorder %s517, %s519
      %p523 = scmp.eq.s32.totalorder %s95, 0
      %p524 = por %p522, %p523
      %p525 = scmp.ne.s32.totalorder %s517, %s519
      %p526 = scmp.eq.s32.totalorder %s100, 1
      %p527 = por %p525, %p526
      %p528 = scmp.ne.s32.totalorder %s519, %s520
      %p529 = scmp.eq.s32.totalorder %s100, 0
      %p530 = por %p528, %p529
      %p531 = scmp.ne.s32.totalorder %s519, %s520
      %p532 = scmp.eq.s32.totalorder %s101, 1
      %p533 = por %p531, %p532
      %p535 = scmp.ne.s32.totalorder %s520, %s534
      %p536 = scmp.eq.s32.totalorder %s101, 0
      %p537 = por %p535, %p536
      %s539 = sadd.s32 %s538, 1
      %p542 = scmp.eq.s32.totalorder %s95, 1
      %p543 = scmp.ne.s32.totalorder %s538, %s540
      %p544 = scmp.eq.s32.totalorder %s95, 0
      %p545 = por %p543, %p544
      %p546 = scmp.ne.s32.totalorder %s538, %s540
      %p547 = scmp.eq.s32.totalorder %s100, 1
      %p548 = por %p546, %p547
      %p549 = scmp.ne.s32.totalorder %s540, %s541
      %p550 = scmp.eq.s32.totalorder %s100, 0
      %p551 = por %p549, %p550
      %p552 = scmp.ne.s32.totalorder %s540, %s541
      %p553 = scmp.eq.s32.totalorder %s101, 1
      %p554 = por %p552, %p553
      %p556 = scmp.ne.s32.totalorder %s541, %s555
      %p557 = scmp.eq.s32.totalorder %s101, 0
      %p558 = por %p556, %p557
      %s560 = sadd.s32 %s559, 1
      %p563 = scmp.eq.s32.totalorder %s95, 1
      %p564 = scmp.ne.s32.totalorder %s559, %s561
      %p565 = scmp.eq.s32.totalorder %s95, 0
      %p566 = por %p564, %p565
      %p567 = scmp.ne.s32.totalorder %s559, %s561
      %p568 = scmp.eq.s32.totalorder %s100, 1
      %p569 = por %p567, %p568
      %p570 = scmp.ne.s32.totalorder %s561, %s562
      %p571 = scmp.eq.s32.totalorder %s100, 0
      %p572 = por %p570, %p571
      %p573 = scmp.ne.s32.totalorder %s561, %s562
      %p574 = scmp.eq.s32.totalorder %s101, 1
      %p575 = por %p573, %p574
      %p577 = scmp.ne.s32.totalorder %s562, %s576
      %p578 = scmp.eq.s32.totalorder %s101, 0
      %p579 = por %p577, %p578
      %s581 = sadd.s32 %s580, 1
      %p584 = scmp.eq.s32.totalorder %s95, 1
      %p585 = scmp.ne.s32.totalorder %s580, %s582
      %p586 = scmp.eq.s32.totalorder %s95, 0
      %p587 = por %p585, %p586
      %p588 = scmp.ne.s32.totalorder %s580, %s582
      %p589 = scmp.eq.s32.totalorder %s100, 1
      %p590 = por %p588, %p589
      %p591 = scmp.ne.s32.totalorder %s582, %s583
      %p592 = scmp.eq.s32.totalorder %s100, 0
      %p593 = por %p591, %p592
      %p594 = scmp.ne.s32.totalorder %s582, %s583
      %p595 = scmp.eq.s32.totalorder %s101, 1
      %p596 = por %p594, %p595
      %p598 = scmp.ne.s32.totalorder %s583, %s597
      %p599 = scmp.eq.s32.totalorder %s101, 0
      %p600 = por %p598, %p599
      %s602 = sadd.s32 %s601, 1
      %p605 = scmp.eq.s32.totalorder %s95, 1
      %p606 = scmp.ne.s32.totalorder %s601, %s603
      %p607 = scmp.eq.s32.totalorder %s95, 0
      %p608 = por %p606, %p607
      %p609 = scmp.ne.s32.totalorder %s601, %s603
      %p610 = scmp.eq.s32.totalorder %s100, 1
      %p611 = por %p609, %p610
      %p612 = scmp.ne.s32.totalorder %s603, %s604
      %p613 = scmp.eq.s32.totalorder %s100, 0
      %p614 = por %p612, %p613
      %p615 = scmp.ne.s32.totalorder %s603, %s604
      %p616 = scmp.eq.s32.totalorder %s101, 1
      %p617 = por %p615, %p616
      %p619 = scmp.ne.s32.totalorder %s604, %s618
      %p620 = scmp.eq.s32.totalorder %s101, 0
      %p621 = por %p619, %p620
      %s623 = sadd.s32 %s622, 1
      %p626 = scmp.eq.s32.totalorder %s95, 1
      %p627 = scmp.ne.s32.totalorder %s622, %s624
      %p628 = scmp.eq.s32.totalorder %s95, 0
      %p629 = por %p627, %p628
      %p630 = scmp.ne.s32.totalorder %s622, %s624
      %p631 = scmp.eq.s32.totalorder %s100, 1
      %p632 = por %p630, %p631
      %p633 = scmp.ne.s32.totalorder %s624, %s625
      %p634 = scmp.eq.s32.totalorder %s100, 0
      %p635 = por %p633, %p634
      %p636 = scmp.ne.s32.totalorder %s624, %s625
      %p637 = scmp.eq.s32.totalorder %s101, 1
      %p638 = por %p636, %p637
      %p640 = scmp.ne.s32.totalorder %s625, %s639
      %p641 = scmp.eq.s32.totalorder %s101, 0
      %p642 = por %p640, %p641
      %s644 = sadd.s32 %s643, 1
      %p647 = scmp.eq.s32.totalorder %s95, 1
      %p648 = scmp.ne.s32.totalorder %s643, %s645
      %p649 = scmp.eq.s32.totalorder %s95, 0
      %p650 = por %p648, %p649
      %p651 = scmp.ne.s32.totalorder %s643, %s645
      %p652 = scmp.eq.s32.totalorder %s100, 1
      %p653 = por %p651, %p652
      %p654 = scmp.ne.s32.totalorder %s645, %s646
      %p655 = scmp.eq.s32.totalorder %s100, 0
      %p656 = por %p654, %p655
      %p657 = scmp.ne.s32.totalorder %s645, %s646
      %p658 = scmp.eq.s32.totalorder %s101, 1
      %p659 = por %p657, %p658
      %p661 = scmp.ne.s32.totalorder %s646, %s660
      %p662 = scmp.eq.s32.totalorder %s101, 0
      %p663 = por %p661, %p662
      %s665 = sadd.s32 %s664, 1
      %p668 = scmp.eq.s32.totalorder %s95, 1
      %p669 = scmp.ne.s32.totalorder %s664, %s666
      %p670 = scmp.eq.s32.totalorder %s95, 0
      %p671 = por %p669, %p670
      %p672 = scmp.ne.s32.totalorder %s664, %s666
      %p673 = scmp.eq.s32.totalorder %s100, 1
      %p674 = por %p672, %p673
      %p675 = scmp.ne.s32.totalorder %s666, %s667
      %p676 = scmp.eq.s32.totalorder %s100, 0
      %p677 = por %p675, %p676
      %p678 = scmp.ne.s32.totalorder %s666, %s667
      %p679 = scmp.eq.s32.totalorder %s101, 1
      %p680 = por %p678, %p679
      %p682 = scmp.ne.s32.totalorder %s667, %s681
      %p683 = scmp.eq.s32.totalorder %s101, 0
      %p684 = por %p682, %p683
      %s686 = sadd.s32 %s685, 1
      %p689 = scmp.eq.s32.totalorder %s95, 1
      %p690 = scmp.ne.s32.totalorder %s685, %s687
      %p691 = scmp.eq.s32.totalorder %s95, 0
      %p692 = por %p690, %p691
      %p693 = scmp.ne.s32.totalorder %s685, %s687
      %p694 = scmp.eq.s32.totalorder %s100, 1
      %p695 = por %p693, %p694
      %p696 = scmp.ne.s32.totalorder %s687, %s688
      %p697 = scmp.eq.s32.totalorder %s100, 0
      %p698 = por %p696, %p697
      %p699 = scmp.ne.s32.totalorder %s687, %s688
      %p700 = scmp.eq.s32.totalorder %s101, 1
      %p701 = por %p699, %p700
      %p703 = scmp.ne.s32.totalorder %s688, %s702
      %p704 = scmp.eq.s32.totalorder %s101, 0
      %p705 = por %p703, %p704
      %s707 = sadd.s32 %s706, 1
      %p710 = scmp.eq.s32.totalorder %s95, 1
      %p711 = scmp.ne.s32.totalorder %s706, %s708
      %p712 = scmp.eq.s32.totalorder %s95, 0
      %p713 = por %p711, %p712
      %p714 = scmp.ne.s32.totalorder %s706, %s708
      %p715 = scmp.eq.s32.totalorder %s100, 1
      %p716 = por %p714, %p715
      %p717 = scmp.ne.s32.totalorder %s708, %s709
      %p718 = scmp.eq.s32.totalorder %s100, 0
      %p719 = por %p717, %p718
      %p720 = scmp.ne.s32.totalorder %s708, %s709
      %p721 = scmp.eq.s32.totalorder %s101, 1
      %p722 = por %p720, %p721
      %p724 = scmp.ne.s32.totalorder %s709, %s723
      %p725 = scmp.eq.s32.totalorder %s101, 0
      %p726 = por %p724, %p725
      %s728 = sadd.s32 %s727, 1
      %p731 = scmp.eq.s32.totalorder %s95, 1
      %p732 = scmp.ne.s32.totalorder %s727, %s729
      %p733 = scmp.eq.s32.totalorder %s95, 0
      %p734 = por %p732, %p733
      %p735 = scmp.ne.s32.totalorder %s727, %s729
      %p736 = scmp.eq.s32.totalorder %s100, 1
      %p737 = por %p735, %p736
      %p738 = scmp.ne.s32.totalorder %s729, %s730
      %p739 = scmp.eq.s32.totalorder %s100, 0
      %p740 = por %p738, %p739
      %p741 = scmp.ne.s32.totalorder %s729, %s730
      %p742 = scmp.eq.s32.totalorder %s101, 1
      %p743 = por %p741, %p742
      %p745 = scmp.ne.s32.totalorder %s730, %s744
      %p746 = scmp.eq.s32.totalorder %s101, 0
      %p747 = por %p745, %p746
      %s749 = sadd.s32 %s748, 1
      %p752 = scmp.eq.s32.totalorder %s95, 1
      %p753 = scmp.ne.s32.totalorder %s748, %s750
      %p754 = scmp.eq.s32.totalorder %s95, 0
      %p755 = por %p753, %p754
      %p756 = scmp.ne.s32.totalorder %s748, %s750
      %p757 = scmp.eq.s32.totalorder %s100, 1
      %p758 = por %p756, %p757
      %p759 = scmp.ne.s32.totalorder %s750, %s751
      %p760 = scmp.eq.s32.totalorder %s100, 0
      %p761 = por %p759, %p760
      %p762 = scmp.ne.s32.totalorder %s750, %s751
      %p763 = scmp.eq.s32.totalorder %s101, 1
      %p764 = por %p762, %p763
      %p766 = scmp.ne.s32.totalorder %s751, %s765
      %p767 = scmp.eq.s32.totalorder %s101, 0
      %p768 = por %p766, %p767
      %s770 = sadd.s32 %s769, 1
      %p773 = scmp.eq.s32.totalorder %s95, 1
      %p774 = scmp.ne.s32.totalorder %s769, %s771
      %p775 = scmp.eq.s32.totalorder %s95, 0
      %p776 = por %p774, %p775
      %p777 = scmp.ne.s32.totalorder %s769, %s771
      %p778 = scmp.eq.s32.totalorder %s100, 1
      %p779 = por %p777, %p778
      %p780 = scmp.ne.s32.totalorder %s771, %s772
      %p781 = scmp.eq.s32.totalorder %s100, 0
      %p782 = por %p780, %p781
      %p783 = scmp.ne.s32.totalorder %s771, %s772
      %p784 = scmp.eq.s32.totalorder %s101, 1
      %p785 = por %p783, %p784
      %p787 = scmp.ne.s32.totalorder %s772, %s786
      %p788 = scmp.eq.s32.totalorder %s101, 0
      %p789 = por %p787, %p788
      %s791 = sadd.s32 %s790, 1
      %p794 = scmp.eq.s32.totalorder %s95, 1
      %p795 = scmp.ne.s32.totalorder %s790, %s792
      %p796 = scmp.eq.s32.totalorder %s95, 0
      %p797 = por %p795, %p796
      %p798 = scmp.ne.s32.totalorder %s790, %s792
      %p799 = scmp.eq.s32.totalorder %s100, 1
      %p800 = por %p798, %p799
      %p801 = scmp.ne.s32.totalorder %s792, %s793
      %p802 = scmp.eq.s32.totalorder %s100, 0
      %p803 = por %p801, %p802
      %p804 = scmp.ne.s32.totalorder %s792, %s793
      %p805 = scmp.eq.s32.totalorder %s101, 1
      %p806 = por %p804, %p805
      %p808 = scmp.ne.s32.totalorder %s793, %s807
      %p809 = scmp.eq.s32.totalorder %s101, 0
      %p810 = por %p808, %p809
      %s812 = sadd.s32 %s811, 1
      %p815 = scmp.eq.s32.totalorder %s95, 1
      %p816 = scmp.ne.s32.totalorder %s811, %s813
      %p817 = scmp.eq.s32.totalorder %s95, 0
      %p818 = por %p816, %p817
      %p819 = scmp.ne.s32.totalorder %s811, %s813
      %p820 = scmp.eq.s32.totalorder %s100, 1
      %p821 = por %p819, %p820
      %p822 = scmp.ne.s32.totalorder %s813, %s814
      %p823 = scmp.eq.s32.totalorder %s100, 0
      %p824 = por %p822, %p823
      %p825 = scmp.ne.s32.totalorder %s813, %s814
      %p826 = scmp.eq.s32.totalorder %s101, 1
      %p827 = por %p825, %p826
      %p829 = scmp.ne.s32.totalorder %s814, %s828
      %p830 = scmp.eq.s32.totalorder %s101, 0
      %p831 = por %p829, %p830
      %s833 = sadd.s32 %s832, 1
      %p836 = scmp.eq.s32.totalorder %s95, 1
      %p837 = scmp.ne.s32.totalorder %s832, %s834
      %p838 = scmp.eq.s32.totalorder %s95, 0
      %p839 = por %p837, %p838
      %p840 = scmp.ne.s32.totalorder %s832, %s834
      %p841 = scmp.eq.s32.totalorder %s100, 1
      %p842 = por %p840, %p841
      %p843 = scmp.ne.s32.totalorder %s834, %s835
      %p844 = scmp.eq.s32.totalorder %s100, 0
      %p845 = por %p843, %p844
      %p846 = scmp.ne.s32.totalorder %s834, %s835
      %p847 = scmp.eq.s32.totalorder %s101, 1
      %p848 = por %p846, %p847
      %p850 = scmp.ne.s32.totalorder %s835, %s849
      %p851 = scmp.eq.s32.totalorder %s101, 0
      %p852 = por %p850, %p851
      %s853 = ssub.s32 %s95, %s102
      %p854 = scmp.eq.s32.totalorder %s853, 0
      %s856 = sadd.s32 %s855, 1
      %s857 = scalar_select %p854, %s855, %s856
      %p860 = pneg %p854
      %p861 = scmp.eq.s32.totalorder %s95, 1
      %p862 = por %p860, %p861
      %p863 = scmp.ne.s32.totalorder %s855, %s858
      %p864 = scmp.eq.s32.totalorder %s95, 0
      %p865 = por %p863, %p864
      %p866 = scmp.ne.s32.totalorder %s855, %s858
      %p867 = scmp.eq.s32.totalorder %s100, 1
      %p868 = por %p866, %p867
      %p869 = scmp.ne.s32.totalorder %s858, %s859
      %p870 = scmp.eq.s32.totalorder %s100, 0
      %p871 = por %p869, %p870
      %p872 = scmp.ne.s32.totalorder %s858, %s859
      %p873 = scmp.eq.s32.totalorder %s101, 1
      %p874 = por %p872, %p873
      %p876 = scmp.ne.s32.totalorder %s859, %s875
      %p877 = scmp.eq.s32.totalorder %s101, 0
      %p878 = por %p876, %p877
      %s879 = ssub.s32 %s95, %s102
      %p880 = scmp.eq.s32.totalorder %s879, 0
      %s882 = sadd.s32 %s881, 1
      %s883 = scalar_select %p880, %s881, %s882
      %p886 = pneg %p880
      %p887 = scmp.eq.s32.totalorder %s95, 1
      %p888 = por %p886, %p887
      %p889 = scmp.ne.s32.totalorder %s881, %s884
      %p890 = scmp.eq.s32.totalorder %s95, 0
      %p891 = por %p889, %p890
      %p892 = scmp.ne.s32.totalorder %s881, %s884
      %p893 = scmp.eq.s32.totalorder %s100, 1
      %p894 = por %p892, %p893
      %p895 = scmp.ne.s32.totalorder %s884, %s885
      %p896 = scmp.eq.s32.totalorder %s100, 0
      %p897 = por %p895, %p896
      %p898 = scmp.ne.s32.totalorder %s884, %s885
      %p899 = scmp.eq.s32.totalorder %s101, 1
      %p900 = por %p898, %p899
      %p902 = scmp.ne.s32.totalorder %s885, %s901
      %p903 = scmp.eq.s32.totalorder %s101, 0
      %p904 = por %p902, %p903
      %s905 = ssub.s32 %s95, %s102
      %p906 = scmp.eq.s32.totalorder %s905, 0
      %s908 = sadd.s32 %s907, 1
      %s909 = scalar_select %p906, %s907, %s908
      %p912 = pneg %p906
      %p913 = scmp.eq.s32.totalorder %s95, 1
      %p914 = por %p912, %p913
      %p915 = scmp.ne.s32.totalorder %s907, %s910
      %p916 = scmp.eq.s32.totalorder %s95, 0
      %p917 = por %p915, %p916
      %p918 = scmp.ne.s32.totalorder %s907, %s910
      %p919 = scmp.eq.s32.totalorder %s100, 1
      %p920 = por %p918, %p919
      %p921 = scmp.ne.s32.totalorder %s910, %s911
      %p922 = scmp.eq.s32.totalorder %s100, 0
      %p923 = por %p921, %p922
      %p924 = scmp.ne.s32.totalorder %s910, %s911
      %p925 = scmp.eq.s32.totalorder %s101, 1
      %p926 = por %p924, %p925
      %p928 = scmp.ne.s32.totalorder %s911, %s927
      %p929 = scmp.eq.s32.totalorder %s101, 0
      %p930 = por %p928, %p929
      %p931 = scmp.le.s32.totalorder 1, %s95
      %p932 = scmp.lt.s32.totalorder %s95, 3
      %p933 = pnand %p931, %p932
      %p934 = pneg %p933
      // Predicated region
      $region9: #{fwd.5} parent=5 // pred_check
        _
      $region10: #{fwd.5} parent=5 // pred_check_branch
        %936 = sbr.rel (%p933) target = $region12
      $region11: #{fwd.5} parent=5 // pred_region
        %s937 = ssub.s32 %s95, 1
        // Predicated region
        $region13: #{fwd.5} parent=11 // pred_check
          %p938 = pneg %p194
        $region14: #{fwd.5} parent=11 // pred_check_branch
          %940 = sbr.rel (%p938) target = $region16
        $region15: #{fwd.5} parent=11 // pred_region
          _
        $region16: #{fwd.5} parent=11 // pred_fallthru
          _
        // Predicated region
        $region17: #{fwd.5} parent=11 // pred_check
          %p941 = pneg %p215
        $region18: #{fwd.5} parent=11 // pred_check_branch
          %943 = sbr.rel (%p941) target = $region20
        $region19: #{fwd.5} parent=11 // pred_region
          %s945 = ssub.s32 16, 16
          %946 = vsyncadd [#allocation3], %s945
          %s948 = sshll.u32 [#allocation2], 4
          %s949 = int_to_ptr.vmem [resolvable:$true] %s948
          %951 = dma.hbm_to_vmem [thread:$0]  %s9, 16, %s949, [#allocation3]
        $region20: #{fwd.5} parent=11 // pred_fallthru
          _
        // Predicated region
        $region21: #{fwd.5} parent=11 // pred_check
          %p952 = pneg %p236
        $region22: #{fwd.5} parent=11 // pred_check_branch
          %954 = sbr.rel (%p952) target = $region24
        $region23: #{fwd.5} parent=11 // pred_region
          _
        $region24: #{fwd.5} parent=11 // pred_fallthru
          _
        // Predicated region
        $region25: #{fwd.5} parent=11 // pred_check
          %p955 = pneg %p257
        $region26: #{fwd.5} parent=11 // pred_check_branch
          %957 = sbr.rel (%p955) target = $region28
        $region27: #{fwd.5} parent=11 // pred_region
          %s959 = ssub.s32 16, 16
          %960 = vsyncadd [#allocation6], %s959
          %s962 = sshll.u32 [#allocation5], 4
          %s963 = int_to_ptr.vmem [resolvable:$true] %s962
          %965 = dma.hbm_to_vmem [thread:$0]  %s13, 16, %s963, [#allocation6]
        $region28: #{fwd.5} parent=11 // pred_fallthru
          _
        // Predicated region
        $region29: #{fwd.5} parent=11 // pred_check
          %p966 = pneg %p278
        $region30: #{fwd.5} parent=11 // pred_check_branch
          %968 = sbr.rel (%p966) target = $region32
        $region31: #{fwd.5} parent=11 // pred_region
          _
        $region32: #{fwd.5} parent=11 // pred_fallthru
          _
        // Predicated region
        $region33: #{fwd.5} parent=11 // pred_check
          %p969 = pneg %p299
        $region34: #{fwd.5} parent=11 // pred_check_branch
          %971 = sbr.rel (%p969) target = $region36
        $region35: #{fwd.5} parent=11 // pred_region
          _
        $region36: #{fwd.5} parent=11 // pred_fallthru
          _
        // Predicated region
        $region37: #{fwd.5} parent=11 // pred_check
          %p972 = pneg %p320
        $region38: #{fwd.5} parent=11 // pred_check_branch
          %974 = sbr.rel (%p972) target = $region40
        $region39: #{fwd.5} parent=11 // pred_region
          _
        $region40: #{fwd.5} parent=11 // pred_fallthru
          _
        // Predicated region
        $region41: #{fwd.5} parent=11 // pred_check
          %p975 = pneg %p341
        $region42: #{fwd.5} parent=11 // pred_check_branch
          %977 = sbr.rel (%p975) target = $region44
        $region43: #{fwd.5} parent=11 // pred_region
          _
        $region44: #{fwd.5} parent=11 // pred_fallthru
          _
        // Predicated region
        $region45: #{fwd.5} parent=11 // pred_check
          %p978 = pneg %p362
        $region46: #{fwd.5} parent=11 // pred_check_branch
          %980 = sbr.rel (%p978) target = $region48
        $region47: #{fwd.5} parent=11 // pred_region
          %s982 = ssub.s32 16, 16
          %983 = vsyncadd [#allocation6], %s982
          %s985 = sshll.u32 [#allocation7], 4
          %s986 = int_to_ptr.vmem [resolvable:$true] %s985
          %988 = dma.hbm_to_vmem [thread:$0]  %s23, 16, %s986, [#allocation6]
        $region48: #{fwd.5} parent=11 // pred_fallthru
          _
        // Predicated region
        $region49: #{fwd.5} parent=11 // pred_check
          %p989 = pneg %p383
        $region50: #{fwd.5} parent=11 // pred_check_branch
          %991 = sbr.rel (%p989) target = $region52
        $region51: #{fwd.5} parent=11 // pred_region
          %s993 = ssub.s32 16, 16
          %994 = vsyncadd [#allocation9], %s993
          %s996 = sshll.u32 [#allocation8], 4
          %s997 = int_to_ptr.vmem [resolvable:$true] %s996
          %999 = dma.hbm_to_vmem [thread:$0]  %s25, 16, %s997, [#allocation9]
        $region52: #{fwd.5} parent=11 // pred_fallthru
          _
        // Predicated region
        $region53: #{fwd.5} parent=11 // pred_check
          %p1000 = pneg %p404
        $region54: #{fwd.5} parent=11 // pred_check_branch
          %1002 = sbr.rel (%p1000) target = $region56
        $region55: #{fwd.5} parent=11 // pred_region
          %s1004 = ssub.s32 16, 16
          %1005 = vsyncadd [#allocation9], %s1004
          %s1007 = sshll.u32 [#allocation10], 4
          %s1008 = int_to_ptr.vmem [resolvable:$true] %s1007
          %1010 = dma.hbm_to_vmem [thread:$0]  %s27, 16, %s1008, [#allocation9]
        $region56: #{fwd.5} parent=11 // pred_fallthru
          _
        // Predicated region
        $region57: #{fwd.5} parent=11 // pred_check
          %p1011 = pneg %p425
        $region58: #{fwd.5} parent=11 // pred_check_branch
          %1013 = sbr.rel (%p1011) target = $region60
        $region59: #{fwd.5} parent=11 // pred_region
          _
        $region60: #{fwd.5} parent=11 // pred_fallthru
          _
        // Predicated region
        $region61: #{fwd.5} parent=11 // pred_check
          %p1014 = pneg %p446
        $region62: #{fwd.5} parent=11 // pred_check_branch
          %1016 = sbr.rel (%p1014) target = $region64
        $region63: #{fwd.5} parent=11 // pred_region
          _
        $region64: #{fwd.5} parent=11 // pred_fallthru
          _
        // Predicated region
        $region65: #{fwd.5} parent=11 // pred_check
          %p1017 = pneg %p467
        $region66: #{fwd.5} parent=11 // pred_check_branch
          %1019 = sbr.rel (%p1017) target = $region68
        $region67: #{fwd.5} parent=11 // pred_region
          _
        $region68: #{fwd.5} parent=11 // pred_fallthru
          _
        // Predicated region
        $region69: #{fwd.5} parent=11 // pred_check
          %p1020 = pneg %p488
        $region70: #{fwd.5} parent=11 // pred_check_branch
          %1022 = sbr.rel (%p1020) target = $region72
        $region71: #{fwd.5} parent=11 // pred_region
          %s1024 = ssub.s32 16, 16
          %1025 = vsyncadd [#allocation12], %s1024
          %s1027 = sshll.u32 [#allocation11], 4
          %s1028 = int_to_ptr.vmem [resolvable:$true] %s1027
          %1030 = dma.hbm_to_vmem [thread:$0]  %s35, 16, %s1028, [#allocation12]
        $region72: #{fwd.5} parent=11 // pred_fallthru
          _
        // Predicated region
        $region73: #{fwd.5} parent=11 // pred_check
          %p1031 = pneg %p509
        $region74: #{fwd.5} parent=11 // pred_check_branch
          %1033 = sbr.rel (%p1031) target = $region76
        $region75: #{fwd.5} parent=11 // pred_region
          %s1035 = ssub.s32 16, 16
          %1036 = vsyncadd [#allocation12], %s1035
          %s1038 = sshll.u32 [#allocation13], 4
          %s1039 = int_to_ptr.vmem [resolvable:$true] %s1038
          %1041 = dma.hbm_to_vmem [thread:$0]  %s37, 16, %s1039, [#allocation12]
        $region76: #{fwd.5} parent=11 // pred_fallthru
          _
        // Predicated region
        $region77: #{fwd.5} parent=11 // pred_check
          %p1042 = pneg %p530
        $region78: #{fwd.5} parent=11 // pred_check_branch
          %1044 = sbr.rel (%p1042) target = $region80
        $region79: #{fwd.5} parent=11 // pred_region
          %s1046 = ssub.s32 16, 16
          %1047 = vsyncadd [#allocation15], %s1046
          %s1049 = sshll.u32 [#allocation14], 4
          %s1050 = int_to_ptr.vmem [resolvable:$true] %s1049
          %1052 = dma.hbm_to_vmem [thread:$0]  %s39, 16, %s1050, [#allocation15]
        $region80: #{fwd.5} parent=11 // pred_fallthru
          _
        // Predicated region
        $region81: #{fwd.5} parent=11 // pred_check
          %p1053 = pneg %p551
        $region82: #{fwd.5} parent=11 // pred_check_branch
          %1055 = sbr.rel (%p1053) target = $region84
        $region83: #{fwd.5} parent=11 // pred_region
          _
        $region84: #{fwd.5} parent=11 // pred_fallthru
          _
        // Predicated region
        $region85: #{fwd.5} parent=11 // pred_check
          %p1056 = pneg %p572
        $region86: #{fwd.5} parent=11 // pred_check_branch
          %1058 = sbr.rel (%p1056) target = $region88
        $region87: #{fwd.5} parent=11 // pred_region
          _
        $region88: #{fwd.5} parent=11 // pred_fallthru
          _
        // Predicated region
        $region89: #{fwd.5} parent=11 // pred_check
          %p1059 = pneg %p593
        $region90: #{fwd.5} parent=11 // pred_check_branch
          %1061 = sbr.rel (%p1059) target = $region92
        $region91: #{fwd.5} parent=11 // pred_region
          _
        $region92: #{fwd.5} parent=11 // pred_fallthru
          _
        // Predicated region
        $region93: #{fwd.5} parent=11 // pred_check
          %p1062 = pneg %p614
        $region94: #{fwd.5} parent=11 // pred_check_branch
          %1064 = sbr.rel (%p1062) target = $region96
        $region95: #{fwd.5} parent=11 // pred_region
          _
        $region96: #{fwd.5} parent=11 // pred_fallthru
          _
        // Predicated region
        $region97: #{fwd.5} parent=11 // pred_check
          %p1065 = pneg %p635
        $region98: #{fwd.5} parent=11 // pred_check_branch
          %1067 = sbr.rel (%p1065) target = $region100
        $region99: #{fwd.5} parent=11 // pred_region
          %s1069 = ssub.s32 16, 16
          %1070 = vsyncadd [#allocation15], %s1069
          %s1072 = sshll.u32 [#allocation16], 4
          %s1073 = int_to_ptr.vmem [resolvable:$true] %s1072
          %1075 = dma.hbm_to_vmem [thread:$0]  %s49, 16, %s1073, [#allocation15]
        $region100: #{fwd.5} parent=11 // pred_fallthru
          _
        // Predicated region
        $region101: #{fwd.5} parent=11 // pred_check
          %p1076 = pneg %p656
        $region102: #{fwd.5} parent=11 // pred_check_branch
          %1078 = sbr.rel (%p1076) target = $region104
        $region103: #{fwd.5} parent=11 // pred_region
          %s1080 = ssub.s32 16, 16
          %1081 = vsyncadd [#allocation18], %s1080
          %s1083 = sshll.u32 [#allocation17], 4
          %s1084 = int_to_ptr.vmem [resolvable:$true] %s1083
          %1086 = dma.hbm_to_vmem [thread:$0]  %s51, 16, %s1084, [#allocation18]
        $region104: #{fwd.5} parent=11 // pred_fallthru
          _
        // Predicated region
        $region105: #{fwd.5} parent=11 // pred_check
          %p1087 = pneg %p677
        $region106: #{fwd.5} parent=11 // pred_check_branch
          %1089 = sbr.rel (%p1087) target = $region108
        $region107: #{fwd.5} parent=11 // pred_region
          %s1091 = ssub.s32 16, 16
          %1092 = vsyncadd [#allocation18], %s1091
          %s1094 = sshll.u32 [#allocation19], 4
          %s1095 = int_to_ptr.vmem [resolvable:$true] %s1094
          %1097 = dma.hbm_to_vmem [thread:$0]  %s53, 16, %s1095, [#allocation18]
        $region108: #{fwd.5} parent=11 // pred_fallthru
          _
        // Predicated region
        $region109: #{fwd.5} parent=11 // pred_check
          %p1098 = pneg %p698
        $region110: #{fwd.5} parent=11 // pred_check_branch
          %1100 = sbr.rel (%p1098) target = $region112
        $region111: #{fwd.5} parent=11 // pred_region
          _
        $region112: #{fwd.5} parent=11 // pred_fallthru
          _
        // Predicated region
        $region113: #{fwd.5} parent=11 // pred_check
          %p1101 = pneg %p719
        $region114: #{fwd.5} parent=11 // pred_check_branch
          %1103 = sbr.rel (%p1101) target = $region116
        $region115: #{fwd.5} parent=11 // pred_region
          _
        $region116: #{fwd.5} parent=11 // pred_fallthru
          _
        // Predicated region
        $region117: #{fwd.5} parent=11 // pred_check
          %p1104 = pneg %p740
        $region118: #{fwd.5} parent=11 // pred_check_branch
          %1106 = sbr.rel (%p1104) target = $region120
        $region119: #{fwd.5} parent=11 // pred_region
          _
        $region120: #{fwd.5} parent=11 // pred_fallthru
          _
        // Predicated region
        $region121: #{fwd.5} parent=11 // pred_check
          %p1107 = pneg %p761
        $region122: #{fwd.5} parent=11 // pred_check_branch
          %1109 = sbr.rel (%p1107) target = $region124
        $region123: #{fwd.5} parent=11 // pred_region
          %s1111 = ssub.s32 16, 16
          %1112 = vsyncadd [#allocation21], %s1111
          %s1114 = sshll.u32 [#allocation20], 4
          %s1115 = int_to_ptr.vmem [resolvable:$true] %s1114
          %1117 = dma.hbm_to_vmem [thread:$0]  %s61, 16, %s1115, [#allocation21]
        $region124: #{fwd.5} parent=11 // pred_fallthru
          _
        // Predicated region
        $region125: #{fwd.5} parent=11 // pred_check
          %p1118 = pneg %p782
        $region126: #{fwd.5} parent=11 // pred_check_branch
          %1120 = sbr.rel (%p1118) target = $region128
        $region127: #{fwd.5} parent=11 // pred_region
          _
        $region128: #{fwd.5} parent=11 // pred_fallthru
          _
        // Predicated region
        $region129: #{fwd.5} parent=11 // pred_check
          %p1121 = pneg %p803
        $region130: #{fwd.5} parent=11 // pred_check_branch
          %1123 = sbr.rel (%p1121) target = $region132
        $region131: #{fwd.5} parent=11 // pred_region
          _
        $region132: #{fwd.5} parent=11 // pred_fallthru
          _
        // Predicated region
        $region133: #{fwd.5} parent=11 // pred_check
          %p1124 = pneg %p824
        $region134: #{fwd.5} parent=11 // pred_check_branch
          %1126 = sbr.rel (%p1124) target = $region136
        $region135: #{fwd.5} parent=11 // pred_region
          _
        $region136: #{fwd.5} parent=11 // pred_fallthru
          _
        // Predicated region
        $region137: #{fwd.5} parent=11 // pred_check
          %p1127 = pneg %p845
        $region138: #{fwd.5} parent=11 // pred_check_branch
          %1129 = sbr.rel (%p1127) target = $region140
        $region139: #{fwd.5} parent=11 // pred_region
          _
        $region140: #{fwd.5} parent=11 // pred_fallthru
          _
      $region12: #{fwd.5} parent=5 // pred_fallthru
        _
      %p1130 = scmp.lt.s32.totalorder %s95, 2
      // Predicated region
      $region141: #{fwd.5} parent=5 // pred_check
        %p1131 = pneg %p1130
      $region142: #{fwd.5} parent=5 // pred_check_branch
        %1133 = sbr.rel (%p1131) target = $region144
      $region143: #{fwd.5} parent=5 // pred_region
        // Predicated region
        $region145: #{fwd.5} parent=143 // pred_check
          %p1134 = pneg %p115
        $region146: #{fwd.5} parent=143 // pred_check_branch
          %1136 = sbr.rel (%p1134) target = $region148
        $region147: #{fwd.5} parent=143 // pred_region
          %p1137 = scmp.lt.s32.totalorder %s95, 1
          %s1138 = scalar_select %p1137, %s95, 1
          %s1139 = smul.addr %s1138, 4
          %s1140 = scalar_lea.vmem %s1, %s1139
        $region148: #{fwd.5} parent=143 // pred_fallthru
          _
        // Predicated region
        $region149: #{fwd.5} parent=143 // pred_check
          %p1141 = pneg %p141
        $region150: #{fwd.5} parent=143 // pred_check_branch
          %1143 = sbr.rel (%p1141) target = $region152
        $region151: #{fwd.5} parent=143 // pred_region
          %p1144 = scmp.lt.s32.totalorder %s95, 1
          %s1145 = scalar_select %p1144, %s95, 1
          %s1146 = smul.addr %s1145, 4
          %s1147 = scalar_lea.vmem %s3, %s1146
        $region152: #{fwd.5} parent=143 // pred_fallthru
          _
        // Predicated region
        $region153: #{fwd.5} parent=143 // pred_check
          %p1148 = pneg %p167
        $region154: #{fwd.5} parent=143 // pred_check_branch
          %1150 = sbr.rel (%p1148) target = $region156
        $region155: #{fwd.5} parent=143 // pred_region
          %p1151 = scmp.lt.s32.totalorder %s95, 1
          %s1152 = scalar_select %p1151, %s95, 1
          %s1153 = smul.addr %s1152, 4
          %s1154 = scalar_lea.vmem %s5, %s1153
        $region156: #{fwd.5} parent=143 // pred_fallthru
          _
      $region144: #{fwd.5} parent=5 // pred_fallthru
        _
      %p1155 = scmp.le.s32.totalorder 1, %s95
      %p1156 = scmp.lt.s32.totalorder %s95, 3
      %p1157 = pnand %p1155, %p1156
      %p1158 = pneg %p1157
      // Predicated region
      $region157: #{fwd.5} parent=5 // pred_check
        _
      $region158: #{fwd.5} parent=5 // pred_check_branch
        %1160 = sbr.rel (%p1157) target = $region160
      $region159: #{fwd.5} parent=5 // pred_region
        %s1161 = ssub.s32 %s95, 1
        // Predicated region
        $region161: #{fwd.5} parent=159 // pred_check
          %p1162 = pneg %p215
        $region162: #{fwd.5} parent=159 // pred_check_branch
          %1164 = sbr.rel (%p1162) target = $region164
        $region163: #{fwd.5} parent=159 // pred_region
          %1165 = dma.done [#allocation3], 16
        $region164: #{fwd.5} parent=159 // pred_fallthru
          _
        // Predicated region
        $region165: #{fwd.5} parent=159 // pred_check
          %p1166 = pneg %p257
        $region166: #{fwd.5} parent=159 // pred_check_branch
          %1168 = sbr.rel (%p1166) target = $region168
        $region167: #{fwd.5} parent=159 // pred_region
          %1169 = dma.done [#allocation6], 16
        $region168: #{fwd.5} parent=159 // pred_fallthru
          _
        // Predicated region
        $region169: #{fwd.5} parent=159 // pred_check
          %p1170 = pneg %p362
        $region170: #{fwd.5} parent=159 // pred_check_branch
          %1172 = sbr.rel (%p1170) target = $region172
        $region171: #{fwd.5} parent=159 // pred_region
          %1173 = dma.done [#allocation6], 16
        $region172: #{fwd.5} parent=159 // pred_fallthru
          _
        // Predicated region
        $region173: #{fwd.5} parent=159 // pred_check
          %p1174 = pneg %p383
        $region174: #{fwd.5} parent=159 // pred_check_branch
          %1176 = sbr.rel (%p1174) target = $region176
        $region175: #{fwd.5} parent=159 // pred_region
          %1177 = dma.done [#allocation9], 16
        $region176: #{fwd.5} parent=159 // pred_fallthru
          _
        // Predicated region
        $region177: #{fwd.5} parent=159 // pred_check
          %p1178 = pneg %p404
        $region178: #{fwd.5} parent=159 // pred_check_branch
          %1180 = sbr.rel (%p1178) target = $region180
        $region179: #{fwd.5} parent=159 // pred_region
          %1181 = dma.done [#allocation9], 16
        $region180: #{fwd.5} parent=159 // pred_fallthru
          _
        // Predicated region
        $region181: #{fwd.5} parent=159 // pred_check
          %p1182 = pneg %p488
        $region182: #{fwd.5} parent=159 // pred_check_branch
          %1184 = sbr.rel (%p1182) target = $region184
        $region183: #{fwd.5} parent=159 // pred_region
          %1185 = dma.done [#allocation12], 16
        $region184: #{fwd.5} parent=159 // pred_fallthru
          _
        // Predicated region
        $region185: #{fwd.5} parent=159 // pred_check
          %p1186 = pneg %p509
        $region186: #{fwd.5} parent=159 // pred_check_branch
          %1188 = sbr.rel (%p1186) target = $region188
        $region187: #{fwd.5} parent=159 // pred_region
          %1189 = dma.done [#allocation12], 16
        $region188: #{fwd.5} parent=159 // pred_fallthru
          _
        // Predicated region
        $region189: #{fwd.5} parent=159 // pred_check
          %p1190 = pneg %p530
        $region190: #{fwd.5} parent=159 // pred_check_branch
          %1192 = sbr.rel (%p1190) target = $region192
        $region191: #{fwd.5} parent=159 // pred_region
          %1193 = dma.done [#allocation15], 16
        $region192: #{fwd.5} parent=159 // pred_fallthru
          _
        // Predicated region
        $region193: #{fwd.5} parent=159 // pred_check
          %p1194 = pneg %p635
        $region194: #{fwd.5} parent=159 // pred_check_branch
          %1196 = sbr.rel (%p1194) target = $region196
        $region195: #{fwd.5} parent=159 // pred_region
          %1197 = dma.done [#allocation15], 16
        $region196: #{fwd.5} parent=159 // pred_fallthru
          _
        // Predicated region
        $region197: #{fwd.5} parent=159 // pred_check
          %p1198 = pneg %p656
        $region198: #{fwd.5} parent=159 // pred_check_branch
          %1200 = sbr.rel (%p1198) target = $region200
        $region199: #{fwd.5} parent=159 // pred_region
          %1201 = dma.done [#allocation18], 16
        $region200: #{fwd.5} parent=159 // pred_fallthru
          _
        // Predicated region
        $region201: #{fwd.5} parent=159 // pred_check
          %p1202 = pneg %p677
        $region202: #{fwd.5} parent=159 // pred_check_branch
          %1204 = sbr.rel (%p1202) target = $region204
        $region203: #{fwd.5} parent=159 // pred_region
          %1205 = dma.done [#allocation18], 16
        $region204: #{fwd.5} parent=159 // pred_fallthru
          _
        // Predicated region
        $region205: #{fwd.5} parent=159 // pred_check
          %p1206 = pneg %p761
        $region206: #{fwd.5} parent=159 // pred_check_branch
          %1208 = sbr.rel (%p1206) target = $region208
        $region207: #{fwd.5} parent=159 // pred_region
          %1209 = dma.done [#allocation21], 16
        $region208: #{fwd.5} parent=159 // pred_fallthru
          _
        %p1210 = scmp.lt.s32.totalorder %s100, 1
        %s1211 = scalar_select %p1210, %s100, 1
        %s1212 = smul.addr %s1211, 4
        %s1213 = scalar_lea.vmem %s1, %s1212
        %p1214 = pneg %p121
        %p1215 = pneg %p118
        %p1216 = scmp.lt.s32.totalorder %s100, 1
        %s1217 = scalar_select %p1216, %s100, 1
        %s1218 = smul.addr %s1217, 4
        %s1219 = scalar_lea.vmem %s3, %s1218
        %p1220 = pneg %p147
        %p1221 = pneg %p144
        %p1222 = scmp.lt.s32.totalorder %s100, 1
        %s1223 = scalar_select %p1222, %s100, 1
        %s1224 = smul.addr %s1223, 4
        %s1225 = scalar_lea.vmem %s5, %s1224
        %p1226 = pneg %p173
        %p1227 = pneg %p170
        %p1228 = pneg %p194
        %p1229 = pneg %p191
        %p1230 = pneg %p215
        %p1231 = pneg %p212
        %p1232 = pneg %p236
        %p1233 = pneg %p233
        %p1234 = pneg %p257
        %p1235 = pneg %p254
        %p1236 = pneg %p278
        %p1237 = pneg %p275
        %p1238 = pneg %p299
        %p1239 = pneg %p296
        %p1240 = pneg %p320
        %p1241 = pneg %p317
        %p1242 = pneg %p341
        %p1243 = pneg %p338
        %p1244 = pneg %p362
        %p1245 = pneg %p359
        %p1246 = pneg %p383
        %p1247 = pneg %p380
        %p1248 = pneg %p404
        %p1249 = pneg %p401
        %p1250 = pneg %p425
        %p1251 = pneg %p422
        %p1252 = pneg %p446
        %p1253 = pneg %p443
        %p1254 = pneg %p467
        %p1255 = pneg %p464
        %p1256 = pneg %p488
        %p1257 = pneg %p485
        %p1258 = pneg %p509
        %p1259 = pneg %p506
        %p1260 = pneg %p530
        %p1261 = pneg %p527
        %p1262 = pneg %p551
        %p1263 = pneg %p548
        %p1264 = pneg %p572
        %p1265 = pneg %p569
        %p1266 = pneg %p593
        %p1267 = pneg %p590
        %p1268 = pneg %p614
        %p1269 = pneg %p611
        %p1270 = pneg %p635
        %p1271 = pneg %p632
        %p1272 = pneg %p656
        %p1273 = pneg %p653
        %p1274 = pneg %p677
        %p1275 = pneg %p674
        %p1276 = pneg %p698
        %p1277 = pneg %p695
        %p1278 = pneg %p719
        %p1279 = pneg %p716
        %p1280 = pneg %p740
        %p1281 = pneg %p737
        %p1282 = pneg %p761
        %p1283 = pneg %p758
        %p1284 = pneg %p782
        %p1285 = pneg %p779
        %p1286 = pneg %p803
        %p1287 = pneg %p800
        %p1288 = pneg %p824
        %p1289 = pneg %p821
        %p1290 = pneg %p845
        %p1291 = pneg %p842
        %p1292 = pneg %p871
        %p1293 = pneg %p868
        %s1294 = sand.u32 %s858, 1
        %s1295 = scalar_lea.sflag [#allocation4], %s1294
        %s1296 = sand.u32 %s858, 1
        %s1297 = smul.addr %s1296, 4
        %s1298 = scalar_lea.vmem [#allocation22], %s1297
        %p1299 = pneg %p897
        %p1300 = pneg %p894
        %s1301 = sand.u32 %s100, 1
        %s1302 = scalar_lea.sflag [#allocation24], %s1301
        %s1303 = sand.u32 %s884, 1
        %s1304 = smul.addr %s1303, 4
        %s1305 = scalar_lea.vmem [#allocation23], %s1304
        %p1306 = pneg %p923
        %p1307 = pneg %p920
        %s1308 = sand.u32 %s100, 1
        %s1309 = scalar_lea.sflag [#allocation24], %s1308
        %s1310 = sand.u32 %s910, 1
        %s1311 = scalar_lea.vmem [#allocation25], %s1310
        %p1312 = scmp.lt.s32.totalorder %s100, 1
        %s1313 = scalar_select %p1312, %s100, 1
        %s1314 = smul.addr %s1313, 4
        %s1315 = scalar_lea.vmem %s1, %s1314
        %p1316 = scmp.lt.s32.totalorder %s100, 1
        %s1317 = scalar_select %p1316, %s100, 1
        %s1318 = smul.addr %s1317, 4
        %s1319 = scalar_lea.vmem %s3, %s1318
        %p1320 = scmp.lt.s32.totalorder %s100, 1
        %s1321 = scalar_select %p1320, %s100, 1
        %s1322 = smul.addr %s1321, 4
        %s1323 = scalar_lea.vmem %s5, %s1322
        %v1325 = vld [vmem:[%s1315] sm:$0xf]
        %v1326 = vld [vmem:[%s1319] sm:$0xf]
        %v1327 = vld [vmem:[%s7] sm:$0x1]
        %v1328 = vld [vmem:[#allocation2] sm:$0x1]
        %vm1329 = vcmask 519168
        %v1330 = vsel %vm1329, %v1325, 0.0
        %1331 = vadd.xlane.f32.xlu0 %v1330
        %v1332 = vpop.xlane.xlu0 %1331
        %v1333 = vrcp.pop 64.0
        %v1334 = vmul.f32 %v1332, %v1333
        %v1335 = vsub.f32 %v1325, %v1334
        %v1336 = vmul.f32 %v1335, %v1335
        %v1337 = vsel %vm1329, %v1336, 0.0
        %1338 = vadd.xlane.f32.xlu0 %v1337
        %v1339 = vpop.xlane.xlu0 %1338
        %v1340 = vmul.f32 %v1339, %v1333
        %v1341 = vadd.f32 %v1340, 1e-05
        %v1342 = vrsqrt.pop %v1341
        %v1343 = vmul.f32 %v1335, %v1342
        %v1345 = vlaneseq
        %v1346 = vshrl.u32 %v1345, 7
        %v1347 = vsub.s32 0, %v1346
        %v1348 = vrot.slane %v1327, %v1347
        %v1350 = vmul.f32 %v1343, %v1348
        %v1352 = vlaneseq
        %v1353 = vshrl.u32 %v1352, 7
        %v1354 = vsub.s32 0, %v1353
        %v1355 = vrot.slane %v1328, %v1354
        %v1357 = vadd.f32 %v1350, %v1355
        %v1358 = vsel %vm1329, %v1326, 0.0
        %1359 = vadd.xlane.f32.xlu0 %v1358
        %v1360 = vpop.xlane.xlu0 %1359
        %v1361 = vmul.f32 %v1360, %v1333
        %v1362 = vsub.f32 %v1326, %v1361
        %v1363 = vmul.f32 %v1362, %v1362
        %v1364 = vsel %vm1329, %v1363, 0.0
        %1365 = vadd.xlane.f32.xlu0 %v1364
        %v1366 = vpop.xlane.xlu0 %1365
        %v1367 = vmul.f32 %v1366, %v1333
        %v1368 = vadd.f32 %v1367, 1e-05
        %v1369 = vrsqrt.pop %v1368
        %v1370 = vmul.f32 %v1362, %v1369
        %v1371 = vmul.f32 %v1370, %v1348
        %v1372 = vadd.f32 %v1371, %v1355
        %1374 = vrot.lane.b32.xlu0 %v1372, 64
        %v1375 = vpop.permute.xlu0 %1374
        %vm1377 = vcmask 523264
        %v1378 = vsel %vm1377, %v1357, %v1375
        %v1379 = vpack.c.bf16 %v1378, %v1378
        %v1380 = vld [vmem:[%s11] sm:$0xf]
        %v1381 = vld [vmem:[%s11 + $0x4] sm:$0xf]
        %v1382 = vld [vmem:[%s11 + $0x8] sm:$0xf]
        %v1383 = vld [vmem:[%s11 + $0xc] sm:$0xf]
        %v1384 = vld [vmem:[%s11 + $0x10] sm:$0xf]
        %v1385 = vld [vmem:[%s11 + $0x14] sm:$0xf]
        %v1386 = vld [vmem:[%s11 + $0x18] sm:$0xf]
        %v1387 = vld [vmem:[%s11 + $0x1c] sm:$0xf]
        %v1388 = vld [vmem:[%s11 + $0x20] sm:$0xf]
        %v1389 = vld [vmem:[%s11 + $0x24] sm:$0xf]
        %v1390 = vld [vmem:[%s11 + $0x28] sm:$0xf]
        %v1391 = vld [vmem:[%s11 + $0x2c] sm:$0xf]
        %v1392 = vld [vmem:[%s11 + $0x30] sm:$0xf]
        %v1393 = vld [vmem:[%s11 + $0x34] sm:$0xf]
        %v1394 = vld [vmem:[%s11 + $0x38] sm:$0xf]
        %v1395 = vld [vmem:[%s11 + $0x3c] sm:$0xf]
        %v1396 = vld [vmem:[#allocation5] sm:$0x1]
        %v1398 = vlaneseq
        %v1399 = vshrl.u32 %v1398, 7
        %v1400 = vsub.s32 0, %v1399
        %v1401 = vrot.slane %v1396, %v1400
        %v1419 = vunpack.c.l.b16 %v1380
        %v1420 = vunpack.c.l.b16 %v1381
        %v1421 = vunpack.c.l.b16 %v1382
        %v1422 = vunpack.c.l.b16 %v1383
        %v1423 = vunpack.c.l.b16 %v1384
        %v1424 = vunpack.c.l.b16 %v1385
        %v1425 = vunpack.c.l.b16 %v1386
        %v1426 = vunpack.c.l.b16 %v1387
        %v1427 = vunpack.c.l.b16 %v1388
        %v1428 = vunpack.c.l.b16 %v1389
        %v1429 = vunpack.c.l.b16 %v1390
        %v1430 = vunpack.c.l.b16 %v1391
        %v1431 = vunpack.c.l.b16 %v1392
        %v1432 = vunpack.c.l.b16 %v1393
        %v1433 = vunpack.c.l.b16 %v1394
        %v1434 = vunpack.c.l.b16 %v1395
        %v1435 = vpack.c.b16 %v1420, %v1419
        %v1436 = vpack.c.b16 %v1422, %v1421
        %v1437 = vpack.c.b16 %v1424, %v1423
        %v1438 = vpack.c.b16 %v1426, %v1425
        %v1439 = vpack.c.b16 %v1428, %v1427
        %v1440 = vpack.c.b16 %v1430, %v1429
        %v1441 = vpack.c.b16 %v1432, %v1431
        %v1442 = vpack.c.b16 %v1434, %v1433
        %1451 = vmatprep.subr.bf16.mxu0 0
        %1452 = vmatpush1.bf16.msra.mxu0 %v1435
        %1453 = vmatprep.subr.bf16.mxu0 0
        %1454 = vmatpush1.bf16.msra.mxu0 %v1436
        %1455 = vmatprep.subr.bf16.mxu0 0
        %1456 = vmatpush1.bf16.msra.mxu0 %v1437
        %1457 = vmatprep.subr.bf16.mxu0 0
        %1458 = vmatpush1.bf16.msra.mxu0 %v1438
        %1459 = vmatprep.subr.bf16.mxu0 0
        %1460 = vmatpush1.bf16.msra.mxu0 %v1439
        %1461 = vmatprep.subr.bf16.mxu0 0
        %1462 = vmatpush1.bf16.msra.mxu0 %v1440
        %1463 = vmatprep.subr.bf16.mxu0 0
        %1464 = vmatpush1.bf16.msra.mxu0 %v1441
        %1465 = vmatprep.subr.bf16.mxu0 0
        %1466 = vmatpush1.bf16.msra.mxu0 %v1442
        %1467 = vmatprep.subr.bf16.mxu0 0
        %1468 = vmatpush1.bf16.msra.mxu0 0
        %1469 = vmatprep.subr.bf16.mxu0 0
        %1470 = vmatpush1.bf16.msra.mxu0 0
        %1471 = vmatprep.subr.bf16.mxu0 0
        %1472 = vmatpush1.bf16.msra.mxu0 0
        %1473 = vmatprep.subr.bf16.mxu0 0
        %1474 = vmatpush1.bf16.msra.mxu0 0
        %1475 = vmatprep.subr.bf16.mxu0 0
        %1476 = vmatpush1.bf16.msra.mxu0 0
        %1477 = vmatprep.subr.bf16.mxu0 0
        %1478 = vmatpush1.bf16.msra.mxu0 0
        %1479 = vmatprep.subr.bf16.mxu0 0
        %1480 = vmatpush1.bf16.msra.mxu0 0
        %1481 = vmatprep.subr.bf16.mxu0 0
        %1482 = vmatpush1.bf16.msra.mxu0 0
        %1483 = vmatprep.mubr.bf16.mxu0 0
        %1484 = vmatmul.mubr.bf16.gmra.mrb[0].mxu0 %v1379
        %v1485 = vpop.f32.mrb[0].mxu0
        %v1486 = vadd.f32 %v1401, %v1485
        %v1487 = vpop.f32.mrb[0].mxu0
        %v1488 = vpop.f32.mrb[0].mxu0
        %v1489 = vpop.f32.mrb[0].mxu0
        %1490 = vdwg.mxu0
        %v1491 = vpack.c.bf16 %v1486, %v1486
        %v1492 = vld [vmem:[%s15] sm:$0xff]
        %v1493 = vld [vmem:[%s15 + $0x8] sm:$0xff]
        %v1494 = vld [vmem:[%s15 + $0x10] sm:$0xff]
        %v1495 = vld [vmem:[%s15 + $0x18] sm:$0xff]
        %v1496 = vld [vmem:[%s15 + $0x20] sm:$0xff]
        %v1497 = vld [vmem:[%s15 + $0x28] sm:$0xff]
        %v1498 = vld [vmem:[%s15 + $0x30] sm:$0xff]
        %v1499 = vld [vmem:[%s15 + $0x38] sm:$0xff]
        %v1500 = vld [vmem:[%s17] sm:$0x3]
        %v1502 = vlaneseq
        %v1503 = vshrl.u32 %v1502, 7
        %v1504 = vsub.s32 0, %v1503
        %v1505 = vrot.slane %v1500, %v1504
        %v1506 = vlaneseq
        %v1507 = vshrl.u32 %v1506, 7
        %v1508 = vsub.s32 1, %v1507
        %v1509 = vrot.slane %v1500, %v1508
        %v1520 = vunpack.c.l.b16 %v1492
        %v1521 = vunpack.c.h.b16 %v1492
        %v1522 = vunpack.c.l.b16 %v1493
        %v1523 = vunpack.c.h.b16 %v1493
        %v1524 = vunpack.c.l.b16 %v1494
        %v1525 = vunpack.c.h.b16 %v1494
        %v1526 = vunpack.c.l.b16 %v1495
        %v1527 = vunpack.c.h.b16 %v1495
        %v1528 = vunpack.c.l.b16 %v1496
        %v1529 = vunpack.c.h.b16 %v1496
        %v1530 = vunpack.c.l.b16 %v1497
        %v1531 = vunpack.c.h.b16 %v1497
        %v1532 = vunpack.c.l.b16 %v1498
        %v1533 = vunpack.c.h.b16 %v1498
        %v1534 = vunpack.c.l.b16 %v1499
        %v1535 = vunpack.c.h.b16 %v1499
        %v1536 = vpack.c.b16 %v1522, %v1520
        %v1537 = vpack.c.b16 %v1523, %v1521
        %v1538 = vpack.c.b16 %v1526, %v1524
        %v1539 = vpack.c.b16 %v1527, %v1525
        %v1540 = vpack.c.b16 %v1530, %v1528
        %v1541 = vpack.c.b16 %v1531, %v1529
        %v1542 = vpack.c.b16 %v1534, %v1532
        %v1543 = vpack.c.b16 %v1535, %v1533
        %v1553 = vsel %vm1377, %v1491, 0
        %1555 = vmatprep.subr.bf16.mxu0 %v1537
        %1556 = vmatpush1.bf16.msra.mxu0 %v1536
        %1557 = vmatprep.subr.bf16.mxu0 %v1539
        %1558 = vmatpush1.bf16.msra.mxu0 %v1538
        %1559 = vmatprep.subr.bf16.mxu0 %v1541
        %1560 = vmatpush1.bf16.msra.mxu0 %v1540
        %1561 = vmatprep.subr.bf16.mxu0 %v1543
        %1562 = vmatpush1.bf16.msra.mxu0 %v1542
        %1563 = vmatprep.subr.bf16.mxu0 0
        %1564 = vmatpush1.bf16.msra.mxu0 0
        %1565 = vmatprep.subr.bf16.mxu0 0
        %1566 = vmatpush1.bf16.msra.mxu0 0
        %1567 = vmatprep.subr.bf16.mxu0 0
        %1568 = vmatpush1.bf16.msra.mxu0 0
        %1569 = vmatprep.subr.bf16.mxu0 0
        %1570 = vmatpush1.bf16.msra.mxu0 0
        %1571 = vmatprep.subr.bf16.mxu0 0
        %1572 = vmatpush1.bf16.msra.mxu0 0
        %1573 = vmatprep.subr.bf16.mxu0 0
        %1574 = vmatpush1.bf16.msra.mxu0 0
        %1575 = vmatprep.subr.bf16.mxu0 0
        %1576 = vmatpush1.bf16.msra.mxu0 0
        %1577 = vmatprep.subr.bf16.mxu0 0
        %1578 = vmatpush1.bf16.msra.mxu0 0
        %1579 = vmatprep.subr.bf16.mxu0 0
        %1580 = vmatpush1.bf16.msra.mxu0 0
        %1581 = vmatprep.subr.bf16.mxu0 0
        %1582 = vmatpush1.bf16.msra.mxu0 0
        %1583 = vmatprep.subr.bf16.mxu0 0
        %1584 = vmatpush1.bf16.msra.mxu0 0
        %1585 = vmatprep.subr.bf16.mxu0 0
        %1586 = vmatpush1.bf16.msra.mxu0 0
        %1587 = vmatprep.mubr.bf16.mxu0 0
        %1588 = vmatmul.mubr.bf16.gmra.mrb[0].mxu0 %v1553
        %v1589 = vpop.f32.mrb[0].mxu0
        %v1590 = vadd.f32 %v1505, %v1589
        %v1591 = vpop.f32.mrb[0].mxu0
        %v1592 = vadd.f32 %v1509, %v1591
        %v1593 = vpop.f32.mrb[0].mxu0
        %v1594 = vpop.f32.mrb[0].mxu0
        %1595 = vdwg.mxu0
        %v1596 = vpack.c.bf16 %v1590, %v1590
        %v1597 = vld [vmem:[%s19] sm:$0xf]
        %1599 = vrot.lane.b32.xlu0 %v1596, 64
        %v1600 = vpop.permute.xlu0 %1599
        %vm1601 = vcmask 130048
        %v1603 = vsel %vm1601, %v1596, 0
        %v1606 = vsel %vm1601, %v1600, 0
        %1608 = vmatprep.subr.bf16.mxu0 0
        %1609 = vmatpush1.bf16.xpose.msra.mxu0 %v1606
        %1610 = vmatprep.subr.bf16.mxu0 0
        %1611 = vmatpush1.bf16.xpose.msra.mxu0 0
        %1612 = vmatprep.subr.bf16.mxu0 0
        %1613 = vmatpush1.bf16.xpose.msra.mxu0 0
        %1614 = vmatprep.subr.bf16.mxu0 0
        %1615 = vmatpush1.bf16.xpose.msra.mxu0 0
        %1616 = vmatprep.subr.bf16.mxu0 0
        %1617 = vmatpush1.bf16.xpose.msra.mxu0 0
        %1618 = vmatprep.subr.bf16.mxu0 0
        %1619 = vmatpush1.bf16.xpose.msra.mxu0 0
        %1620 = vmatprep.subr.bf16.mxu0 0
        %1621 = vmatpush1.bf16.xpose.msra.mxu0 0
        %1622 = vmatprep.subr.bf16.mxu0 0
        %1623 = vmatpush1.bf16.xpose.msra.mxu0 0
        %1624 = vmatprep.subr.bf16.mxu0 0
        %1625 = vmatpush1.bf16.xpose.msra.mxu0 0
        %1626 = vmatprep.subr.bf16.mxu0 0
        %1627 = vmatpush1.bf16.xpose.msra.mxu0 0
        %1628 = vmatprep.subr.bf16.mxu0 0
        %1629 = vmatpush1.bf16.xpose.msra.mxu0 0
        %1630 = vmatprep.subr.bf16.mxu0 0
        %1631 = vmatpush1.bf16.xpose.msra.mxu0 0
        %1632 = vmatprep.subr.bf16.mxu0 0
        %1633 = vmatpush1.bf16.xpose.msra.mxu0 0
        %1634 = vmatprep.subr.bf16.mxu0 0
        %1635 = vmatpush1.bf16.xpose.msra.mxu0 0
        %1636 = vmatprep.subr.bf16.mxu0 0
        %1637 = vmatpush1.bf16.xpose.msra.mxu0 0
        %1638 = vmatprep.subr.bf16.mxu0 0
        %1639 = vmatpush1.bf16.xpose.msra.mxu0 0
        %1640 = vmatprep.mubr.bf16.mxu0 0
        %1641 = vmatmul.mubr.bf16.gmra.mrb[0].mxu0 %v1603
        %v1642 = vpop.f32.mrb[0].mxu0
        %v1643 = vadd.f32 %v1597, %v1642
        %v1644 = vpop.f32.mrb[0].mxu0
        %v1645 = vpop.f32.mrb[0].mxu0
        %v1646 = vpop.f32.mrb[0].mxu0
        %1647 = vdwg.mxu0
        %vm1648 = vcmask 27648
        %v1649 = vsel %vm1648, %v1643, -inf
        %1650 = vmax.xlane.f32.xlu0 %v1649
        %v1651 = vpop.xlane.xlu0 %1650
        %v1652 = vsub.f32 %v1643, %v1651
        %v1653 = vmul.f32 %v1652, 1.442695
        %v1654 = vpow.pop %v1653
        %v1655 = vsel %vm1648, %v1654, 0.0
        %1656 = vadd.xlane.f32.xlu0 %v1655
        %v1657 = vpop.xlane.xlu0 %1656
        %v1658 = vrcp.pop %v1657
        %v1659 = vmul.f32 1.0, %v1658
        %v1660 = vmul.f32 %v1654, %v1659
        %v1661 = vpack.c.bf16 %v1660, %v1660
        %v1662 = vpack.c.bf16 %v1592, %v1592
        %vm1663 = vcmask 31744
        %v1665 = vsel %vm1663, %v1661, 0
        %vm1667 = vcmask 1041408
        %v1669 = vsel %vm1667, %v1662, 0
        %1671 = vmatprep.subr.bf16.mxu0 0
        %1672 = vmatpush1.bf16.msra.mxu0 %v1669
        %1673 = vmatprep.subr.bf16.mxu0 0
        %1674 = vmatpush1.bf16.msra.mxu0 0
        %1675 = vmatprep.subr.bf16.mxu0 0
        %1676 = vmatpush1.bf16.msra.mxu0 0
        %1677 = vmatprep.subr.bf16.mxu0 0
        %1678 = vmatpush1.bf16.msra.mxu0 0
        %1679 = vmatprep.subr.bf16.mxu0 0
        %1680 = vmatpush1.bf16.msra.mxu0 0
        %1681 = vmatprep.subr.bf16.mxu0 0
        %1682 = vmatpush1.bf16.msra.mxu0 0
        %1683 = vmatprep.subr.bf16.mxu0 0
        %1684 = vmatpush1.bf16.msra.mxu0 0
        %1685 = vmatprep.subr.bf16.mxu0 0
        %1686 = vmatpush1.bf16.msra.mxu0 0
        %1687 = vmatprep.subr.bf16.mxu0 0
        %1688 = vmatpush1.bf16.msra.mxu0 0
        %1689 = vmatprep.subr.bf16.mxu0 0
        %1690 = vmatpush1.bf16.msra.mxu0 0
        %1691 = vmatprep.subr.bf16.mxu0 0
        %1692 = vmatpush1.bf16.msra.mxu0 0
        %1693 = vmatprep.subr.bf16.mxu0 0
        %1694 = vmatpush1.bf16.msra.mxu0 0
        %1695 = vmatprep.subr.bf16.mxu0 0
        %1696 = vmatpush1.bf16.msra.mxu0 0
        %1697 = vmatprep.subr.bf16.mxu0 0
        %1698 = vmatpush1.bf16.msra.mxu0 0
        %1699 = vmatprep.subr.bf16.mxu0 0
        %1700 = vmatpush1.bf16.msra.mxu0 0
        %1701 = vmatprep.subr.bf16.mxu0 0
        %1702 = vmatpush1.bf16.msra.mxu0 0
        %1703 = vmatprep.mubr.bf16.mxu0 0
        %1704 = vmatmul.mubr.bf16.gmra.mrb[0].mxu0 %v1665
        %v1705 = vpop.f32.mrb[0].mxu0
        %v1706 = vadd.f32 0.0, %v1705
        %v1707 = vpop.f32.mrb[0].mxu0
        %v1708 = vpop.f32.mrb[0].mxu0
        %v1709 = vpop.f32.mrb[0].mxu0
        %1710 = vdwg.mxu0
        %s1711 = scalar_lea.vmem %s19, 4
        %v1712 = vld [vmem:[%s1711] sm:$0xf]
        %1713 = vrot.lane.b32.xlu0 %v1596, 112
        %v1714 = vpop.permute.xlu0 %1713
        %1715 = vrot.lane.b32.xlu0 %v1596, 48
        %v1716 = vpop.permute.xlu0 %1715
        %v1718 = vsel %vm1601, %v1714, 0
        %v1721 = vsel %vm1601, %v1716, 0
        %1723 = vmatprep.subr.bf16.mxu0 0
        %1724 = vmatpush1.bf16.xpose.msra.mxu0 %v1721
        %1725 = vmatprep.subr.bf16.mxu0 0
        %1726 = vmatpush1.bf16.xpose.msra.mxu0 0
        %1727 = vmatprep.subr.bf16.mxu0 0
        %1728 = vmatpush1.bf16.xpose.msra.mxu0 0
        %1729 = vmatprep.subr.bf16.mxu0 0
        %1730 = vmatpush1.bf16.xpose.msra.mxu0 0
        %1731 = vmatprep.subr.bf16.mxu0 0
        %1732 = vmatpush1.bf16.xpose.msra.mxu0 0
        %1733 = vmatprep.subr.bf16.mxu0 0
        %1734 = vmatpush1.bf16.xpose.msra.mxu0 0
        %1735 = vmatprep.subr.bf16.mxu0 0
        %1736 = vmatpush1.bf16.xpose.msra.mxu0 0
        %1737 = vmatprep.subr.bf16.mxu0 0
        %1738 = vmatpush1.bf16.xpose.msra.mxu0 0
        %1739 = vmatprep.subr.bf16.mxu0 0
        %1740 = vmatpush1.bf16.xpose.msra.mxu0 0
        %1741 = vmatprep.subr.bf16.mxu0 0
        %1742 = vmatpush1.bf16.xpose.msra.mxu0 0
        %1743 = vmatprep.subr.bf16.mxu0 0
        %1744 = vmatpush1.bf16.xpose.msra.mxu0 0
        %1745 = vmatprep.subr.bf16.mxu0 0
        %1746 = vmatpush1.bf16.xpose.msra.mxu0 0
        %1747 = vmatprep.subr.bf16.mxu0 0
        %1748 = vmatpush1.bf16.xpose.msra.mxu0 0
        %1749 = vmatprep.subr.bf16.mxu0 0
        %1750 = vmatpush1.bf16.xpose.msra.mxu0 0
        %1751 = vmatprep.subr.bf16.mxu0 0
        %1752 = vmatpush1.bf16.xpose.msra.mxu0 0
        %1753 = vmatprep.subr.bf16.mxu0 0
        %1754 = vmatpush1.bf16.xpose.msra.mxu0 0
        %1755 = vmatprep.mubr.bf16.mxu0 0
        %1756 = vmatmul.mubr.bf16.gmra.mrb[0].mxu0 %v1718
        %v1757 = vpop.f32.mrb[0].mxu0
        %v1758 = vadd.f32 %v1712, %v1757
        %v1759 = vpop.f32.mrb[0].mxu0
        %v1760 = vpop.f32.mrb[0].mxu0
        %v1761 = vpop.f32.mrb[0].mxu0
        %1762 = vdwg.mxu0
        %v1763 = vsel %vm1648, %v1758, -inf
        %1764 = vmax.xlane.f32.xlu0 %v1763
        %v1765 = vpop.xlane.xlu0 %1764
        %v1766 = vsub.f32 %v1758, %v1765
        %v1767 = vmul.f32 %v1766, 1.442695
        %v1768 = vpow.pop %v1767
        %v1769 = vsel %vm1648, %v1768, 0.0
        %1770 = vadd.xlane.f32.xlu0 %v1769
        %v1771 = vpop.xlane.xlu0 %1770
        %v1772 = vrcp.pop %v1771
        %v1773 = vmul.f32 1.0, %v1772
        %v1774 = vmul.f32 %v1768, %v1773
        %v1775 = vpack.c.bf16 %v1774, %v1774
        %1777 = vrot.lane.b32.xlu0 %v1662, 112
        %v1778 = vpop.permute.xlu0 %1777
        %v1780 = vsel %vm1663, %v1775, 0
        %v1783 = vsel %vm1667, %v1778, 0
        %1785 = vmatprep.subr.bf16.mxu0 0
        %1786 = vmatpush1.bf16.msra.mxu0 %v1783
        %1787 = vmatprep.subr.bf16.mxu0 0
        %1788 = vmatpush1.bf16.msra.mxu0 0
        %1789 = vmatprep.subr.bf16.mxu0 0
        %1790 = vmatpush1.bf16.msra.mxu0 0
        %1791 = vmatprep.subr.bf16.mxu0 0
        %1792 = vmatpush1.bf16.msra.mxu0 0
        %1793 = vmatprep.subr.bf16.mxu0 0
        %1794 = vmatpush1.bf16.msra.mxu0 0
        %1795 = vmatprep.subr.bf16.mxu0 0
        %1796 = vmatpush1.bf16.msra.mxu0 0
        %1797 = vmatprep.subr.bf16.mxu0 0
        %1798 = vmatpush1.bf16.msra.mxu0 0
        %1799 = vmatprep.subr.bf16.mxu0 0
        %1800 = vmatpush1.bf16.msra.mxu0 0
        %1801 = vmatprep.subr.bf16.mxu0 0
        %1802 = vmatpush1.bf16.msra.mxu0 0
        %1803 = vmatprep.subr.bf16.mxu0 0
        %1804 = vmatpush1.bf16.msra.mxu0 0
        %1805 = vmatprep.subr.bf16.mxu0 0
        %1806 = vmatpush1.bf16.msra.mxu0 0
        %1807 = vmatprep.subr.bf16.mxu0 0
        %1808 = vmatpush1.bf16.msra.mxu0 0
        %1809 = vmatprep.subr.bf16.mxu0 0
        %1810 = vmatpush1.bf16.msra.mxu0 0
        %1811 = vmatprep.subr.bf16.mxu0 0
        %1812 = vmatpush1.bf16.msra.mxu0 0
        %1813 = vmatprep.subr.bf16.mxu0 0
        %1814 = vmatpush1.bf16.msra.mxu0 0
        %1815 = vmatprep.subr.bf16.mxu0 0
        %1816 = vmatpush1.bf16.msra.mxu0 0
        %1817 = vmatprep.mubr.bf16.mxu0 0
        %1818 = vmatmul.mubr.bf16.gmra.mrb[0].mxu0 %v1780
        %v1819 = vpop.f32.mrb[0].mxu0
        %v1820 = vadd.f32 0.0, %v1819
        %v1821 = vpop.f32.mrb[0].mxu0
        %v1822 = vpop.f32.mrb[0].mxu0
        %v1823 = vpop.f32.mrb[0].mxu0
        %1824 = vdwg.mxu0
        %s1825 = scalar_lea.vmem %s19, 8
        %v1826 = vld [vmem:[%s1825] sm:$0xf]
        %1827 = vrot.lane.b32.xlu0 %v1596, 96
        %v1828 = vpop.permute.xlu0 %1827
        %1829 = vrot.lane.b32.xlu0 %v1596, 32
        %v1830 = vpop.permute.xlu0 %1829
        %v1832 = vsel %vm1601, %v1828, 0
        %v1835 = vsel %vm1601, %v1830, 0
        %1837 = vmatprep.subr.bf16.mxu0 0
        %1838 = vmatpush1.bf16.xpose.msra.mxu0 %v1835
        %1839 = vmatprep.subr.bf16.mxu0 0
        %1840 = vmatpush1.bf16.xpose.msra.mxu0 0
        %1841 = vmatprep.subr.bf16.mxu0 0
        %1842 = vmatpush1.bf16.xpose.msra.mxu0 0
        %1843 = vmatprep.subr.bf16.mxu0 0
        %1844 = vmatpush1.bf16.xpose.msra.mxu0 0
        %1845 = vmatprep.subr.bf16.mxu0 0
        %1846 = vmatpush1.bf16.xpose.msra.mxu0 0
        %1847 = vmatprep.subr.bf16.mxu0 0
        %1848 = vmatpush1.bf16.xpose.msra.mxu0 0
        %1849 = vmatprep.subr.bf16.mxu0 0
        %1850 = vmatpush1.bf16.xpose.msra.mxu0 0
        %1851 = vmatprep.subr.bf16.mxu0 0
        %1852 = vmatpush1.bf16.xpose.msra.mxu0 0
        %1853 = vmatprep.subr.bf16.mxu0 0
        %1854 = vmatpush1.bf16.xpose.msra.mxu0 0
        %1855 = vmatprep.subr.bf16.mxu0 0
        %1856 = vmatpush1.bf16.xpose.msra.mxu0 0
        %1857 = vmatprep.subr.bf16.mxu0 0
        %1858 = vmatpush1.bf16.xpose.msra.mxu0 0
        %1859 = vmatprep.subr.bf16.mxu0 0
        %1860 = vmatpush1.bf16.xpose.msra.mxu0 0
        %1861 = vmatprep.subr.bf16.mxu0 0
        %1862 = vmatpush1.bf16.xpose.msra.mxu0 0
        %1863 = vmatprep.subr.bf16.mxu0 0
        %1864 = vmatpush1.bf16.xpose.msra.mxu0 0
        %1865 = vmatprep.subr.bf16.mxu0 0
        %1866 = vmatpush1.bf16.xpose.msra.mxu0 0
        %1867 = vmatprep.subr.bf16.mxu0 0
        %1868 = vmatpush1.bf16.xpose.msra.mxu0 0
        %1869 = vmatprep.mubr.bf16.mxu0 0
        %1870 = vmatmul.mubr.bf16.gmra.mrb[0].mxu0 %v1832
        %v1871 = vpop.f32.mrb[0].mxu0
        %v1872 = vadd.f32 %v1826, %v1871
        %v1873 = vpop.f32.mrb[0].mxu0
        %v1874 = vpop.f32.mrb[0].mxu0
        %v1875 = vpop.f32.mrb[0].mxu0
        %1876 = vdwg.mxu0
        %v1877 = vsel %vm1648, %v1872, -inf
        %1878 = vmax.xlane.f32.xlu0 %v1877
        %v1879 = vpop.xlane.xlu0 %1878
        %v1880 = vsub.f32 %v1872, %v1879
        %v1881 = vmul.f32 %v1880, 1.442695
        %v1882 = vpow.pop %v1881
        %v1883 = vsel %vm1648, %v1882, 0.0
        %1884 = vadd.xlane.f32.xlu0 %v1883
        %v1885 = vpop.xlane.xlu0 %1884
        %v1886 = vrcp.pop %v1885
        %v1887 = vmul.f32 1.0, %v1886
        %v1888 = vmul.f32 %v1882, %v1887
        %v1889 = vpack.c.bf16 %v1888, %v1888
        %1890 = vrot.lane.b32.xlu0 %v1662, 96
        %v1891 = vpop.permute.xlu0 %1890
        %v1893 = vsel %vm1663, %v1889, 0
        %v1896 = vsel %vm1667, %v1891, 0
        %1898 = vmatprep.subr.bf16.mxu0 0
        %1899 = vmatpush1.bf16.msra.mxu0 %v1896
        %1900 = vmatprep.subr.bf16.mxu0 0
        %1901 = vmatpush1.bf16.msra.mxu0 0
        %1902 = vmatprep.subr.bf16.mxu0 0
        %1903 = vmatpush1.bf16.msra.mxu0 0
        %1904 = vmatprep.subr.bf16.mxu0 0
        %1905 = vmatpush1.bf16.msra.mxu0 0
        %1906 = vmatprep.subr.bf16.mxu0 0
        %1907 = vmatpush1.bf16.msra.mxu0 0
        %1908 = vmatprep.subr.bf16.mxu0 0
        %1909 = vmatpush1.bf16.msra.mxu0 0
        %1910 = vmatprep.subr.bf16.mxu0 0
        %1911 = vmatpush1.bf16.msra.mxu0 0
        %1912 = vmatprep.subr.bf16.mxu0 0
        %1913 = vmatpush1.bf16.msra.mxu0 0
        %1914 = vmatprep.subr.bf16.mxu0 0
        %1915 = vmatpush1.bf16.msra.mxu0 0
        %1916 = vmatprep.subr.bf16.mxu0 0
        %1917 = vmatpush1.bf16.msra.mxu0 0
        %1918 = vmatprep.subr.bf16.mxu0 0
        %1919 = vmatpush1.bf16.msra.mxu0 0
        %1920 = vmatprep.subr.bf16.mxu0 0
        %1921 = vmatpush1.bf16.msra.mxu0 0
        %1922 = vmatprep.subr.bf16.mxu0 0
        %1923 = vmatpush1.bf16.msra.mxu0 0
        %1924 = vmatprep.subr.bf16.mxu0 0
        %1925 = vmatpush1.bf16.msra.mxu0 0
        %1926 = vmatprep.subr.bf16.mxu0 0
        %1927 = vmatpush1.bf16.msra.mxu0 0
        %1928 = vmatprep.subr.bf16.mxu0 0
        %1929 = vmatpush1.bf16.msra.mxu0 0
        %1930 = vmatprep.mubr.bf16.mxu0 0
        %1931 = vmatmul.mubr.bf16.gmra.mrb[0].mxu0 %v1893
        %v1932 = vpop.f32.mrb[0].mxu0
        %v1933 = vadd.f32 0.0, %v1932
        %v1934 = vpop.f32.mrb[0].mxu0
        %v1935 = vpop.f32.mrb[0].mxu0
        %v1936 = vpop.f32.mrb[0].mxu0
        %1937 = vdwg.mxu0
        %s1938 = scalar_lea.vmem %s19, 12
        %v1939 = vld [vmem:[%s1938] sm:$0xf]
        %1940 = vrot.lane.b32.xlu0 %v1596, 80
        %v1941 = vpop.permute.xlu0 %1940
        %1942 = vrot.lane.b32.xlu0 %v1596, 16
        %v1943 = vpop.permute.xlu0 %1942
        %v1945 = vsel %vm1601, %v1941, 0
        %v1948 = vsel %vm1601, %v1943, 0
        %1950 = vmatprep.subr.bf16.mxu0 0
        %1951 = vmatpush1.bf16.xpose.msra.mxu0 %v1948
        %1952 = vmatprep.subr.bf16.mxu0 0
        %1953 = vmatpush1.bf16.xpose.msra.mxu0 0
        %1954 = vmatprep.subr.bf16.mxu0 0
        %1955 = vmatpush1.bf16.xpose.msra.mxu0 0
        %1956 = vmatprep.subr.bf16.mxu0 0
        %1957 = vmatpush1.bf16.xpose.msra.mxu0 0
        %1958 = vmatprep.subr.bf16.mxu0 0
        %1959 = vmatpush1.bf16.xpose.msra.mxu0 0
        %1960 = vmatprep.subr.bf16.mxu0 0
        %1961 = vmatpush1.bf16.xpose.msra.mxu0 0
        %1962 = vmatprep.subr.bf16.mxu0 0
        %1963 = vmatpush1.bf16.xpose.msra.mxu0 0
        %1964 = vmatprep.subr.bf16.mxu0 0
        %1965 = vmatpush1.bf16.xpose.msra.mxu0 0
        %1966 = vmatprep.subr.bf16.mxu0 0
        %1967 = vmatpush1.bf16.xpose.msra.mxu0 0
        %1968 = vmatprep.subr.bf16.mxu0 0
        %1969 = vmatpush1.bf16.xpose.msra.mxu0 0
        %1970 = vmatprep.subr.bf16.mxu0 0
        %1971 = vmatpush1.bf16.xpose.msra.mxu0 0
        %1972 = vmatprep.subr.bf16.mxu0 0
        %1973 = vmatpush1.bf16.xpose.msra.mxu0 0
        %1974 = vmatprep.subr.bf16.mxu0 0
        %1975 = vmatpush1.bf16.xpose.msra.mxu0 0
        %1976 = vmatprep.subr.bf16.mxu0 0
        %1977 = vmatpush1.bf16.xpose.msra.mxu0 0
        %1978 = vmatprep.subr.bf16.mxu0 0
        %1979 = vmatpush1.bf16.xpose.msra.mxu0 0
        %1980 = vmatprep.subr.bf16.mxu0 0
        %1981 = vmatpush1.bf16.xpose.msra.mxu0 0
        %1982 = vmatprep.mubr.bf16.mxu0 0
        %1983 = vmatmul.mubr.bf16.gmra.mrb[0].mxu0 %v1945
        %v1984 = vpop.f32.mrb[0].mxu0
        %v1985 = vadd.f32 %v1939, %v1984
        %v1986 = vpop.f32.mrb[0].mxu0
        %v1987 = vpop.f32.mrb[0].mxu0
        %v1988 = vpop.f32.mrb[0].mxu0
        %1989 = vdwg.mxu0
        %v1990 = vsel %vm1648, %v1985, -inf
        %1991 = vmax.xlane.f32.xlu0 %v1990
        %v1992 = vpop.xlane.xlu0 %1991
        %v1993 = vsub.f32 %v1985, %v1992
        %v1994 = vmul.f32 %v1993, 1.442695
        %v1995 = vpow.pop %v1994
        %v1996 = vsel %vm1648, %v1995, 0.0
        %1997 = vadd.xlane.f32.xlu0 %v1996
        %v1998 = vpop.xlane.xlu0 %1997
        %v1999 = vrcp.pop %v1998
        %v2000 = vmul.f32 1.0, %v1999
        %v2001 = vmul.f32 %v1995, %v2000
        %v2002 = vpack.c.bf16 %v2001, %v2001
        %2003 = vrot.lane.b32.xlu0 %v1662, 80
        %v2004 = vpop.permute.xlu0 %2003
        %v2006 = vsel %vm1663, %v2002, 0
        %v2009 = vsel %vm1667, %v2004, 0
        %2011 = vmatprep.subr.bf16.mxu0 0
        %2012 = vmatpush1.bf16.msra.mxu0 %v2009
        %2013 = vmatprep.subr.bf16.mxu0 0
        %2014 = vmatpush1.bf16.msra.mxu0 0
        %2015 = vmatprep.subr.bf16.mxu0 0
        %2016 = vmatpush1.bf16.msra.mxu0 0
        %2017 = vmatprep.subr.bf16.mxu0 0
        %2018 = vmatpush1.bf16.msra.mxu0 0
        %2019 = vmatprep.subr.bf16.mxu0 0
        %2020 = vmatpush1.bf16.msra.mxu0 0
        %2021 = vmatprep.subr.bf16.mxu0 0
        %2022 = vmatpush1.bf16.msra.mxu0 0
        %2023 = vmatprep.subr.bf16.mxu0 0
        %2024 = vmatpush1.bf16.msra.mxu0 0
        %2025 = vmatprep.subr.bf16.mxu0 0
        %2026 = vmatpush1.bf16.msra.mxu0 0
        %2027 = vmatprep.subr.bf16.mxu0 0
        %2028 = vmatpush1.bf16.msra.mxu0 0
        %2029 = vmatprep.subr.bf16.mxu0 0
        %2030 = vmatpush1.bf16.msra.mxu0 0
        %2031 = vmatprep.subr.bf16.mxu0 0
        %2032 = vmatpush1.bf16.msra.mxu0 0
        %2033 = vmatprep.subr.bf16.mxu0 0
        %2034 = vmatpush1.bf16.msra.mxu0 0
        %2035 = vmatprep.subr.bf16.mxu0 0
        %2036 = vmatpush1.bf16.msra.mxu0 0
        %2037 = vmatprep.subr.bf16.mxu0 0
        %2038 = vmatpush1.bf16.msra.mxu0 0
        %2039 = vmatprep.subr.bf16.mxu0 0
        %2040 = vmatpush1.bf16.msra.mxu0 0
        %2041 = vmatprep.subr.bf16.mxu0 0
        %2042 = vmatpush1.bf16.msra.mxu0 0
        %2043 = vmatprep.mubr.bf16.mxu0 0
        %2044 = vmatmul.mubr.bf16.gmra.mrb[0].mxu0 %v2006
        %v2045 = vpop.f32.mrb[0].mxu0
        %v2046 = vadd.f32 0.0, %v2045
        %v2047 = vpop.f32.mrb[0].mxu0
        %v2048 = vpop.f32.mrb[0].mxu0
        %v2049 = vpop.f32.mrb[0].mxu0
        %2050 = vdwg.mxu0
        %2052 = vrot.lane.b32.xlu0 %v1820, 16
        %v2053 = vpop.permute.xlu0 %2052
        %2056 = vrot.lane.b32.xlu0 %v1933, 32
        %v2057 = vpop.permute.xlu0 %2056
        %2060 = vrot.lane.b32.xlu0 %v2046, 48
        %v2061 = vpop.permute.xlu0 %2060
        %v2063 = vsel %vm1601, %v1706, %v2053
        %vm2064 = vcmask 261120
        %v2065 = vsel %vm2064, %v2063, %v2057
        %vm2066 = vcmask 392192
        %v2067 = vsel %vm2066, %v2065, %v2061
        %v2068 = vpack.c.bf16 %v2067, %v2067
        %v2069 = vld [vmem:[%s21] sm:$0xf]
        %v2070 = vld [vmem:[%s21 + $0x4] sm:$0xf]
        %v2071 = vld [vmem:[%s21 + $0x8] sm:$0xf]
        %v2072 = vld [vmem:[%s21 + $0xc] sm:$0xf]
        %v2073 = vld [vmem:[%s21 + $0x10] sm:$0xf]
        %v2074 = vld [vmem:[%s21 + $0x14] sm:$0xf]
        %v2075 = vld [vmem:[%s21 + $0x18] sm:$0xf]
        %v2076 = vld [vmem:[%s21 + $0x1c] sm:$0xf]
        %v2077 = vld [vmem:[#allocation7] sm:$0x1]
        %v2079 = vlaneseq
        %v2080 = vshrl.u32 %v2079, 7
        %v2081 = vsub.s32 0, %v2080
        %v2082 = vrot.slane %v2077, %v2081
        %v2092 = vunpack.c.l.b16 %v2069
        %v2093 = vunpack.c.l.b16 %v2070
        %v2094 = vunpack.c.l.b16 %v2071
        %v2095 = vunpack.c.l.b16 %v2072
        %v2096 = vunpack.c.l.b16 %v2073
        %v2097 = vunpack.c.l.b16 %v2074
        %v2098 = vunpack.c.l.b16 %v2075
        %v2099 = vunpack.c.l.b16 %v2076
        %v2100 = vpack.c.b16 %v2093, %v2092
        %v2101 = vpack.c.b16 %v2095, %v2094
        %v2102 = vpack.c.b16 %v2097, %v2096
        %v2103 = vpack.c.b16 %v2099, %v2098
        %v2109 = vsel %vm1377, %v2068, 0
        %2111 = vmatprep.subr.bf16.mxu0 0
        %2112 = vmatpush1.bf16.msra.mxu0 %v2100
        %2113 = vmatprep.subr.bf16.mxu0 0
        %2114 = vmatpush1.bf16.msra.mxu0 %v2101
        %2115 = vmatprep.subr.bf16.mxu0 0
        %2116 = vmatpush1.bf16.msra.mxu0 %v2102
        %2117 = vmatprep.subr.bf16.mxu0 0
        %2118 = vmatpush1.bf16.msra.mxu0 %v2103
        %2119 = vmatprep.subr.bf16.mxu0 0
        %2120 = vmatpush1.bf16.msra.mxu0 0
        %2121 = vmatprep.subr.bf16.mxu0 0
        %2122 = vmatpush1.bf16.msra.mxu0 0
        %2123 = vmatprep.subr.bf16.mxu0 0
        %2124 = vmatpush1.bf16.msra.mxu0 0
        %2125 = vmatprep.subr.bf16.mxu0 0
        %2126 = vmatpush1.bf16.msra.mxu0 0
        %2127 = vmatprep.subr.bf16.mxu0 0
        %2128 = vmatpush1.bf16.msra.mxu0 0
        %2129 = vmatprep.subr.bf16.mxu0 0
        %2130 = vmatpush1.bf16.msra.mxu0 0
        %2131 = vmatprep.subr.bf16.mxu0 0
        %2132 = vmatpush1.bf16.msra.mxu0 0
        %2133 = vmatprep.subr.bf16.mxu0 0
        %2134 = vmatpush1.bf16.msra.mxu0 0
        %2135 = vmatprep.subr.bf16.mxu0 0
        %2136 = vmatpush1.bf16.msra.mxu0 0
        %2137 = vmatprep.subr.bf16.mxu0 0
        %2138 = vmatpush1.bf16.msra.mxu0 0
        %2139 = vmatprep.subr.bf16.mxu0 0
        %2140 = vmatpush1.bf16.msra.mxu0 0
        %2141 = vmatprep.subr.bf16.mxu0 0
        %2142 = vmatpush1.bf16.msra.mxu0 0
        %2143 = vmatprep.mubr.bf16.mxu0 0
        %2144 = vmatmul.mubr.bf16.gmra.mrb[0].mxu0 %v2109
        %v2145 = vpop.f32.mrb[0].mxu0
        %v2146 = vadd.f32 %v2082, %v2145
        %v2147 = vpop.f32.mrb[0].mxu0
        %v2148 = vpop.f32.mrb[0].mxu0
        %v2149 = vpop.f32.mrb[0].mxu0
        %2150 = vdwg.mxu0
        %v2151 = vadd.f32 %v1325, %v2146
        %v2152 = vld [vmem:[#allocation8] sm:$0x1]
        %v2153 = vld [vmem:[#allocation10] sm:$0x1]
        %v2154 = vsel %vm1329, %v2151, 0.0
        %2155 = vadd.xlane.f32.xlu0 %v2154
        %v2156 = vpop.xlane.xlu0 %2155
        %v2157 = vmul.f32 %v2156, %v1333
        %v2158 = vsub.f32 %v2151, %v2157
        %v2159 = vmul.f32 %v2158, %v2158
        %v2160 = vsel %vm1329, %v2159, 0.0
        %2161 = vadd.xlane.f32.xlu0 %v2160
        %v2162 = vpop.xlane.xlu0 %2161
        %v2163 = vmul.f32 %v2162, %v1333
        %v2164 = vadd.f32 %v2163, 1e-05
        %v2165 = vrsqrt.pop %v2164
        %v2166 = vmul.f32 %v2158, %v2165
        %v2168 = vlaneseq
        %v2169 = vshrl.u32 %v2168, 7
        %v2170 = vsub.s32 0, %v2169
        %v2171 = vrot.slane %v2152, %v2170
        %v2173 = vmul.f32 %v2166, %v2171
        %v2175 = vlaneseq
        %v2176 = vshrl.u32 %v2175, 7
        %v2177 = vsub.s32 0, %v2176
        %v2178 = vrot.slane %v2153, %v2177
        %v2180 = vadd.f32 %v2173, %v2178
        %v2181 = vpack.c.bf16 %v2180, %v2180
        %v2182 = vld [vmem:[%s29] sm:$0xff]
        %v2183 = vld [vmem:[%s29 + $0x8] sm:$0xff]
        %v2184 = vld [vmem:[%s29 + $0x10] sm:$0xff]
        %v2185 = vld [vmem:[%s29 + $0x18] sm:$0xff]
        %v2186 = vld [vmem:[%s29 + $0x20] sm:$0xff]
        %v2187 = vld [vmem:[%s29 + $0x28] sm:$0xff]
        %v2188 = vld [vmem:[%s29 + $0x30] sm:$0xff]
        %v2189 = vld [vmem:[%s29 + $0x38] sm:$0xff]
        %v2190 = vld [vmem:[%s31] sm:$0x3]
        %v2192 = vlaneseq
        %v2193 = vshrl.u32 %v2192, 7
        %v2194 = vsub.s32 0, %v2193
        %v2195 = vrot.slane %v2190, %v2194
        %v2196 = vlaneseq
        %v2197 = vshrl.u32 %v2196, 7
        %v2198 = vsub.s32 1, %v2197
        %v2199 = vrot.slane %v2190, %v2198
        %v2210 = vunpack.c.l.b16 %v2182
        %v2211 = vunpack.c.h.b16 %v2182
        %v2212 = vunpack.c.l.b16 %v2183
        %v2213 = vunpack.c.h.b16 %v2183
        %v2214 = vunpack.c.l.b16 %v2184
        %v2215 = vunpack.c.h.b16 %v2184
        %v2216 = vunpack.c.l.b16 %v2185
        %v2217 = vunpack.c.h.b16 %v2185
        %v2218 = vunpack.c.l.b16 %v2186
        %v2219 = vunpack.c.h.b16 %v2186
        %v2220 = vunpack.c.l.b16 %v2187
        %v2221 = vunpack.c.h.b16 %v2187
        %v2222 = vunpack.c.l.b16 %v2188
        %v2223 = vunpack.c.h.b16 %v2188
        %v2224 = vunpack.c.l.b16 %v2189
        %v2225 = vunpack.c.h.b16 %v2189
        %v2226 = vpack.c.b16 %v2212, %v2210
        %v2227 = vpack.c.b16 %v2213, %v2211
        %v2228 = vpack.c.b16 %v2216, %v2214
        %v2229 = vpack.c.b16 %v2217, %v2215
        %v2230 = vpack.c.b16 %v2220, %v2218
        %v2231 = vpack.c.b16 %v2221, %v2219
        %v2232 = vpack.c.b16 %v2224, %v2222
        %v2233 = vpack.c.b16 %v2225, %v2223
        %v2243 = vsel %vm1377, %v2181, 0
        %2245 = vmatprep.subr.bf16.mxu0 %v2227
        %2246 = vmatpush1.bf16.msra.mxu0 %v2226
        %2247 = vmatprep.subr.bf16.mxu0 %v2229
        %2248 = vmatpush1.bf16.msra.mxu0 %v2228
        %2249 = vmatprep.subr.bf16.mxu0 %v2231
        %2250 = vmatpush1.bf16.msra.mxu0 %v2230
        %2251 = vmatprep.subr.bf16.mxu0 %v2233
        %2252 = vmatpush1.bf16.msra.mxu0 %v2232
        %2253 = vmatprep.subr.bf16.mxu0 0
        %2254 = vmatpush1.bf16.msra.mxu0 0
        %2255 = vmatprep.subr.bf16.mxu0 0
        %2256 = vmatpush1.bf16.msra.mxu0 0
        %2257 = vmatprep.subr.bf16.mxu0 0
        %2258 = vmatpush1.bf16.msra.mxu0 0
        %2259 = vmatprep.subr.bf16.mxu0 0
        %2260 = vmatpush1.bf16.msra.mxu0 0
        %2261 = vmatprep.subr.bf16.mxu0 0
        %2262 = vmatpush1.bf16.msra.mxu0 0
        %2263 = vmatprep.subr.bf16.mxu0 0
        %2264 = vmatpush1.bf16.msra.mxu0 0
        %2265 = vmatprep.subr.bf16.mxu0 0
        %2266 = vmatpush1.bf16.msra.mxu0 0
        %2267 = vmatprep.subr.bf16.mxu0 0
        %2268 = vmatpush1.bf16.msra.mxu0 0
        %2269 = vmatprep.subr.bf16.mxu0 0
        %2270 = vmatpush1.bf16.msra.mxu0 0
        %2271 = vmatprep.subr.bf16.mxu0 0
        %2272 = vmatpush1.bf16.msra.mxu0 0
        %2273 = vmatprep.subr.bf16.mxu0 0
        %2274 = vmatpush1.bf16.msra.mxu0 0
        %2275 = vmatprep.subr.bf16.mxu0 0
        %2276 = vmatpush1.bf16.msra.mxu0 0
        %2277 = vmatprep.mubr.bf16.mxu0 0
        %2278 = vmatmul.mubr.bf16.gmra.mrb[0].mxu0 %v2243
        %v2279 = vpop.f32.mrb[0].mxu0
        %v2280 = vadd.f32 %v2195, %v2279
        %v2281 = vpop.f32.mrb[0].mxu0
        %v2282 = vadd.f32 %v2199, %v2281
        %v2283 = vpop.f32.mrb[0].mxu0
        %v2284 = vpop.f32.mrb[0].mxu0
        %2285 = vdwg.mxu0
        %v2286 = vmul.f32 %v2280, 0.5
        %v2287 = vmul.f32 %v2282, 0.5
        %v2288 = vmul.f32 %v2280, 0.70710677
        %v2289 = vmul.f32 %v2282, 0.70710677
        %v2290 = vand.u32 2147483647, %v2288
        %v2291 = vand.u32 2147483647, %v2289
        %v2292 = vmul.f32 %v2290, 0.3275911
        %v2293 = vmul.f32 %v2291, 0.3275911
        %v2294 = vadd.f32 %v2292, 1.0
        %v2295 = vadd.f32 %v2293, 1.0
        %v2296 = vrcp.pop %v2294
        %v2297 = vmul.f32 1.0, %v2296
        %v2298 = vrcp.pop %v2295
        %v2299 = vmul.f32 1.0, %v2298
        %v2300 = vmul.f32 %v2297, 1.0614054
        %v2301 = vmul.f32 %v2299, 1.0614054
        %v2302 = vadd.f32 %v2300, -1.4531521
        %v2303 = vadd.f32 %v2301, -1.4531521
        %v2304 = vmul.f32 %v2302, %v2297
        %v2305 = vmul.f32 %v2303, %v2299
        %v2306 = vadd.f32 %v2304, 1.4214138
        %v2307 = vadd.f32 %v2305, 1.4214138
        %v2308 = vmul.f32 %v2306, %v2297
        %v2309 = vmul.f32 %v2307, %v2299
        %v2310 = vadd.f32 %v2308, -0.28449672
        %v2311 = vadd.f32 %v2309, -0.28449672
        %v2312 = vmul.f32 %v2310, %v2297
        %v2313 = vmul.f32 %v2311, %v2299
        %v2314 = vadd.f32 %v2312, 0.2548296
        %v2315 = vadd.f32 %v2313, 0.2548296
        %v2316 = vmul.f32 %v2314, %v2297
        %v2317 = vmul.f32 %v2315, %v2299
        %v2318 = vsub.f32 0.0, %v2290
        %v2319 = vsub.f32 0.0, %v2291
        %v2320 = vmul.f32 %v2318, %v2290
        %v2321 = vmul.f32 %v2319, %v2291
        %v2322 = vmul.f32 %v2320, 1.442695
        %v2323 = vpow.pop %v2322
        %v2324 = vmul.f32 %v2321, 1.442695
        %v2325 = vpow.pop %v2324
        %v2326 = vmul.f32 %v2316, %v2323
        %v2327 = vmul.f32 %v2317, %v2325
        %v2328 = vsub.f32 1.0, %v2326
        %v2329 = vsub.f32 1.0, %v2327
        %vm2330 = vcmp.lt.f32.partialorder %v2288, 0.0
        %vm2331 = vcmp.lt.f32.partialorder %v2289, 0.0
        %v2332 = vsub.f32 0.0, %v2328
        %v2333 = vsub.f32 0.0, %v2329
        %v2334 = vsel %vm2330, %v2332, %v2328
        %v2335 = vsel %vm2331, %v2333, %v2329
        %v2336 = vadd.f32 %v2334, 1.0
        %v2337 = vadd.f32 %v2335, 1.0
        %v2338 = vmul.f32 %v2286, %v2336
        %v2339 = vmul.f32 %v2287, %v2337
        %v2340 = vpack.c.bf16 %v2338, %v2338
        %v2341 = vpack.c.bf16 %v2339, %v2339
        %v2342 = vld [vmem:[%s33] sm:$0xf]
        %v2343 = vld [vmem:[%s33 + $0x4] sm:$0xf]
        %v2344 = vld [vmem:[%s33 + $0x8] sm:$0xf]
        %v2345 = vld [vmem:[%s33 + $0xc] sm:$0xf]
        %v2346 = vld [vmem:[%s33 + $0x10] sm:$0xf]
        %v2347 = vld [vmem:[%s33 + $0x14] sm:$0xf]
        %v2348 = vld [vmem:[%s33 + $0x18] sm:$0xf]
        %v2349 = vld [vmem:[%s33 + $0x1c] sm:$0xf]
        %v2350 = vld [vmem:[%s33 + $0x20] sm:$0xf]
        %v2351 = vld [vmem:[%s33 + $0x24] sm:$0xf]
        %v2352 = vld [vmem:[%s33 + $0x28] sm:$0xf]
        %v2353 = vld [vmem:[%s33 + $0x2c] sm:$0xf]
        %v2354 = vld [vmem:[%s33 + $0x30] sm:$0xf]
        %v2355 = vld [vmem:[%s33 + $0x34] sm:$0xf]
        %v2356 = vld [vmem:[%s33 + $0x38] sm:$0xf]
        %v2357 = vld [vmem:[%s33 + $0x3c] sm:$0xf]
        %v2358 = vld [vmem:[%s33 + $0x40] sm:$0xf]
        %v2359 = vld [vmem:[%s33 + $0x44] sm:$0xf]
        %v2360 = vld [vmem:[%s33 + $0x48] sm:$0xf]
        %v2361 = vld [vmem:[%s33 + $0x4c] sm:$0xf]
        %v2362 = vld [vmem:[%s33 + $0x50] sm:$0xf]
        %v2363 = vld [vmem:[%s33 + $0x54] sm:$0xf]
        %v2364 = vld [vmem:[%s33 + $0x58] sm:$0xf]
        %v2365 = vld [vmem:[%s33 + $0x5c] sm:$0xf]
        %v2366 = vld [vmem:[%s33 + $0x60] sm:$0xf]
        %v2367 = vld [vmem:[%s33 + $0x64] sm:$0xf]
        %v2368 = vld [vmem:[%s33 + $0x68] sm:$0xf]
        %v2369 = vld [vmem:[%s33 + $0x6c] sm:$0xf]
        %v2370 = vld [vmem:[%s33 + $0x70] sm:$0xf]
        %v2371 = vld [vmem:[%s33 + $0x74] sm:$0xf]
        %v2372 = vld [vmem:[%s33 + $0x78] sm:$0xf]
        %v2373 = vld [vmem:[%s33 + $0x7c] sm:$0xf]
        %v2374 = vld [vmem:[#allocation11] sm:$0x1]
        %v2376 = vlaneseq
        %v2377 = vshrl.u32 %v2376, 7
        %v2378 = vsub.s32 0, %v2377
        %v2379 = vrot.slane %v2374, %v2378
        %v2413 = vunpack.c.l.b16 %v2342
        %v2414 = vunpack.c.l.b16 %v2343
        %v2415 = vunpack.c.l.b16 %v2344
        %v2416 = vunpack.c.l.b16 %v2345
        %v2417 = vunpack.c.l.b16 %v2346
        %v2418 = vunpack.c.l.b16 %v2347
        %v2419 = vunpack.c.l.b16 %v2348
        %v2420 = vunpack.c.l.b16 %v2349
        %v2421 = vunpack.c.l.b16 %v2350
        %v2422 = vunpack.c.l.b16 %v2351
        %v2423 = vunpack.c.l.b16 %v2352
        %v2424 = vunpack.c.l.b16 %v2353
        %v2425 = vunpack.c.l.b16 %v2354
        %v2426 = vunpack.c.l.b16 %v2355
        %v2427 = vunpack.c.l.b16 %v2356
        %v2428 = vunpack.c.l.b16 %v2357
        %v2429 = vunpack.c.l.b16 %v2358
        %v2430 = vunpack.c.l.b16 %v2359
        %v2431 = vunpack.c.l.b16 %v2360
        %v2432 = vunpack.c.l.b16 %v2361
        %v2433 = vunpack.c.l.b16 %v2362
        %v2434 = vunpack.c.l.b16 %v2363
        %v2435 = vunpack.c.l.b16 %v2364
        %v2436 = vunpack.c.l.b16 %v2365
        %v2437 = vunpack.c.l.b16 %v2366
        %v2438 = vunpack.c.l.b16 %v2367
        %v2439 = vunpack.c.l.b16 %v2368
        %v2440 = vunpack.c.l.b16 %v2369
        %v2441 = vunpack.c.l.b16 %v2370
        %v2442 = vunpack.c.l.b16 %v2371
        %v2443 = vunpack.c.l.b16 %v2372
        %v2444 = vunpack.c.l.b16 %v2373
        %v2445 = vpack.c.b16 %v2414, %v2413
        %v2446 = vpack.c.b16 %v2416, %v2415
        %v2447 = vpack.c.b16 %v2418, %v2417
        %v2448 = vpack.c.b16 %v2420, %v2419
        %v2449 = vpack.c.b16 %v2422, %v2421
        %v2450 = vpack.c.b16 %v2424, %v2423
        %v2451 = vpack.c.b16 %v2426, %v2425
        %v2452 = vpack.c.b16 %v2428, %v2427
        %v2453 = vpack.c.b16 %v2430, %v2429
        %v2454 = vpack.c.b16 %v2432, %v2431
        %v2455 = vpack.c.b16 %v2434, %v2433
        %v2456 = vpack.c.b16 %v2436, %v2435
        %v2457 = vpack.c.b16 %v2438, %v2437
        %v2458 = vpack.c.b16 %v2440, %v2439
        %v2459 = vpack.c.b16 %v2442, %v2441
        %v2460 = vpack.c.b16 %v2444, %v2443
        %2477 = vmatprep.subr.bf16.mxu0 0
        %2478 = vmatpush1.bf16.msra.mxu0 %v2445
        %2479 = vmatprep.subr.bf16.mxu0 0
        %2480 = vmatpush1.bf16.msra.mxu0 %v2446
        %2481 = vmatprep.subr.bf16.mxu0 0
        %2482 = vmatpush1.bf16.msra.mxu0 %v2447
        %2483 = vmatprep.subr.bf16.mxu0 0
        %2484 = vmatpush1.bf16.msra.mxu0 %v2448
        %2485 = vmatprep.subr.bf16.mxu0 0
        %2486 = vmatpush1.bf16.msra.mxu0 %v2449
        %2487 = vmatprep.subr.bf16.mxu0 0
        %2488 = vmatpush1.bf16.msra.mxu0 %v2450
        %2489 = vmatprep.subr.bf16.mxu0 0
        %2490 = vmatpush1.bf16.msra.mxu0 %v2451
        %2491 = vmatprep.subr.bf16.mxu0 0
        %2492 = vmatpush1.bf16.msra.mxu0 %v2452
        %2493 = vmatprep.subr.bf16.mxu0 0
        %2494 = vmatpush1.bf16.msra.mxu0 %v2453
        %2495 = vmatprep.subr.bf16.mxu0 0
        %2496 = vmatpush1.bf16.msra.mxu0 %v2454
        %2497 = vmatprep.subr.bf16.mxu0 0
        %2498 = vmatpush1.bf16.msra.mxu0 %v2455
        %2499 = vmatprep.subr.bf16.mxu0 0
        %2500 = vmatpush1.bf16.msra.mxu0 %v2456
        %2501 = vmatprep.subr.bf16.mxu0 0
        %2502 = vmatpush1.bf16.msra.mxu0 %v2457
        %2503 = vmatprep.subr.bf16.mxu0 0
        %2504 = vmatpush1.bf16.msra.mxu0 %v2458
        %2505 = vmatprep.subr.bf16.mxu0 0
        %2506 = vmatpush1.bf16.msra.mxu0 %v2459
        %2507 = vmatprep.subr.bf16.mxu0 0
        %2508 = vmatpush1.bf16.msra.mxu0 %v2460
        %2509 = vmatprep.mubr.bf16.mxu0 %v2341
        %2510 = vmatmul.mubr.bf16.gmra.mrb[0].mxu0 %v2340
        %v2511 = vpop.f32.mrb[0].mxu0
        %v2512 = vadd.f32 %v2379, %v2511
        %v2513 = vpop.f32.mrb[0].mxu0
        %v2514 = vpop.f32.mrb[0].mxu0
        %v2515 = vpop.f32.mrb[0].mxu0
        %2516 = vdwg.mxu0
        %v2517 = vadd.f32 %v2151, %v2512
        %v2518 = vld [vmem:[#allocation13] sm:$0x1]
        %v2519 = vld [vmem:[#allocation14] sm:$0x1]
        %v2520 = vsel %vm1329, %v2517, 0.0
        %2521 = vadd.xlane.f32.xlu0 %v2520
        %v2522 = vpop.xlane.xlu0 %2521
        %v2523 = vmul.f32 %v2522, %v1333
        %v2524 = vsub.f32 %v2517, %v2523
        %v2525 = vmul.f32 %v2524, %v2524
        %v2526 = vsel %vm1329, %v2525, 0.0
        %2527 = vadd.xlane.f32.xlu0 %v2526
        %v2528 = vpop.xlane.xlu0 %2527
        %v2529 = vmul.f32 %v2528, %v1333
        %v2530 = vadd.f32 %v2529, 1e-05
        %v2531 = vrsqrt.pop %v2530
        %v2532 = vmul.f32 %v2524, %v2531
        %v2534 = vlaneseq
        %v2535 = vshrl.u32 %v2534, 7
        %v2536 = vsub.s32 0, %v2535
        %v2537 = vrot.slane %v2518, %v2536
        %v2539 = vmul.f32 %v2532, %v2537
        %v2541 = vlaneseq
        %v2542 = vshrl.u32 %v2541, 7
        %v2543 = vsub.s32 0, %v2542
        %v2544 = vrot.slane %v2519, %v2543
        %v2546 = vadd.f32 %v2539, %v2544
        %v2547 = vpack.c.bf16 %v2546, %v2546
        %v2548 = vld [vmem:[%s41] sm:$0xff]
        %v2549 = vld [vmem:[%s41 + $0x8] sm:$0xff]
        %v2550 = vld [vmem:[%s41 + $0x10] sm:$0xff]
        %v2551 = vld [vmem:[%s41 + $0x18] sm:$0xff]
        %v2552 = vld [vmem:[%s41 + $0x20] sm:$0xff]
        %v2553 = vld [vmem:[%s41 + $0x28] sm:$0xff]
        %v2554 = vld [vmem:[%s41 + $0x30] sm:$0xff]
        %v2555 = vld [vmem:[%s41 + $0x38] sm:$0xff]
        %v2556 = vld [vmem:[%s43] sm:$0x3]
        %v2558 = vlaneseq
        %v2559 = vshrl.u32 %v2558, 7
        %v2560 = vsub.s32 0, %v2559
        %v2561 = vrot.slane %v2556, %v2560
        %v2562 = vlaneseq
        %v2563 = vshrl.u32 %v2562, 7
        %v2564 = vsub.s32 1, %v2563
        %v2565 = vrot.slane %v2556, %v2564
        %v2576 = vunpack.c.l.b16 %v2548
        %v2577 = vunpack.c.h.b16 %v2548
        %v2578 = vunpack.c.l.b16 %v2549
        %v2579 = vunpack.c.h.b16 %v2549
        %v2580 = vunpack.c.l.b16 %v2550
        %v2581 = vunpack.c.h.b16 %v2550
        %v2582 = vunpack.c.l.b16 %v2551
        %v2583 = vunpack.c.h.b16 %v2551
        %v2584 = vunpack.c.l.b16 %v2552
        %v2585 = vunpack.c.h.b16 %v2552
        %v2586 = vunpack.c.l.b16 %v2553
        %v2587 = vunpack.c.h.b16 %v2553
        %v2588 = vunpack.c.l.b16 %v2554
        %v2589 = vunpack.c.h.b16 %v2554
        %v2590 = vunpack.c.l.b16 %v2555
        %v2591 = vunpack.c.h.b16 %v2555
        %v2592 = vpack.c.b16 %v2578, %v2576
        %v2593 = vpack.c.b16 %v2579, %v2577
        %v2594 = vpack.c.b16 %v2582, %v2580
        %v2595 = vpack.c.b16 %v2583, %v2581
        %v2596 = vpack.c.b16 %v2586, %v2584
        %v2597 = vpack.c.b16 %v2587, %v2585
        %v2598 = vpack.c.b16 %v2590, %v2588
        %v2599 = vpack.c.b16 %v2591, %v2589
        %v2609 = vsel %vm1377, %v2547, 0
        %2611 = vmatprep.subr.bf16.mxu0 %v2593
        %2612 = vmatpush1.bf16.msra.mxu0 %v2592
        %2613 = vmatprep.subr.bf16.mxu0 %v2595
        %2614 = vmatpush1.bf16.msra.mxu0 %v2594
        %2615 = vmatprep.subr.bf16.mxu0 %v2597
        %2616 = vmatpush1.bf16.msra.mxu0 %v2596
        %2617 = vmatprep.subr.bf16.mxu0 %v2599
        %2618 = vmatpush1.bf16.msra.mxu0 %v2598
        %2619 = vmatprep.subr.bf16.mxu0 0
        %2620 = vmatpush1.bf16.msra.mxu0 0
        %2621 = vmatprep.subr.bf16.mxu0 0
        %2622 = vmatpush1.bf16.msra.mxu0 0
        %2623 = vmatprep.subr.bf16.mxu0 0
        %2624 = vmatpush1.bf16.msra.mxu0 0
        %2625 = vmatprep.subr.bf16.mxu0 0
        %2626 = vmatpush1.bf16.msra.mxu0 0
        %2627 = vmatprep.subr.bf16.mxu0 0
        %2628 = vmatpush1.bf16.msra.mxu0 0
        %2629 = vmatprep.subr.bf16.mxu0 0
        %2630 = vmatpush1.bf16.msra.mxu0 0
        %2631 = vmatprep.subr.bf16.mxu0 0
        %2632 = vmatpush1.bf16.msra.mxu0 0
        %2633 = vmatprep.subr.bf16.mxu0 0
        %2634 = vmatpush1.bf16.msra.mxu0 0
        %2635 = vmatprep.subr.bf16.mxu0 0
        %2636 = vmatpush1.bf16.msra.mxu0 0
        %2637 = vmatprep.subr.bf16.mxu0 0
        %2638 = vmatpush1.bf16.msra.mxu0 0
        %2639 = vmatprep.subr.bf16.mxu0 0
        %2640 = vmatpush1.bf16.msra.mxu0 0
        %2641 = vmatprep.subr.bf16.mxu0 0
        %2642 = vmatpush1.bf16.msra.mxu0 0
        %2643 = vmatprep.mubr.bf16.mxu0 0
        %2644 = vmatmul.mubr.bf16.gmra.mrb[0].mxu0 %v2609
        %v2645 = vpop.f32.mrb[0].mxu0
        %v2646 = vadd.f32 %v2561, %v2645
        %v2647 = vpop.f32.mrb[0].mxu0
        %v2648 = vadd.f32 %v2565, %v2647
        %v2649 = vpop.f32.mrb[0].mxu0
        %v2650 = vpop.f32.mrb[0].mxu0
        %2651 = vdwg.mxu0
        %v2652 = vpack.c.bf16 %v2646, %v2646
        %v2653 = vld [vmem:[%s45] sm:$0xf]
        %2655 = vrot.lane.b32.xlu0 %v2652, 64
        %v2656 = vpop.permute.xlu0 %2655
        %v2658 = vsel %vm1601, %v2652, 0
        %v2661 = vsel %vm1601, %v2656, 0
        %2663 = vmatprep.subr.bf16.mxu0 0
        %2664 = vmatpush1.bf16.xpose.msra.mxu0 %v2661
        %2665 = vmatprep.subr.bf16.mxu0 0
        %2666 = vmatpush1.bf16.xpose.msra.mxu0 0
        %2667 = vmatprep.subr.bf16.mxu0 0
        %2668 = vmatpush1.bf16.xpose.msra.mxu0 0
        %2669 = vmatprep.subr.bf16.mxu0 0
        %2670 = vmatpush1.bf16.xpose.msra.mxu0 0
        %2671 = vmatprep.subr.bf16.mxu0 0
        %2672 = vmatpush1.bf16.xpose.msra.mxu0 0
        %2673 = vmatprep.subr.bf16.mxu0 0
        %2674 = vmatpush1.bf16.xpose.msra.mxu0 0
        %2675 = vmatprep.subr.bf16.mxu0 0
        %2676 = vmatpush1.bf16.xpose.msra.mxu0 0
        %2677 = vmatprep.subr.bf16.mxu0 0
        %2678 = vmatpush1.bf16.xpose.msra.mxu0 0
        %2679 = vmatprep.subr.bf16.mxu0 0
        %2680 = vmatpush1.bf16.xpose.msra.mxu0 0
        %2681 = vmatprep.subr.bf16.mxu0 0
        %2682 = vmatpush1.bf16.xpose.msra.mxu0 0
        %2683 = vmatprep.subr.bf16.mxu0 0
        %2684 = vmatpush1.bf16.xpose.msra.mxu0 0
        %2685 = vmatprep.subr.bf16.mxu0 0
        %2686 = vmatpush1.bf16.xpose.msra.mxu0 0
        %2687 = vmatprep.subr.bf16.mxu0 0
        %2688 = vmatpush1.bf16.xpose.msra.mxu0 0
        %2689 = vmatprep.subr.bf16.mxu0 0
        %2690 = vmatpush1.bf16.xpose.msra.mxu0 0
        %2691 = vmatprep.subr.bf16.mxu0 0
        %2692 = vmatpush1.bf16.xpose.msra.mxu0 0
        %2693 = vmatprep.subr.bf16.mxu0 0
        %2694 = vmatpush1.bf16.xpose.msra.mxu0 0
        %2695 = vmatprep.mubr.bf16.mxu0 0
        %2696 = vmatmul.mubr.bf16.gmra.mrb[0].mxu0 %v2658
        %v2697 = vpop.f32.mrb[0].mxu0
        %v2698 = vadd.f32 %v2653, %v2697
        %v2699 = vpop.f32.mrb[0].mxu0
        %v2700 = vpop.f32.mrb[0].mxu0
        %v2701 = vpop.f32.mrb[0].mxu0
        %2702 = vdwg.mxu0
        %v2703 = vsel %vm1648, %v2698, -inf
        %2704 = vmax.xlane.f32.xlu0 %v2703
        %v2705 = vpop.xlane.xlu0 %2704
        %v2706 = vsub.f32 %v2698, %v2705
        %v2707 = vmul.f32 %v2706, 1.442695
        %v2708 = vpow.pop %v2707
        %v2709 = vsel %vm1648, %v2708, 0.0
        %2710 = vadd.xlane.f32.xlu0 %v2709
        %v2711 = vpop.xlane.xlu0 %2710
        %v2712 = vrcp.pop %v2711
        %v2713 = vmul.f32 1.0, %v2712
        %v2714 = vmul.f32 %v2708, %v2713
        %v2715 = vpack.c.bf16 %v2714, %v2714
        %v2716 = vpack.c.bf16 %v2648, %v2648
        %v2718 = vsel %vm1663, %v2715, 0
        %v2721 = vsel %vm1667, %v2716, 0
        %2723 = vmatprep.subr.bf16.mxu0 0
        %2724 = vmatpush1.bf16.msra.mxu0 %v2721
        %2725 = vmatprep.subr.bf16.mxu0 0
        %2726 = vmatpush1.bf16.msra.mxu0 0
        %2727 = vmatprep.subr.bf16.mxu0 0
        %2728 = vmatpush1.bf16.msra.mxu0 0
        %2729 = vmatprep.subr.bf16.mxu0 0
        %2730 = vmatpush1.bf16.msra.mxu0 0
        %2731 = vmatprep.subr.bf16.mxu0 0
        %2732 = vmatpush1.bf16.msra.mxu0 0
        %2733 = vmatprep.subr.bf16.mxu0 0
        %2734 = vmatpush1.bf16.msra.mxu0 0
        %2735 = vmatprep.subr.bf16.mxu0 0
        %2736 = vmatpush1.bf16.msra.mxu0 0
        %2737 = vmatprep.subr.bf16.mxu0 0
        %2738 = vmatpush1.bf16.msra.mxu0 0
        %2739 = vmatprep.subr.bf16.mxu0 0
        %2740 = vmatpush1.bf16.msra.mxu0 0
        %2741 = vmatprep.subr.bf16.mxu0 0
        %2742 = vmatpush1.bf16.msra.mxu0 0
        %2743 = vmatprep.subr.bf16.mxu0 0
        %2744 = vmatpush1.bf16.msra.mxu0 0
        %2745 = vmatprep.subr.bf16.mxu0 0
        %2746 = vmatpush1.bf16.msra.mxu0 0
        %2747 = vmatprep.subr.bf16.mxu0 0
        %2748 = vmatpush1.bf16.msra.mxu0 0
        %2749 = vmatprep.subr.bf16.mxu0 0
        %2750 = vmatpush1.bf16.msra.mxu0 0
        %2751 = vmatprep.subr.bf16.mxu0 0
        %2752 = vmatpush1.bf16.msra.mxu0 0
        %2753 = vmatprep.subr.bf16.mxu0 0
        %2754 = vmatpush1.bf16.msra.mxu0 0
        %2755 = vmatprep.mubr.bf16.mxu0 0
        %2756 = vmatmul.mubr.bf16.gmra.mrb[0].mxu0 %v2718
        %v2757 = vpop.f32.mrb[0].mxu0
        %v2758 = vadd.f32 0.0, %v2757
        %v2759 = vpop.f32.mrb[0].mxu0
        %v2760 = vpop.f32.mrb[0].mxu0
        %v2761 = vpop.f32.mrb[0].mxu0
        %2762 = vdwg.mxu0
        %s2763 = scalar_lea.vmem %s45, 4
        %v2764 = vld [vmem:[%s2763] sm:$0xf]
        %2765 = vrot.lane.b32.xlu0 %v2652, 112
        %v2766 = vpop.permute.xlu0 %2765
        %2767 = vrot.lane.b32.xlu0 %v2652, 48
        %v2768 = vpop.permute.xlu0 %2767
        %v2770 = vsel %vm1601, %v2766, 0
        %v2773 = vsel %vm1601, %v2768, 0
        %2775 = vmatprep.subr.bf16.mxu0 0
        %2776 = vmatpush1.bf16.xpose.msra.mxu0 %v2773
        %2777 = vmatprep.subr.bf16.mxu0 0
        %2778 = vmatpush1.bf16.xpose.msra.mxu0 0
        %2779 = vmatprep.subr.bf16.mxu0 0
        %2780 = vmatpush1.bf16.xpose.msra.mxu0 0
        %2781 = vmatprep.subr.bf16.mxu0 0
        %2782 = vmatpush1.bf16.xpose.msra.mxu0 0
        %2783 = vmatprep.subr.bf16.mxu0 0
        %2784 = vmatpush1.bf16.xpose.msra.mxu0 0
        %2785 = vmatprep.subr.bf16.mxu0 0
        %2786 = vmatpush1.bf16.xpose.msra.mxu0 0
        %2787 = vmatprep.subr.bf16.mxu0 0
        %2788 = vmatpush1.bf16.xpose.msra.mxu0 0
        %2789 = vmatprep.subr.bf16.mxu0 0
        %2790 = vmatpush1.bf16.xpose.msra.mxu0 0
        %2791 = vmatprep.subr.bf16.mxu0 0
        %2792 = vmatpush1.bf16.xpose.msra.mxu0 0
        %2793 = vmatprep.subr.bf16.mxu0 0
        %2794 = vmatpush1.bf16.xpose.msra.mxu0 0
        %2795 = vmatprep.subr.bf16.mxu0 0
        %2796 = vmatpush1.bf16.xpose.msra.mxu0 0
        %2797 = vmatprep.subr.bf16.mxu0 0
        %2798 = vmatpush1.bf16.xpose.msra.mxu0 0
        %2799 = vmatprep.subr.bf16.mxu0 0
        %2800 = vmatpush1.bf16.xpose.msra.mxu0 0
        %2801 = vmatprep.subr.bf16.mxu0 0
        %2802 = vmatpush1.bf16.xpose.msra.mxu0 0
        %2803 = vmatprep.subr.bf16.mxu0 0
        %2804 = vmatpush1.bf16.xpose.msra.mxu0 0
        %2805 = vmatprep.subr.bf16.mxu0 0
        %2806 = vmatpush1.bf16.xpose.msra.mxu0 0
        %2807 = vmatprep.mubr.bf16.mxu0 0
        %2808 = vmatmul.mubr.bf16.gmra.mrb[0].mxu0 %v2770
        %v2809 = vpop.f32.mrb[0].mxu0
        %v2810 = vadd.f32 %v2764, %v2809
        %v2811 = vpop.f32.mrb[0].mxu0
        %v2812 = vpop.f32.mrb[0].mxu0
        %v2813 = vpop.f32.mrb[0].mxu0
        %2814 = vdwg.mxu0
        %v2815 = vsel %vm1648, %v2810, -inf
        %2816 = vmax.xlane.f32.xlu0 %v2815
        %v2817 = vpop.xlane.xlu0 %2816
        %v2818 = vsub.f32 %v2810, %v2817
        %v2819 = vmul.f32 %v2818, 1.442695
        %v2820 = vpow.pop %v2819
        %v2821 = vsel %vm1648, %v2820, 0.0
        %2822 = vadd.xlane.f32.xlu0 %v2821
        %v2823 = vpop.xlane.xlu0 %2822
        %v2824 = vrcp.pop %v2823
        %v2825 = vmul.f32 1.0, %v2824
        %v2826 = vmul.f32 %v2820, %v2825
        %v2827 = vpack.c.bf16 %v2826, %v2826
        %2829 = vrot.lane.b32.xlu0 %v2716, 112
        %v2830 = vpop.permute.xlu0 %2829
        %v2832 = vsel %vm1663, %v2827, 0
        %v2835 = vsel %vm1667, %v2830, 0
        %2837 = vmatprep.subr.bf16.mxu0 0
        %2838 = vmatpush1.bf16.msra.mxu0 %v2835
        %2839 = vmatprep.subr.bf16.mxu0 0
        %2840 = vmatpush1.bf16.msra.mxu0 0
        %2841 = vmatprep.subr.bf16.mxu0 0
        %2842 = vmatpush1.bf16.msra.mxu0 0
        %2843 = vmatprep.subr.bf16.mxu0 0
        %2844 = vmatpush1.bf16.msra.mxu0 0
        %2845 = vmatprep.subr.bf16.mxu0 0
        %2846 = vmatpush1.bf16.msra.mxu0 0
        %2847 = vmatprep.subr.bf16.mxu0 0
        %2848 = vmatpush1.bf16.msra.mxu0 0
        %2849 = vmatprep.subr.bf16.mxu0 0
        %2850 = vmatpush1.bf16.msra.mxu0 0
        %2851 = vmatprep.subr.bf16.mxu0 0
        %2852 = vmatpush1.bf16.msra.mxu0 0
        %2853 = vmatprep.subr.bf16.mxu0 0
        %2854 = vmatpush1.bf16.msra.mxu0 0
        %2855 = vmatprep.subr.bf16.mxu0 0
        %2856 = vmatpush1.bf16.msra.mxu0 0
        %2857 = vmatprep.subr.bf16.mxu0 0
        %2858 = vmatpush1.bf16.msra.mxu0 0
        %2859 = vmatprep.subr.bf16.mxu0 0
        %2860 = vmatpush1.bf16.msra.mxu0 0
        %2861 = vmatprep.subr.bf16.mxu0 0
        %2862 = vmatpush1.bf16.msra.mxu0 0
        %2863 = vmatprep.subr.bf16.mxu0 0
        %2864 = vmatpush1.bf16.msra.mxu0 0
        %2865 = vmatprep.subr.bf16.mxu0 0
        %2866 = vmatpush1.bf16.msra.mxu0 0
        %2867 = vmatprep.subr.bf16.mxu0 0
        %2868 = vmatpush1.bf16.msra.mxu0 0
        %2869 = vmatprep.mubr.bf16.mxu0 0
        %2870 = vmatmul.mubr.bf16.gmra.mrb[0].mxu0 %v2832
        %v2871 = vpop.f32.mrb[0].mxu0
        %v2872 = vadd.f32 0.0, %v2871
        %v2873 = vpop.f32.mrb[0].mxu0
        %v2874 = vpop.f32.mrb[0].mxu0
        %v2875 = vpop.f32.mrb[0].mxu0
        %2876 = vdwg.mxu0
        %s2877 = scalar_lea.vmem %s45, 8
        %v2878 = vld [vmem:[%s2877] sm:$0xf]
        %2879 = vrot.lane.b32.xlu0 %v2652, 96
        %v2880 = vpop.permute.xlu0 %2879
        %2881 = vrot.lane.b32.xlu0 %v2652, 32
        %v2882 = vpop.permute.xlu0 %2881
        %v2884 = vsel %vm1601, %v2880, 0
        %v2887 = vsel %vm1601, %v2882, 0
        %2889 = vmatprep.subr.bf16.mxu0 0
        %2890 = vmatpush1.bf16.xpose.msra.mxu0 %v2887
        %2891 = vmatprep.subr.bf16.mxu0 0
        %2892 = vmatpush1.bf16.xpose.msra.mxu0 0
        %2893 = vmatprep.subr.bf16.mxu0 0
        %2894 = vmatpush1.bf16.xpose.msra.mxu0 0
        %2895 = vmatprep.subr.bf16.mxu0 0
        %2896 = vmatpush1.bf16.xpose.msra.mxu0 0
        %2897 = vmatprep.subr.bf16.mxu0 0
        %2898 = vmatpush1.bf16.xpose.msra.mxu0 0
        %2899 = vmatprep.subr.bf16.mxu0 0
        %2900 = vmatpush1.bf16.xpose.msra.mxu0 0
        %2901 = vmatprep.subr.bf16.mxu0 0
        %2902 = vmatpush1.bf16.xpose.msra.mxu0 0
        %2903 = vmatprep.subr.bf16.mxu0 0
        %2904 = vmatpush1.bf16.xpose.msra.mxu0 0
        %2905 = vmatprep.subr.bf16.mxu0 0
        %2906 = vmatpush1.bf16.xpose.msra.mxu0 0
        %2907 = vmatprep.subr.bf16.mxu0 0
        %2908 = vmatpush1.bf16.xpose.msra.mxu0 0
        %2909 = vmatprep.subr.bf16.mxu0 0
        %2910 = vmatpush1.bf16.xpose.msra.mxu0 0
        %2911 = vmatprep.subr.bf16.mxu0 0
        %2912 = vmatpush1.bf16.xpose.msra.mxu0 0
        %2913 = vmatprep.subr.bf16.mxu0 0
        %2914 = vmatpush1.bf16.xpose.msra.mxu0 0
        %2915 = vmatprep.subr.bf16.mxu0 0
        %2916 = vmatpush1.bf16.xpose.msra.mxu0 0
        %2917 = vmatprep.subr.bf16.mxu0 0
        %2918 = vmatpush1.bf16.xpose.msra.mxu0 0
        %2919 = vmatprep.subr.bf16.mxu0 0
        %2920 = vmatpush1.bf16.xpose.msra.mxu0 0
        %2921 = vmatprep.mubr.bf16.mxu0 0
        %2922 = vmatmul.mubr.bf16.gmra.mrb[0].mxu0 %v2884
        %v2923 = vpop.f32.mrb[0].mxu0
        %v2924 = vadd.f32 %v2878, %v2923
        %v2925 = vpop.f32.mrb[0].mxu0
        %v2926 = vpop.f32.mrb[0].mxu0
        %v2927 = vpop.f32.mrb[0].mxu0
        %2928 = vdwg.mxu0
        %v2929 = vsel %vm1648, %v2924, -inf
        %2930 = vmax.xlane.f32.xlu0 %v2929
        %v2931 = vpop.xlane.xlu0 %2930
        %v2932 = vsub.f32 %v2924, %v2931
        %v2933 = vmul.f32 %v2932, 1.442695
        %v2934 = vpow.pop %v2933
        %v2935 = vsel %vm1648, %v2934, 0.0
        %2936 = vadd.xlane.f32.xlu0 %v2935
        %v2937 = vpop.xlane.xlu0 %2936
        %v2938 = vrcp.pop %v2937
        %v2939 = vmul.f32 1.0, %v2938
        %v2940 = vmul.f32 %v2934, %v2939
        %v2941 = vpack.c.bf16 %v2940, %v2940
        %2942 = vrot.lane.b32.xlu0 %v2716, 96
        %v2943 = vpop.permute.xlu0 %2942
        %v2945 = vsel %vm1663, %v2941, 0
        %v2948 = vsel %vm1667, %v2943, 0
        %2950 = vmatprep.subr.bf16.mxu0 0
        %2951 = vmatpush1.bf16.msra.mxu0 %v2948
        %2952 = vmatprep.subr.bf16.mxu0 0
        %2953 = vmatpush1.bf16.msra.mxu0 0
        %2954 = vmatprep.subr.bf16.mxu0 0
        %2955 = vmatpush1.bf16.msra.mxu0 0
        %2956 = vmatprep.subr.bf16.mxu0 0
        %2957 = vmatpush1.bf16.msra.mxu0 0
        %2958 = vmatprep.subr.bf16.mxu0 0
        %2959 = vmatpush1.bf16.msra.mxu0 0
        %2960 = vmatprep.subr.bf16.mxu0 0
        %2961 = vmatpush1.bf16.msra.mxu0 0
        %2962 = vmatprep.subr.bf16.mxu0 0
        %2963 = vmatpush1.bf16.msra.mxu0 0
        %2964 = vmatprep.subr.bf16.mxu0 0
        %2965 = vmatpush1.bf16.msra.mxu0 0
        %2966 = vmatprep.subr.bf16.mxu0 0
        %2967 = vmatpush1.bf16.msra.mxu0 0
        %2968 = vmatprep.subr.bf16.mxu0 0
        %2969 = vmatpush1.bf16.msra.mxu0 0
        %2970 = vmatprep.subr.bf16.mxu0 0
        %2971 = vmatpush1.bf16.msra.mxu0 0
        %2972 = vmatprep.subr.bf16.mxu0 0
        %2973 = vmatpush1.bf16.msra.mxu0 0
        %2974 = vmatprep.subr.bf16.mxu0 0
        %2975 = vmatpush1.bf16.msra.mxu0 0
        %2976 = vmatprep.subr.bf16.mxu0 0
        %2977 = vmatpush1.bf16.msra.mxu0 0
        %2978 = vmatprep.subr.bf16.mxu0 0
        %2979 = vmatpush1.bf16.msra.mxu0 0
        %2980 = vmatprep.subr.bf16.mxu0 0
        %2981 = vmatpush1.bf16.msra.mxu0 0
        %2982 = vmatprep.mubr.bf16.mxu0 0
        %2983 = vmatmul.mubr.bf16.gmra.mrb[0].mxu0 %v2945
        %v2984 = vpop.f32.mrb[0].mxu0
        %v2985 = vadd.f32 0.0, %v2984
        %v2986 = vpop.f32.mrb[0].mxu0
        %v2987 = vpop.f32.mrb[0].mxu0
        %v2988 = vpop.f32.mrb[0].mxu0
        %2989 = vdwg.mxu0
        %s2990 = scalar_lea.vmem %s45, 12
        %v2991 = vld [vmem:[%s2990] sm:$0xf]
        %2992 = vrot.lane.b32.xlu0 %v2652, 80
        %v2993 = vpop.permute.xlu0 %2992
        %2994 = vrot.lane.b32.xlu0 %v2652, 16
        %v2995 = vpop.permute.xlu0 %2994
        %v2997 = vsel %vm1601, %v2993, 0
        %v3000 = vsel %vm1601, %v2995, 0
        %3002 = vmatprep.subr.bf16.mxu0 0
        %3003 = vmatpush1.bf16.xpose.msra.mxu0 %v3000
        %3004 = vmatprep.subr.bf16.mxu0 0
        %3005 = vmatpush1.bf16.xpose.msra.mxu0 0
        %3006 = vmatprep.subr.bf16.mxu0 0
        %3007 = vmatpush1.bf16.xpose.msra.mxu0 0
        %3008 = vmatprep.subr.bf16.mxu0 0
        %3009 = vmatpush1.bf16.xpose.msra.mxu0 0
        %3010 = vmatprep.subr.bf16.mxu0 0
        %3011 = vmatpush1.bf16.xpose.msra.mxu0 0
        %3012 = vmatprep.subr.bf16.mxu0 0
        %3013 = vmatpush1.bf16.xpose.msra.mxu0 0
        %3014 = vmatprep.subr.bf16.mxu0 0
        %3015 = vmatpush1.bf16.xpose.msra.mxu0 0
        %3016 = vmatprep.subr.bf16.mxu0 0
        %3017 = vmatpush1.bf16.xpose.msra.mxu0 0
        %3018 = vmatprep.subr.bf16.mxu0 0
        %3019 = vmatpush1.bf16.xpose.msra.mxu0 0
        %3020 = vmatprep.subr.bf16.mxu0 0
        %3021 = vmatpush1.bf16.xpose.msra.mxu0 0
        %3022 = vmatprep.subr.bf16.mxu0 0
        %3023 = vmatpush1.bf16.xpose.msra.mxu0 0
        %3024 = vmatprep.subr.bf16.mxu0 0
        %3025 = vmatpush1.bf16.xpose.msra.mxu0 0
        %3026 = vmatprep.subr.bf16.mxu0 0
        %3027 = vmatpush1.bf16.xpose.msra.mxu0 0
        %3028 = vmatprep.subr.bf16.mxu0 0
        %3029 = vmatpush1.bf16.xpose.msra.mxu0 0
        %3030 = vmatprep.subr.bf16.mxu0 0
        %3031 = vmatpush1.bf16.xpose.msra.mxu0 0
        %3032 = vmatprep.subr.bf16.mxu0 0
        %3033 = vmatpush1.bf16.xpose.msra.mxu0 0
        %3034 = vmatprep.mubr.bf16.mxu0 0
        %3035 = vmatmul.mubr.bf16.gmra.mrb[0].mxu0 %v2997
        %v3036 = vpop.f32.mrb[0].mxu0
        %v3037 = vadd.f32 %v2991, %v3036
        %v3038 = vpop.f32.mrb[0].mxu0
        %v3039 = vpop.f32.mrb[0].mxu0
        %v3040 = vpop.f32.mrb[0].mxu0
        %3041 = vdwg.mxu0
        %v3042 = vsel %vm1648, %v3037, -inf
        %3043 = vmax.xlane.f32.xlu0 %v3042
        %v3044 = vpop.xlane.xlu0 %3043
        %v3045 = vsub.f32 %v3037, %v3044
        %v3046 = vmul.f32 %v3045, 1.442695
        %v3047 = vpow.pop %v3046
        %v3048 = vsel %vm1648, %v3047, 0.0
        %3049 = vadd.xlane.f32.xlu0 %v3048
        %v3050 = vpop.xlane.xlu0 %3049
        %v3051 = vrcp.pop %v3050
        %v3052 = vmul.f32 1.0, %v3051
        %v3053 = vmul.f32 %v3047, %v3052
        %v3054 = vpack.c.bf16 %v3053, %v3053
        %3055 = vrot.lane.b32.xlu0 %v2716, 80
        %v3056 = vpop.permute.xlu0 %3055
        %v3058 = vsel %vm1663, %v3054, 0
        %v3061 = vsel %vm1667, %v3056, 0
        %3063 = vmatprep.subr.bf16.mxu0 0
        %3064 = vmatpush1.bf16.msra.mxu0 %v3061
        %3065 = vmatprep.subr.bf16.mxu0 0
        %3066 = vmatpush1.bf16.msra.mxu0 0
        %3067 = vmatprep.subr.bf16.mxu0 0
        %3068 = vmatpush1.bf16.msra.mxu0 0
        %3069 = vmatprep.subr.bf16.mxu0 0
        %3070 = vmatpush1.bf16.msra.mxu0 0
        %3071 = vmatprep.subr.bf16.mxu0 0
        %3072 = vmatpush1.bf16.msra.mxu0 0
        %3073 = vmatprep.subr.bf16.mxu0 0
        %3074 = vmatpush1.bf16.msra.mxu0 0
        %3075 = vmatprep.subr.bf16.mxu0 0
        %3076 = vmatpush1.bf16.msra.mxu0 0
        %3077 = vmatprep.subr.bf16.mxu0 0
        %3078 = vmatpush1.bf16.msra.mxu0 0
        %3079 = vmatprep.subr.bf16.mxu0 0
        %3080 = vmatpush1.bf16.msra.mxu0 0
        %3081 = vmatprep.subr.bf16.mxu0 0
        %3082 = vmatpush1.bf16.msra.mxu0 0
        %3083 = vmatprep.subr.bf16.mxu0 0
        %3084 = vmatpush1.bf16.msra.mxu0 0
        %3085 = vmatprep.subr.bf16.mxu0 0
        %3086 = vmatpush1.bf16.msra.mxu0 0
        %3087 = vmatprep.subr.bf16.mxu0 0
        %3088 = vmatpush1.bf16.msra.mxu0 0
        %3089 = vmatprep.subr.bf16.mxu0 0
        %3090 = vmatpush1.bf16.msra.mxu0 0
        %3091 = vmatprep.subr.bf16.mxu0 0
        %3092 = vmatpush1.bf16.msra.mxu0 0
        %3093 = vmatprep.subr.bf16.mxu0 0
        %3094 = vmatpush1.bf16.msra.mxu0 0
        %3095 = vmatprep.mubr.bf16.mxu0 0
        %3096 = vmatmul.mubr.bf16.gmra.mrb[0].mxu0 %v3058
        %v3097 = vpop.f32.mrb[0].mxu0
        %v3098 = vadd.f32 0.0, %v3097
        %v3099 = vpop.f32.mrb[0].mxu0
        %v3100 = vpop.f32.mrb[0].mxu0
        %v3101 = vpop.f32.mrb[0].mxu0
        %3102 = vdwg.mxu0
        %3104 = vrot.lane.b32.xlu0 %v2872, 16
        %v3105 = vpop.permute.xlu0 %3104
        %3108 = vrot.lane.b32.xlu0 %v2985, 32
        %v3109 = vpop.permute.xlu0 %3108
        %3112 = vrot.lane.b32.xlu0 %v3098, 48
        %v3113 = vpop.permute.xlu0 %3112
        %v3115 = vsel %vm1601, %v2758, %v3105
        %v3116 = vsel %vm2064, %v3115, %v3109
        %v3117 = vsel %vm2066, %v3116, %v3113
        %v3118 = vpack.c.bf16 %v3117, %v3117
        %v3119 = vld [vmem:[%s47] sm:$0xf]
        %v3120 = vld [vmem:[%s47 + $0x4] sm:$0xf]
        %v3121 = vld [vmem:[%s47 + $0x8] sm:$0xf]
        %v3122 = vld [vmem:[%s47 + $0xc] sm:$0xf]
        %v3123 = vld [vmem:[%s47 + $0x10] sm:$0xf]
        %v3124 = vld [vmem:[%s47 + $0x14] sm:$0xf]
        %v3125 = vld [vmem:[%s47 + $0x18] sm:$0xf]
        %v3126 = vld [vmem:[%s47 + $0x1c] sm:$0xf]
        %v3127 = vld [vmem:[#allocation16] sm:$0x1]
        %v3129 = vlaneseq
        %v3130 = vshrl.u32 %v3129, 7
        %v3131 = vsub.s32 0, %v3130
        %v3132 = vrot.slane %v3127, %v3131
        %v3142 = vunpack.c.l.b16 %v3119
        %v3143 = vunpack.c.l.b16 %v3120
        %v3144 = vunpack.c.l.b16 %v3121
        %v3145 = vunpack.c.l.b16 %v3122
        %v3146 = vunpack.c.l.b16 %v3123
        %v3147 = vunpack.c.l.b16 %v3124
        %v3148 = vunpack.c.l.b16 %v3125
        %v3149 = vunpack.c.l.b16 %v3126
        %v3150 = vpack.c.b16 %v3143, %v3142
        %v3151 = vpack.c.b16 %v3145, %v3144
        %v3152 = vpack.c.b16 %v3147, %v3146
        %v3153 = vpack.c.b16 %v3149, %v3148
        %v3159 = vsel %vm1377, %v3118, 0
        %3161 = vmatprep.subr.bf16.mxu0 0
        %3162 = vmatpush1.bf16.msra.mxu0 %v3150
        %3163 = vmatprep.subr.bf16.mxu0 0
        %3164 = vmatpush1.bf16.msra.mxu0 %v3151
        %3165 = vmatprep.subr.bf16.mxu0 0
        %3166 = vmatpush1.bf16.msra.mxu0 %v3152
        %3167 = vmatprep.subr.bf16.mxu0 0
        %3168 = vmatpush1.bf16.msra.mxu0 %v3153
        %3169 = vmatprep.subr.bf16.mxu0 0
        %3170 = vmatpush1.bf16.msra.mxu0 0
        %3171 = vmatprep.subr.bf16.mxu0 0
        %3172 = vmatpush1.bf16.msra.mxu0 0
        %3173 = vmatprep.subr.bf16.mxu0 0
        %3174 = vmatpush1.bf16.msra.mxu0 0
        %3175 = vmatprep.subr.bf16.mxu0 0
        %3176 = vmatpush1.bf16.msra.mxu0 0
        %3177 = vmatprep.subr.bf16.mxu0 0
        %3178 = vmatpush1.bf16.msra.mxu0 0
        %3179 = vmatprep.subr.bf16.mxu0 0
        %3180 = vmatpush1.bf16.msra.mxu0 0
        %3181 = vmatprep.subr.bf16.mxu0 0
        %3182 = vmatpush1.bf16.msra.mxu0 0
        %3183 = vmatprep.subr.bf16.mxu0 0
        %3184 = vmatpush1.bf16.msra.mxu0 0
        %3185 = vmatprep.subr.bf16.mxu0 0
        %3186 = vmatpush1.bf16.msra.mxu0 0
        %3187 = vmatprep.subr.bf16.mxu0 0
        %3188 = vmatpush1.bf16.msra.mxu0 0
        %3189 = vmatprep.subr.bf16.mxu0 0
        %3190 = vmatpush1.bf16.msra.mxu0 0
        %3191 = vmatprep.subr.bf16.mxu0 0
        %3192 = vmatpush1.bf16.msra.mxu0 0
        %3193 = vmatprep.mubr.bf16.mxu0 0
        %3194 = vmatmul.mubr.bf16.gmra.mrb[0].mxu0 %v3159
        %v3195 = vpop.f32.mrb[0].mxu0
        %v3196 = vadd.f32 %v3132, %v3195
        %v3197 = vpop.f32.mrb[0].mxu0
        %v3198 = vpop.f32.mrb[0].mxu0
        %v3199 = vpop.f32.mrb[0].mxu0
        %3200 = vdwg.mxu0
        %v3201 = vadd.f32 %v2517, %v3196
        %v3202 = vld [vmem:[#allocation17] sm:$0x1]
        %v3203 = vld [vmem:[#allocation19] sm:$0x1]
        %v3204 = vsel %vm1329, %v3201, 0.0
        %3205 = vadd.xlane.f32.xlu0 %v3204
        %v3206 = vpop.xlane.xlu0 %3205
        %v3207 = vmul.f32 %v3206, %v1333
        %v3208 = vsub.f32 %v3201, %v3207
        %v3209 = vmul.f32 %v3208, %v3208
        %v3210 = vsel %vm1329, %v3209, 0.0
        %3211 = vadd.xlane.f32.xlu0 %v3210
        %v3212 = vpop.xlane.xlu0 %3211
        %v3213 = vmul.f32 %v3212, %v1333
        %v3214 = vadd.f32 %v3213, 1e-05
        %v3215 = vrsqrt.pop %v3214
        %v3216 = vmul.f32 %v3208, %v3215
        %v3218 = vlaneseq
        %v3219 = vshrl.u32 %v3218, 7
        %v3220 = vsub.s32 0, %v3219
        %v3221 = vrot.slane %v3202, %v3220
        %v3223 = vmul.f32 %v3216, %v3221
        %v3225 = vlaneseq
        %v3226 = vshrl.u32 %v3225, 7
        %v3227 = vsub.s32 0, %v3226
        %v3228 = vrot.slane %v3203, %v3227
        %v3230 = vadd.f32 %v3223, %v3228
        %v3231 = vpack.c.bf16 %v3230, %v3230
        %v3232 = vld [vmem:[%s55] sm:$0xff]
        %v3233 = vld [vmem:[%s55 + $0x8] sm:$0xff]
        %v3234 = vld [vmem:[%s55 + $0x10] sm:$0xff]
        %v3235 = vld [vmem:[%s55 + $0x18] sm:$0xff]
        %v3236 = vld [vmem:[%s55 + $0x20] sm:$0xff]
        %v3237 = vld [vmem:[%s55 + $0x28] sm:$0xff]
        %v3238 = vld [vmem:[%s55 + $0x30] sm:$0xff]
        %v3239 = vld [vmem:[%s55 + $0x38] sm:$0xff]
        %v3240 = vld [vmem:[%s57] sm:$0x3]
        %v3242 = vlaneseq
        %v3243 = vshrl.u32 %v3242, 7
        %v3244 = vsub.s32 0, %v3243
        %v3245 = vrot.slane %v3240, %v3244
        %v3246 = vlaneseq
        %v3247 = vshrl.u32 %v3246, 7
        %v3248 = vsub.s32 1, %v3247
        %v3249 = vrot.slane %v3240, %v3248
        %v3260 = vunpack.c.l.b16 %v3232
        %v3261 = vunpack.c.h.b16 %v3232
        %v3262 = vunpack.c.l.b16 %v3233
        %v3263 = vunpack.c.h.b16 %v3233
        %v3264 = vunpack.c.l.b16 %v3234
        %v3265 = vunpack.c.h.b16 %v3234
        %v3266 = vunpack.c.l.b16 %v3235
        %v3267 = vunpack.c.h.b16 %v3235
        %v3268 = vunpack.c.l.b16 %v3236
        %v3269 = vunpack.c.h.b16 %v3236
        %v3270 = vunpack.c.l.b16 %v3237
        %v3271 = vunpack.c.h.b16 %v3237
        %v3272 = vunpack.c.l.b16 %v3238
        %v3273 = vunpack.c.h.b16 %v3238
        %v3274 = vunpack.c.l.b16 %v3239
        %v3275 = vunpack.c.h.b16 %v3239
        %v3276 = vpack.c.b16 %v3262, %v3260
        %v3277 = vpack.c.b16 %v3263, %v3261
        %v3278 = vpack.c.b16 %v3266, %v3264
        %v3279 = vpack.c.b16 %v3267, %v3265
        %v3280 = vpack.c.b16 %v3270, %v3268
        %v3281 = vpack.c.b16 %v3271, %v3269
        %v3282 = vpack.c.b16 %v3274, %v3272
        %v3283 = vpack.c.b16 %v3275, %v3273
        %v3293 = vsel %vm1377, %v3231, 0
        %3295 = vmatprep.subr.bf16.mxu0 %v3277
        %3296 = vmatpush1.bf16.msra.mxu0 %v3276
        %3297 = vmatprep.subr.bf16.mxu0 %v3279
        %3298 = vmatpush1.bf16.msra.mxu0 %v3278
        %3299 = vmatprep.subr.bf16.mxu0 %v3281
        %3300 = vmatpush1.bf16.msra.mxu0 %v3280
        %3301 = vmatprep.subr.bf16.mxu0 %v3283
        %3302 = vmatpush1.bf16.msra.mxu0 %v3282
        %3303 = vmatprep.subr.bf16.mxu0 0
        %3304 = vmatpush1.bf16.msra.mxu0 0
        %3305 = vmatprep.subr.bf16.mxu0 0
        %3306 = vmatpush1.bf16.msra.mxu0 0
        %3307 = vmatprep.subr.bf16.mxu0 0
        %3308 = vmatpush1.bf16.msra.mxu0 0
        %3309 = vmatprep.subr.bf16.mxu0 0
        %3310 = vmatpush1.bf16.msra.mxu0 0
        %3311 = vmatprep.subr.bf16.mxu0 0
        %3312 = vmatpush1.bf16.msra.mxu0 0
        %3313 = vmatprep.subr.bf16.mxu0 0
        %3314 = vmatpush1.bf16.msra.mxu0 0
        %3315 = vmatprep.subr.bf16.mxu0 0
        %3316 = vmatpush1.bf16.msra.mxu0 0
        %3317 = vmatprep.subr.bf16.mxu0 0
        %3318 = vmatpush1.bf16.msra.mxu0 0
        %3319 = vmatprep.subr.bf16.mxu0 0
        %3320 = vmatpush1.bf16.msra.mxu0 0
        %3321 = vmatprep.subr.bf16.mxu0 0
        %3322 = vmatpush1.bf16.msra.mxu0 0
        %3323 = vmatprep.subr.bf16.mxu0 0
        %3324 = vmatpush1.bf16.msra.mxu0 0
        %3325 = vmatprep.subr.bf16.mxu0 0
        %3326 = vmatpush1.bf16.msra.mxu0 0
        %3327 = vmatprep.mubr.bf16.mxu0 0
        %3328 = vmatmul.mubr.bf16.gmra.mrb[0].mxu0 %v3293
        %v3329 = vpop.f32.mrb[0].mxu0
        %v3330 = vadd.f32 %v3245, %v3329
        %v3331 = vpop.f32.mrb[0].mxu0
        %v3332 = vadd.f32 %v3249, %v3331
        %v3333 = vpop.f32.mrb[0].mxu0
        %v3334 = vpop.f32.mrb[0].mxu0
        %3335 = vdwg.mxu0
        %v3336 = vmul.f32 %v3330, 0.5
        %v3337 = vmul.f32 %v3332, 0.5
        %v3338 = vmul.f32 %v3330, 0.70710677
        %v3339 = vmul.f32 %v3332, 0.70710677
        %v3340 = vand.u32 2147483647, %v3338
        %v3341 = vand.u32 2147483647, %v3339
        %v3342 = vmul.f32 %v3340, 0.3275911
        %v3343 = vmul.f32 %v3341, 0.3275911
        %v3344 = vadd.f32 %v3342, 1.0
        %v3345 = vadd.f32 %v3343, 1.0
        %v3346 = vrcp.pop %v3344
        %v3347 = vmul.f32 1.0, %v3346
        %v3348 = vrcp.pop %v3345
        %v3349 = vmul.f32 1.0, %v3348
        %v3350 = vmul.f32 %v3347, 1.0614054
        %v3351 = vmul.f32 %v3349, 1.0614054
        %v3352 = vadd.f32 %v3350, -1.4531521
        %v3353 = vadd.f32 %v3351, -1.4531521
        %v3354 = vmul.f32 %v3352, %v3347
        %v3355 = vmul.f32 %v3353, %v3349
        %v3356 = vadd.f32 %v3354, 1.4214138
        %v3357 = vadd.f32 %v3355, 1.4214138
        %v3358 = vmul.f32 %v3356, %v3347
        %v3359 = vmul.f32 %v3357, %v3349
        %v3360 = vadd.f32 %v3358, -0.28449672
        %v3361 = vadd.f32 %v3359, -0.28449672
        %v3362 = vmul.f32 %v3360, %v3347
        %v3363 = vmul.f32 %v3361, %v3349
        %v3364 = vadd.f32 %v3362, 0.2548296
        %v3365 = vadd.f32 %v3363, 0.2548296
        %v3366 = vmul.f32 %v3364, %v3347
        %v3367 = vmul.f32 %v3365, %v3349
        %v3368 = vsub.f32 0.0, %v3340
        %v3369 = vsub.f32 0.0, %v3341
        %v3370 = vmul.f32 %v3368, %v3340
        %v3371 = vmul.f32 %v3369, %v3341
        %v3372 = vmul.f32 %v3370, 1.442695
        %v3373 = vpow.pop %v3372
        %v3374 = vmul.f32 %v3371, 1.442695
        %v3375 = vpow.pop %v3374
        %v3376 = vmul.f32 %v3366, %v3373
        %v3377 = vmul.f32 %v3367, %v3375
        %v3378 = vsub.f32 1.0, %v3376
        %v3379 = vsub.f32 1.0, %v3377
        %vm3380 = vcmp.lt.f32.partialorder %v3338, 0.0
        %vm3381 = vcmp.lt.f32.partialorder %v3339, 0.0
        %v3382 = vsub.f32 0.0, %v3378
        %v3383 = vsub.f32 0.0, %v3379
        %v3384 = vsel %vm3380, %v3382, %v3378
        %v3385 = vsel %vm3381, %v3383, %v3379
        %v3386 = vadd.f32 %v3384, 1.0
        %v3387 = vadd.f32 %v3385, 1.0
        %v3388 = vmul.f32 %v3336, %v3386
        %v3389 = vmul.f32 %v3337, %v3387
        %v3390 = vpack.c.bf16 %v3388, %v3388
        %v3391 = vpack.c.bf16 %v3389, %v3389
        %v3392 = vld [vmem:[%s59] sm:$0xf]
        %v3393 = vld [vmem:[%s59 + $0x4] sm:$0xf]
        %v3394 = vld [vmem:[%s59 + $0x8] sm:$0xf]
        %v3395 = vld [vmem:[%s59 + $0xc] sm:$0xf]
        %v3396 = vld [vmem:[%s59 + $0x10] sm:$0xf]
        %v3397 = vld [vmem:[%s59 + $0x14] sm:$0xf]
        %v3398 = vld [vmem:[%s59 + $0x18] sm:$0xf]
        %v3399 = vld [vmem:[%s59 + $0x1c] sm:$0xf]
        %v3400 = vld [vmem:[%s59 + $0x20] sm:$0xf]
        %v3401 = vld [vmem:[%s59 + $0x24] sm:$0xf]
        %v3402 = vld [vmem:[%s59 + $0x28] sm:$0xf]
        %v3403 = vld [vmem:[%s59 + $0x2c] sm:$0xf]
        %v3404 = vld [vmem:[%s59 + $0x30] sm:$0xf]
        %v3405 = vld [vmem:[%s59 + $0x34] sm:$0xf]
        %v3406 = vld [vmem:[%s59 + $0x38] sm:$0xf]
        %v3407 = vld [vmem:[%s59 + $0x3c] sm:$0xf]
        %v3408 = vld [vmem:[%s59 + $0x40] sm:$0xf]
        %v3409 = vld [vmem:[%s59 + $0x44] sm:$0xf]
        %v3410 = vld [vmem:[%s59 + $0x48] sm:$0xf]
        %v3411 = vld [vmem:[%s59 + $0x4c] sm:$0xf]
        %v3412 = vld [vmem:[%s59 + $0x50] sm:$0xf]
        %v3413 = vld [vmem:[%s59 + $0x54] sm:$0xf]
        %v3414 = vld [vmem:[%s59 + $0x58] sm:$0xf]
        %v3415 = vld [vmem:[%s59 + $0x5c] sm:$0xf]
        %v3416 = vld [vmem:[%s59 + $0x60] sm:$0xf]
        %v3417 = vld [vmem:[%s59 + $0x64] sm:$0xf]
        %v3418 = vld [vmem:[%s59 + $0x68] sm:$0xf]
        %v3419 = vld [vmem:[%s59 + $0x6c] sm:$0xf]
        %v3420 = vld [vmem:[%s59 + $0x70] sm:$0xf]
        %v3421 = vld [vmem:[%s59 + $0x74] sm:$0xf]
        %v3422 = vld [vmem:[%s59 + $0x78] sm:$0xf]
        %v3423 = vld [vmem:[%s59 + $0x7c] sm:$0xf]
        %v3424 = vld [vmem:[#allocation20] sm:$0x1]
        %v3426 = vlaneseq
        %v3427 = vshrl.u32 %v3426, 7
        %v3428 = vsub.s32 0, %v3427
        %v3429 = vrot.slane %v3424, %v3428
        %v3463 = vunpack.c.l.b16 %v3392
        %v3464 = vunpack.c.l.b16 %v3393
        %v3465 = vunpack.c.l.b16 %v3394
        %v3466 = vunpack.c.l.b16 %v3395
        %v3467 = vunpack.c.l.b16 %v3396
        %v3468 = vunpack.c.l.b16 %v3397
        %v3469 = vunpack.c.l.b16 %v3398
        %v3470 = vunpack.c.l.b16 %v3399
        %v3471 = vunpack.c.l.b16 %v3400
        %v3472 = vunpack.c.l.b16 %v3401
        %v3473 = vunpack.c.l.b16 %v3402
        %v3474 = vunpack.c.l.b16 %v3403
        %v3475 = vunpack.c.l.b16 %v3404
        %v3476 = vunpack.c.l.b16 %v3405
        %v3477 = vunpack.c.l.b16 %v3406
        %v3478 = vunpack.c.l.b16 %v3407
        %v3479 = vunpack.c.l.b16 %v3408
        %v3480 = vunpack.c.l.b16 %v3409
        %v3481 = vunpack.c.l.b16 %v3410
        %v3482 = vunpack.c.l.b16 %v3411
        %v3483 = vunpack.c.l.b16 %v3412
        %v3484 = vunpack.c.l.b16 %v3413
        %v3485 = vunpack.c.l.b16 %v3414
        %v3486 = vunpack.c.l.b16 %v3415
        %v3487 = vunpack.c.l.b16 %v3416
        %v3488 = vunpack.c.l.b16 %v3417
        %v3489 = vunpack.c.l.b16 %v3418
        %v3490 = vunpack.c.l.b16 %v3419
        %v3491 = vunpack.c.l.b16 %v3420
        %v3492 = vunpack.c.l.b16 %v3421
        %v3493 = vunpack.c.l.b16 %v3422
        %v3494 = vunpack.c.l.b16 %v3423
        %v3495 = vpack.c.b16 %v3464, %v3463
        %v3496 = vpack.c.b16 %v3466, %v3465
        %v3497 = vpack.c.b16 %v3468, %v3467
        %v3498 = vpack.c.b16 %v3470, %v3469
        %v3499 = vpack.c.b16 %v3472, %v3471
        %v3500 = vpack.c.b16 %v3474, %v3473
        %v3501 = vpack.c.b16 %v3476, %v3475
        %v3502 = vpack.c.b16 %v3478, %v3477
        %v3503 = vpack.c.b16 %v3480, %v3479
        %v3504 = vpack.c.b16 %v3482, %v3481
        %v3505 = vpack.c.b16 %v3484, %v3483
        %v3506 = vpack.c.b16 %v3486, %v3485
        %v3507 = vpack.c.b16 %v3488, %v3487
        %v3508 = vpack.c.b16 %v3490, %v3489
        %v3509 = vpack.c.b16 %v3492, %v3491
        %v3510 = vpack.c.b16 %v3494, %v3493
        %3527 = vmatprep.subr.bf16.mxu0 0
        %3528 = vmatpush1.bf16.msra.mxu0 %v3495
        %3529 = vmatprep.subr.bf16.mxu0 0
        %3530 = vmatpush1.bf16.msra.mxu0 %v3496
        %3531 = vmatprep.subr.bf16.mxu0 0
        %3532 = vmatpush1.bf16.msra.mxu0 %v3497
        %3533 = vmatprep.subr.bf16.mxu0 0
        %3534 = vmatpush1.bf16.msra.mxu0 %v3498
        %3535 = vmatprep.subr.bf16.mxu0 0
        %3536 = vmatpush1.bf16.msra.mxu0 %v3499
        %3537 = vmatprep.subr.bf16.mxu0 0
        %3538 = vmatpush1.bf16.msra.mxu0 %v3500
        %3539 = vmatprep.subr.bf16.mxu0 0
        %3540 = vmatpush1.bf16.msra.mxu0 %v3501
        %3541 = vmatprep.subr.bf16.mxu0 0
        %3542 = vmatpush1.bf16.msra.mxu0 %v3502
        %3543 = vmatprep.subr.bf16.mxu0 0
        %3544 = vmatpush1.bf16.msra.mxu0 %v3503
        %3545 = vmatprep.subr.bf16.mxu0 0
        %3546 = vmatpush1.bf16.msra.mxu0 %v3504
        %3547 = vmatprep.subr.bf16.mxu0 0
        %3548 = vmatpush1.bf16.msra.mxu0 %v3505
        %3549 = vmatprep.subr.bf16.mxu0 0
        %3550 = vmatpush1.bf16.msra.mxu0 %v3506
        %3551 = vmatprep.subr.bf16.mxu0 0
        %3552 = vmatpush1.bf16.msra.mxu0 %v3507
        %3553 = vmatprep.subr.bf16.mxu0 0
        %3554 = vmatpush1.bf16.msra.mxu0 %v3508
        %3555 = vmatprep.subr.bf16.mxu0 0
        %3556 = vmatpush1.bf16.msra.mxu0 %v3509
        %3557 = vmatprep.subr.bf16.mxu0 0
        %3558 = vmatpush1.bf16.msra.mxu0 %v3510
        %3559 = vmatprep.mubr.bf16.mxu0 %v3391
        %3560 = vmatmul.mubr.bf16.gmra.mrb[0].mxu0 %v3390
        %v3561 = vpop.f32.mrb[0].mxu0
        %v3562 = vadd.f32 %v3429, %v3561
        %v3563 = vpop.f32.mrb[0].mxu0
        %v3564 = vpop.f32.mrb[0].mxu0
        %v3565 = vpop.f32.mrb[0].mxu0
        %3566 = vdwg.mxu0
        %v3567 = vadd.f32 %v3201, %v3562
        %v3568 = vxor.u32 %v3567, 2147483648
        %v3569 = vmul.f32 %v3568, 1.442695
        %v3570 = vpow.pop %v3569
        %v3571 = vadd.f32 %v3570, 1.0
        %v3572 = vrcp.pop %v3571
        %v3573 = vmul.f32 1.0, %v3572
        %v3574 = vtanh.pop %v3567
        %v3575 = vld [vmem:[%s1323] sm:$0xf]
        %v3576 = vadd.f32 %v3575, %v3574
        %v3577 = vmul.f32 %v3573, %v3576
        %v3578 = vtanh.pop %v3577
        %v3579 = vmul.f32 %v3573, %v3578
        %3580 = vst.msk [vmem:[%s1298] sm:$0xf] %vm1329, %v3579
        %3581 = vst.msk [vmem:[%s1305] sm:$0xf] %vm1329, %v3577
        %v3582 = vld [vmem:[%s63] sm:$0xf]
        %v3584 = vsel %vm1663, %v3582, 0
        %vm3586 = vcmask 1043456
        %v3588 = vsel %vm3586, %v3579, 0
        %3590 = vmatprep.subr.mxu0 0.0
        %3591 = vmatpush1.msra.mxu0 %v3588
        %3592 = vmatprep.subr.mxu0 0.0
        %3593 = vmatpush1.msra.mxu0 0.0
        %3594 = vmatprep.subr.mxu0 0.0
        %3595 = vmatpush1.msra.mxu0 0.0
        %3596 = vmatprep.subr.mxu0 0.0
        %3597 = vmatpush1.msra.mxu0 0.0
        %3598 = vmatprep.subr.mxu0 0.0
        %3599 = vmatpush1.msra.mxu0 0.0
        %3600 = vmatprep.subr.mxu0 0.0
        %3601 = vmatpush1.msra.mxu0 0.0
        %3602 = vmatprep.subr.mxu0 0.0
        %3603 = vmatpush1.msra.mxu0 0.0
        %3604 = vmatprep.subr.mxu0 0.0
        %3605 = vmatpush1.msra.mxu0 0.0
        %3606 = vmatprep.subr.mxu0 0.0
        %3607 = vmatpush1.msra.mxu0 0.0
        %3608 = vmatprep.subr.mxu0 0.0
        %3609 = vmatpush1.msra.mxu0 0.0
        %3610 = vmatprep.subr.mxu0 0.0
        %3611 = vmatpush1.msra.mxu0 0.0
        %3612 = vmatprep.subr.mxu0 0.0
        %3613 = vmatpush1.msra.mxu0 0.0
        %3614 = vmatprep.subr.mxu0 0.0
        %3615 = vmatpush1.msra.mxu0 0.0
        %3616 = vmatprep.subr.mxu0 0.0
        %3617 = vmatpush1.msra.mxu0 0.0
        %3618 = vmatprep.subr.mxu0 0.0
        %3619 = vmatpush1.msra.mxu0 0.0
        %3620 = vmatprep.subr.mxu0 0.0
        %3621 = vmatpush1.msra.mxu0 0.0
        %3622 = vmatprep.subr.mxu0 0.0
        %3623 = vmatpush1.msra.mxu0 0.0
        %3624 = vmatprep.subr.mxu0 0.0
        %3625 = vmatpush1.msra.mxu0 0.0
        %3626 = vmatprep.subr.mxu0 0.0
        %3627 = vmatpush1.msra.mxu0 0.0
        %3628 = vmatprep.subr.mxu0 0.0
        %3629 = vmatpush1.msra.mxu0 0.0
        %3630 = vmatprep.subr.mxu0 0.0
        %3631 = vmatpush1.msra.mxu0 0.0
        %3632 = vmatprep.subr.mxu0 0.0
        %3633 = vmatpush1.msra.mxu0 0.0
        %3634 = vmatprep.subr.mxu0 0.0
        %3635 = vmatpush1.msra.mxu0 0.0
        %3636 = vmatprep.subr.mxu0 0.0
        %3637 = vmatpush1.msra.mxu0 0.0
        %3638 = vmatprep.subr.mxu0 0.0
        %3639 = vmatpush1.msra.mxu0 0.0
        %3640 = vmatprep.subr.mxu0 0.0
        %3641 = vmatpush1.msra.mxu0 0.0
        %3642 = vmatprep.subr.mxu0 0.0
        %3643 = vmatpush1.msra.mxu0 0.0
        %3644 = vmatprep.subr.mxu0 0.0
        %3645 = vmatpush1.msra.mxu0 0.0
        %3646 = vmatprep.subr.mxu0 0.0
        %3647 = vmatpush1.msra.mxu0 0.0
        %3648 = vmatprep.subr.mxu0 0.0
        %3649 = vmatpush1.msra.mxu0 0.0
        %3650 = vmatprep.subr.mxu0 0.0
        %3651 = vmatpush1.msra.mxu0 0.0
        %3652 = vmatprep.subr.mxu0 0.0
        %3653 = vmatpush1.msra.mxu0 0.0
        %3654 = vmatprep.mubr.f32.mxu0 0.0
        %3655 = vmatmul.mubr.f32.gmra.mrb[0].mxu0 %v3584
        %v3656 = vpop.f32.mrb[0].mxu0
        %v3657 = vadd.f32 0.0, %v3656
        %v3658 = vpop.f32.mrb[0].mxu0
        %3659 = vdwg.mxu0
        %v3661 = vrot.slane %v3657, 1
        %3662 = vrot.lane.b32.xlu0 %v3661, 64
        %v3663 = vpop.permute.xlu0 %3662
        %v3665 = vrot.slane %v3657, 2
        %v3667 = vrot.slane %v3657, 3
        %3668 = vrot.lane.b32.xlu0 %v3667, 64
        %v3669 = vpop.permute.xlu0 %3668
        %v3671 = vsel %vm1377, %v3657, %v3663
        %v3672 = vsel %vm1377, %v3665, %v3669
        %v3673 = vld [vmem:[%s65] sm:$0x3]
        %v3674 = vld [vmem:[%s67] sm:$0x3]
        %vm3675 = vcmask 1040384
        %v3676 = vsel %vm3675, %v3671, 0.0
        %v3677 = vsel %vm3675, %v3672, 0.0
        %v3678 = vadd.f32 %v3676, %v3677
        %3679 = vadd.xlane.f32.xlu0 %v3678
        %v3680 = vpop.xlane.xlu0 %3679
        %v3681 = vrcp.pop 256.0
        %v3682 = vmul.f32 %v3680, %v3681
        %v3683 = vsub.f32 %v3671, %v3682
        %v3684 = vsub.f32 %v3672, %v3682
        %v3685 = vmul.f32 %v3683, %v3683
        %v3686 = vmul.f32 %v3684, %v3684
        %v3687 = vsel %vm3675, %v3685, 0.0
        %v3688 = vsel %vm3675, %v3686, 0.0
        %v3689 = vadd.f32 %v3687, %v3688
        %3690 = vadd.xlane.f32.xlu0 %v3689
        %v3691 = vpop.xlane.xlu0 %3690
        %v3692 = vmul.f32 %v3691, %v3681
        %v3693 = vadd.f32 %v3692, 1e-05
        %v3694 = vrsqrt.pop %v3693
        %v3695 = vmul.f32 %v3683, %v3694
        %v3696 = vmul.f32 %v3684, %v3694
        %v3698 = vlaneseq
        %v3699 = vshrl.u32 %v3698, 7
        %v3700 = vsub.s32 0, %v3699
        %v3701 = vrot.slane %v3673, %v3700
        %v3702 = vlaneseq
        %v3703 = vshrl.u32 %v3702, 7
        %v3704 = vsub.s32 1, %v3703
        %v3705 = vrot.slane %v3673, %v3704
        %v3708 = vmul.f32 %v3695, %v3701
        %v3709 = vmul.f32 %v3696, %v3705
        %v3711 = vlaneseq
        %v3712 = vshrl.u32 %v3711, 7
        %v3713 = vsub.s32 0, %v3712
        %v3714 = vrot.slane %v3674, %v3713
        %v3715 = vlaneseq
        %v3716 = vshrl.u32 %v3715, 7
        %v3717 = vsub.s32 1, %v3716
        %v3718 = vrot.slane %v3674, %v3717
        %v3721 = vadd.f32 %v3708, %v3714
        %v3722 = vadd.f32 %v3709, %v3718
        %v3723 = vpack.c.bf16 %v3721, %v3721
        %v3724 = vpack.c.bf16 %v3722, %v3722
        %v3725 = vld [vmem:[%s69] sm:$0xf]
        %v3726 = vld [vmem:[%s69 + $0x4] sm:$0xf]
        %v3727 = vld [vmem:[%s69 + $0x8] sm:$0xf]
        %v3728 = vld [vmem:[%s69 + $0xc] sm:$0xf]
        %v3729 = vld [vmem:[%s69 + $0x10] sm:$0xf]
        %v3730 = vld [vmem:[%s69 + $0x14] sm:$0xf]
        %v3731 = vld [vmem:[%s69 + $0x18] sm:$0xf]
        %v3732 = vld [vmem:[%s69 + $0x1c] sm:$0xf]
        %v3733 = vld [vmem:[%s69 + $0x20] sm:$0xf]
        %v3734 = vld [vmem:[%s69 + $0x24] sm:$0xf]
        %v3735 = vld [vmem:[%s69 + $0x28] sm:$0xf]
        %v3736 = vld [vmem:[%s69 + $0x2c] sm:$0xf]
        %v3737 = vld [vmem:[%s69 + $0x30] sm:$0xf]
        %v3738 = vld [vmem:[%s69 + $0x34] sm:$0xf]
        %v3739 = vld [vmem:[%s69 + $0x38] sm:$0xf]
        %v3740 = vld [vmem:[%s69 + $0x3c] sm:$0xf]
        %v3741 = vld [vmem:[%s69 + $0x40] sm:$0xf]
        %v3742 = vld [vmem:[%s69 + $0x44] sm:$0xf]
        %v3743 = vld [vmem:[%s69 + $0x48] sm:$0xf]
        %v3744 = vld [vmem:[%s69 + $0x4c] sm:$0xf]
        %v3745 = vld [vmem:[%s69 + $0x50] sm:$0xf]
        %v3746 = vld [vmem:[%s69 + $0x54] sm:$0xf]
        %v3747 = vld [vmem:[%s69 + $0x58] sm:$0xf]
        %v3748 = vld [vmem:[%s69 + $0x5c] sm:$0xf]
        %v3749 = vld [vmem:[%s69 + $0x60] sm:$0xf]
        %v3750 = vld [vmem:[%s69 + $0x64] sm:$0xf]
        %v3751 = vld [vmem:[%s69 + $0x68] sm:$0xf]
        %v3752 = vld [vmem:[%s69 + $0x6c] sm:$0xf]
        %v3753 = vld [vmem:[%s69 + $0x70] sm:$0xf]
        %v3754 = vld [vmem:[%s69 + $0x74] sm:$0xf]
        %v3755 = vld [vmem:[%s69 + $0x78] sm:$0xf]
        %v3756 = vld [vmem:[%s69 + $0x7c] sm:$0xf]
        %v3789 = vunpack.c.l.b16 %v3725
        %v3790 = vunpack.c.l.b16 %v3726
        %v3791 = vunpack.c.l.b16 %v3727
        %v3792 = vunpack.c.l.b16 %v3728
        %v3793 = vunpack.c.l.b16 %v3729
        %v3794 = vunpack.c.l.b16 %v3730
        %v3795 = vunpack.c.l.b16 %v3731
        %v3796 = vunpack.c.l.b16 %v3732
        %v3797 = vunpack.c.l.b16 %v3733
        %v3798 = vunpack.c.l.b16 %v3734
        %v3799 = vunpack.c.l.b16 %v3735
        %v3800 = vunpack.c.l.b16 %v3736
        %v3801 = vunpack.c.l.b16 %v3737
        %v3802 = vunpack.c.l.b16 %v3738
        %v3803 = vunpack.c.l.b16 %v3739
        %v3804 = vunpack.c.l.b16 %v3740
        %v3805 = vunpack.c.l.b16 %v3741
        %v3806 = vunpack.c.l.b16 %v3742
        %v3807 = vunpack.c.l.b16 %v3743
        %v3808 = vunpack.c.l.b16 %v3744
        %v3809 = vunpack.c.l.b16 %v3745
        %v3810 = vunpack.c.l.b16 %v3746
        %v3811 = vunpack.c.l.b16 %v3747
        %v3812 = vunpack.c.l.b16 %v3748
        %v3813 = vunpack.c.l.b16 %v3749
        %v3814 = vunpack.c.l.b16 %v3750
        %v3815 = vunpack.c.l.b16 %v3751
        %v3816 = vunpack.c.l.b16 %v3752
        %v3817 = vunpack.c.l.b16 %v3753
        %v3818 = vunpack.c.l.b16 %v3754
        %v3819 = vunpack.c.l.b16 %v3755
        %v3820 = vunpack.c.l.b16 %v3756
        %v3821 = vpack.c.b16 %v3790, %v3789
        %v3822 = vpack.c.b16 %v3792, %v3791
        %v3823 = vpack.c.b16 %v3794, %v3793
        %v3824 = vpack.c.b16 %v3796, %v3795
        %v3825 = vpack.c.b16 %v3798, %v3797
        %v3826 = vpack.c.b16 %v3800, %v3799
        %v3827 = vpack.c.b16 %v3802, %v3801
        %v3828 = vpack.c.b16 %v3804, %v3803
        %v3829 = vpack.c.b16 %v3806, %v3805
        %v3830 = vpack.c.b16 %v3808, %v3807
        %v3831 = vpack.c.b16 %v3810, %v3809
        %v3832 = vpack.c.b16 %v3812, %v3811
        %v3833 = vpack.c.b16 %v3814, %v3813
        %v3834 = vpack.c.b16 %v3816, %v3815
        %v3835 = vpack.c.b16 %v3818, %v3817
        %v3836 = vpack.c.b16 %v3820, %v3819
        %3853 = vmatprep.subr.bf16.mxu0 0
        %3854 = vmatpush1.bf16.msra.mxu0 %v3821
        %3855 = vmatprep.subr.bf16.mxu0 0
        %3856 = vmatpush1.bf16.msra.mxu0 %v3822
        %3857 = vmatprep.subr.bf16.mxu0 0
        %3858 = vmatpush1.bf16.msra.mxu0 %v3823
        %3859 = vmatprep.subr.bf16.mxu0 0
        %3860 = vmatpush1.bf16.msra.mxu0 %v3824
        %3861 = vmatprep.subr.bf16.mxu0 0
        %3862 = vmatpush1.bf16.msra.mxu0 %v3825
        %3863 = vmatprep.subr.bf16.mxu0 0
        %3864 = vmatpush1.bf16.msra.mxu0 %v3826
        %3865 = vmatprep.subr.bf16.mxu0 0
        %3866 = vmatpush1.bf16.msra.mxu0 %v3827
        %3867 = vmatprep.subr.bf16.mxu0 0
        %3868 = vmatpush1.bf16.msra.mxu0 %v3828
        %3869 = vmatprep.subr.bf16.mxu0 0
        %3870 = vmatpush1.bf16.msra.mxu0 %v3829
        %3871 = vmatprep.subr.bf16.mxu0 0
        %3872 = vmatpush1.bf16.msra.mxu0 %v3830
        %3873 = vmatprep.subr.bf16.mxu0 0
        %3874 = vmatpush1.bf16.msra.mxu0 %v3831
        %3875 = vmatprep.subr.bf16.mxu0 0
        %3876 = vmatpush1.bf16.msra.mxu0 %v3832
        %3877 = vmatprep.subr.bf16.mxu0 0
        %3878 = vmatpush1.bf16.msra.mxu0 %v3833
        %3879 = vmatprep.subr.bf16.mxu0 0
        %3880 = vmatpush1.bf16.msra.mxu0 %v3834
        %3881 = vmatprep.subr.bf16.mxu0 0
        %3882 = vmatpush1.bf16.msra.mxu0 %v3835
        %3883 = vmatprep.subr.bf16.mxu0 0
        %3884 = vmatpush1.bf16.msra.mxu0 %v3836
        %3885 = vmatprep.mubr.bf16.mxu0 %v3724
        %3886 = vmatmul.mubr.bf16.gmra.mrb[0].mxu0 %v3723
        %v3887 = vpop.f32.mrb[0].mxu0
        %v3888 = vadd.f32 0.0, %v3887
        %v3889 = vpop.f32.mrb[0].mxu0
        %v3890 = vpop.f32.mrb[0].mxu0
        %v3891 = vpop.f32.mrb[0].mxu0
        %3892 = vdwg.mxu0
        %3893 = vst [vmem:[%s1311] sm:$0x1] %v3888
        %s3894 = sand.u32 %s858, 1
        %s3895 = scalar_lea.sflag [#allocation4], %s3894
        %s3896 = sand.u32 %s858, 1
        %s3897 = smul.addr %s3896, 4
        %s3898 = scalar_lea.vmem [#allocation22], %s3897
        %s3899 = sand.u32 %s100, 1
        %s3900 = scalar_lea.sflag [#allocation24], %s3899
        %s3901 = sand.u32 %s884, 1
        %s3902 = smul.addr %s3901, 4
        %s3903 = scalar_lea.vmem [#allocation23], %s3902
        %s3904 = sand.u32 %s100, 1
        %s3905 = scalar_lea.sflag [#allocation24], %s3904
        %s3906 = sand.u32 %s910, 1
        %s3907 = scalar_lea.vmem [#allocation25], %s3906
        // Predicated region
        $region209: #{fwd.5} parent=159 // pred_check
          %p3908 = pneg %p868
        $region210: #{fwd.5} parent=159 // pred_check_branch
          %3910 = sbr.rel (%p3908) target = $region212
        $region211: #{fwd.5} parent=159 // pred_region
          %s3912 = ssub.s32 64, 64
          %3913 = vsyncadd %s3895, %s3912
          %s3914 = smul.addr %s100, 64
          %s3915 = scalar_lea.hbm %s71, %s3914
          %s3917 = sshll.u32 %s3898, 4
          %s3918 = int_to_ptr.vmem [resolvable:$true] %s3917
          %3920 = dma.vmem_to_hbm [thread:$0]  %s3918, 64, %s3915, %s3895
        $region212: #{fwd.5} parent=159 // pred_fallthru
          _
        // Predicated region
        $region213: #{fwd.5} parent=159 // pred_check
          %p3921 = pneg %p894
        $region214: #{fwd.5} parent=159 // pred_check_branch
          %3923 = sbr.rel (%p3921) target = $region216
        $region215: #{fwd.5} parent=159 // pred_region
          %s3925 = ssub.s32 64, 64
          %3926 = vsyncadd %s3900, %s3925
          %s3927 = smul.addr %s100, 64
          %s3928 = scalar_lea.hbm %s73, %s3927
          %s3930 = sshll.u32 %s3903, 4
          %s3931 = int_to_ptr.vmem [resolvable:$true] %s3930
          %3933 = dma.vmem_to_hbm [thread:$0]  %s3931, 64, %s3928, %s3900
        $region216: #{fwd.5} parent=159 // pred_fallthru
          _
        // Predicated region
        $region217: #{fwd.5} parent=159 // pred_check
          %p3934 = pneg %p920
        $region218: #{fwd.5} parent=159 // pred_check_branch
          %3936 = sbr.rel (%p3934) target = $region220
        $region219: #{fwd.5} parent=159 // pred_region
          %s3938 = ssub.s32 16, 16
          %3939 = vsyncadd %s3905, %s3938
          %s3940 = smul.addr %s100, 16
          %s3941 = scalar_lea.hbm %s75, %s3940
          %s3943 = sshll.u32 %s3907, 4
          %s3944 = int_to_ptr.vmem [resolvable:$true] %s3943
          %3946 = dma.vmem_to_hbm [thread:$0]  %s3944, 16, %s3941, %s3905
        $region220: #{fwd.5} parent=159 // pred_fallthru
          _
      $region160: #{fwd.5} parent=5 // pred_fallthru
        _
      %p3947 = scmp.le.s32.totalorder 2, %s95
      // Predicated region
      $region221: #{fwd.5} parent=5 // pred_check
        %p3948 = pneg %p3947
      $region222: #{fwd.5} parent=5 // pred_check_branch
        %3950 = sbr.rel (%p3948) target = $region224
      $region223: #{fwd.5} parent=5 // pred_region
        %s3951 = ssub.s32 %s95, 2
        // Predicated region
        $region225: #{fwd.5} parent=223 // pred_check
          %p3952 = pneg %p874
        $region226: #{fwd.5} parent=223 // pred_check_branch
          %3954 = sbr.rel (%p3952) target = $region228
        $region227: #{fwd.5} parent=223 // pred_region
          %s3955 = sand.u32 %s859, 1
          %s3956 = scalar_lea.sflag [#allocation4], %s3955
          %s3957 = sand.u32 %s859, 1
          %s3958 = smul.addr %s3957, 4
          %s3959 = scalar_lea.vmem [#allocation22], %s3958
          %3960 = dma.done %s3956, 64
        $region228: #{fwd.5} parent=223 // pred_fallthru
          _
        // Predicated region
        $region229: #{fwd.5} parent=223 // pred_check
          %p3961 = pneg %p900
        $region230: #{fwd.5} parent=223 // pred_check_branch
          %3963 = sbr.rel (%p3961) target = $region232
        $region231: #{fwd.5} parent=223 // pred_region
          %s3964 = sand.u32 %s101, 1
          %s3965 = scalar_lea.sflag [#allocation24], %s3964
          %s3966 = sand.u32 %s885, 1
          %s3967 = smul.addr %s3966, 4
          %s3968 = scalar_lea.vmem [#allocation23], %s3967
          %3969 = dma.done %s3965, 64
        $region232: #{fwd.5} parent=223 // pred_fallthru
          _
        // Predicated region
        $region233: #{fwd.5} parent=223 // pred_check
          %p3970 = pneg %p926
        $region234: #{fwd.5} parent=223 // pred_check_branch
          %3972 = sbr.rel (%p3970) target = $region236
        $region235: #{fwd.5} parent=223 // pred_region
          %s3973 = sand.u32 %s101, 1
          %s3974 = scalar_lea.sflag [#allocation24], %s3973
          %s3975 = sand.u32 %s911, 1
          %s3976 = scalar_lea.vmem [#allocation25], %s3975
          %3977 = dma.done %s3974, 16
        $region236: #{fwd.5} parent=223 // pred_fallthru
          _
      $region224: #{fwd.5} parent=5 // pred_fallthru
        _
    $region6: #{fwd.5} parent=1 // loop_footer
      %s99 = sadd.s32 1, %s95
    $region7: #{fwd.5} parent=1 // loop_footer_branch
      %94 = sbr.rel target = $region3
    $region8: #{fwd.5} parent=1 // loop_exit
      _
    %3978 = vsyncpa [#allocation3], 1
    %s3979 = scalar_lea.sflag [#allocation3], 1
    %3980 = vsyncpa %s3979, 1
    %3981 = vsyncpa [#allocation6], 1
    %3982 = vsyncpa [#allocation9], 1
    %3983 = vsyncpa [#allocation12], 1
    %3984 = vsyncpa [#allocation15], 1
    %3985 = vsyncpa [#allocation18], 1
    %3986 = vsyncpa [#allocation21], 1
    %3987 = vsyncpa [#allocation4], 1
    %s3988 = scalar_lea.sflag [#allocation4], 1
    %3989 = vsyncpa %s3988, 1
    %3990 = vsyncpa [#allocation24], 1
    %s3991 = scalar_lea.sflag [#allocation24], 1
    %3992 = vsyncpa %s3991, 1

</llo_original>
